<compile_context>
chip_gen: v6e
topology: v6e:2x2x1
jax: 0.10.0
libtpu: 0.0.40
codegen_flags: <defaults>
</compile_context>

<pallas_src>
import math
import jax
import jax.numpy as jnp
from jax import lax
from jax.experimental import pallas as pl
from jax.experimental.pallas import tpu as pltpu

# ---- model hyper-parameters (small, consistent with the module) -------------
FEATURE_DIM = 256          # feature_dim
HIDDEN_DIM = 128           # hidden_dim (divisible by 8 heads)
N_CLASSES = 1
N_LAYERS = 6
N_HEADS = 8
HEAD_DIM = HIDDEN_DIM // N_HEADS
LN_EPS = 1e-5
FEAT_ROW0 = 8              # feature tokens start at an 8-aligned sublane row
NEG_BIG = -1e30            # additive bias for padded key rows


def _layer_norm(x, g, b):
    mu = jnp.mean(x, axis=-1, keepdims=True)
    xc = x - mu
    var = jnp.mean(xc * xc, axis=-1, keepdims=True)
    return xc * lax.rsqrt(var + LN_EPS) * g + b


# ---------------------------- Pallas kernel ----------------------------------
def _make_kernel(Bb, N, S_pad):
    """Kernel closure over static sizes: Bb bags per grid step, N tokens/bag,
    S_pad padded sequence length (cls at row 0, feats at rows 8..8+N-1)."""
    H, nh, hd = HIDDEN_DIM, N_HEADS, HEAD_DIM
    BS = Bb * S_pad
    J = nh * S_pad                     # "blocked" key axis: j = head*S_pad + key
    TAIL = S_pad - FEAT_ROW0 - N       # zero rows after the feature tokens
    bf16 = jnp.bfloat16

    def kernel(feats_ref, pos_ref,
               fc1_w_ref, fc1_b_ref, pos_w_ref, pos_b_ref, cls_ref,
               ln1g_ref, ln1b_ref, inw_ref, inb_ref, outw_ref, outb_ref,
               ln2g_ref, ln2b_ref, w1_ref, b1_ref, w2_ref, b2_ref,
               normg_ref, normb_ref, clfw_ref, clfb_ref,
               blkmask_ref, gg_ref, kbias_ref,
               out_ref, x_scr):
        # ---- token embedding: fc1(feats) + pos_embedding(positions) --------
        feats = feats_ref[...].reshape(Bb * N, FEATURE_DIM)
        pos = pos_ref[...].reshape(Bb * N, 2)
        h = jnp.dot(feats.astype(bf16), fc1_w_ref[...],
                    preferred_element_type=jnp.float32) + fc1_b_ref[...]
        pos_emb = (pos[:, 0:1] * pos_w_ref[0:1, :] +
                   pos[:, 1:2] * pos_w_ref[1:2, :] + pos_b_ref[...])
        h = (h + pos_emb).reshape(Bb, N, H)                        # (Bb, N, H)

        # ---- padded, 8-aligned token block ----------------------------------
        # row 0: cls token, rows 1..7: zero pad, rows 8..8+N-1: feature tokens,
        # remaining rows: zero pad.  Padded rows are excluded as KEYS via the
        # additive bias below, so the result is exact w.r.t. the unpadded
        # computation.  Only the rows that need values are stored (no full
        # zero-fill followed by overwrite).
        row_iota = lax.broadcasted_iota(jnp.int32, (1, FEAT_ROW0, 1), 1)
        head_rows = jnp.where(row_iota == 0, cls_ref[...][None], 0.0)
        x_scr[:, 0:FEAT_ROW0, :] = jnp.broadcast_to(head_rows, (Bb, FEAT_ROW0, H))
        x_scr[:, FEAT_ROW0:FEAT_ROW0 + N, :] = h
        if TAIL > 0:
            x_scr[:, FEAT_ROW0 + N:S_pad, :] = jnp.zeros((Bb, TAIL, H),
                                                         jnp.float32)

        # ---- 6 pre-norm transformer layers ----------------------------------
        # TODO(synk): body is large, so the rolled pl.loop is fine; sweep a
        # partial unroll (lax.fori_loop(..., unroll=2)) only if the bundle dump
        # shows dead cycles at the loop boundary.
        @pl.loop(0, N_LAYERS)
        def _layer(l):
            x2d = x_scr[...].reshape(BS, H)

            # ---- multi-head self-attention (dropout = identity, eval mode) --
            xn = _layer_norm(x2d, ln1g_ref[l], ln1b_ref[l])
            # 1/sqrt(hd) is pre-folded into the q-columns of inw/inb (host).
            qkv = jnp.dot(xn.astype(bf16), inw_ref[l],
                          preferred_element_type=jnp.float32) + inb_ref[l]
            q3 = qkv[:, 0:H].astype(bf16).reshape(Bb, S_pad, H)
            k3 = qkv[:, H:2 * H].astype(bf16).reshape(Bb, S_pad, H)
            v3 = qkv[:, 2 * H:3 * H].astype(bf16).reshape(Bb, S_pad, H)

            # All heads at once: tile K/V x nh along sublanes and apply the
            # block-diagonal head mask so column group j = h*S_pad + k only
            # keeps head h's 16 lanes.  One einsum then yields every head's
            # scores; a second yields the concatenated-head attention output.
            # TODO(synk): for bag sizes in the thousands switch to flash-style
            # KV blocking (per-head, online softmax); derive the kv block from
            # 64 MiB VMEM on v7x (half of v5e/v6e).
            bm = blkmask_ref[...]                                   # (J, H) bf16
            k_blk = jnp.concatenate([k3] * nh, axis=1) * bm         # (Bb, J, H)
            v_blk = jnp.concatenate([v3] * nh, axis=1) * bm         # (Bb, J, H)

            s = jnp.einsum('bqd,bjd->bqj', q3, k_blk,
                           preferred_element_type=jnp.float32)      # (Bb,S,J)
            s = s + kbias_ref[...]            # padded key rows -> -1e30
            m = jnp.max(s, axis=-1, keepdims=True)   # global row max
            p = jnp.exp(s - m)                       # 0 exactly for padded keys
            # per-head denominator, broadcast back over j by a block-of-ones
            # matmul (f32, exact sums); reciprocal on the EUP slot.
            p2 = p.reshape(BS, J)
            den = jnp.dot(p2, gg_ref[...], preferred_element_type=jnp.float32)
            pn = (p2 * pl.reciprocal(den, approx=True)).reshape(Bb, S_pad, J)
            o = jnp.einsum('bqj,bjd->bqd', pn.astype(bf16), v_blk,
                           preferred_element_type=jnp.float32)      # (Bb,S,H)

            attn = jnp.dot(o.reshape(BS, H).astype(bf16), outw_ref[l],
                           preferred_element_type=jnp.float32) + outb_ref[l]
            x2d = x2d + attn

            # ---- feed-forward -----------------------------------------------
            xn2 = _layer_norm(x2d, ln2g_ref[l], ln2b_ref[l])
            hid = jnp.maximum(
                jnp.dot(xn2.astype(bf16), w1_ref[l],
                        preferred_element_type=jnp.float32) + b1_ref[l], 0.0)
            ffn = jnp.dot(hid.astype(bf16), w2_ref[l],
                          preferred_element_type=jnp.float32) + b2_ref[l]
            x_scr[...] = (x2d + ffn).reshape(Bb, S_pad, H)

        # ---- final norm on the cls tokens + classifier ----------------------
        cls_out = _layer_norm(x_scr[:, 0, :], normg_ref[...], normb_ref[...])
        logits = jnp.dot(cls_out.astype(bf16), clfw_ref[...],
                         preferred_element_type=jnp.float32) + clfb_ref[...]
        out_ref[:, 0, :] = logits

    return kernel


# ---------------------------- wrapper -----------------------------------------
_PARAM_ORDER = ['fc1_w', 'fc1_b', 'pos_w', 'pos_b', 'cls',
                'ln1g', 'ln1b', 'inw', 'inb', 'outw', 'outb',
                'ln2g', 'ln2b', 'w1', 'b1', 'w2', 'b2',
                'normg', 'normb', 'clf_w', 'clf_b']
_BF16_WEIGHTS = {'fc1_w', 'inw', 'outw', 'w1', 'w2', 'clf_w'}


def _pick_bags_per_step(B, S_pad, target_rows=256):
    """Fill the MXU M dimension (v6e/v7x like ~256 rows; v5e is already full
    at 128) while keeping >= 2 grid steps so both v7x TensorCores get work."""
    want = max(1, target_rows // S_pad)
    if B >= 2:
        want = min(want, B // 2)
    want = max(1, min(want, B))
    for bb in range(want, 0, -1):
        if B % bb == 0:
            return bb
    return 1


def ctmil_forward(feats, positions, params, bags_per_step=None):
    B, N, F = feats.shape
    H, C, L = HIDDEN_DIM, N_CLASSES, N_LAYERS
    nh, hd = N_HEADS, HEAD_DIM
    S_pad = FEAT_ROW0 + ((N + 7) // 8) * 8
    J = nh * S_pad
    Bb = bags_per_step if bags_per_step is not None else _pick_bags_per_step(B, S_pad)
    assert B % Bb == 0, "bags_per_step must divide the batch size"

    # Fold 1/sqrt(hd) into the q-projection (exact: scale is a power of two),
    # then ship matmul weights in bf16 (f32 MXU accumulation in the kernel);
    # biases / layernorm parameters stay f32.
    scale = 1.0 / math.sqrt(hd)
    p = {k: jnp.asarray(v) for k, v in params.items()}
    p['inw'] = p['inw'].at[:, :, :H].multiply(scale)
    p['inb'] = p['inb'].at[:, :, :H].multiply(scale)
    p = {k: (v.astype(jnp.bfloat16) if k in _BF16_WEIGHTS else v)
         for k, v in p.items()}

    # Host-built constants for the all-heads block formulation.
    grp = jnp.arange(J, dtype=jnp.int32) // S_pad           # head of column j
    kpos = jnp.arange(J, dtype=jnp.int32) % S_pad            # key row of column j
    col_head = jnp.arange(H, dtype=jnp.int32) // hd
    blkmask = (grp[:, None] == col_head[None, :]).astype(jnp.bfloat16)   # (J, H)
    gg = (grp[:, None] == grp[None, :]).astype(jnp.float32)              # (J, J)
    valid_key = (kpos == 0) | ((kpos >= FEAT_ROW0) & (kpos < FEAT_ROW0 + N))
    kbias = jnp.where(valid_key, 0.0, NEG_BIG).astype(jnp.float32)[None, :]  # (1, J)

    def cmap(nd):
        return lambda i: (0,) * nd

    def build_in_specs(single_buffer_weights):
        wkw = ({'pipeline_mode': pl.Buffered(1)} if single_buffer_weights else {})

        def wspec(shape):
            # Constant index map -> weights are grid-invariant; single buffer
            # them to halve their VMEM footprint (matters most on v7x, 64 MiB).
            return pl.BlockSpec(shape, cmap(len(shape)), **wkw)

        return [
            pl.BlockSpec((Bb, N, F), lambda i: (i, 0, 0)),
            pl.BlockSpec((Bb, N, 2), lambda i: (i, 0, 0)),
            wspec((F, H)),            # fc1_w (bf16)
            wspec((1, H)),            # fc1_b
            wspec((2, H)),            # pos_w
            wspec((1, H)),            # pos_b
            wspec((1, H)),            # cls
            wspec((L, 1, H)),         # ln1g
            wspec((L, 1, H)),         # ln1b
            wspec((L, H, 3 * H)),     # inw (bf16, q-scaled)
            wspec((L, 1, 3 * H)),     # inb (q-scaled)
            wspec((L, H, H)),         # outw (bf16)
            wspec((L, 1, H)),         # outb
            wspec((L, 1, H)),         # ln2g
            wspec((L, 1, H)),         # ln2b
            wspec((L, H, 4 * H)),     # w1 (bf16)
            wspec((L, 1, 4 * H)),     # b1
            wspec((L, 4 * H, H)),     # w2 (bf16)
            wspec((L, 1, H)),         # b2
            wspec((1, H)),            # normg
            wspec((1, H)),            # normb
            wspec((H, C)),            # clf_w (bf16)
            wspec((1, C)),            # clf_b
            wspec((J, H)),            # blkmask (bf16)
            wspec((J, J)),            # gg block-of-ones (f32)
            wspec((1, J)),            # key pad bias (f32)
        ]

    out_spec = pl.BlockSpec((Bb, 1, C), lambda i: (i, 0, 0))
    kernel = _make_kernel(Bb, N, S_pad)

    def run(single_buffer_weights):
        return pl.pallas_call(
            kernel,
            out_shape=jax.ShapeDtypeStruct((B, 1, C), jnp.float32),
            grid_spec=pltpu.PrefetchScalarGridSpec(
                num_scalar_prefetch=0,
                grid=(B // Bb,),
                in_specs=build_in_specs(single_buffer_weights),
                out_specs=out_spec,
                scratch_shapes=[
                    pltpu.VMEM((Bb, S_pad, H), jnp.float32),   # token activations
                ],
            ),
            compiler_params=pltpu.CompilerParams(
                dimension_semantics=("parallel",),
                # ~2.5 MB single-buffered weights + small activations and the
                # (Bb, J, H) blocked K/V; 32 MiB leaves ample headroom on
                # v5e/v6e/v7x for default Bb choices.
                vmem_limit_bytes=32 * 1024 * 1024,
            ),
        )(feats, positions, *[p[k] for k in _PARAM_ORDER], blkmask, gg, kbias)

    try:
        out = run(True)
    except Exception:
        # pl.Buffered(1) / pipeline_mode not supported on this jax version:
        # fall back to default double-buffering (identical results).
        out = run(False)
    return out.reshape(B, C)


# ---------------------------- reference (plain JAX, f32) -----------------------
def ctmil_reference(feats, positions, pd):
    B, N, _ = feats.shape
    H, nh, hd = HIDDEN_DIM, N_HEADS, HEAD_DIM
    S = N + 1
    h = feats @ pd['fc1_w'] + pd['fc1_b'] + positions @ pd['pos_w'] + pd['pos_b']
    cls = jnp.broadcast_to(pd['cls'][None], (B, 1, H))
    x = jnp.concatenate([cls, h], axis=1)
    for l in range(N_LAYERS):
        xn = _layer_norm(x, pd['ln1g'][l], pd['ln1b'][l])
        qkv = xn @ pd['inw'][l] + pd['inb'][l]
        q, k, v = jnp.split(qkv, 3, axis=-1)
        q = q.reshape(B, S, nh, hd).transpose(0, 2, 1, 3)
        k = k.reshape(B, S, nh, hd).transpose(0, 2, 1, 3)
        v = v.reshape(B, S, nh, hd).transpose(0, 2, 1, 3)
        s = jnp.einsum('bhqd,bhkd->bhqk', q, k) / math.sqrt(hd)
        p = jax.nn.softmax(s, axis=-1)
        o = jnp.einsum('bhqk,bhkd->bhqd', p, v).transpose(0, 2, 1, 3).reshape(B, S, H)
        x = x + (o @ pd['outw'][l] + pd['outb'][l])
        xn2 = _layer_norm(x, pd['ln2g'][l], pd['ln2b'][l])
        ffn = jax.nn.relu(xn2 @ pd['w1'][l] + pd['b1'][l]) @ pd['w2'][l] + pd['b2'][l]
        x = x + ffn
    cls_out = _layer_norm(x[:, 0, :], pd['normg'], pd['normb'])
    return cls_out @ pd['clf_w'] + pd['clf_b']


# ---------------------------- parameter init ----------------------------------
def init_params(key):
    H, F, C, L = HIDDEN_DIM, FEATURE_DIM, N_CLASSES, N_LAYERS
    ks = jax.random.split(key, 16)

    def w(k, shape, scale=0.02):
        return scale * jax.random.normal(k, shape, jnp.float32)

    return {
        'fc1_w': w(ks[0], (F, H)),
        'fc1_b': w(ks[1], (1, H)),
        'pos_w': w(ks[2], (2, H)),
        'pos_b': w(ks[3], (1, H)),
        'cls':   w(ks[4], (1, H), 1.0),
        'ln1g':  jnp.ones((L, 1, H), jnp.float32),
        'ln1b':  jnp.zeros((L, 1, H), jnp.float32),
        'inw':   w(ks[5], (L, H, 3 * H)),
        'inb':   w(ks[6], (L, 1, 3 * H)),
        'outw':  w(ks[7], (L, H, H)),
        'outb':  w(ks[8], (L, 1, H)),
        'ln2g':  jnp.ones((L, 1, H), jnp.float32),
        'ln2b':  jnp.zeros((L, 1, H), jnp.float32),
        'w1':    w(ks[9], (L, H, 4 * H)),
        'b1':    w(ks[10], (L, 1, 4 * H)),
        'w2':    w(ks[11], (L, 4 * H, H)),
        'b2':    w(ks[12], (L, 1, H)),
        'normg': jnp.ones((1, H), jnp.float32),
        'normb': jnp.zeros((1, H), jnp.float32),
        'clf_w': w(ks[13], (H, C)),
        'clf_b': jnp.zeros((1, C), jnp.float32),
    }


if __name__ == "__main__":
    B, N = 2, 8
    key = jax.random.PRNGKey(0)
    k_feat, k_pos, k_param = jax.random.split(key, 3)
    feats = jax.random.normal(k_feat, (B, N, FEATURE_DIM), jnp.float32)
    positions = jax.random.uniform(k_pos, (B, N, 2), jnp.float32)
    params = init_params(k_param)

    out = ctmil_forward(feats, positions, params)
    out = jax.block_until_ready(out)
    assert out.shape == (B, N_CLASSES)

    ref = ctmil_reference(feats, positions, params)
    assert jnp.allclose(out, ref, atol=5e-2, rtol=5e-2), (out, ref)

    # TODO(synk): dropout (p=0.1 attn, p=0.05 residual) is identity here (eval
    # mode); attention-weight (return_attn) and patch-logit (return_patch)
    # paths are not materialized.
    print("KERNEL_OK")
</pallas_src>

<mosaic_0001>
module attributes {stable_mosaic.version = 11 : i64} {
  func.func @kernel(%arg0: i32, %arg1: memref<1x8x256xf32, #tpu.memory_space<vmem>>, %arg2: memref<1x8x2xf32, #tpu.memory_space<vmem>>, %arg3: memref<256x128xbf16, #tpu.memory_space<vmem>>, %arg4: memref<1x128xf32, #tpu.memory_space<vmem>>, %arg5: memref<2x128xf32, #tpu.memory_space<vmem>>, %arg6: memref<1x128xf32, #tpu.memory_space<vmem>>, %arg7: memref<1x128xf32, #tpu.memory_space<vmem>>, %arg8: memref<6x1x128xf32, #tpu.memory_space<vmem>>, %arg9: memref<6x1x128xf32, #tpu.memory_space<vmem>>, %arg10: memref<6x128x384xbf16, #tpu.memory_space<vmem>>, %arg11: memref<6x1x384xf32, #tpu.memory_space<vmem>>, %arg12: memref<6x128x128xbf16, #tpu.memory_space<vmem>>, %arg13: memref<6x1x128xf32, #tpu.memory_space<vmem>>, %arg14: memref<6x1x128xf32, #tpu.memory_space<vmem>>, %arg15: memref<6x1x128xf32, #tpu.memory_space<vmem>>, %arg16: memref<6x128x512xbf16, #tpu.memory_space<vmem>>, %arg17: memref<6x1x512xf32, #tpu.memory_space<vmem>>, %arg18: memref<6x512x128xbf16, #tpu.memory_space<vmem>>, %arg19: memref<6x1x128xf32, #tpu.memory_space<vmem>>, %arg20: memref<1x128xf32, #tpu.memory_space<vmem>>, %arg21: memref<1x128xf32, #tpu.memory_space<vmem>>, %arg22: memref<128x1xbf16, #tpu.memory_space<vmem>>, %arg23: memref<1x1xf32, #tpu.memory_space<vmem>>, %arg24: memref<128x128xbf16, #tpu.memory_space<vmem>>, %arg25: memref<128x128xf32, #tpu.memory_space<vmem>>, %arg26: memref<1x128xf32, #tpu.memory_space<vmem>>, %arg27: memref<1x1x1xf32, #tpu.memory_space<vmem>>, %arg28: memref<1x16x128xf32, #tpu.memory_space<vmem>>) attributes {dimension_semantics = [#tpu.dimension_semantics<parallel>], iteration_bounds = array<i64: 2>, scalar_prefetch = 0 : i64, scratch_operands = 1 : i64, tpu.core_type = #tpu.core_type<tc>, window_params = [{transform_indices = @transform_0, window_bounds = array<i64: 1, 8, 256>}, {transform_indices = @transform_1, window_bounds = array<i64: 1, 8, 2>}, {pipeline_mode = #tpu.pipeline_mode<synchronous>, transform_indices = @transform_2, window_bounds = array<i64: 256, 128>}, {pipeline_mode = #tpu.pipeline_mode<synchronous>, transform_indices = @transform_3, window_bounds = array<i64: 1, 128>}, {pipeline_mode = #tpu.pipeline_mode<synchronous>, transform_indices = @transform_4, window_bounds = array<i64: 2, 128>}, {pipeline_mode = #tpu.pipeline_mode<synchronous>, transform_indices = @transform_5, window_bounds = array<i64: 1, 128>}, {pipeline_mode = #tpu.pipeline_mode<synchronous>, transform_indices = @transform_6, window_bounds = array<i64: 1, 128>}, {pipeline_mode = #tpu.pipeline_mode<synchronous>, transform_indices = @transform_7, window_bounds = array<i64: 6, 1, 128>}, {pipeline_mode = #tpu.pipeline_mode<synchronous>, transform_indices = @transform_8, window_bounds = array<i64: 6, 1, 128>}, {pipeline_mode = #tpu.pipeline_mode<synchronous>, transform_indices = @transform_9, window_bounds = array<i64: 6, 128, 384>}, {pipeline_mode = #tpu.pipeline_mode<synchronous>, transform_indices = @transform_10, window_bounds = array<i64: 6, 1, 384>}, {pipeline_mode = #tpu.pipeline_mode<synchronous>, transform_indices = @transform_11, window_bounds = array<i64: 6, 128, 128>}, {pipeline_mode = #tpu.pipeline_mode<synchronous>, transform_indices = @transform_12, window_bounds = array<i64: 6, 1, 128>}, {pipeline_mode = #tpu.pipeline_mode<synchronous>, transform_indices = @transform_13, window_bounds = array<i64: 6, 1, 128>}, {pipeline_mode = #tpu.pipeline_mode<synchronous>, transform_indices = @transform_14, window_bounds = array<i64: 6, 1, 128>}, {pipeline_mode = #tpu.pipeline_mode<synchronous>, transform_indices = @transform_15, window_bounds = array<i64: 6, 128, 512>}, {pipeline_mode = #tpu.pipeline_mode<synchronous>, transform_indices = @transform_16, window_bounds = array<i64: 6, 1, 512>}, {pipeline_mode = #tpu.pipeline_mode<synchronous>, transform_indices = @transform_17, window_bounds = array<i64: 6, 512, 128>}, {pipeline_mode = #tpu.pipeline_mode<synchronous>, transform_indices = @transform_18, window_bounds = array<i64: 6, 1, 128>}, {pipeline_mode = #tpu.pipeline_mode<synchronous>, transform_indices = @transform_19, window_bounds = array<i64: 1, 128>}, {pipeline_mode = #tpu.pipeline_mode<synchronous>, transform_indices = @transform_20, window_bounds = array<i64: 1, 128>}, {pipeline_mode = #tpu.pipeline_mode<synchronous>, transform_indices = @transform_21, window_bounds = array<i64: 128, 1>}, {pipeline_mode = #tpu.pipeline_mode<synchronous>, transform_indices = @transform_22, window_bounds = array<i64: 1, 1>}, {pipeline_mode = #tpu.pipeline_mode<synchronous>, transform_indices = @transform_23, window_bounds = array<i64: 128, 128>}, {pipeline_mode = #tpu.pipeline_mode<synchronous>, transform_indices = @transform_24, window_bounds = array<i64: 128, 128>}, {pipeline_mode = #tpu.pipeline_mode<synchronous>, transform_indices = @transform_25, window_bounds = array<i64: 1, 128>}, {transform_indices = @transform_26, window_bounds = array<i64: 1, 1, 1>}]} {
    %c0 = arith.constant 0 : index
    %c0_0 = arith.constant 0 : index
    %c0_1 = arith.constant 0 : index
    %0 = vector.load %arg1[%c0, %c0_0, %c0_1] : memref<1x8x256xf32, #tpu.memory_space<vmem>>, vector<1x8x256xf32>
    %1 = vector.shape_cast %0 : vector<1x8x256xf32> to vector<8x256xf32>
    %c0_2 = arith.constant 0 : index
    %c0_3 = arith.constant 0 : index
    %c0_4 = arith.constant 0 : index
    %2 = vector.load %arg2[%c0_2, %c0_3, %c0_4] : memref<1x8x2xf32, #tpu.memory_space<vmem>>, vector<1x8x2xf32>
    %3 = vector.shape_cast %2 : vector<1x8x2xf32> to vector<8x2xf32>
    %4 = arith.truncf %1 : vector<8x256xf32> to vector<8x256xbf16>
    %c0_5 = arith.constant 0 : index
    %c0_6 = arith.constant 0 : index
    %5 = vector.load %arg3[%c0_5, %c0_6] : memref<256x128xbf16, #tpu.memory_space<vmem>>, vector<256x128xbf16>
    %cst = arith.constant dense<0.000000e+00> : vector<8x128xf32>
    %6 = tpu.matmul %4, %5, %cst {dimension_numbers = #tpu.dot_dimension_numbers<[1], [0], [0], [1], [0, 0, 1, 1], [], []>} : vector<8x256xbf16>, vector<256x128xbf16>, vector<8x128xf32> -> vector<8x128xf32>
    %c0_7 = arith.constant 0 : index
    %c0_8 = arith.constant 0 : index
    %7 = vector.load %arg4[%c0_7, %c0_8] : memref<1x128xf32, #tpu.memory_space<vmem>>, vector<1x128xf32>
    %8 = vector.broadcast %7 : vector<1x128xf32> to vector<8x128xf32>
    %9 = arith.addf %6, %8 : vector<8x128xf32>
    %10 = vector.extract_strided_slice %3 {offsets = [0, 0], sizes = [8, 1], strides = [1, 1]} : vector<8x2xf32> to vector<8x1xf32>
    %c0_9 = arith.constant 0 : index
    %c0_10 = arith.constant 0 : index
    %11 = vector.load %arg5[%c0_9, %c0_10] : memref<2x128xf32, #tpu.memory_space<vmem>>, vector<1x128xf32>
    %12 = vector.broadcast %10 : vector<8x1xf32> to vector<8x128xf32>
    %13 = vector.broadcast %11 : vector<1x128xf32> to vector<8x128xf32>
    %14 = arith.mulf %12, %13 : vector<8x128xf32>
    %15 = vector.extract_strided_slice %3 {offsets = [0, 1], sizes = [8, 1], strides = [1, 1]} : vector<8x2xf32> to vector<8x1xf32>
    %c1 = arith.constant 1 : index
    %c0_11 = arith.constant 0 : index
    %16 = vector.load %arg5[%c1, %c0_11] : memref<2x128xf32, #tpu.memory_space<vmem>>, vector<1x128xf32>
    %17 = vector.broadcast %15 : vector<8x1xf32> to vector<8x128xf32>
    %18 = vector.broadcast %16 : vector<1x128xf32> to vector<8x128xf32>
    %19 = arith.mulf %17, %18 : vector<8x128xf32>
    %20 = arith.addf %14, %19 : vector<8x128xf32>
    %c0_12 = arith.constant 0 : index
    %c0_13 = arith.constant 0 : index
    %21 = vector.load %arg6[%c0_12, %c0_13] : memref<1x128xf32, #tpu.memory_space<vmem>>, vector<1x128xf32>
    %22 = vector.broadcast %21 : vector<1x128xf32> to vector<8x128xf32>
    %23 = arith.addf %20, %22 : vector<8x128xf32>
    %24 = arith.addf %9, %23 : vector<8x128xf32>
    %25 = vector.shape_cast %24 : vector<8x128xf32> to vector<1x8x128xf32>
    %26 = tpu.iota {dimensions = array<i32: 1>} : vector<1x8x1xi32>
    %c0_i32 = arith.constant 0 : i32
    %27 = vector.broadcast %c0_i32 : i32 to vector<1x8x1xi32>
    %28 = arith.cmpi eq, %26, %27 : vector<1x8x1xi32>
    %c0_14 = arith.constant 0 : index
    %c0_15 = arith.constant 0 : index
    %29 = vector.load %arg7[%c0_14, %c0_15] : memref<1x128xf32, #tpu.memory_space<vmem>>, vector<1x128xf32>
    %30 = vector.shape_cast %29 : vector<1x128xf32> to vector<1x1x128xf32>
    %cst_16 = arith.constant 0.000000e+00 : f32
    %31 = vector.shape_cast %28 : vector<1x8x1xi1> to vector<1x8x1xi1>
    %32 = vector.broadcast %31 : vector<1x8x1xi1> to vector<1x8x128xi1>
    %33 = vector.shape_cast %30 : vector<1x1x128xf32> to vector<1x1x128xf32>
    %34 = vector.broadcast %33 : vector<1x1x128xf32> to vector<1x8x128xf32>
    %35 = vector.broadcast %cst_16 : f32 to vector<1x8x128xf32>
    %36 = arith.select %32, %34, %35 : vector<1x8x128xi1>, vector<1x8x128xf32>
    %c0_17 = arith.constant 0 : index
    %c0_18 = arith.constant 0 : index
    %c0_19 = arith.constant 0 : index
    %37 = vector.load %arg28[%c0_17, %c0_18, %c0_19] : memref<1x16x128xf32, #tpu.memory_space<vmem>>, vector<1x8x128xf32>
    tpu.vector_store %arg28[%c0_17, %c0_18, %c0_19], %36 {strides = array<i32>} : memref<1x16x128xf32, #tpu.memory_space<vmem>>, vector<1x8x128xf32>,
    %c0_20 = arith.constant 0 : index
    %c8 = arith.constant 8 : index
    %c0_21 = arith.constant 0 : index
    %38 = vector.load %arg28[%c0_20, %c8, %c0_21] : memref<1x16x128xf32, #tpu.memory_space<vmem>>, vector<1x8x128xf32>
    tpu.vector_store %arg28[%c0_20, %c8, %c0_21], %25 {strides = array<i32>} : memref<1x16x128xf32, #tpu.memory_space<vmem>>, vector<1x8x128xf32>,
    %c0_i32_22 = arith.constant 0 : i32
    %c6_i32 = arith.constant 6 : i32
    %39 = arith.addi %c0_i32_22, %c6_i32 : i32
    %c1_i32 = arith.constant 1 : i32
    scf.for %arg29 = %c0_i32_22 to %39 step %c1_i32  : i32 {
      %c1_i32_44 = arith.constant 1 : i32
      %70 = arith.muli %arg29, %c1_i32_44 : i32
      %c0_i32_45 = arith.constant 0 : i32
      %71 = arith.addi %c0_i32_45, %70 : i32
      %c0_46 = arith.constant 0 : index
      %c0_47 = arith.constant 0 : index
      %c0_48 = arith.constant 0 : index
      %72 = vector.load %arg28[%c0_46, %c0_47, %c0_48] : memref<1x16x128xf32, #tpu.memory_space<vmem>>, vector<1x16x128xf32>
      %73 = vector.shape_cast %72 : vector<1x16x128xf32> to vector<16x128xf32>
      %74 = arith.index_cast %71 : i32 to index
      %c0_49 = arith.constant 0 : index
      %c0_50 = arith.constant 0 : index
      %75 = vector.load %arg8[%74, %c0_49, %c0_50] : memref<6x1x128xf32, #tpu.memory_space<vmem>>, vector<1x1x128xf32>
      %76 = vector.shape_cast %75 : vector<1x1x128xf32> to vector<1x128xf32>
      %77 = arith.index_cast %71 : i32 to index
      %c0_51 = arith.constant 0 : index
      %c0_52 = arith.constant 0 : index
      %78 = vector.load %arg9[%77, %c0_51, %c0_52] : memref<6x1x128xf32, #tpu.memory_space<vmem>>, vector<1x1x128xf32>
      %79 = vector.shape_cast %78 : vector<1x1x128xf32> to vector<1x128xf32>
      %cst_53 = arith.constant dense<0.000000e+00> : vector<16xf32>
      %80 = vector.multi_reduction <add>, %73, %cst_53 [1] : vector<16x128xf32> to vector<16xf32>
      %81 = vector.shape_cast %80 : vector<16xf32> to vector<16x1xf32>
      %cst_54 = arith.constant 1.280000e+02 : f32
      %82 = vector.broadcast %cst_54 : f32 to vector<16x1xf32>
      %83 = arith.divf %81, %82 : vector<16x1xf32>
      %84 = vector.broadcast %83 : vector<16x1xf32> to vector<16x128xf32>
      %85 = arith.subf %73, %84 : vector<16x128xf32>
      %86 = arith.mulf %85, %85 : vector<16x128xf32>
      %cst_55 = arith.constant dense<0.000000e+00> : vector<16xf32>
      %87 = vector.multi_reduction <add>, %86, %cst_55 [1] : vector<16x128xf32> to vector<16xf32>
      %88 = vector.shape_cast %87 : vector<16xf32> to vector<16x1xf32>
      %cst_56 = arith.constant 1.280000e+02 : f32
      %89 = vector.broadcast %cst_56 : f32 to vector<16x1xf32>
      %90 = arith.divf %88, %89 : vector<16x1xf32>
      %cst_57 = arith.constant 9.99999974E-6 : f32
      %91 = vector.broadcast %cst_57 : f32 to vector<16x1xf32>
      %92 = arith.addf %90, %91 : vector<16x1xf32>
      %93 = math.rsqrt %92 : vector<16x1xf32>
      %94 = vector.broadcast %93 : vector<16x1xf32> to vector<16x128xf32>
      %95 = arith.mulf %85, %94 : vector<16x128xf32>
      %96 = vector.broadcast %76 : vector<1x128xf32> to vector<16x128xf32>
      %97 = arith.mulf %95, %96 : vector<16x128xf32>
      %98 = vector.broadcast %79 : vector<1x128xf32> to vector<16x128xf32>
      %99 = arith.addf %97, %98 : vector<16x128xf32>
      %100 = arith.truncf %99 : vector<16x128xf32> to vector<16x128xbf16>
      %101 = arith.index_cast %71 : i32 to index
      %c0_58 = arith.constant 0 : index
      %c0_59 = arith.constant 0 : index
      %102 = vector.load %arg10[%101, %c0_58, %c0_59] : memref<6x128x384xbf16, #tpu.memory_space<vmem>>, vector<1x128x384xbf16>
      %103 = vector.shape_cast %102 : vector<1x128x384xbf16> to vector<128x384xbf16>
      %cst_60 = arith.constant dense<0.000000e+00> : vector<16x384xf32>
      %104 = tpu.matmul %100, %103, %cst_60 {dimension_numbers = #tpu.dot_dimension_numbers<[1], [0], [0], [1], [0, 0, 1, 1], [], []>} : vector<16x128xbf16>, vector<128x384xbf16>, vector<16x384xf32> -> vector<16x384xf32>
      %105 = arith.index_cast %71 : i32 to index
      %c0_61 = arith.constant 0 : index
      %c0_62 = arith.constant 0 : index
      %106 = vector.load %arg11[%105, %c0_61, %c0_62] : memref<6x1x384xf32, #tpu.memory_space<vmem>>, vector<1x1x384xf32>
      %107 = vector.shape_cast %106 : vector<1x1x384xf32> to vector<1x384xf32>
      %108 = vector.broadcast %107 : vector<1x384xf32> to vector<16x384xf32>
      %109 = arith.addf %104, %108 : vector<16x384xf32>
      %110 = vector.extract_strided_slice %109 {offsets = [0, 0], sizes = [16, 128], strides = [1, 1]} : vector<16x384xf32> to vector<16x128xf32>
      %111 = arith.truncf %110 : vector<16x128xf32> to vector<16x128xbf16>
      %112 = vector.shape_cast %111 : vector<16x128xbf16> to vector<1x16x128xbf16>
      %113 = vector.extract_strided_slice %109 {offsets = [0, 128], sizes = [16, 128], strides = [1, 1]} : vector<16x384xf32> to vector<16x128xf32>
      %114 = arith.truncf %113 : vector<16x128xf32> to vector<16x128xbf16>
      %115 = vector.shape_cast %114 : vector<16x128xbf16> to vector<1x16x128xbf16>
      %116 = vector.extract_strided_slice %109 {offsets = [0, 256], sizes = [16, 128], strides = [1, 1]} : vector<16x384xf32> to vector<16x128xf32>
      %117 = arith.truncf %116 : vector<16x128xf32> to vector<16x128xbf16>
      %118 = vector.shape_cast %117 : vector<16x128xbf16> to vector<1x16x128xbf16>
      %c0_63 = arith.constant 0 : index
      %c0_64 = arith.constant 0 : index
      %119 = vector.load %arg24[%c0_63, %c0_64] : memref<128x128xbf16, #tpu.memory_space<vmem>>, vector<128x128xbf16>
      %120 = tpu.concatenate %115, %115, %115, %115, %115, %115, %115, %115 in 1 : vector<1x16x128xbf16>, vector<1x16x128xbf16>, vector<1x16x128xbf16>, vector<1x16x128xbf16>, vector<1x16x128xbf16>, vector<1x16x128xbf16>, vector<1x16x128xbf16>, vector<1x16x128xbf16> -> vector<1x128x128xbf16>
      %121 = vector.shape_cast %119 : vector<128x128xbf16> to vector<1x128x128xbf16>
      %122 = arith.mulf %120, %121 : vector<1x128x128xbf16>
      %123 = tpu.concatenate %118, %118, %118, %118, %118, %118, %118, %118 in 1 : vector<1x16x128xbf16>, vector<1x16x128xbf16>, vector<1x16x128xbf16>, vector<1x16x128xbf16>, vector<1x16x128xbf16>, vector<1x16x128xbf16>, vector<1x16x128xbf16>, vector<1x16x128xbf16> -> vector<1x128x128xbf16>
      %124 = vector.shape_cast %119 : vector<128x128xbf16> to vector<1x128x128xbf16>
      %125 = arith.mulf %123, %124 : vector<1x128x128xbf16>
      "tpu.trace_start"() <{level = 10 : i32, message = "bqd,bjd->bqj"}> : () -> ()
      %cst_65 = arith.constant dense<0.000000e+00> : vector<1x16x128xf32>
      %126 = tpu.matmul %112, %122, %cst_65 {dimension_numbers = #tpu.dot_dimension_numbers<[2], [2], [1], [1], [0, 0, 0, 1, 1, 1], [0], [0]>} : vector<1x16x128xbf16>, vector<1x128x128xbf16>, vector<1x16x128xf32> -> vector<1x16x128xf32>
      "tpu.trace_stop"() : () -> ()
      %c0_66 = arith.constant 0 : index
      %c0_67 = arith.constant 0 : index
      %127 = vector.load %arg26[%c0_66, %c0_67] : memref<1x128xf32, #tpu.memory_space<vmem>>, vector<1x128xf32>
      %128 = vector.shape_cast %127 : vector<1x128xf32> to vector<1x1x128xf32>
      %129 = vector.broadcast %128 : vector<1x1x128xf32> to vector<1x16x128xf32>
      %130 = arith.addf %126, %129 : vector<1x16x128xf32>
      %cst_68 = arith.constant dense<0xFF800000> : vector<1x16xf32>
      %131 = vector.multi_reduction <maximumf>, %130, %cst_68 [2] : vector<1x16x128xf32> to vector<1x16xf32>
      %132 = vector.shape_cast %131 : vector<1x16xf32> to vector<1x16x1xf32>
      %133 = vector.broadcast %132 : vector<1x16x1xf32> to vector<1x16x128xf32>
      %134 = arith.subf %130, %133 : vector<1x16x128xf32>
      %135 = math.exp %134 : vector<1x16x128xf32>
      %136 = vector.shape_cast %135 : vector<1x16x128xf32> to vector<16x128xf32>
      %c0_69 = arith.constant 0 : index
      %c0_70 = arith.constant 0 : index
      %137 = vector.load %arg25[%c0_69, %c0_70] : memref<128x128xf32, #tpu.memory_space<vmem>>, vector<128x128xf32>
      %cst_71 = arith.constant dense<0.000000e+00> : vector<16x128xf32>
      %138 = tpu.matmul %136, %137, %cst_71 {dimension_numbers = #tpu.dot_dimension_numbers<[1], [0], [0], [1], [0, 0, 1, 1], [], []>} : vector<16x128xf32>, vector<128x128xf32>, vector<16x128xf32> -> vector<16x128xf32>
      %139 = tpu.reciprocal %138 {approx = true} : vector<16x128xf32> -> vector<16x128xf32>
      %140 = arith.mulf %136, %139 : vector<16x128xf32>
      %141 = vector.shape_cast %140 : vector<16x128xf32> to vector<1x16x128xf32>
      %142 = arith.truncf %141 : vector<1x16x128xf32> to vector<1x16x128xbf16>
      "tpu.trace_start"() <{level = 10 : i32, message = "bqj,bjd->bqd"}> : () -> ()
      %cst_72 = arith.constant dense<0.000000e+00> : vector<1x16x128xf32>
      %143 = tpu.matmul %142, %125, %cst_72 {dimension_numbers = #tpu.dot_dimension_numbers<[2], [1], [1], [2], [0, 0, 0, 1, 1, 2], [0], [0]>} : vector<1x16x128xbf16>, vector<1x128x128xbf16>, vector<1x16x128xf32> -> vector<1x16x128xf32>
      "tpu.trace_stop"() : () -> ()
      %144 = vector.shape_cast %143 : vector<1x16x128xf32> to vector<16x128xf32>
      %145 = arith.truncf %144 : vector<16x128xf32> to vector<16x128xbf16>
      %146 = arith.index_cast %71 : i32 to index
      %c0_73 = arith.constant 0 : index
      %c0_74 = arith.constant 0 : index
      %147 = vector.load %arg12[%146, %c0_73, %c0_74] : memref<6x128x128xbf16, #tpu.memory_space<vmem>>, vector<1x128x128xbf16>
      %148 = vector.shape_cast %147 : vector<1x128x128xbf16> to vector<128x128xbf16>
      %cst_75 = arith.constant dense<0.000000e+00> : vector<16x128xf32>
      %149 = tpu.matmul %145, %148, %cst_75 {dimension_numbers = #tpu.dot_dimension_numbers<[1], [0], [0], [1], [0, 0, 1, 1], [], []>} : vector<16x128xbf16>, vector<128x128xbf16>, vector<16x128xf32> -> vector<16x128xf32>
      %150 = arith.index_cast %71 : i32 to index
      %c0_76 = arith.constant 0 : index
      %c0_77 = arith.constant 0 : index
      %151 = vector.load %arg13[%150, %c0_76, %c0_77] : memref<6x1x128xf32, #tpu.memory_space<vmem>>, vector<1x1x128xf32>
      %152 = vector.shape_cast %151 : vector<1x1x128xf32> to vector<1x128xf32>
      %153 = vector.broadcast %152 : vector<1x128xf32> to vector<16x128xf32>
      %154 = arith.addf %149, %153 : vector<16x128xf32>
      %155 = arith.addf %73, %154 : vector<16x128xf32>
      %156 = arith.index_cast %71 : i32 to index
      %c0_78 = arith.constant 0 : index
      %c0_79 = arith.constant 0 : index
      %157 = vector.load %arg14[%156, %c0_78, %c0_79] : memref<6x1x128xf32, #tpu.memory_space<vmem>>, vector<1x1x128xf32>
      %158 = vector.shape_cast %157 : vector<1x1x128xf32> to vector<1x128xf32>
      %159 = arith.index_cast %71 : i32 to index
      %c0_80 = arith.constant 0 : index
      %c0_81 = arith.constant 0 : index
      %160 = vector.load %arg15[%159, %c0_80, %c0_81] : memref<6x1x128xf32, #tpu.memory_space<vmem>>, vector<1x1x128xf32>
      %161 = vector.shape_cast %160 : vector<1x1x128xf32> to vector<1x128xf32>
      %cst_82 = arith.constant dense<0.000000e+00> : vector<16xf32>
      %162 = vector.multi_reduction <add>, %155, %cst_82 [1] : vector<16x128xf32> to vector<16xf32>
      %163 = vector.shape_cast %162 : vector<16xf32> to vector<16x1xf32>
      %cst_83 = arith.constant 1.280000e+02 : f32
      %164 = vector.broadcast %cst_83 : f32 to vector<16x1xf32>
      %165 = arith.divf %163, %164 : vector<16x1xf32>
      %166 = vector.broadcast %165 : vector<16x1xf32> to vector<16x128xf32>
      %167 = arith.subf %155, %166 : vector<16x128xf32>
      %168 = arith.mulf %167, %167 : vector<16x128xf32>
      %cst_84 = arith.constant dense<0.000000e+00> : vector<16xf32>
      %169 = vector.multi_reduction <add>, %168, %cst_84 [1] : vector<16x128xf32> to vector<16xf32>
      %170 = vector.shape_cast %169 : vector<16xf32> to vector<16x1xf32>
      %cst_85 = arith.constant 1.280000e+02 : f32
      %171 = vector.broadcast %cst_85 : f32 to vector<16x1xf32>
      %172 = arith.divf %170, %171 : vector<16x1xf32>
      %cst_86 = arith.constant 9.99999974E-6 : f32
      %173 = vector.broadcast %cst_86 : f32 to vector<16x1xf32>
      %174 = arith.addf %172, %173 : vector<16x1xf32>
      %175 = math.rsqrt %174 : vector<16x1xf32>
      %176 = vector.broadcast %175 : vector<16x1xf32> to vector<16x128xf32>
      %177 = arith.mulf %167, %176 : vector<16x128xf32>
      %178 = vector.broadcast %158 : vector<1x128xf32> to vector<16x128xf32>
      %179 = arith.mulf %177, %178 : vector<16x128xf32>
      %180 = vector.broadcast %161 : vector<1x128xf32> to vector<16x128xf32>
      %181 = arith.addf %179, %180 : vector<16x128xf32>
      %182 = arith.truncf %181 : vector<16x128xf32> to vector<16x128xbf16>
      %183 = arith.index_cast %71 : i32 to index
      %c0_87 = arith.constant 0 : index
      %c0_88 = arith.constant 0 : index
      %184 = vector.load %arg16[%183, %c0_87, %c0_88] : memref<6x128x512xbf16, #tpu.memory_space<vmem>>, vector<1x128x512xbf16>
      %185 = vector.shape_cast %184 : vector<1x128x512xbf16> to vector<128x512xbf16>
      %cst_89 = arith.constant dense<0.000000e+00> : vector<16x512xf32>
      %186 = tpu.matmul %182, %185, %cst_89 {dimension_numbers = #tpu.dot_dimension_numbers<[1], [0], [0], [1], [0, 0, 1, 1], [], []>} : vector<16x128xbf16>, vector<128x512xbf16>, vector<16x512xf32> -> vector<16x512xf32>
      %187 = arith.index_cast %71 : i32 to index
      %c0_90 = arith.constant 0 : index
      %c0_91 = arith.constant 0 : index
      %188 = vector.load %arg17[%187, %c0_90, %c0_91] : memref<6x1x512xf32, #tpu.memory_space<vmem>>, vector<1x1x512xf32>
      %189 = vector.shape_cast %188 : vector<1x1x512xf32> to vector<1x512xf32>
      %190 = vector.broadcast %189 : vector<1x512xf32> to vector<16x512xf32>
      %191 = arith.addf %186, %190 : vector<16x512xf32>
      %cst_92 = arith.constant 0.000000e+00 : f32
      %192 = vector.broadcast %cst_92 : f32 to vector<16x512xf32>
      %193 = arith.maximumf %191, %192 : vector<16x512xf32>
      %194 = arith.truncf %193 : vector<16x512xf32> to vector<16x512xbf16>
      %195 = arith.index_cast %71 : i32 to index
      %c0_93 = arith.constant 0 : index
      %c0_94 = arith.constant 0 : index
      %196 = vector.load %arg18[%195, %c0_93, %c0_94] : memref<6x512x128xbf16, #tpu.memory_space<vmem>>, vector<1x512x128xbf16>
      %197 = vector.shape_cast %196 : vector<1x512x128xbf16> to vector<512x128xbf16>
      %cst_95 = arith.constant dense<0.000000e+00> : vector<16x128xf32>
      %198 = tpu.matmul %194, %197, %cst_95 {dimension_numbers = #tpu.dot_dimension_numbers<[1], [0], [0], [1], [0, 0, 1, 1], [], []>} : vector<16x512xbf16>, vector<512x128xbf16>, vector<16x128xf32> -> vector<16x128xf32>
      %199 = arith.index_cast %71 : i32 to index
      %c0_96 = arith.constant 0 : index
      %c0_97 = arith.constant 0 : index
      %200 = vector.load %arg19[%199, %c0_96, %c0_97] : memref<6x1x128xf32, #tpu.memory_space<vmem>>, vector<1x1x128xf32>
      %201 = vector.shape_cast %200 : vector<1x1x128xf32> to vector<1x128xf32>
      %202 = vector.broadcast %201 : vector<1x128xf32> to vector<16x128xf32>
      %203 = arith.addf %198, %202 : vector<16x128xf32>
      %204 = arith.addf %155, %203 : vector<16x128xf32>
      %205 = vector.shape_cast %204 : vector<16x128xf32> to vector<1x16x128xf32>
      %c0_98 = arith.constant 0 : index
      %c0_99 = arith.constant 0 : index
      %c0_100 = arith.constant 0 : index
      %206 = vector.load %arg28[%c0_98, %c0_99, %c0_100] : memref<1x16x128xf32, #tpu.memory_space<vmem>>, vector<1x16x128xf32>
      tpu.vector_store %arg28[%c0_98, %c0_99, %c0_100], %205 {strides = array<i32>} : memref<1x16x128xf32, #tpu.memory_space<vmem>>, vector<1x16x128xf32>,
    }
    %c6_i32_23 = arith.constant 6 : i32
    %c0_24 = arith.constant 0 : index
    %c0_25 = arith.constant 0 : index
    %c0_26 = arith.constant 0 : index
    %40 = vector.load %arg28[%c0_24, %c0_25, %c0_26] : memref<1x16x128xf32, #tpu.memory_space<vmem>>, vector<1x1x128xf32>
    %41 = vector.shape_cast %40 : vector<1x1x128xf32> to vector<1x128xf32>
    %c0_27 = arith.constant 0 : index
    %c0_28 = arith.constant 0 : index
    %42 = vector.load %arg20[%c0_27, %c0_28] : memref<1x128xf32, #tpu.memory_space<vmem>>, vector<1x128xf32>
    %c0_29 = arith.constant 0 : index
    %c0_30 = arith.constant 0 : index
    %43 = vector.load %arg21[%c0_29, %c0_30] : memref<1x128xf32, #tpu.memory_space<vmem>>, vector<1x128xf32>
    %cst_31 = arith.constant dense<0.000000e+00> : vector<1xf32>
    %44 = vector.multi_reduction <add>, %41, %cst_31 [1] : vector<1x128xf32> to vector<1xf32>
    %45 = vector.shape_cast %44 : vector<1xf32> to vector<1x1xf32>
    %cst_32 = arith.constant 1.280000e+02 : f32
    %46 = vector.broadcast %cst_32 : f32 to vector<1x1xf32>
    %47 = arith.divf %45, %46 : vector<1x1xf32>
    %48 = vector.broadcast %47 : vector<1x1xf32> to vector<1x128xf32>
    %49 = arith.subf %41, %48 : vector<1x128xf32>
    %50 = arith.mulf %49, %49 : vector<1x128xf32>
    %cst_33 = arith.constant dense<0.000000e+00> : vector<1xf32>
    %51 = vector.multi_reduction <add>, %50, %cst_33 [1] : vector<1x128xf32> to vector<1xf32>
    %52 = vector.shape_cast %51 : vector<1xf32> to vector<1x1xf32>
    %cst_34 = arith.constant 1.280000e+02 : f32
    %53 = vector.broadcast %cst_34 : f32 to vector<1x1xf32>
    %54 = arith.divf %52, %53 : vector<1x1xf32>
    %cst_35 = arith.constant 9.99999974E-6 : f32
    %55 = vector.broadcast %cst_35 : f32 to vector<1x1xf32>
    %56 = arith.addf %54, %55 : vector<1x1xf32>
    %57 = math.rsqrt %56 : vector<1x1xf32>
    %58 = vector.broadcast %57 : vector<1x1xf32> to vector<1x128xf32>
    %59 = arith.mulf %49, %58 : vector<1x128xf32>
    %60 = arith.mulf %59, %42 : vector<1x128xf32>
    %61 = arith.addf %60, %43 : vector<1x128xf32>
    %62 = arith.truncf %61 : vector<1x128xf32> to vector<1x128xbf16>
    %c0_36 = arith.constant 0 : index
    %c0_37 = arith.constant 0 : index
    %63 = vector.load %arg22[%c0_36, %c0_37] : memref<128x1xbf16, #tpu.memory_space<vmem>>, vector<128x1xbf16>
    %cst_38 = arith.constant dense<0.000000e+00> : vector<1x1xf32>
    %64 = tpu.matmul %62, %63, %cst_38 {dimension_numbers = #tpu.dot_dimension_numbers<[1], [0], [0], [1], [0, 0, 1, 1], [], []>} : vector<1x128xbf16>, vector<128x1xbf16>, vector<1x1xf32> -> vector<1x1xf32>
    %c0_39 = arith.constant 0 : index
    %c0_40 = arith.constant 0 : index
    %65 = vector.load %arg23[%c0_39, %c0_40] : memref<1x1xf32, #tpu.memory_space<vmem>>, vector<1x1xf32>
    %66 = arith.addf %64, %65 : vector<1x1xf32>
    %c0_41 = arith.constant 0 : index
    %c0_42 = arith.constant 0 : index
    %c0_43 = arith.constant 0 : index
    %67 = vector.load %arg27[%c0_41, %c0_42, %c0_43] : memref<1x1x1xf32, #tpu.memory_space<vmem>>, vector<1x1x1xf32>
    %68 = vector.shape_cast %67 : vector<1x1x1xf32> to vector<1x1xf32>
    %69 = vector.shape_cast %66 : vector<1x1xf32> to vector<1x1x1xf32>
    tpu.vector_store %arg27[%c0_41, %c0_42, %c0_43], %69 {strides = array<i32>} : memref<1x1x1xf32, #tpu.memory_space<vmem>>, vector<1x1x1xf32>,
    return
  }
  func.func @transform_0(%arg0: i32) -> (i32, i32, i32) {
    %c0_i32 = arith.constant 0 : i32
    %c0_i32_0 = arith.constant 0 : i32
    %c0_i32_1 = arith.constant 0 : i32
    return %arg0, %c0_i32, %c0_i32_0 : i32, i32, i32
  }
  func.func @transform_1(%arg0: i32) -> (i32, i32, i32) {
    %c0_i32 = arith.constant 0 : i32
    %c0_i32_0 = arith.constant 0 : i32
    %c0_i32_1 = arith.constant 0 : i32
    return %arg0, %c0_i32, %c0_i32_0 : i32, i32, i32
  }
  func.func @transform_2(%arg0: i32) -> (i32, i32) {
    %c0_i32 = arith.constant 0 : i32
    %c0_i32_0 = arith.constant 0 : i32
    %c0_i32_1 = arith.constant 0 : i32
    return %c0_i32, %c0_i32_0 : i32, i32
  }
  func.func @transform_3(%arg0: i32) -> (i32, i32) {
    %c0_i32 = arith.constant 0 : i32
    %c0_i32_0 = arith.constant 0 : i32
    %c0_i32_1 = arith.constant 0 : i32
    return %c0_i32, %c0_i32_0 : i32, i32
  }
  func.func @transform_4(%arg0: i32) -> (i32, i32) {
    %c0_i32 = arith.constant 0 : i32
    %c0_i32_0 = arith.constant 0 : i32
    %c0_i32_1 = arith.constant 0 : i32
    return %c0_i32, %c0_i32_0 : i32, i32
  }
  func.func @transform_5(%arg0: i32) -> (i32, i32) {
    %c0_i32 = arith.constant 0 : i32
    %c0_i32_0 = arith.constant 0 : i32
    %c0_i32_1 = arith.constant 0 : i32
    return %c0_i32, %c0_i32_0 : i32, i32
  }
  func.func @transform_6(%arg0: i32) -> (i32, i32) {
    %c0_i32 = arith.constant 0 : i32
    %c0_i32_0 = arith.constant 0 : i32
    %c0_i32_1 = arith.constant 0 : i32
    return %c0_i32, %c0_i32_0 : i32, i32
  }
  func.func @transform_7(%arg0: i32) -> (i32, i32, i32) {
    %c0_i32 = arith.constant 0 : i32
    %c0_i32_0 = arith.constant 0 : i32
    %c0_i32_1 = arith.constant 0 : i32
    %c0_i32_2 = arith.constant 0 : i32
    return %c0_i32, %c0_i32_0, %c0_i32_1 : i32, i32, i32
  }
  func.func @transform_8(%arg0: i32) -> (i32, i32, i32) {
    %c0_i32 = arith.constant 0 : i32
    %c0_i32_0 = arith.constant 0 : i32
    %c0_i32_1 = arith.constant 0 : i32
    %c0_i32_2 = arith.constant 0 : i32
    return %c0_i32, %c0_i32_0, %c0_i32_1 : i32, i32, i32
  }
  func.func @transform_9(%arg0: i32) -> (i32, i32, i32) {
    %c0_i32 = arith.constant 0 : i32
    %c0_i32_0 = arith.constant 0 : i32
    %c0_i32_1 = arith.constant 0 : i32
    %c0_i32_2 = arith.constant 0 : i32
    return %c0_i32, %c0_i32_0, %c0_i32_1 : i32, i32, i32
  }
  func.func @transform_10(%arg0: i32) -> (i32, i32, i32) {
    %c0_i32 = arith.constant 0 : i32
    %c0_i32_0 = arith.constant 0 : i32
    %c0_i32_1 = arith.constant 0 : i32
    %c0_i32_2 = arith.constant 0 : i32
    return %c0_i32, %c0_i32_0, %c0_i32_1 : i32, i32, i32
  }
  func.func @transform_11(%arg0: i32) -> (i32, i32, i32) {
    %c0_i32 = arith.constant 0 : i32
    %c0_i32_0 = arith.constant 0 : i32
    %c0_i32_1 = arith.constant 0 : i32
    %c0_i32_2 = arith.constant 0 : i32
    return %c0_i32, %c0_i32_0, %c0_i32_1 : i32, i32, i32
  }
  func.func @transform_12(%arg0: i32) -> (i32, i32, i32) {
    %c0_i32 = arith.constant 0 : i32
    %c0_i32_0 = arith.constant 0 : i32
    %c0_i32_1 = arith.constant 0 : i32
    %c0_i32_2 = arith.constant 0 : i32
    return %c0_i32, %c0_i32_0, %c0_i32_1 : i32, i32, i32
  }
  func.func @transform_13(%arg0: i32) -> (i32, i32, i32) {
    %c0_i32 = arith.constant 0 : i32
    %c0_i32_0 = arith.constant 0 : i32
    %c0_i32_1 = arith.constant 0 : i32
    %c0_i32_2 = arith.constant 0 : i32
    return %c0_i32, %c0_i32_0, %c0_i32_1 : i32, i32, i32
  }
  func.func @transform_14(%arg0: i32) -> (i32, i32, i32) {
    %c0_i32 = arith.constant 0 : i32
    %c0_i32_0 = arith.constant 0 : i32
    %c0_i32_1 = arith.constant 0 : i32
    %c0_i32_2 = arith.constant 0 : i32
    return %c0_i32, %c0_i32_0, %c0_i32_1 : i32, i32, i32
  }
  func.func @transform_15(%arg0: i32) -> (i32, i32, i32) {
    %c0_i32 = arith.constant 0 : i32
    %c0_i32_0 = arith.constant 0 : i32
    %c0_i32_1 = arith.constant 0 : i32
    %c0_i32_2 = arith.constant 0 : i32
    return %c0_i32, %c0_i32_0, %c0_i32_1 : i32, i32, i32
  }
  func.func @transform_16(%arg0: i32) -> (i32, i32, i32) {
    %c0_i32 = arith.constant 0 : i32
    %c0_i32_0 = arith.constant 0 : i32
    %c0_i32_1 = arith.constant 0 : i32
    %c0_i32_2 = arith.constant 0 : i32
    return %c0_i32, %c0_i32_0, %c0_i32_1 : i32, i32, i32
  }
  func.func @transform_17(%arg0: i32) -> (i32, i32, i32) {
    %c0_i32 = arith.constant 0 : i32
    %c0_i32_0 = arith.constant 0 : i32
    %c0_i32_1 = arith.constant 0 : i32
    %c0_i32_2 = arith.constant 0 : i32
    return %c0_i32, %c0_i32_0, %c0_i32_1 : i32, i32, i32
  }
  func.func @transform_18(%arg0: i32) -> (i32, i32, i32) {
    %c0_i32 = arith.constant 0 : i32
    %c0_i32_0 = arith.constant 0 : i32
    %c0_i32_1 = arith.constant 0 : i32
    %c0_i32_2 = arith.constant 0 : i32
    return %c0_i32, %c0_i32_0, %c0_i32_1 : i32, i32, i32
  }
  func.func @transform_19(%arg0: i32) -> (i32, i32) {
    %c0_i32 = arith.constant 0 : i32
    %c0_i32_0 = arith.constant 0 : i32
    %c0_i32_1 = arith.constant 0 : i32
    return %c0_i32, %c0_i32_0 : i32, i32
  }
  func.func @transform_20(%arg0: i32) -> (i32, i32) {
    %c0_i32 = arith.constant 0 : i32
    %c0_i32_0 = arith.constant 0 : i32
    %c0_i32_1 = arith.constant 0 : i32
    return %c0_i32, %c0_i32_0 : i32, i32
  }
  func.func @transform_21(%arg0: i32) -> (i32, i32) {
    %c0_i32 = arith.constant 0 : i32
    %c0_i32_0 = arith.constant 0 : i32
    %c0_i32_1 = arith.constant 0 : i32
    return %c0_i32, %c0_i32_0 : i32, i32
  }
  func.func @transform_22(%arg0: i32) -> (i32, i32) {
    %c0_i32 = arith.constant 0 : i32
    %c0_i32_0 = arith.constant 0 : i32
    %c0_i32_1 = arith.constant 0 : i32
    return %c0_i32, %c0_i32_0 : i32, i32
  }
  func.func @transform_23(%arg0: i32) -> (i32, i32) {
    %c0_i32 = arith.constant 0 : i32
    %c0_i32_0 = arith.constant 0 : i32
    %c0_i32_1 = arith.constant 0 : i32
    return %c0_i32, %c0_i32_0 : i32, i32
  }
  func.func @transform_24(%arg0: i32) -> (i32, i32) {
    %c0_i32 = arith.constant 0 : i32
    %c0_i32_0 = arith.constant 0 : i32
    %c0_i32_1 = arith.constant 0 : i32
    return %c0_i32, %c0_i32_0 : i32, i32
  }
  func.func @transform_25(%arg0: i32) -> (i32, i32) {
    %c0_i32 = arith.constant 0 : i32
    %c0_i32_0 = arith.constant 0 : i32
    %c0_i32_1 = arith.constant 0 : i32
    return %c0_i32, %c0_i32_0 : i32, i32
  }
  func.func @transform_26(%arg0: i32) -> (i32, i32, i32) {
    %c0_i32 = arith.constant 0 : i32
    %c0_i32_0 = arith.constant 0 : i32
    %c0_i32_1 = arith.constant 0 : i32
    return %arg0, %c0_i32, %c0_i32_0 : i32, i32, i32
  }
}

module attributes {stable_mosaic.version = 11 : i64} {
  func.func @kernel(%arg0: i32, %arg1: memref<1x8x256xf32, #tpu.memory_space<vmem>>, %arg2: memref<1x8x2xf32, #tpu.memory_space<vmem>>, %arg3: memref<256x128xbf16, #tpu.memory_space<vmem>>, %arg4: memref<1x128xf32, #tpu.memory_space<vmem>>, %arg5: memref<2x128xf32, #tpu.memory_space<vmem>>, %arg6: memref<1x128xf32, #tpu.memory_space<vmem>>, %arg7: memref<1x128xf32, #tpu.memory_space<vmem>>, %arg8: memref<6x1x128xf32, #tpu.memory_space<vmem>>, %arg9: memref<6x1x128xf32, #tpu.memory_space<vmem>>, %arg10: memref<6x128x384xbf16, #tpu.memory_space<vmem>>, %arg11: memref<6x1x384xf32, #tpu.memory_space<vmem>>, %arg12: memref<6x128x128xbf16, #tpu.memory_space<vmem>>, %arg13: memref<6x1x128xf32, #tpu.memory_space<vmem>>, %arg14: memref<6x1x128xf32, #tpu.memory_space<vmem>>, %arg15: memref<6x1x128xf32, #tpu.memory_space<vmem>>, %arg16: memref<6x128x512xbf16, #tpu.memory_space<vmem>>, %arg17: memref<6x1x512xf32, #tpu.memory_space<vmem>>, %arg18: memref<6x512x128xbf16, #tpu.memory_space<vmem>>, %arg19: memref<6x1x128xf32, #tpu.memory_space<vmem>>, %arg20: memref<1x128xf32, #tpu.memory_space<vmem>>, %arg21: memref<1x128xf32, #tpu.memory_space<vmem>>, %arg22: memref<128x1xbf16, #tpu.memory_space<vmem>>, %arg23: memref<1x1xf32, #tpu.memory_space<vmem>>, %arg24: memref<128x128xbf16, #tpu.memory_space<vmem>>, %arg25: memref<128x128xf32, #tpu.memory_space<vmem>>, %arg26: memref<1x128xf32, #tpu.memory_space<vmem>>, %arg27: memref<1x1x1xf32, #tpu.memory_space<vmem>>, %arg28: memref<1x16x128xf32, #tpu.memory_space<vmem>>) attributes {dimension_semantics = [#tpu.dimension_semantics<parallel>], iteration_bounds = array<i64: 2>, scalar_prefetch = 0 : i64, scratch_operands = 1 : i64, tpu.core_type = #tpu.core_type<tc>, window_params = [{transform_indices = @transform_0, window_bounds = array<i64: 1, 8, 256>}, {transform_indices = @transform_1, window_bounds = array<i64: 1, 8, 2>}, {pipeline_mode = #tpu.pipeline_mode<synchronous>, transform_indices = @transform_2, window_bounds = array<i64: 256, 128>}, {pipeline_mode = #tpu.pipeline_mode<synchronous>, transform_indices = @transform_3, window_bounds = array<i64: 1, 128>}, {pipeline_mode = #tpu.pipeline_mode<synchronous>, transform_indices = @transform_4, window_bounds = array<i64: 2, 128>}, {pipeline_mode = #tpu.pipeline_mode<synchronous>, transform_indices = @transform_5, window_bounds = array<i64: 1, 128>}, {pipeline_mode = #tpu.pipeline_mode<synchronous>, transform_indices = @transform_6, window_bounds = array<i64: 1, 128>}, {pipeline_mode = #tpu.pipeline_mode<synchronous>, transform_indices = @transform_7, window_bounds = array<i64: 6, 1, 128>}, {pipeline_mode = #tpu.pipeline_mode<synchronous>, transform_indices = @transform_8, window_bounds = array<i64: 6, 1, 128>}, {pipeline_mode = #tpu.pipeline_mode<synchronous>, transform_indices = @transform_9, window_bounds = array<i64: 6, 128, 384>}, {pipeline_mode = #tpu.pipeline_mode<synchronous>, transform_indices = @transform_10, window_bounds = array<i64: 6, 1, 384>}, {pipeline_mode = #tpu.pipeline_mode<synchronous>, transform_indices = @transform_11, window_bounds = array<i64: 6, 128, 128>}, {pipeline_mode = #tpu.pipeline_mode<synchronous>, transform_indices = @transform_12, window_bounds = array<i64: 6, 1, 128>}, {pipeline_mode = #tpu.pipeline_mode<synchronous>, transform_indices = @transform_13, window_bounds = array<i64: 6, 1, 128>}, {pipeline_mode = #tpu.pipeline_mode<synchronous>, transform_indices = @transform_14, window_bounds = array<i64: 6, 1, 128>}, {pipeline_mode = #tpu.pipeline_mode<synchronous>, transform_indices = @transform_15, window_bounds = array<i64: 6, 128, 512>}, {pipeline_mode = #tpu.pipeline_mode<synchronous>, transform_indices = @transform_16, window_bounds = array<i64: 6, 1, 512>}, {pipeline_mode = #tpu.pipeline_mode<synchronous>, transform_indices = @transform_17, window_bounds = array<i64: 6, 512, 128>}, {pipeline_mode = #tpu.pipeline_mode<synchronous>, transform_indices = @transform_18, window_bounds = array<i64: 6, 1, 128>}, {pipeline_mode = #tpu.pipeline_mode<synchronous>, transform_indices = @transform_19, window_bounds = array<i64: 1, 128>}, {pipeline_mode = #tpu.pipeline_mode<synchronous>, transform_indices = @transform_20, window_bounds = array<i64: 1, 128>}, {pipeline_mode = #tpu.pipeline_mode<synchronous>, transform_indices = @transform_21, window_bounds = array<i64: 128, 1>}, {pipeline_mode = #tpu.pipeline_mode<synchronous>, transform_indices = @transform_22, window_bounds = array<i64: 1, 1>}, {pipeline_mode = #tpu.pipeline_mode<synchronous>, transform_indices = @transform_23, window_bounds = array<i64: 128, 128>}, {pipeline_mode = #tpu.pipeline_mode<synchronous>, transform_indices = @transform_24, window_bounds = array<i64: 128, 128>}, {pipeline_mode = #tpu.pipeline_mode<synchronous>, transform_indices = @transform_25, window_bounds = array<i64: 1, 128>}, {transform_indices = @transform_26, window_bounds = array<i64: 1, 1, 1>}]} {
    %c0 = arith.constant 0 : index
    %c0_0 = arith.constant 0 : index
    %c0_1 = arith.constant 0 : index
    %0 = vector.load %arg1[%c0, %c0_0, %c0_1] : memref<1x8x256xf32, #tpu.memory_space<vmem>>, vector<1x8x256xf32>
    %1 = vector.shape_cast %0 : vector<1x8x256xf32> to vector<8x256xf32>
    %c0_2 = arith.constant 0 : index
    %c0_3 = arith.constant 0 : index
    %c0_4 = arith.constant 0 : index
    %2 = vector.load %arg2[%c0_2, %c0_3, %c0_4] : memref<1x8x2xf32, #tpu.memory_space<vmem>>, vector<1x8x2xf32>
    %3 = vector.shape_cast %2 : vector<1x8x2xf32> to vector<8x2xf32>
    %4 = arith.truncf %1 : vector<8x256xf32> to vector<8x256xbf16>
    %c0_5 = arith.constant 0 : index
    %c0_6 = arith.constant 0 : index
    %5 = vector.load %arg3[%c0_5, %c0_6] : memref<256x128xbf16, #tpu.memory_space<vmem>>, vector<256x128xbf16>
    %cst = arith.constant dense<0.000000e+00> : vector<8x128xf32>
    %6 = tpu.matmul %4, %5, %cst {dimension_numbers = #tpu.dot_dimension_numbers<[1], [0], [0], [1], [0, 0, 1, 1], [], []>} : vector<8x256xbf16>, vector<256x128xbf16>, vector<8x128xf32> -> vector<8x128xf32>
    %c0_7 = arith.constant 0 : index
    %c0_8 = arith.constant 0 : index
    %7 = vector.load %arg4[%c0_7, %c0_8] : memref<1x128xf32, #tpu.memory_space<vmem>>, vector<1x128xf32>
    %8 = vector.broadcast %7 : vector<1x128xf32> to vector<8x128xf32>
    %9 = arith.addf %6, %8 : vector<8x128xf32>
    %10 = vector.extract_strided_slice %3 {offsets = [0, 0], sizes = [8, 1], strides = [1, 1]} : vector<8x2xf32> to vector<8x1xf32>
    %c0_9 = arith.constant 0 : index
    %c0_10 = arith.constant 0 : index
    %11 = vector.load %arg5[%c0_9, %c0_10] : memref<2x128xf32, #tpu.memory_space<vmem>>, vector<1x128xf32>
    %12 = vector.broadcast %10 : vector<8x1xf32> to vector<8x128xf32>
    %13 = vector.broadcast %11 : vector<1x128xf32> to vector<8x128xf32>
    %14 = arith.mulf %12, %13 : vector<8x128xf32>
    %15 = vector.extract_strided_slice %3 {offsets = [0, 1], sizes = [8, 1], strides = [1, 1]} : vector<8x2xf32> to vector<8x1xf32>
    %c1 = arith.constant 1 : index
    %c0_11 = arith.constant 0 : index
    %16 = vector.load %arg5[%c1, %c0_11] : memref<2x128xf32, #tpu.memory_space<vmem>>, vector<1x128xf32>
    %17 = vector.broadcast %15 : vector<8x1xf32> to vector<8x128xf32>
    %18 = vector.broadcast %16 : vector<1x128xf32> to vector<8x128xf32>
    %19 = arith.mulf %17, %18 : vector<8x128xf32>
    %20 = arith.addf %14, %19 : vector<8x128xf32>
    %c0_12 = arith.constant 0 : index
    %c0_13 = arith.constant 0 : index
    %21 = vector.load %arg6[%c0_12, %c0_13] : memref<1x128xf32, #tpu.memory_space<vmem>>, vector<1x128xf32>
    %22 = vector.broadcast %21 : vector<1x128xf32> to vector<8x128xf32>
    %23 = arith.addf %20, %22 : vector<8x128xf32>
    %24 = arith.addf %9, %23 : vector<8x128xf32>
    %25 = vector.shape_cast %24 : vector<8x128xf32> to vector<1x8x128xf32>
    %26 = tpu.iota {dimensions = array<i32: 1>} : vector<1x8x1xi32>
    %c0_i32 = arith.constant 0 : i32
    %27 = vector.broadcast %c0_i32 : i32 to vector<1x8x1xi32>
    %28 = arith.cmpi eq, %26, %27 : vector<1x8x1xi32>
    %c0_14 = arith.constant 0 : index
    %c0_15 = arith.constant 0 : index
    %29 = vector.load %arg7[%c0_14, %c0_15] : memref<1x128xf32, #tpu.memory_space<vmem>>, vector<1x128xf32>
    %30 = vector.shape_cast %29 : vector<1x128xf32> to vector<1x1x128xf32>
    %cst_16 = arith.constant 0.000000e+00 : f32
    %31 = vector.shape_cast %28 : vector<1x8x1xi1> to vector<1x8x1xi1>
    %32 = vector.broadcast %31 : vector<1x8x1xi1> to vector<1x8x128xi1>
    %33 = vector.shape_cast %30 : vector<1x1x128xf32> to vector<1x1x128xf32>
    %34 = vector.broadcast %33 : vector<1x1x128xf32> to vector<1x8x128xf32>
    %35 = vector.broadcast %cst_16 : f32 to vector<1x8x128xf32>
    %36 = arith.select %32, %34, %35 : vector<1x8x128xi1>, vector<1x8x128xf32>
    %c0_17 = arith.constant 0 : index
    %c0_18 = arith.constant 0 : index
    %c0_19 = arith.constant 0 : index
    %37 = vector.load %arg28[%c0_17, %c0_18, %c0_19] : memref<1x16x128xf32, #tpu.memory_space<vmem>>, vector<1x8x128xf32>
    tpu.vector_store %arg28[%c0_17, %c0_18, %c0_19], %36 {strides = array<i32>} : memref<1x16x128xf32, #tpu.memory_space<vmem>>, vector<1x8x128xf32>,
    %c0_20 = arith.constant 0 : index
    %c8 = arith.constant 8 : index
    %c0_21 = arith.constant 0 : index
    %38 = vector.load %arg28[%c0_20, %c8, %c0_21] : memref<1x16x128xf32, #tpu.memory_space<vmem>>, vector<1x8x128xf32>
    tpu.vector_store %arg28[%c0_20, %c8, %c0_21], %25 {strides = array<i32>} : memref<1x16x128xf32, #tpu.memory_space<vmem>>, vector<1x8x128xf32>,
    %c0_i32_22 = arith.constant 0 : i32
    %c6_i32 = arith.constant 6 : i32
    %39 = arith.addi %c0_i32_22, %c6_i32 : i32
    %c1_i32 = arith.constant 1 : i32
    scf.for %arg29 = %c0_i32_22 to %39 step %c1_i32  : i32 {
      %c1_i32_44 = arith.constant 1 : i32
      %70 = arith.muli %arg29, %c1_i32_44 : i32
      %c0_i32_45 = arith.constant 0 : i32
      %71 = arith.addi %c0_i32_45, %70 : i32
      %c0_46 = arith.constant 0 : index
      %c0_47 = arith.constant 0 : index
      %c0_48 = arith.constant 0 : index
      %72 = vector.load %arg28[%c0_46, %c0_47, %c0_48] : memref<1x16x128xf32, #tpu.memory_space<vmem>>, vector<1x16x128xf32>
      %73 = vector.shape_cast %72 : vector<1x16x128xf32> to vector<16x128xf32>
      %74 = arith.index_cast %71 : i32 to index
      %c0_49 = arith.constant 0 : index
      %c0_50 = arith.constant 0 : index
      %75 = vector.load %arg8[%74, %c0_49, %c0_50] : memref<6x1x128xf32, #tpu.memory_space<vmem>>, vector<1x1x128xf32>
      %76 = vector.shape_cast %75 : vector<1x1x128xf32> to vector<1x128xf32>
      %77 = arith.index_cast %71 : i32 to index
      %c0_51 = arith.constant 0 : index
      %c0_52 = arith.constant 0 : index
      %78 = vector.load %arg9[%77, %c0_51, %c0_52] : memref<6x1x128xf32, #tpu.memory_space<vmem>>, vector<1x1x128xf32>
      %79 = vector.shape_cast %78 : vector<1x1x128xf32> to vector<1x128xf32>
      %cst_53 = arith.constant dense<0.000000e+00> : vector<16xf32>
      %80 = vector.multi_reduction <add>, %73, %cst_53 [1] : vector<16x128xf32> to vector<16xf32>
      %81 = vector.shape_cast %80 : vector<16xf32> to vector<16x1xf32>
      %cst_54 = arith.constant 1.280000e+02 : f32
      %82 = vector.broadcast %cst_54 : f32 to vector<16x1xf32>
      %83 = arith.divf %81, %82 : vector<16x1xf32>
      %84 = vector.broadcast %83 : vector<16x1xf32> to vector<16x128xf32>
      %85 = arith.subf %73, %84 : vector<16x128xf32>
      %86 = arith.mulf %85, %85 : vector<16x128xf32>
      %cst_55 = arith.constant dense<0.000000e+00> : vector<16xf32>
      %87 = vector.multi_reduction <add>, %86, %cst_55 [1] : vector<16x128xf32> to vector<16xf32>
      %88 = vector.shape_cast %87 : vector<16xf32> to vector<16x1xf32>
      %cst_56 = arith.constant 1.280000e+02 : f32
      %89 = vector.broadcast %cst_56 : f32 to vector<16x1xf32>
      %90 = arith.divf %88, %89 : vector<16x1xf32>
      %cst_57 = arith.constant 9.99999974E-6 : f32
      %91 = vector.broadcast %cst_57 : f32 to vector<16x1xf32>
      %92 = arith.addf %90, %91 : vector<16x1xf32>
      %93 = math.rsqrt %92 : vector<16x1xf32>
      %94 = vector.broadcast %93 : vector<16x1xf32> to vector<16x128xf32>
      %95 = arith.mulf %85, %94 : vector<16x128xf32>
      %96 = vector.broadcast %76 : vector<1x128xf32> to vector<16x128xf32>
      %97 = arith.mulf %95, %96 : vector<16x128xf32>
      %98 = vector.broadcast %79 : vector<1x128xf32> to vector<16x128xf32>
      %99 = arith.addf %97, %98 : vector<16x128xf32>
      %100 = arith.truncf %99 : vector<16x128xf32> to vector<16x128xbf16>
      %101 = arith.index_cast %71 : i32 to index
      %c0_58 = arith.constant 0 : index
      %c0_59 = arith.constant 0 : index
      %102 = vector.load %arg10[%101, %c0_58, %c0_59] : memref<6x128x384xbf16, #tpu.memory_space<vmem>>, vector<1x128x384xbf16>
      %103 = vector.shape_cast %102 : vector<1x128x384xbf16> to vector<128x384xbf16>
      %cst_60 = arith.constant dense<0.000000e+00> : vector<16x384xf32>
      %104 = tpu.matmul %100, %103, %cst_60 {dimension_numbers = #tpu.dot_dimension_numbers<[1], [0], [0], [1], [0, 0, 1, 1], [], []>} : vector<16x128xbf16>, vector<128x384xbf16>, vector<16x384xf32> -> vector<16x384xf32>
      %105 = arith.index_cast %71 : i32 to index
      %c0_61 = arith.constant 0 : index
      %c0_62 = arith.constant 0 : index
      %106 = vector.load %arg11[%105, %c0_61, %c0_62] : memref<6x1x384xf32, #tpu.memory_space<vmem>>, vector<1x1x384xf32>
      %107 = vector.shape_cast %106 : vector<1x1x384xf32> to vector<1x384xf32>
      %108 = vector.broadcast %107 : vector<1x384xf32> to vector<16x384xf32>
      %109 = arith.addf %104, %108 : vector<16x384xf32>
      %110 = vector.extract_strided_slice %109 {offsets = [0, 0], sizes = [16, 128], strides = [1, 1]} : vector<16x384xf32> to vector<16x128xf32>
      %111 = arith.truncf %110 : vector<16x128xf32> to vector<16x128xbf16>
      %112 = vector.shape_cast %111 : vector<16x128xbf16> to vector<1x16x128xbf16>
      %113 = vector.extract_strided_slice %109 {offsets = [0, 128], sizes = [16, 128], strides = [1, 1]} : vector<16x384xf32> to vector<16x128xf32>
      %114 = arith.truncf %113 : vector<16x128xf32> to vector<16x128xbf16>
      %115 = vector.shape_cast %114 : vector<16x128xbf16> to vector<1x16x128xbf16>
      %116 = vector.extract_strided_slice %109 {offsets = [0, 256], sizes = [16, 128], strides = [1, 1]} : vector<16x384xf32> to vector<16x128xf32>
      %117 = arith.truncf %116 : vector<16x128xf32> to vector<16x128xbf16>
      %118 = vector.shape_cast %117 : vector<16x128xbf16> to vector<1x16x128xbf16>
      %c0_63 = arith.constant 0 : index
      %c0_64 = arith.constant 0 : index
      %119 = vector.load %arg24[%c0_63, %c0_64] : memref<128x128xbf16, #tpu.memory_space<vmem>>, vector<128x128xbf16>
      %120 = tpu.concatenate %115, %115, %115, %115, %115, %115, %115, %115 in 1 : vector<1x16x128xbf16>, vector<1x16x128xbf16>, vector<1x16x128xbf16>, vector<1x16x128xbf16>, vector<1x16x128xbf16>, vector<1x16x128xbf16>, vector<1x16x128xbf16>, vector<1x16x128xbf16> -> vector<1x128x128xbf16>
      %121 = vector.shape_cast %119 : vector<128x128xbf16> to vector<1x128x128xbf16>
      %122 = arith.mulf %120, %121 : vector<1x128x128xbf16>
      %123 = tpu.concatenate %118, %118, %118, %118, %118, %118, %118, %118 in 1 : vector<1x16x128xbf16>, vector<1x16x128xbf16>, vector<1x16x128xbf16>, vector<1x16x128xbf16>, vector<1x16x128xbf16>, vector<1x16x128xbf16>, vector<1x16x128xbf16>, vector<1x16x128xbf16> -> vector<1x128x128xbf16>
      %124 = vector.shape_cast %119 : vector<128x128xbf16> to vector<1x128x128xbf16>
      %125 = arith.mulf %123, %124 : vector<1x128x128xbf16>
      "tpu.trace_start"() <{level = 10 : i32, message = "bqd,bjd->bqj"}> : () -> ()
      %cst_65 = arith.constant dense<0.000000e+00> : vector<1x16x128xf32>
      %126 = tpu.matmul %112, %122, %cst_65 {dimension_numbers = #tpu.dot_dimension_numbers<[2], [2], [1], [1], [0, 0, 0, 1, 1, 1], [0], [0]>} : vector<1x16x128xbf16>, vector<1x128x128xbf16>, vector<1x16x128xf32> -> vector<1x16x128xf32>
      "tpu.trace_stop"() : () -> ()
      %c0_66 = arith.constant 0 : index
      %c0_67 = arith.constant 0 : index
      %127 = vector.load %arg26[%c0_66, %c0_67] : memref<1x128xf32, #tpu.memory_space<vmem>>, vector<1x128xf32>
      %128 = vector.shape_cast %127 : vector<1x128xf32> to vector<1x1x128xf32>
      %129 = vector.broadcast %128 : vector<1x1x128xf32> to vector<1x16x128xf32>
      %130 = arith.addf %126, %129 : vector<1x16x128xf32>
      %cst_68 = arith.constant dense<0xFF800000> : vector<1x16xf32>
      %131 = vector.multi_reduction <maximumf>, %130, %cst_68 [2] : vector<1x16x128xf32> to vector<1x16xf32>
      %132 = vector.shape_cast %131 : vector<1x16xf32> to vector<1x16x1xf32>
      %133 = vector.broadcast %132 : vector<1x16x1xf32> to vector<1x16x128xf32>
      %134 = arith.subf %130, %133 : vector<1x16x128xf32>
      %135 = math.exp %134 : vector<1x16x128xf32>
      %136 = vector.shape_cast %135 : vector<1x16x128xf32> to vector<16x128xf32>
      %c0_69 = arith.constant 0 : index
      %c0_70 = arith.constant 0 : index
      %137 = vector.load %arg25[%c0_69, %c0_70] : memref<128x128xf32, #tpu.memory_space<vmem>>, vector<128x128xf32>
      %cst_71 = arith.constant dense<0.000000e+00> : vector<16x128xf32>
      %138 = tpu.matmul %136, %137, %cst_71 {dimension_numbers = #tpu.dot_dimension_numbers<[1], [0], [0], [1], [0, 0, 1, 1], [], []>} : vector<16x128xf32>, vector<128x128xf32>, vector<16x128xf32> -> vector<16x128xf32>
      %139 = tpu.reciprocal %138 {approx = true} : vector<16x128xf32> -> vector<16x128xf32>
      %140 = arith.mulf %136, %139 : vector<16x128xf32>
      %141 = vector.shape_cast %140 : vector<16x128xf32> to vector<1x16x128xf32>
      %142 = arith.truncf %141 : vector<1x16x128xf32> to vector<1x16x128xbf16>
      "tpu.trace_start"() <{level = 10 : i32, message = "bqj,bjd->bqd"}> : () -> ()
      %cst_72 = arith.constant dense<0.000000e+00> : vector<1x16x128xf32>
      %143 = tpu.matmul %142, %125, %cst_72 {dimension_numbers = #tpu.dot_dimension_numbers<[2], [1], [1], [2], [0, 0, 0, 1, 1, 2], [0], [0]>} : vector<1x16x128xbf16>, vector<1x128x128xbf16>, vector<1x16x128xf32> -> vector<1x16x128xf32>
      "tpu.trace_stop"() : () -> ()
      %144 = vector.shape_cast %143 : vector<1x16x128xf32> to vector<16x128xf32>
      %145 = arith.truncf %144 : vector<16x128xf32> to vector<16x128xbf16>
      %146 = arith.index_cast %71 : i32 to index
      %c0_73 = arith.constant 0 : index
      %c0_74 = arith.constant 0 : index
      %147 = vector.load %arg12[%146, %c0_73, %c0_74] : memref<6x128x128xbf16, #tpu.memory_space<vmem>>, vector<1x128x128xbf16>
      %148 = vector.shape_cast %147 : vector<1x128x128xbf16> to vector<128x128xbf16>
      %cst_75 = arith.constant dense<0.000000e+00> : vector<16x128xf32>
      %149 = tpu.matmul %145, %148, %cst_75 {dimension_numbers = #tpu.dot_dimension_numbers<[1], [0], [0], [1], [0, 0, 1, 1], [], []>} : vector<16x128xbf16>, vector<128x128xbf16>, vector<16x128xf32> -> vector<16x128xf32>
      %150 = arith.index_cast %71 : i32 to index
      %c0_76 = arith.constant 0 : index
      %c0_77 = arith.constant 0 : index
      %151 = vector.load %arg13[%150, %c0_76, %c0_77] : memref<6x1x128xf32, #tpu.memory_space<vmem>>, vector<1x1x128xf32>
      %152 = vector.shape_cast %151 : vector<1x1x128xf32> to vector<1x128xf32>
      %153 = vector.broadcast %152 : vector<1x128xf32> to vector<16x128xf32>
      %154 = arith.addf %149, %153 : vector<16x128xf32>
      %155 = arith.addf %73, %154 : vector<16x128xf32>
      %156 = arith.index_cast %71 : i32 to index
      %c0_78 = arith.constant 0 : index
      %c0_79 = arith.constant 0 : index
      %157 = vector.load %arg14[%156, %c0_78, %c0_79] : memref<6x1x128xf32, #tpu.memory_space<vmem>>, vector<1x1x128xf32>
      %158 = vector.shape_cast %157 : vector<1x1x128xf32> to vector<1x128xf32>
      %159 = arith.index_cast %71 : i32 to index
      %c0_80 = arith.constant 0 : index
      %c0_81 = arith.constant 0 : index
      %160 = vector.load %arg15[%159, %c0_80, %c0_81] : memref<6x1x128xf32, #tpu.memory_space<vmem>>, vector<1x1x128xf32>
      %161 = vector.shape_cast %160 : vector<1x1x128xf32> to vector<1x128xf32>
      %cst_82 = arith.constant dense<0.000000e+00> : vector<16xf32>
      %162 = vector.multi_reduction <add>, %155, %cst_82 [1] : vector<16x128xf32> to vector<16xf32>
      %163 = vector.shape_cast %162 : vector<16xf32> to vector<16x1xf32>
      %cst_83 = arith.constant 1.280000e+02 : f32
      %164 = vector.broadcast %cst_83 : f32 to vector<16x1xf32>
      %165 = arith.divf %163, %164 : vector<16x1xf32>
      %166 = vector.broadcast %165 : vector<16x1xf32> to vector<16x128xf32>
      %167 = arith.subf %155, %166 : vector<16x128xf32>
      %168 = arith.mulf %167, %167 : vector<16x128xf32>
      %cst_84 = arith.constant dense<0.000000e+00> : vector<16xf32>
      %169 = vector.multi_reduction <add>, %168, %cst_84 [1] : vector<16x128xf32> to vector<16xf32>
      %170 = vector.shape_cast %169 : vector<16xf32> to vector<16x1xf32>
      %cst_85 = arith.constant 1.280000e+02 : f32
      %171 = vector.broadcast %cst_85 : f32 to vector<16x1xf32>
      %172 = arith.divf %170, %171 : vector<16x1xf32>
      %cst_86 = arith.constant 9.99999974E-6 : f32
      %173 = vector.broadcast %cst_86 : f32 to vector<16x1xf32>
      %174 = arith.addf %172, %173 : vector<16x1xf32>
      %175 = math.rsqrt %174 : vector<16x1xf32>
      %176 = vector.broadcast %175 : vector<16x1xf32> to vector<16x128xf32>
      %177 = arith.mulf %167, %176 : vector<16x128xf32>
      %178 = vector.broadcast %158 : vector<1x128xf32> to vector<16x128xf32>
      %179 = arith.mulf %177, %178 : vector<16x128xf32>
      %180 = vector.broadcast %161 : vector<1x128xf32> to vector<16x128xf32>
      %181 = arith.addf %179, %180 : vector<16x128xf32>
      %182 = arith.truncf %181 : vector<16x128xf32> to vector<16x128xbf16>
      %183 = arith.index_cast %71 : i32 to index
      %c0_87 = arith.constant 0 : index
      %c0_88 = arith.constant 0 : index
      %184 = vector.load %arg16[%183, %c0_87, %c0_88] : memref<6x128x512xbf16, #tpu.memory_space<vmem>>, vector<1x128x512xbf16>
      %185 = vector.shape_cast %184 : vector<1x128x512xbf16> to vector<128x512xbf16>
      %cst_89 = arith.constant dense<0.000000e+00> : vector<16x512xf32>
      %186 = tpu.matmul %182, %185, %cst_89 {dimension_numbers = #tpu.dot_dimension_numbers<[1], [0], [0], [1], [0, 0, 1, 1], [], []>} : vector<16x128xbf16>, vector<128x512xbf16>, vector<16x512xf32> -> vector<16x512xf32>
      %187 = arith.index_cast %71 : i32 to index
      %c0_90 = arith.constant 0 : index
      %c0_91 = arith.constant 0 : index
      %188 = vector.load %arg17[%187, %c0_90, %c0_91] : memref<6x1x512xf32, #tpu.memory_space<vmem>>, vector<1x1x512xf32>
      %189 = vector.shape_cast %188 : vector<1x1x512xf32> to vector<1x512xf32>
      %190 = vector.broadcast %189 : vector<1x512xf32> to vector<16x512xf32>
      %191 = arith.addf %186, %190 : vector<16x512xf32>
      %cst_92 = arith.constant 0.000000e+00 : f32
      %192 = vector.broadcast %cst_92 : f32 to vector<16x512xf32>
      %193 = arith.maximumf %191, %192 : vector<16x512xf32>
      %194 = arith.truncf %193 : vector<16x512xf32> to vector<16x512xbf16>
      %195 = arith.index_cast %71 : i32 to index
      %c0_93 = arith.constant 0 : index
      %c0_94 = arith.constant 0 : index
      %196 = vector.load %arg18[%195, %c0_93, %c0_94] : memref<6x512x128xbf16, #tpu.memory_space<vmem>>, vector<1x512x128xbf16>
      %197 = vector.shape_cast %196 : vector<1x512x128xbf16> to vector<512x128xbf16>
      %cst_95 = arith.constant dense<0.000000e+00> : vector<16x128xf32>
      %198 = tpu.matmul %194, %197, %cst_95 {dimension_numbers = #tpu.dot_dimension_numbers<[1], [0], [0], [1], [0, 0, 1, 1], [], []>} : vector<16x512xbf16>, vector<512x128xbf16>, vector<16x128xf32> -> vector<16x128xf32>
      %199 = arith.index_cast %71 : i32 to index
      %c0_96 = arith.constant 0 : index
      %c0_97 = arith.constant 0 : index
      %200 = vector.load %arg19[%199, %c0_96, %c0_97] : memref<6x1x128xf32, #tpu.memory_space<vmem>>, vector<1x1x128xf32>
      %201 = vector.shape_cast %200 : vector<1x1x128xf32> to vector<1x128xf32>
      %202 = vector.broadcast %201 : vector<1x128xf32> to vector<16x128xf32>
      %203 = arith.addf %198, %202 : vector<16x128xf32>
      %204 = arith.addf %155, %203 : vector<16x128xf32>
      %205 = vector.shape_cast %204 : vector<16x128xf32> to vector<1x16x128xf32>
      %c0_98 = arith.constant 0 : index
      %c0_99 = arith.constant 0 : index
      %c0_100 = arith.constant 0 : index
      %206 = vector.load %arg28[%c0_98, %c0_99, %c0_100] : memref<1x16x128xf32, #tpu.memory_space<vmem>>, vector<1x16x128xf32>
      tpu.vector_store %arg28[%c0_98, %c0_99, %c0_100], %205 {strides = array<i32>} : memref<1x16x128xf32, #tpu.memory_space<vmem>>, vector<1x16x128xf32>,
    }
    %c6_i32_23 = arith.constant 6 : i32
    %c0_24 = arith.constant 0 : index
    %c0_25 = arith.constant 0 : index
    %c0_26 = arith.constant 0 : index
    %40 = vector.load %arg28[%c0_24, %c0_25, %c0_26] : memref<1x16x128xf32, #tpu.memory_space<vmem>>, vector<1x1x128xf32>
    %41 = vector.shape_cast %40 : vector<1x1x128xf32> to vector<1x128xf32>
    %c0_27 = arith.constant 0 : index
    %c0_28 = arith.constant 0 : index
    %42 = vector.load %arg20[%c0_27, %c0_28] : memref<1x128xf32, #tpu.memory_space<vmem>>, vector<1x128xf32>
    %c0_29 = arith.constant 0 : index
    %c0_30 = arith.constant 0 : index
    %43 = vector.load %arg21[%c0_29, %c0_30] : memref<1x128xf32, #tpu.memory_space<vmem>>, vector<1x128xf32>
    %cst_31 = arith.constant dense<0.000000e+00> : vector<1xf32>
    %44 = vector.multi_reduction <add>, %41, %cst_31 [1] : vector<1x128xf32> to vector<1xf32>
    %45 = vector.shape_cast %44 : vector<1xf32> to vector<1x1xf32>
    %cst_32 = arith.constant 1.280000e+02 : f32
    %46 = vector.broadcast %cst_32 : f32 to vector<1x1xf32>
    %47 = arith.divf %45, %46 : vector<1x1xf32>
    %48 = vector.broadcast %47 : vector<1x1xf32> to vector<1x128xf32>
    %49 = arith.subf %41, %48 : vector<1x128xf32>
    %50 = arith.mulf %49, %49 : vector<1x128xf32>
    %cst_33 = arith.constant dense<0.000000e+00> : vector<1xf32>
    %51 = vector.multi_reduction <add>, %50, %cst_33 [1] : vector<1x128xf32> to vector<1xf32>
    %52 = vector.shape_cast %51 : vector<1xf32> to vector<1x1xf32>
    %cst_34 = arith.constant 1.280000e+02 : f32
    %53 = vector.broadcast %cst_34 : f32 to vector<1x1xf32>
    %54 = arith.divf %52, %53 : vector<1x1xf32>
    %cst_35 = arith.constant 9.99999974E-6 : f32
    %55 = vector.broadcast %cst_35 : f32 to vector<1x1xf32>
    %56 = arith.addf %54, %55 : vector<1x1xf32>
    %57 = math.rsqrt %56 : vector<1x1xf32>
    %58 = vector.broadcast %57 : vector<1x1xf32> to vector<1x128xf32>
    %59 = arith.mulf %49, %58 : vector<1x128xf32>
    %60 = arith.mulf %59, %42 : vector<1x128xf32>
    %61 = arith.addf %60, %43 : vector<1x128xf32>
    %62 = arith.truncf %61 : vector<1x128xf32> to vector<1x128xbf16>
    %c0_36 = arith.constant 0 : index
    %c0_37 = arith.constant 0 : index
    %63 = vector.load %arg22[%c0_36, %c0_37] : memref<128x1xbf16, #tpu.memory_space<vmem>>, vector<128x1xbf16>
    %cst_38 = arith.constant dense<0.000000e+00> : vector<1x1xf32>
    %64 = tpu.matmul %62, %63, %cst_38 {dimension_numbers = #tpu.dot_dimension_numbers<[1], [0], [0], [1], [0, 0, 1, 1], [], []>} : vector<1x128xbf16>, vector<128x1xbf16>, vector<1x1xf32> -> vector<1x1xf32>
    %c0_39 = arith.constant 0 : index
    %c0_40 = arith.constant 0 : index
    %65 = vector.load %arg23[%c0_39, %c0_40] : memref<1x1xf32, #tpu.memory_space<vmem>>, vector<1x1xf32>
    %66 = arith.addf %64, %65 : vector<1x1xf32>
    %c0_41 = arith.constant 0 : index
    %c0_42 = arith.constant 0 : index
    %c0_43 = arith.constant 0 : index
    %67 = vector.load %arg27[%c0_41, %c0_42, %c0_43] : memref<1x1x1xf32, #tpu.memory_space<vmem>>, vector<1x1x1xf32>
    %68 = vector.shape_cast %67 : vector<1x1x1xf32> to vector<1x1xf32>
    %69 = vector.shape_cast %66 : vector<1x1xf32> to vector<1x1x1xf32>
    tpu.vector_store %arg27[%c0_41, %c0_42, %c0_43], %69 {strides = array<i32>} : memref<1x1x1xf32, #tpu.memory_space<vmem>>, vector<1x1x1xf32>,
    return
  }
  func.func @transform_0(%arg0: i32) -> (i32, i32, i32) {
    %c0_i32 = arith.constant 0 : i32
    %c0_i32_0 = arith.constant 0 : i32
    %c0_i32_1 = arith.constant 0 : i32
    return %arg0, %c0_i32, %c0_i32_0 : i32, i32, i32
  }
  func.func @transform_1(%arg0: i32) -> (i32, i32, i32) {
    %c0_i32 = arith.constant 0 : i32
    %c0_i32_0 = arith.constant 0 : i32
    %c0_i32_1 = arith.constant 0 : i32
    return %arg0, %c0_i32, %c0_i32_0 : i32, i32, i32
  }
  func.func @transform_2(%arg0: i32) -> (i32, i32) {
    %c0_i32 = arith.constant 0 : i32
    %c0_i32_0 = arith.constant 0 : i32
    %c0_i32_1 = arith.constant 0 : i32
    return %c0_i32, %c0_i32_0 : i32, i32
  }
  func.func @transform_3(%arg0: i32) -> (i32, i32) {
    %c0_i32 = arith.constant 0 : i32
    %c0_i32_0 = arith.constant 0 : i32
    %c0_i32_1 = arith.constant 0 : i32
    return %c0_i32, %c0_i32_0 : i32, i32
  }
  func.func @transform_4(%arg0: i32) -> (i32, i32) {
    %c0_i32 = arith.constant 0 : i32
    %c0_i32_0 = arith.constant 0 : i32
    %c0_i32_1 = arith.constant 0 : i32
    return %c0_i32, %c0_i32_0 : i32, i32
  }
  func.func @transform_5(%arg0: i32) -> (i32, i32) {
    %c0_i32 = arith.constant 0 : i32
    %c0_i32_0 = arith.constant 0 : i32
    %c0_i32_1 = arith.constant 0 : i32
    return %c0_i32, %c0_i32_0 : i32, i32
  }
  func.func @transform_6(%arg0: i32) -> (i32, i32) {
    %c0_i32 = arith.constant 0 : i32
    %c0_i32_0 = arith.constant 0 : i32
    %c0_i32_1 = arith.constant 0 : i32
    return %c0_i32, %c0_i32_0 : i32, i32
  }
  func.func @transform_7(%arg0: i32) -> (i32, i32, i32) {
    %c0_i32 = arith.constant 0 : i32
    %c0_i32_0 = arith.constant 0 : i32
    %c0_i32_1 = arith.constant 0 : i32
    %c0_i32_2 = arith.constant 0 : i32
    return %c0_i32, %c0_i32_0, %c0_i32_1 : i32, i32, i32
  }
  func.func @transform_8(%arg0: i32) -> (i32, i32, i32) {
    %c0_i32 = arith.constant 0 : i32
    %c0_i32_0 = arith.constant 0 : i32
    %c0_i32_1 = arith.constant 0 : i32
    %c0_i32_2 = arith.constant 0 : i32
    return %c0_i32, %c0_i32_0, %c0_i32_1 : i32, i32, i32
  }
  func.func @transform_9(%arg0: i32) -> (i32, i32, i32) {
    %c0_i32 = arith.constant 0 : i32
    %c0_i32_0 = arith.constant 0 : i32
    %c0_i32_1 = arith.constant 0 : i32
    %c0_i32_2 = arith.constant 0 : i32
    return %c0_i32, %c0_i32_0, %c0_i32_1 : i32, i32, i32
  }
  func.func @transform_10(%arg0: i32) -> (i32, i32, i32) {
    %c0_i32 = arith.constant 0 : i32
    %c0_i32_0 = arith.constant 0 : i32
    %c0_i32_1 = arith.constant 0 : i32
    %c0_i32_2 = arith.constant 0 : i32
    return %c0_i32, %c0_i32_0, %c0_i32_1 : i32, i32, i32
  }
  func.func @transform_11(%arg0: i32) -> (i32, i32, i32) {
    %c0_i32 = arith.constant 0 : i32
    %c0_i32_0 = arith.constant 0 : i32
    %c0_i32_1 = arith.constant 0 : i32
    %c0_i32_2 = arith.constant 0 : i32
    return %c0_i32, %c0_i32_0, %c0_i32_1 : i32, i32, i32
  }
  func.func @transform_12(%arg0: i32) -> (i32, i32, i32) {
    %c0_i32 = arith.constant 0 : i32
    %c0_i32_0 = arith.constant 0 : i32
    %c0_i32_1 = arith.constant 0 : i32
    %c0_i32_2 = arith.constant 0 : i32
    return %c0_i32, %c0_i32_0, %c0_i32_1 : i32, i32, i32
  }
  func.func @transform_13(%arg0: i32) -> (i32, i32, i32) {
    %c0_i32 = arith.constant 0 : i32
    %c0_i32_0 = arith.constant 0 : i32
    %c0_i32_1 = arith.constant 0 : i32
    %c0_i32_2 = arith.constant 0 : i32
    return %c0_i32, %c0_i32_0, %c0_i32_1 : i32, i32, i32
  }
  func.func @transform_14(%arg0: i32) -> (i32, i32, i32) {
    %c0_i32 = arith.constant 0 : i32
    %c0_i32_0 = arith.constant 0 : i32
    %c0_i32_1 = arith.constant 0 : i32
    %c0_i32_2 = arith.constant 0 : i32
    return %c0_i32, %c0_i32_0, %c0_i32_1 : i32, i32, i32
  }
  func.func @transform_15(%arg0: i32) -> (i32, i32, i32) {
    %c0_i32 = arith.constant 0 : i32
    %c0_i32_0 = arith.constant 0 : i32
    %c0_i32_1 = arith.constant 0 : i32
    %c0_i32_2 = arith.constant 0 : i32
    return %c0_i32, %c0_i32_0, %c0_i32_1 : i32, i32, i32
  }
  func.func @transform_16(%arg0: i32) -> (i32, i32, i32) {
    %c0_i32 = arith.constant 0 : i32
    %c0_i32_0 = arith.constant 0 : i32
    %c0_i32_1 = arith.constant 0 : i32
    %c0_i32_2 = arith.constant 0 : i32
    return %c0_i32, %c0_i32_0, %c0_i32_1 : i32, i32, i32
  }
  func.func @transform_17(%arg0: i32) -> (i32, i32, i32) {
    %c0_i32 = arith.constant 0 : i32
    %c0_i32_0 = arith.constant 0 : i32
    %c0_i32_1 = arith.constant 0 : i32
    %c0_i32_2 = arith.constant 0 : i32
    return %c0_i32, %c0_i32_0, %c0_i32_1 : i32, i32, i32
  }
  func.func @transform_18(%arg0: i32) -> (i32, i32, i32) {
    %c0_i32 = arith.constant 0 : i32
    %c0_i32_0 = arith.constant 0 : i32
    %c0_i32_1 = arith.constant 0 : i32
    %c0_i32_2 = arith.constant 0 : i32
    return %c0_i32, %c0_i32_0, %c0_i32_1 : i32, i32, i32
  }
  func.func @transform_19(%arg0: i32) -> (i32, i32) {
    %c0_i32 = arith.constant 0 : i32
    %c0_i32_0 = arith.constant 0 : i32
    %c0_i32_1 = arith.constant 0 : i32
    return %c0_i32, %c0_i32_0 : i32, i32
  }
  func.func @transform_20(%arg0: i32) -> (i32, i32) {
    %c0_i32 = arith.constant 0 : i32
    %c0_i32_0 = arith.constant 0 : i32
    %c0_i32_1 = arith.constant 0 : i32
    return %c0_i32, %c0_i32_0 : i32, i32
  }
  func.func @transform_21(%arg0: i32) -> (i32, i32) {
    %c0_i32 = arith.constant 0 : i32
    %c0_i32_0 = arith.constant 0 : i32
    %c0_i32_1 = arith.constant 0 : i32
    return %c0_i32, %c0_i32_0 : i32, i32
  }
  func.func @transform_22(%arg0: i32) -> (i32, i32) {
    %c0_i32 = arith.constant 0 : i32
    %c0_i32_0 = arith.constant 0 : i32
    %c0_i32_1 = arith.constant 0 : i32
    return %c0_i32, %c0_i32_0 : i32, i32
  }
  func.func @transform_23(%arg0: i32) -> (i32, i32) {
    %c0_i32 = arith.constant 0 : i32
    %c0_i32_0 = arith.constant 0 : i32
    %c0_i32_1 = arith.constant 0 : i32
    return %c0_i32, %c0_i32_0 : i32, i32
  }
  func.func @transform_24(%arg0: i32) -> (i32, i32) {
    %c0_i32 = arith.constant 0 : i32
    %c0_i32_0 = arith.constant 0 : i32
    %c0_i32_1 = arith.constant 0 : i32
    return %c0_i32, %c0_i32_0 : i32, i32
  }
  func.func @transform_25(%arg0: i32) -> (i32, i32) {
    %c0_i32 = arith.constant 0 : i32
    %c0_i32_0 = arith.constant 0 : i32
    %c0_i32_1 = arith.constant 0 : i32
    return %c0_i32, %c0_i32_0 : i32, i32
  }
  func.func @transform_26(%arg0: i32) -> (i32, i32, i32) {
    %c0_i32 = arith.constant 0 : i32
    %c0_i32_0 = arith.constant 0 : i32
    %c0_i32_1 = arith.constant 0 : i32
    return %arg0, %c0_i32, %c0_i32_0 : i32, i32, i32
  }
}

</mosaic_0001>

<llo_original>
// kernel: tpu_custom_call.1
$region0: #{tpu_custom_call.1}
  #allocation0 [shape = 'u32[]', space=smem, size = 0x4, offset = 0x4, fixed_abs, tag = 'smem constant byte address 0x4 - core index']
  #allocation1 [shape = 'u32[144,128]{1,0:T(1,128)}', space=vmem, size = 0x12000, scoped, tag = 'internal scratch']
  #allocation2 [shape = 'f32[1,16,128]{2,1,0:T(8,128)}', space=vmem, size = 0x2000, scoped, tag = 'scratch operand']
  #allocation3 [shape = 'f32[1,1]{1,0:T(1,128)S(1)}', space=vmem, size = 0x200, scoped, tag = 'scoped memory for tpu_custom_call.1']
  %s0 = inlined_call_operand.hbm [shape: f32[2,8,256], index: 0, kind: input, shape index: {}]
  %s1 = inlined_call_operand.vmem [shape: f32[2,8,2], index: 1, kind: input, shape index: {}]
  %s2 = inlined_call_operand.hbm [shape: bf16[256,128], index: 2, kind: input, shape index: {}]
  %s3 = inlined_call_operand.vmem [shape: f32[1,128], index: 3, kind: input, shape index: {}]
  %s4 = inlined_call_operand.hbm [shape: f32[2,128], index: 4, kind: input, shape index: {}]
  %s5 = inlined_call_operand.hbm [shape: f32[1,128], index: 5, kind: input, shape index: {}]
  %s6 = inlined_call_operand.hbm [shape: f32[1,128], index: 6, kind: input, shape index: {}]
  %s7 = inlined_call_operand.hbm [shape: f32[6,1,128], index: 7, kind: input, shape index: {}]
  %s8 = inlined_call_operand.hbm [shape: f32[6,1,128], index: 8, kind: input, shape index: {}]
  %s9 = inlined_call_operand.hbm [shape: bf16[6,128,384], index: 9, kind: input, shape index: {}]
  %s10 = inlined_call_operand.hbm [shape: f32[6,1,384], index: 10, kind: input, shape index: {}]
  %s11 = inlined_call_operand.hbm [shape: bf16[6,128,128], index: 11, kind: input, shape index: {}]
  %s12 = inlined_call_operand.hbm [shape: f32[6,1,128], index: 12, kind: input, shape index: {}]
  %s13 = inlined_call_operand.hbm [shape: f32[6,1,128], index: 13, kind: input, shape index: {}]
  %s14 = inlined_call_operand.hbm [shape: f32[6,1,128], index: 14, kind: input, shape index: {}]
  %s15 = inlined_call_operand.hbm [shape: bf16[6,128,512], index: 15, kind: input, shape index: {}]
  %s16 = inlined_call_operand.hbm [shape: f32[6,1,512], index: 16, kind: input, shape index: {}]
  %s17 = inlined_call_operand.hbm [shape: bf16[6,512,128], index: 17, kind: input, shape index: {}]
  %s18 = inlined_call_operand.hbm [shape: f32[6,1,128], index: 18, kind: input, shape index: {}]
  %s19 = inlined_call_operand.hbm [shape: f32[1,128], index: 19, kind: input, shape index: {}]
  %s20 = inlined_call_operand.hbm [shape: f32[1,128], index: 20, kind: input, shape index: {}]
  %s21 = inlined_call_operand.vmem [shape: bf16[128,1], index: 21, kind: input, shape index: {}]
  %s22 = inlined_call_operand.<no memory space> [shape: f32[1,1], index: 22, kind: input, shape index: {}]
  %s23 = inlined_call_operand.hbm [shape: bf16[128,128], index: 23, kind: input, shape index: {}]
  %s24 = inlined_call_operand.vmem [shape: f32[128,128], index: 24, kind: input, shape index: {}]
  %s25 = inlined_call_operand.vmem [shape: f32[1,128], index: 25, kind: input, shape index: {}]
  %s26 = inlined_call_operand.vmem [shape: f32[2,1,1], index: 26, kind: output, shape index: {}]
  %s27 = sld [smem:[#allocation0]]
  $region224: #{tpu_custom_call.1} parent=0
    _
  %s29 = ssub.s32 1, %s27
  %s30 = scalar_select 0, %s29, %s27
  %v31 = vstv %s22
  %32 = vst [vmem:[#allocation3] sm:$0x1] %v31
  $region1: #{tpu_custom_call.1} parent=0
    #allocation4 [shape = 'u8[16384]{0}', space=vmem, size = 0x4000, scoped, tag = 'input window, operand 0']
    #allocation5 [shape = 's32[2]{0}', space=sflag, size = 0x8, scoped, tag = 'scoped memory for tpu_custom_call.1']
    #allocation6 [shape = 'u8[65536]{0}', space=vmem, size = 0x10000, scoped, tag = 'input window, operand 2, single buffered']
    #allocation7 [shape = 's32[1]{0}', space=sflag, size = 0x4, scoped, tag = 'scoped memory for tpu_custom_call.1']
    #allocation8 [shape = 'u8[1024]{0}', space=vmem, size = 0x400, scoped, tag = 'input window, operand 4, single buffered']
    #allocation9 [shape = 'u8[512]{0}', space=vmem, size = 0x400, scoped, tag = 'input window, operand 5, single buffered']
    #allocation10 [shape = 's32[1]{0}', space=sflag, size = 0x4, scoped, tag = 'scoped memory for tpu_custom_call.1']
    #allocation11 [shape = 'u8[512]{0}', space=vmem, size = 0x400, scoped, tag = 'input window, operand 6, single buffered']
    #allocation12 [shape = 'u8[3072]{0}', space=vmem, size = 0xc00, scoped, tag = 'input window, operand 7, single buffered']
    #allocation13 [shape = 's32[1]{0}', space=sflag, size = 0x4, scoped, tag = 'scoped memory for tpu_custom_call.1']
    #allocation14 [shape = 'u8[3072]{0}', space=vmem, size = 0xc00, scoped, tag = 'input window, operand 8, single buffered']
    #allocation15 [shape = 'u8[589824]{0}', space=vmem, size = 0x90000, scoped, tag = 'input window, operand 9, single buffered']
    #allocation16 [shape = 's32[1]{0}', space=sflag, size = 0x4, scoped, tag = 'scoped memory for tpu_custom_call.1']
    #allocation17 [shape = 'u8[9216]{0}', space=vmem, size = 0x2400, scoped, tag = 'input window, operand 10, single buffered']
    #allocation18 [shape = 'u8[196608]{0}', space=vmem, size = 0x30000, scoped, tag = 'input window, operand 11, single buffered']
    #allocation19 [shape = 's32[1]{0}', space=sflag, size = 0x4, scoped, tag = 'scoped memory for tpu_custom_call.1']
    #allocation20 [shape = 'u8[3072]{0}', space=vmem, size = 0xc00, scoped, tag = 'input window, operand 12, single buffered']
    #allocation21 [shape = 'u8[3072]{0}', space=vmem, size = 0xc00, scoped, tag = 'input window, operand 13, single buffered']
    #allocation22 [shape = 's32[1]{0}', space=sflag, size = 0x4, scoped, tag = 'scoped memory for tpu_custom_call.1']
    #allocation23 [shape = 'u8[3072]{0}', space=vmem, size = 0xc00, scoped, tag = 'input window, operand 14, single buffered']
    #allocation24 [shape = 'u8[786432]{0}', space=vmem, size = 0xc0000, scoped, tag = 'input window, operand 15, single buffered']
    #allocation25 [shape = 's32[1]{0}', space=sflag, size = 0x4, scoped, tag = 'scoped memory for tpu_custom_call.1']
    #allocation26 [shape = 'u8[12288]{0}', space=vmem, size = 0x3000, scoped, tag = 'input window, operand 16, single buffered']
    #allocation27 [shape = 'u8[786432]{0}', space=vmem, size = 0xc0000, scoped, tag = 'input window, operand 17, single buffered']
    #allocation28 [shape = 's32[1]{0}', space=sflag, size = 0x4, scoped, tag = 'scoped memory for tpu_custom_call.1']
    #allocation29 [shape = 'u8[3072]{0}', space=vmem, size = 0xc00, scoped, tag = 'input window, operand 18, single buffered']
    #allocation30 [shape = 'u8[512]{0}', space=vmem, size = 0x400, scoped, tag = 'input window, operand 19, single buffered']
    #allocation31 [shape = 's32[1]{0}', space=sflag, size = 0x4, scoped, tag = 'scoped memory for tpu_custom_call.1']
    #allocation32 [shape = 'u8[512]{0}', space=vmem, size = 0x400, scoped, tag = 'input window, operand 20, single buffered']
    #allocation33 [shape = 'u8[32768]{0}', space=vmem, size = 0x8000, scoped, tag = 'input window, operand 23, single buffered']
    #allocation34 [shape = 's32[1]{0}', space=sflag, size = 0x4, scoped, tag = 'scoped memory for tpu_custom_call.1']
    %33 = vsyncpa [#allocation5], 0
    %s34 = scalar_lea.sflag [#allocation5], 1
    %35 = vsyncpa %s34, 0
    %36 = vsyncpa [#allocation7], 0
    %37 = vsyncpa [#allocation10], 0
    %38 = vsyncpa [#allocation13], 0
    %39 = vsyncpa [#allocation16], 0
    %40 = vsyncpa [#allocation19], 0
    %41 = vsyncpa [#allocation22], 0
    %42 = vsyncpa [#allocation25], 0
    %43 = vsyncpa [#allocation28], 0
    %44 = vsyncpa [#allocation31], 0
    %45 = vsyncpa [#allocation34], 0
    loop: start=0, step=1, limit=4
    $region2: #{tpu_custom_call.1} parent=1 // loop_pre_header
      _
    $region3: #{tpu_custom_call.1} parent=1 // loop_header
      %s47 = sphi 0, %s51
      %p48 = scmp.ge.s32.totalorder %s47, 4
      %s57 = sphi 0, %s59
      %s60 = sphi 0, %s57
      %s61 = sphi 0, %s60
      %s77 = sphi 0, %s61
      %s83 = sphi 0, %s85
      %s86 = sphi 0, %s83
      %s87 = sphi 0, %s86
      %s103 = sphi 0, %s87
      %s107 = sphi 0, %s107
      %s109 = sphi 0, %s107
      %s110 = sphi 0, %s109
      %s124 = sphi 0, %s110
      %s128 = sphi 0, %s128
      %s130 = sphi 0, %s128
      %s131 = sphi 0, %s130
      %s145 = sphi 0, %s131
      %s149 = sphi 0, %s149
      %s151 = sphi 0, %s149
      %s152 = sphi 0, %s151
      %s166 = sphi 0, %s152
      %s170 = sphi 0, %s170
      %s172 = sphi 0, %s170
      %s173 = sphi 0, %s172
      %s187 = sphi 0, %s173
      %s191 = sphi 0, %s191
      %s193 = sphi 0, %s191
      %s194 = sphi 0, %s193
      %s208 = sphi 0, %s194
      %s212 = sphi 0, %s212
      %s214 = sphi 0, %s212
      %s215 = sphi 0, %s214
      %s229 = sphi 0, %s215
      %s233 = sphi 0, %s233
      %s235 = sphi 0, %s233
      %s236 = sphi 0, %s235
      %s250 = sphi 0, %s236
      %s254 = sphi 0, %s254
      %s256 = sphi 0, %s254
      %s257 = sphi 0, %s256
      %s271 = sphi 0, %s257
      %s275 = sphi 0, %s275
      %s277 = sphi 0, %s275
      %s278 = sphi 0, %s277
      %s292 = sphi 0, %s278
      %s296 = sphi 0, %s296
      %s298 = sphi 0, %s296
      %s299 = sphi 0, %s298
      %s313 = sphi 0, %s299
      %s317 = sphi 0, %s317
      %s319 = sphi 0, %s317
      %s320 = sphi 0, %s319
      %s334 = sphi 0, %s320
      %s338 = sphi 0, %s338
      %s340 = sphi 0, %s338
      %s341 = sphi 0, %s340
      %s355 = sphi 0, %s341
      %s359 = sphi 0, %s359
      %s361 = sphi 0, %s359
      %s362 = sphi 0, %s361
      %s376 = sphi 0, %s362
      %s380 = sphi 0, %s380
      %s382 = sphi 0, %s380
      %s383 = sphi 0, %s382
      %s397 = sphi 0, %s383
      %s401 = sphi 0, %s401
      %s403 = sphi 0, %s401
      %s404 = sphi 0, %s403
      %s418 = sphi 0, %s404
      %s422 = sphi 0, %s422
      %s424 = sphi 0, %s422
      %s425 = sphi 0, %s424
      %s439 = sphi 0, %s425
      %s443 = sphi 0, %s443
      %s445 = sphi 0, %s443
      %s446 = sphi 0, %s445
      %s460 = sphi 0, %s446
      %s464 = sphi 0, %s464
      %s466 = sphi 0, %s464
      %s467 = sphi 0, %s466
      %s481 = sphi 0, %s467
      %s485 = sphi 0, %s485
      %s487 = sphi 0, %s485
      %s488 = sphi 0, %s487
      %s502 = sphi 0, %s488
      %s506 = sphi 0, %s506
      %s508 = sphi 0, %s506
      %s509 = sphi 0, %s508
      %s523 = sphi 0, %s509
      %s527 = sphi 0, %s527
      %s529 = sphi 0, %s527
      %s530 = sphi 0, %s529
      %s544 = sphi 0, %s530
      %s548 = sphi 0, %s548
      %s550 = sphi 0, %s548
      %s551 = sphi 0, %s550
      %s565 = sphi 0, %s551
      %s569 = sphi 0, %s569
      %s571 = sphi 0, %s569
      %s572 = sphi 0, %s571
      %s586 = sphi 0, %s572
      %s590 = sphi 0, %s590
      %s592 = sphi 0, %s590
      %s593 = sphi 0, %s592
      %s607 = sphi 0, %s593
      %s613 = sphi 0, %s615
      %s616 = sphi 0, %s613
      %s617 = sphi 0, %s616
      %s633 = sphi 0, %s617
    $region4: #{tpu_custom_call.1} parent=1 // loop_header_branch
      %50 = sbr.rel (%p48) target = $region8
    $region5: #{tpu_custom_call.1} parent=1 // loop_body
      %s52 = ssub.s32 %s47, 1
      %s53 = ssub.s32 %s47, 2
      %s54 = sadd.s32 %s47, 1
      %s55 = ssub.s32 %s47, %s54
      %p56 = scmp.eq.s32.totalorder %s55, 0
      %s58 = sadd.s32 %s57, 1
      %s59 = scalar_select %p56, %s57, %s58
      %p62 = pneg %p56
      %p63 = scmp.eq.s32.totalorder %s47, 1
      %p64 = por %p62, %p63
      %p65 = scmp.ne.s32.totalorder %s57, %s60
      %p66 = scmp.eq.s32.totalorder %s47, 0
      %p67 = por %p65, %p66
      %p68 = scmp.ne.s32.totalorder %s57, %s60
      %p69 = scmp.eq.s32.totalorder %s52, 1
      %p70 = por %p68, %p69
      %p71 = scmp.ne.s32.totalorder %s60, %s61
      %p72 = scmp.eq.s32.totalorder %s52, 0
      %p73 = por %p71, %p72
      %p74 = scmp.ne.s32.totalorder %s60, %s61
      %p75 = scmp.eq.s32.totalorder %s53, 1
      %p76 = por %p74, %p75
      %p78 = scmp.ne.s32.totalorder %s61, %s77
      %p79 = scmp.eq.s32.totalorder %s53, 0
      %p80 = por %p78, %p79
      %s81 = ssub.s32 %s47, %s54
      %p82 = scmp.eq.s32.totalorder %s81, 0
      %s84 = sadd.s32 %s83, 1
      %s85 = scalar_select %p82, %s83, %s84
      %p88 = pneg %p82
      %p89 = scmp.eq.s32.totalorder %s47, 1
      %p90 = por %p88, %p89
      %p91 = scmp.ne.s32.totalorder %s83, %s86
      %p92 = scmp.eq.s32.totalorder %s47, 0
      %p93 = por %p91, %p92
      %p94 = scmp.ne.s32.totalorder %s83, %s86
      %p95 = scmp.eq.s32.totalorder %s52, 1
      %p96 = por %p94, %p95
      %p97 = scmp.ne.s32.totalorder %s86, %s87
      %p98 = scmp.eq.s32.totalorder %s52, 0
      %p99 = por %p97, %p98
      %p100 = scmp.ne.s32.totalorder %s86, %s87
      %p101 = scmp.eq.s32.totalorder %s53, 1
      %p102 = por %p100, %p101
      %p104 = scmp.ne.s32.totalorder %s87, %s103
      %p105 = scmp.eq.s32.totalorder %s53, 0
      %p106 = por %p104, %p105
      %s108 = sadd.s32 %s107, 1
      %p111 = scmp.eq.s32.totalorder %s47, 1
      %p112 = scmp.ne.s32.totalorder %s107, %s109
      %p113 = scmp.eq.s32.totalorder %s47, 0
      %p114 = por %p112, %p113
      %p115 = scmp.ne.s32.totalorder %s107, %s109
      %p116 = scmp.eq.s32.totalorder %s52, 1
      %p117 = por %p115, %p116
      %p118 = scmp.ne.s32.totalorder %s109, %s110
      %p119 = scmp.eq.s32.totalorder %s52, 0
      %p120 = por %p118, %p119
      %p121 = scmp.ne.s32.totalorder %s109, %s110
      %p122 = scmp.eq.s32.totalorder %s53, 1
      %p123 = por %p121, %p122
      %p125 = scmp.ne.s32.totalorder %s110, %s124
      %p126 = scmp.eq.s32.totalorder %s53, 0
      %p127 = por %p125, %p126
      %s129 = sadd.s32 %s128, 1
      %p132 = scmp.eq.s32.totalorder %s47, 1
      %p133 = scmp.ne.s32.totalorder %s128, %s130
      %p134 = scmp.eq.s32.totalorder %s47, 0
      %p135 = por %p133, %p134
      %p136 = scmp.ne.s32.totalorder %s128, %s130
      %p137 = scmp.eq.s32.totalorder %s52, 1
      %p138 = por %p136, %p137
      %p139 = scmp.ne.s32.totalorder %s130, %s131
      %p140 = scmp.eq.s32.totalorder %s52, 0
      %p141 = por %p139, %p140
      %p142 = scmp.ne.s32.totalorder %s130, %s131
      %p143 = scmp.eq.s32.totalorder %s53, 1
      %p144 = por %p142, %p143
      %p146 = scmp.ne.s32.totalorder %s131, %s145
      %p147 = scmp.eq.s32.totalorder %s53, 0
      %p148 = por %p146, %p147
      %s150 = sadd.s32 %s149, 1
      %p153 = scmp.eq.s32.totalorder %s47, 1
      %p154 = scmp.ne.s32.totalorder %s149, %s151
      %p155 = scmp.eq.s32.totalorder %s47, 0
      %p156 = por %p154, %p155
      %p157 = scmp.ne.s32.totalorder %s149, %s151
      %p158 = scmp.eq.s32.totalorder %s52, 1
      %p159 = por %p157, %p158
      %p160 = scmp.ne.s32.totalorder %s151, %s152
      %p161 = scmp.eq.s32.totalorder %s52, 0
      %p162 = por %p160, %p161
      %p163 = scmp.ne.s32.totalorder %s151, %s152
      %p164 = scmp.eq.s32.totalorder %s53, 1
      %p165 = por %p163, %p164
      %p167 = scmp.ne.s32.totalorder %s152, %s166
      %p168 = scmp.eq.s32.totalorder %s53, 0
      %p169 = por %p167, %p168
      %s171 = sadd.s32 %s170, 1
      %p174 = scmp.eq.s32.totalorder %s47, 1
      %p175 = scmp.ne.s32.totalorder %s170, %s172
      %p176 = scmp.eq.s32.totalorder %s47, 0
      %p177 = por %p175, %p176
      %p178 = scmp.ne.s32.totalorder %s170, %s172
      %p179 = scmp.eq.s32.totalorder %s52, 1
      %p180 = por %p178, %p179
      %p181 = scmp.ne.s32.totalorder %s172, %s173
      %p182 = scmp.eq.s32.totalorder %s52, 0
      %p183 = por %p181, %p182
      %p184 = scmp.ne.s32.totalorder %s172, %s173
      %p185 = scmp.eq.s32.totalorder %s53, 1
      %p186 = por %p184, %p185
      %p188 = scmp.ne.s32.totalorder %s173, %s187
      %p189 = scmp.eq.s32.totalorder %s53, 0
      %p190 = por %p188, %p189
      %s192 = sadd.s32 %s191, 1
      %p195 = scmp.eq.s32.totalorder %s47, 1
      %p196 = scmp.ne.s32.totalorder %s191, %s193
      %p197 = scmp.eq.s32.totalorder %s47, 0
      %p198 = por %p196, %p197
      %p199 = scmp.ne.s32.totalorder %s191, %s193
      %p200 = scmp.eq.s32.totalorder %s52, 1
      %p201 = por %p199, %p200
      %p202 = scmp.ne.s32.totalorder %s193, %s194
      %p203 = scmp.eq.s32.totalorder %s52, 0
      %p204 = por %p202, %p203
      %p205 = scmp.ne.s32.totalorder %s193, %s194
      %p206 = scmp.eq.s32.totalorder %s53, 1
      %p207 = por %p205, %p206
      %p209 = scmp.ne.s32.totalorder %s194, %s208
      %p210 = scmp.eq.s32.totalorder %s53, 0
      %p211 = por %p209, %p210
      %s213 = sadd.s32 %s212, 1
      %p216 = scmp.eq.s32.totalorder %s47, 1
      %p217 = scmp.ne.s32.totalorder %s212, %s214
      %p218 = scmp.eq.s32.totalorder %s47, 0
      %p219 = por %p217, %p218
      %p220 = scmp.ne.s32.totalorder %s212, %s214
      %p221 = scmp.eq.s32.totalorder %s52, 1
      %p222 = por %p220, %p221
      %p223 = scmp.ne.s32.totalorder %s214, %s215
      %p224 = scmp.eq.s32.totalorder %s52, 0
      %p225 = por %p223, %p224
      %p226 = scmp.ne.s32.totalorder %s214, %s215
      %p227 = scmp.eq.s32.totalorder %s53, 1
      %p228 = por %p226, %p227
      %p230 = scmp.ne.s32.totalorder %s215, %s229
      %p231 = scmp.eq.s32.totalorder %s53, 0
      %p232 = por %p230, %p231
      %s234 = sadd.s32 %s233, 1
      %p237 = scmp.eq.s32.totalorder %s47, 1
      %p238 = scmp.ne.s32.totalorder %s233, %s235
      %p239 = scmp.eq.s32.totalorder %s47, 0
      %p240 = por %p238, %p239
      %p241 = scmp.ne.s32.totalorder %s233, %s235
      %p242 = scmp.eq.s32.totalorder %s52, 1
      %p243 = por %p241, %p242
      %p244 = scmp.ne.s32.totalorder %s235, %s236
      %p245 = scmp.eq.s32.totalorder %s52, 0
      %p246 = por %p244, %p245
      %p247 = scmp.ne.s32.totalorder %s235, %s236
      %p248 = scmp.eq.s32.totalorder %s53, 1
      %p249 = por %p247, %p248
      %p251 = scmp.ne.s32.totalorder %s236, %s250
      %p252 = scmp.eq.s32.totalorder %s53, 0
      %p253 = por %p251, %p252
      %s255 = sadd.s32 %s254, 1
      %p258 = scmp.eq.s32.totalorder %s47, 1
      %p259 = scmp.ne.s32.totalorder %s254, %s256
      %p260 = scmp.eq.s32.totalorder %s47, 0
      %p261 = por %p259, %p260
      %p262 = scmp.ne.s32.totalorder %s254, %s256
      %p263 = scmp.eq.s32.totalorder %s52, 1
      %p264 = por %p262, %p263
      %p265 = scmp.ne.s32.totalorder %s256, %s257
      %p266 = scmp.eq.s32.totalorder %s52, 0
      %p267 = por %p265, %p266
      %p268 = scmp.ne.s32.totalorder %s256, %s257
      %p269 = scmp.eq.s32.totalorder %s53, 1
      %p270 = por %p268, %p269
      %p272 = scmp.ne.s32.totalorder %s257, %s271
      %p273 = scmp.eq.s32.totalorder %s53, 0
      %p274 = por %p272, %p273
      %s276 = sadd.s32 %s275, 1
      %p279 = scmp.eq.s32.totalorder %s47, 1
      %p280 = scmp.ne.s32.totalorder %s275, %s277
      %p281 = scmp.eq.s32.totalorder %s47, 0
      %p282 = por %p280, %p281
      %p283 = scmp.ne.s32.totalorder %s275, %s277
      %p284 = scmp.eq.s32.totalorder %s52, 1
      %p285 = por %p283, %p284
      %p286 = scmp.ne.s32.totalorder %s277, %s278
      %p287 = scmp.eq.s32.totalorder %s52, 0
      %p288 = por %p286, %p287
      %p289 = scmp.ne.s32.totalorder %s277, %s278
      %p290 = scmp.eq.s32.totalorder %s53, 1
      %p291 = por %p289, %p290
      %p293 = scmp.ne.s32.totalorder %s278, %s292
      %p294 = scmp.eq.s32.totalorder %s53, 0
      %p295 = por %p293, %p294
      %s297 = sadd.s32 %s296, 1
      %p300 = scmp.eq.s32.totalorder %s47, 1
      %p301 = scmp.ne.s32.totalorder %s296, %s298
      %p302 = scmp.eq.s32.totalorder %s47, 0
      %p303 = por %p301, %p302
      %p304 = scmp.ne.s32.totalorder %s296, %s298
      %p305 = scmp.eq.s32.totalorder %s52, 1
      %p306 = por %p304, %p305
      %p307 = scmp.ne.s32.totalorder %s298, %s299
      %p308 = scmp.eq.s32.totalorder %s52, 0
      %p309 = por %p307, %p308
      %p310 = scmp.ne.s32.totalorder %s298, %s299
      %p311 = scmp.eq.s32.totalorder %s53, 1
      %p312 = por %p310, %p311
      %p314 = scmp.ne.s32.totalorder %s299, %s313
      %p315 = scmp.eq.s32.totalorder %s53, 0
      %p316 = por %p314, %p315
      %s318 = sadd.s32 %s317, 1
      %p321 = scmp.eq.s32.totalorder %s47, 1
      %p322 = scmp.ne.s32.totalorder %s317, %s319
      %p323 = scmp.eq.s32.totalorder %s47, 0
      %p324 = por %p322, %p323
      %p325 = scmp.ne.s32.totalorder %s317, %s319
      %p326 = scmp.eq.s32.totalorder %s52, 1
      %p327 = por %p325, %p326
      %p328 = scmp.ne.s32.totalorder %s319, %s320
      %p329 = scmp.eq.s32.totalorder %s52, 0
      %p330 = por %p328, %p329
      %p331 = scmp.ne.s32.totalorder %s319, %s320
      %p332 = scmp.eq.s32.totalorder %s53, 1
      %p333 = por %p331, %p332
      %p335 = scmp.ne.s32.totalorder %s320, %s334
      %p336 = scmp.eq.s32.totalorder %s53, 0
      %p337 = por %p335, %p336
      %s339 = sadd.s32 %s338, 1
      %p342 = scmp.eq.s32.totalorder %s47, 1
      %p343 = scmp.ne.s32.totalorder %s338, %s340
      %p344 = scmp.eq.s32.totalorder %s47, 0
      %p345 = por %p343, %p344
      %p346 = scmp.ne.s32.totalorder %s338, %s340
      %p347 = scmp.eq.s32.totalorder %s52, 1
      %p348 = por %p346, %p347
      %p349 = scmp.ne.s32.totalorder %s340, %s341
      %p350 = scmp.eq.s32.totalorder %s52, 0
      %p351 = por %p349, %p350
      %p352 = scmp.ne.s32.totalorder %s340, %s341
      %p353 = scmp.eq.s32.totalorder %s53, 1
      %p354 = por %p352, %p353
      %p356 = scmp.ne.s32.totalorder %s341, %s355
      %p357 = scmp.eq.s32.totalorder %s53, 0
      %p358 = por %p356, %p357
      %s360 = sadd.s32 %s359, 1
      %p363 = scmp.eq.s32.totalorder %s47, 1
      %p364 = scmp.ne.s32.totalorder %s359, %s361
      %p365 = scmp.eq.s32.totalorder %s47, 0
      %p366 = por %p364, %p365
      %p367 = scmp.ne.s32.totalorder %s359, %s361
      %p368 = scmp.eq.s32.totalorder %s52, 1
      %p369 = por %p367, %p368
      %p370 = scmp.ne.s32.totalorder %s361, %s362
      %p371 = scmp.eq.s32.totalorder %s52, 0
      %p372 = por %p370, %p371
      %p373 = scmp.ne.s32.totalorder %s361, %s362
      %p374 = scmp.eq.s32.totalorder %s53, 1
      %p375 = por %p373, %p374
      %p377 = scmp.ne.s32.totalorder %s362, %s376
      %p378 = scmp.eq.s32.totalorder %s53, 0
      %p379 = por %p377, %p378
      %s381 = sadd.s32 %s380, 1
      %p384 = scmp.eq.s32.totalorder %s47, 1
      %p385 = scmp.ne.s32.totalorder %s380, %s382
      %p386 = scmp.eq.s32.totalorder %s47, 0
      %p387 = por %p385, %p386
      %p388 = scmp.ne.s32.totalorder %s380, %s382
      %p389 = scmp.eq.s32.totalorder %s52, 1
      %p390 = por %p388, %p389
      %p391 = scmp.ne.s32.totalorder %s382, %s383
      %p392 = scmp.eq.s32.totalorder %s52, 0
      %p393 = por %p391, %p392
      %p394 = scmp.ne.s32.totalorder %s382, %s383
      %p395 = scmp.eq.s32.totalorder %s53, 1
      %p396 = por %p394, %p395
      %p398 = scmp.ne.s32.totalorder %s383, %s397
      %p399 = scmp.eq.s32.totalorder %s53, 0
      %p400 = por %p398, %p399
      %s402 = sadd.s32 %s401, 1
      %p405 = scmp.eq.s32.totalorder %s47, 1
      %p406 = scmp.ne.s32.totalorder %s401, %s403
      %p407 = scmp.eq.s32.totalorder %s47, 0
      %p408 = por %p406, %p407
      %p409 = scmp.ne.s32.totalorder %s401, %s403
      %p410 = scmp.eq.s32.totalorder %s52, 1
      %p411 = por %p409, %p410
      %p412 = scmp.ne.s32.totalorder %s403, %s404
      %p413 = scmp.eq.s32.totalorder %s52, 0
      %p414 = por %p412, %p413
      %p415 = scmp.ne.s32.totalorder %s403, %s404
      %p416 = scmp.eq.s32.totalorder %s53, 1
      %p417 = por %p415, %p416
      %p419 = scmp.ne.s32.totalorder %s404, %s418
      %p420 = scmp.eq.s32.totalorder %s53, 0
      %p421 = por %p419, %p420
      %s423 = sadd.s32 %s422, 1
      %p426 = scmp.eq.s32.totalorder %s47, 1
      %p427 = scmp.ne.s32.totalorder %s422, %s424
      %p428 = scmp.eq.s32.totalorder %s47, 0
      %p429 = por %p427, %p428
      %p430 = scmp.ne.s32.totalorder %s422, %s424
      %p431 = scmp.eq.s32.totalorder %s52, 1
      %p432 = por %p430, %p431
      %p433 = scmp.ne.s32.totalorder %s424, %s425
      %p434 = scmp.eq.s32.totalorder %s52, 0
      %p435 = por %p433, %p434
      %p436 = scmp.ne.s32.totalorder %s424, %s425
      %p437 = scmp.eq.s32.totalorder %s53, 1
      %p438 = por %p436, %p437
      %p440 = scmp.ne.s32.totalorder %s425, %s439
      %p441 = scmp.eq.s32.totalorder %s53, 0
      %p442 = por %p440, %p441
      %s444 = sadd.s32 %s443, 1
      %p447 = scmp.eq.s32.totalorder %s47, 1
      %p448 = scmp.ne.s32.totalorder %s443, %s445
      %p449 = scmp.eq.s32.totalorder %s47, 0
      %p450 = por %p448, %p449
      %p451 = scmp.ne.s32.totalorder %s443, %s445
      %p452 = scmp.eq.s32.totalorder %s52, 1
      %p453 = por %p451, %p452
      %p454 = scmp.ne.s32.totalorder %s445, %s446
      %p455 = scmp.eq.s32.totalorder %s52, 0
      %p456 = por %p454, %p455
      %p457 = scmp.ne.s32.totalorder %s445, %s446
      %p458 = scmp.eq.s32.totalorder %s53, 1
      %p459 = por %p457, %p458
      %p461 = scmp.ne.s32.totalorder %s446, %s460
      %p462 = scmp.eq.s32.totalorder %s53, 0
      %p463 = por %p461, %p462
      %s465 = sadd.s32 %s464, 1
      %p468 = scmp.eq.s32.totalorder %s47, 1
      %p469 = scmp.ne.s32.totalorder %s464, %s466
      %p470 = scmp.eq.s32.totalorder %s47, 0
      %p471 = por %p469, %p470
      %p472 = scmp.ne.s32.totalorder %s464, %s466
      %p473 = scmp.eq.s32.totalorder %s52, 1
      %p474 = por %p472, %p473
      %p475 = scmp.ne.s32.totalorder %s466, %s467
      %p476 = scmp.eq.s32.totalorder %s52, 0
      %p477 = por %p475, %p476
      %p478 = scmp.ne.s32.totalorder %s466, %s467
      %p479 = scmp.eq.s32.totalorder %s53, 1
      %p480 = por %p478, %p479
      %p482 = scmp.ne.s32.totalorder %s467, %s481
      %p483 = scmp.eq.s32.totalorder %s53, 0
      %p484 = por %p482, %p483
      %s486 = sadd.s32 %s485, 1
      %p489 = scmp.eq.s32.totalorder %s47, 1
      %p490 = scmp.ne.s32.totalorder %s485, %s487
      %p491 = scmp.eq.s32.totalorder %s47, 0
      %p492 = por %p490, %p491
      %p493 = scmp.ne.s32.totalorder %s485, %s487
      %p494 = scmp.eq.s32.totalorder %s52, 1
      %p495 = por %p493, %p494
      %p496 = scmp.ne.s32.totalorder %s487, %s488
      %p497 = scmp.eq.s32.totalorder %s52, 0
      %p498 = por %p496, %p497
      %p499 = scmp.ne.s32.totalorder %s487, %s488
      %p500 = scmp.eq.s32.totalorder %s53, 1
      %p501 = por %p499, %p500
      %p503 = scmp.ne.s32.totalorder %s488, %s502
      %p504 = scmp.eq.s32.totalorder %s53, 0
      %p505 = por %p503, %p504
      %s507 = sadd.s32 %s506, 1
      %p510 = scmp.eq.s32.totalorder %s47, 1
      %p511 = scmp.ne.s32.totalorder %s506, %s508
      %p512 = scmp.eq.s32.totalorder %s47, 0
      %p513 = por %p511, %p512
      %p514 = scmp.ne.s32.totalorder %s506, %s508
      %p515 = scmp.eq.s32.totalorder %s52, 1
      %p516 = por %p514, %p515
      %p517 = scmp.ne.s32.totalorder %s508, %s509
      %p518 = scmp.eq.s32.totalorder %s52, 0
      %p519 = por %p517, %p518
      %p520 = scmp.ne.s32.totalorder %s508, %s509
      %p521 = scmp.eq.s32.totalorder %s53, 1
      %p522 = por %p520, %p521
      %p524 = scmp.ne.s32.totalorder %s509, %s523
      %p525 = scmp.eq.s32.totalorder %s53, 0
      %p526 = por %p524, %p525
      %s528 = sadd.s32 %s527, 1
      %p531 = scmp.eq.s32.totalorder %s47, 1
      %p532 = scmp.ne.s32.totalorder %s527, %s529
      %p533 = scmp.eq.s32.totalorder %s47, 0
      %p534 = por %p532, %p533
      %p535 = scmp.ne.s32.totalorder %s527, %s529
      %p536 = scmp.eq.s32.totalorder %s52, 1
      %p537 = por %p535, %p536
      %p538 = scmp.ne.s32.totalorder %s529, %s530
      %p539 = scmp.eq.s32.totalorder %s52, 0
      %p540 = por %p538, %p539
      %p541 = scmp.ne.s32.totalorder %s529, %s530
      %p542 = scmp.eq.s32.totalorder %s53, 1
      %p543 = por %p541, %p542
      %p545 = scmp.ne.s32.totalorder %s530, %s544
      %p546 = scmp.eq.s32.totalorder %s53, 0
      %p547 = por %p545, %p546
      %s549 = sadd.s32 %s548, 1
      %p552 = scmp.eq.s32.totalorder %s47, 1
      %p553 = scmp.ne.s32.totalorder %s548, %s550
      %p554 = scmp.eq.s32.totalorder %s47, 0
      %p555 = por %p553, %p554
      %p556 = scmp.ne.s32.totalorder %s548, %s550
      %p557 = scmp.eq.s32.totalorder %s52, 1
      %p558 = por %p556, %p557
      %p559 = scmp.ne.s32.totalorder %s550, %s551
      %p560 = scmp.eq.s32.totalorder %s52, 0
      %p561 = por %p559, %p560
      %p562 = scmp.ne.s32.totalorder %s550, %s551
      %p563 = scmp.eq.s32.totalorder %s53, 1
      %p564 = por %p562, %p563
      %p566 = scmp.ne.s32.totalorder %s551, %s565
      %p567 = scmp.eq.s32.totalorder %s53, 0
      %p568 = por %p566, %p567
      %s570 = sadd.s32 %s569, 1
      %p573 = scmp.eq.s32.totalorder %s47, 1
      %p574 = scmp.ne.s32.totalorder %s569, %s571
      %p575 = scmp.eq.s32.totalorder %s47, 0
      %p576 = por %p574, %p575
      %p577 = scmp.ne.s32.totalorder %s569, %s571
      %p578 = scmp.eq.s32.totalorder %s52, 1
      %p579 = por %p577, %p578
      %p580 = scmp.ne.s32.totalorder %s571, %s572
      %p581 = scmp.eq.s32.totalorder %s52, 0
      %p582 = por %p580, %p581
      %p583 = scmp.ne.s32.totalorder %s571, %s572
      %p584 = scmp.eq.s32.totalorder %s53, 1
      %p585 = por %p583, %p584
      %p587 = scmp.ne.s32.totalorder %s572, %s586
      %p588 = scmp.eq.s32.totalorder %s53, 0
      %p589 = por %p587, %p588
      %s591 = sadd.s32 %s590, 1
      %p594 = scmp.eq.s32.totalorder %s47, 1
      %p595 = scmp.ne.s32.totalorder %s590, %s592
      %p596 = scmp.eq.s32.totalorder %s47, 0
      %p597 = por %p595, %p596
      %p598 = scmp.ne.s32.totalorder %s590, %s592
      %p599 = scmp.eq.s32.totalorder %s52, 1
      %p600 = por %p598, %p599
      %p601 = scmp.ne.s32.totalorder %s592, %s593
      %p602 = scmp.eq.s32.totalorder %s52, 0
      %p603 = por %p601, %p602
      %p604 = scmp.ne.s32.totalorder %s592, %s593
      %p605 = scmp.eq.s32.totalorder %s53, 1
      %p606 = por %p604, %p605
      %p608 = scmp.ne.s32.totalorder %s593, %s607
      %p609 = scmp.eq.s32.totalorder %s53, 0
      %p610 = por %p608, %p609
      %s611 = ssub.s32 %s47, %s54
      %p612 = scmp.eq.s32.totalorder %s611, 0
      %s614 = sadd.s32 %s613, 1
      %s615 = scalar_select %p612, %s613, %s614
      %p618 = pneg %p612
      %p619 = scmp.eq.s32.totalorder %s47, 1
      %p620 = por %p618, %p619
      %p621 = scmp.ne.s32.totalorder %s613, %s616
      %p622 = scmp.eq.s32.totalorder %s47, 0
      %p623 = por %p621, %p622
      %p624 = scmp.ne.s32.totalorder %s613, %s616
      %p625 = scmp.eq.s32.totalorder %s52, 1
      %p626 = por %p624, %p625
      %p627 = scmp.ne.s32.totalorder %s616, %s617
      %p628 = scmp.eq.s32.totalorder %s52, 0
      %p629 = por %p627, %p628
      %p630 = scmp.ne.s32.totalorder %s616, %s617
      %p631 = scmp.eq.s32.totalorder %s53, 1
      %p632 = por %p630, %p631
      %p634 = scmp.ne.s32.totalorder %s617, %s633
      %p635 = scmp.eq.s32.totalorder %s53, 0
      %p636 = por %p634, %p635
      %p637 = scmp.le.s32.totalorder 1, %s47
      %p638 = scmp.lt.s32.totalorder %s47, 3
      %p639 = pnand %p637, %p638
      %p640 = pneg %p639
      // Predicated region
      $region9: #{tpu_custom_call.1} parent=5 // pred_check
        _
      $region10: #{tpu_custom_call.1} parent=5 // pred_check_branch
        %642 = sbr.rel (%p639) target = $region12
      $region11: #{tpu_custom_call.1} parent=5 // pred_region
        %s643 = ssub.s32 %s47, 1
        // Predicated region
        $region13: #{tpu_custom_call.1} parent=11 // pred_check
          %p644 = pneg %p120
        $region14: #{tpu_custom_call.1} parent=11 // pred_check_branch
          %646 = sbr.rel (%p644) target = $region16
        $region15: #{tpu_custom_call.1} parent=11 // pred_region
          %s648 = ssub.s32 2048, 2048
          %649 = vsyncadd [#allocation7], %s648
          %s650 = sshll.u32 [#allocation6], 4
          %s651 = int_to_ptr.vmem [resolvable:$true] %s650
          %656 = dma.hbm_to_vmem [thread:$0]  %s2, 2048, %s651, [#allocation7], 64, 64, 4
        $region16: #{tpu_custom_call.1} parent=11 // pred_fallthru
          _
        // Predicated region
        $region17: #{tpu_custom_call.1} parent=11 // pred_check
          %p657 = pneg %p141
        $region18: #{tpu_custom_call.1} parent=11 // pred_check_branch
          %659 = sbr.rel (%p657) target = $region20
        $region19: #{tpu_custom_call.1} parent=11 // pred_region
          _
        $region20: #{tpu_custom_call.1} parent=11 // pred_fallthru
          _
        // Predicated region
        $region21: #{tpu_custom_call.1} parent=11 // pred_check
          %p660 = pneg %p162
        $region22: #{tpu_custom_call.1} parent=11 // pred_check_branch
          %662 = sbr.rel (%p660) target = $region24
        $region23: #{tpu_custom_call.1} parent=11 // pred_region
          %s664 = ssub.s32 32, 32
          %665 = vsyncadd [#allocation7], %s664
          %s667 = sshll.u32 [#allocation8], 4
          %s668 = int_to_ptr.vmem [resolvable:$true] %s667
          %670 = dma.hbm_to_vmem [thread:$0]  %s4, 32, %s668, [#allocation7]
        $region24: #{tpu_custom_call.1} parent=11 // pred_fallthru
          _
        // Predicated region
        $region25: #{tpu_custom_call.1} parent=11 // pred_check
          %p671 = pneg %p183
        $region26: #{tpu_custom_call.1} parent=11 // pred_check_branch
          %673 = sbr.rel (%p671) target = $region28
        $region27: #{tpu_custom_call.1} parent=11 // pred_region
          %s675 = ssub.s32 16, 16
          %676 = vsyncadd [#allocation10], %s675
          %s678 = sshll.u32 [#allocation9], 4
          %s679 = int_to_ptr.vmem [resolvable:$true] %s678
          %681 = dma.hbm_to_vmem [thread:$0]  %s5, 16, %s679, [#allocation10]
        $region28: #{tpu_custom_call.1} parent=11 // pred_fallthru
          _
        // Predicated region
        $region29: #{tpu_custom_call.1} parent=11 // pred_check
          %p682 = pneg %p204
        $region30: #{tpu_custom_call.1} parent=11 // pred_check_branch
          %684 = sbr.rel (%p682) target = $region32
        $region31: #{tpu_custom_call.1} parent=11 // pred_region
          %s686 = ssub.s32 16, 16
          %687 = vsyncadd [#allocation10], %s686
          %s689 = sshll.u32 [#allocation11], 4
          %s690 = int_to_ptr.vmem [resolvable:$true] %s689
          %692 = dma.hbm_to_vmem [thread:$0]  %s6, 16, %s690, [#allocation10]
        $region32: #{tpu_custom_call.1} parent=11 // pred_fallthru
          _
        // Predicated region
        $region33: #{tpu_custom_call.1} parent=11 // pred_check
          %p693 = pneg %p225
        $region34: #{tpu_custom_call.1} parent=11 // pred_check_branch
          %695 = sbr.rel (%p693) target = $region36
        $region35: #{tpu_custom_call.1} parent=11 // pred_region
          %s697 = ssub.s32 96, 96
          %698 = vsyncadd [#allocation13], %s697
          %s699 = sshll.u32 [#allocation12], 4
          %s700 = int_to_ptr.vmem [resolvable:$true] %s699
          %705 = dma.hbm_to_vmem [thread:$0]  %s7, 96, %s700, [#allocation13], 16, 16, 1
        $region36: #{tpu_custom_call.1} parent=11 // pred_fallthru
          _
        // Predicated region
        $region37: #{tpu_custom_call.1} parent=11 // pred_check
          %p706 = pneg %p246
        $region38: #{tpu_custom_call.1} parent=11 // pred_check_branch
          %708 = sbr.rel (%p706) target = $region40
        $region39: #{tpu_custom_call.1} parent=11 // pred_region
          %s710 = ssub.s32 96, 96
          %711 = vsyncadd [#allocation13], %s710
          %s712 = sshll.u32 [#allocation14], 4
          %s713 = int_to_ptr.vmem [resolvable:$true] %s712
          %718 = dma.hbm_to_vmem [thread:$0]  %s8, 96, %s713, [#allocation13], 16, 16, 1
        $region40: #{tpu_custom_call.1} parent=11 // pred_fallthru
          _
        // Predicated region
        $region41: #{tpu_custom_call.1} parent=11 // pred_check
          %p719 = pneg %p267
        $region42: #{tpu_custom_call.1} parent=11 // pred_check_branch
          %721 = sbr.rel (%p719) target = $region44
        $region43: #{tpu_custom_call.1} parent=11 // pred_region
          %s723 = ssub.s32 18432, 18432
          %724 = vsyncadd [#allocation16], %s723
          %s725 = sshll.u32 [#allocation15], 4
          %s726 = int_to_ptr.vmem [resolvable:$true] %s725
          %731 = dma.hbm_to_vmem [thread:$0]  %s9, 18432, %s726, [#allocation16], 192, 192, 12
        $region44: #{tpu_custom_call.1} parent=11 // pred_fallthru
          _
        // Predicated region
        $region45: #{tpu_custom_call.1} parent=11 // pred_check
          %p732 = pneg %p288
        $region46: #{tpu_custom_call.1} parent=11 // pred_check_branch
          %734 = sbr.rel (%p732) target = $region48
        $region47: #{tpu_custom_call.1} parent=11 // pred_region
          %s736 = ssub.s32 288, 288
          %737 = vsyncadd [#allocation16], %s736
          %s738 = sshll.u32 [#allocation17], 4
          %s739 = int_to_ptr.vmem [resolvable:$true] %s738
          %744 = dma.hbm_to_vmem [thread:$0]  %s10, 288, %s739, [#allocation16], 48, 48, 3
        $region48: #{tpu_custom_call.1} parent=11 // pred_fallthru
          _
        // Predicated region
        $region49: #{tpu_custom_call.1} parent=11 // pred_check
          %p745 = pneg %p309
        $region50: #{tpu_custom_call.1} parent=11 // pred_check_branch
          %747 = sbr.rel (%p745) target = $region52
        $region51: #{tpu_custom_call.1} parent=11 // pred_region
          %s749 = ssub.s32 6144, 6144
          %750 = vsyncadd [#allocation19], %s749
          %s751 = sshll.u32 [#allocation18], 4
          %s752 = int_to_ptr.vmem [resolvable:$true] %s751
          %757 = dma.hbm_to_vmem [thread:$0]  %s11, 6144, %s752, [#allocation19], 64, 64, 4
        $region52: #{tpu_custom_call.1} parent=11 // pred_fallthru
          _
        // Predicated region
        $region53: #{tpu_custom_call.1} parent=11 // pred_check
          %p758 = pneg %p330
        $region54: #{tpu_custom_call.1} parent=11 // pred_check_branch
          %760 = sbr.rel (%p758) target = $region56
        $region55: #{tpu_custom_call.1} parent=11 // pred_region
          %s762 = ssub.s32 96, 96
          %763 = vsyncadd [#allocation19], %s762
          %s764 = sshll.u32 [#allocation20], 4
          %s765 = int_to_ptr.vmem [resolvable:$true] %s764
          %770 = dma.hbm_to_vmem [thread:$0]  %s12, 96, %s765, [#allocation19], 16, 16, 1
        $region56: #{tpu_custom_call.1} parent=11 // pred_fallthru
          _
        // Predicated region
        $region57: #{tpu_custom_call.1} parent=11 // pred_check
          %p771 = pneg %p351
        $region58: #{tpu_custom_call.1} parent=11 // pred_check_branch
          %773 = sbr.rel (%p771) target = $region60
        $region59: #{tpu_custom_call.1} parent=11 // pred_region
          %s775 = ssub.s32 96, 96
          %776 = vsyncadd [#allocation22], %s775
          %s777 = sshll.u32 [#allocation21], 4
          %s778 = int_to_ptr.vmem [resolvable:$true] %s777
          %783 = dma.hbm_to_vmem [thread:$0]  %s13, 96, %s778, [#allocation22], 16, 16, 1
        $region60: #{tpu_custom_call.1} parent=11 // pred_fallthru
          _
        // Predicated region
        $region61: #{tpu_custom_call.1} parent=11 // pred_check
          %p784 = pneg %p372
        $region62: #{tpu_custom_call.1} parent=11 // pred_check_branch
          %786 = sbr.rel (%p784) target = $region64
        $region63: #{tpu_custom_call.1} parent=11 // pred_region
          %s788 = ssub.s32 96, 96
          %789 = vsyncadd [#allocation22], %s788
          %s790 = sshll.u32 [#allocation23], 4
          %s791 = int_to_ptr.vmem [resolvable:$true] %s790
          %796 = dma.hbm_to_vmem [thread:$0]  %s14, 96, %s791, [#allocation22], 16, 16, 1
        $region64: #{tpu_custom_call.1} parent=11 // pred_fallthru
          _
        // Predicated region
        $region65: #{tpu_custom_call.1} parent=11 // pred_check
          %p797 = pneg %p393
        $region66: #{tpu_custom_call.1} parent=11 // pred_check_branch
          %799 = sbr.rel (%p797) target = $region68
        $region67: #{tpu_custom_call.1} parent=11 // pred_region
          %s801 = ssub.s32 24576, 24576
          %802 = vsyncadd [#allocation25], %s801
          %s803 = sshll.u32 [#allocation24], 4
          %s804 = int_to_ptr.vmem [resolvable:$true] %s803
          %809 = dma.hbm_to_vmem [thread:$0]  %s15, 24576, %s804, [#allocation25], 256, 256, 16
        $region68: #{tpu_custom_call.1} parent=11 // pred_fallthru
          _
        // Predicated region
        $region69: #{tpu_custom_call.1} parent=11 // pred_check
          %p810 = pneg %p414
        $region70: #{tpu_custom_call.1} parent=11 // pred_check_branch
          %812 = sbr.rel (%p810) target = $region72
        $region71: #{tpu_custom_call.1} parent=11 // pred_region
          %s814 = ssub.s32 384, 384
          %815 = vsyncadd [#allocation25], %s814
          %s816 = sshll.u32 [#allocation26], 4
          %s817 = int_to_ptr.vmem [resolvable:$true] %s816
          %822 = dma.hbm_to_vmem [thread:$0]  %s16, 384, %s817, [#allocation25], 64, 64, 4
        $region72: #{tpu_custom_call.1} parent=11 // pred_fallthru
          _
        // Predicated region
        $region73: #{tpu_custom_call.1} parent=11 // pred_check
          %p823 = pneg %p435
        $region74: #{tpu_custom_call.1} parent=11 // pred_check_branch
          %825 = sbr.rel (%p823) target = $region76
        $region75: #{tpu_custom_call.1} parent=11 // pred_region
          %s827 = ssub.s32 24576, 24576
          %828 = vsyncadd [#allocation28], %s827
          %s829 = sshll.u32 [#allocation27], 4
          %s830 = int_to_ptr.vmem [resolvable:$true] %s829
          %835 = dma.hbm_to_vmem [thread:$0]  %s17, 24576, %s830, [#allocation28], 64, 64, 4
        $region76: #{tpu_custom_call.1} parent=11 // pred_fallthru
          _
        // Predicated region
        $region77: #{tpu_custom_call.1} parent=11 // pred_check
          %p836 = pneg %p456
        $region78: #{tpu_custom_call.1} parent=11 // pred_check_branch
          %838 = sbr.rel (%p836) target = $region80
        $region79: #{tpu_custom_call.1} parent=11 // pred_region
          %s840 = ssub.s32 96, 96
          %841 = vsyncadd [#allocation28], %s840
          %s842 = sshll.u32 [#allocation29], 4
          %s843 = int_to_ptr.vmem [resolvable:$true] %s842
          %848 = dma.hbm_to_vmem [thread:$0]  %s18, 96, %s843, [#allocation28], 16, 16, 1
        $region80: #{tpu_custom_call.1} parent=11 // pred_fallthru
          _
        // Predicated region
        $region81: #{tpu_custom_call.1} parent=11 // pred_check
          %p849 = pneg %p477
        $region82: #{tpu_custom_call.1} parent=11 // pred_check_branch
          %851 = sbr.rel (%p849) target = $region84
        $region83: #{tpu_custom_call.1} parent=11 // pred_region
          %s853 = ssub.s32 16, 16
          %854 = vsyncadd [#allocation31], %s853
          %s856 = sshll.u32 [#allocation30], 4
          %s857 = int_to_ptr.vmem [resolvable:$true] %s856
          %859 = dma.hbm_to_vmem [thread:$0]  %s19, 16, %s857, [#allocation31]
        $region84: #{tpu_custom_call.1} parent=11 // pred_fallthru
          _
        // Predicated region
        $region85: #{tpu_custom_call.1} parent=11 // pred_check
          %p860 = pneg %p498
        $region86: #{tpu_custom_call.1} parent=11 // pred_check_branch
          %862 = sbr.rel (%p860) target = $region88
        $region87: #{tpu_custom_call.1} parent=11 // pred_region
          %s864 = ssub.s32 16, 16
          %865 = vsyncadd [#allocation31], %s864
          %s867 = sshll.u32 [#allocation32], 4
          %s868 = int_to_ptr.vmem [resolvable:$true] %s867
          %870 = dma.hbm_to_vmem [thread:$0]  %s20, 16, %s868, [#allocation31]
        $region88: #{tpu_custom_call.1} parent=11 // pred_fallthru
          _
        // Predicated region
        $region89: #{tpu_custom_call.1} parent=11 // pred_check
          %p871 = pneg %p519
        $region90: #{tpu_custom_call.1} parent=11 // pred_check_branch
          %873 = sbr.rel (%p871) target = $region92
        $region91: #{tpu_custom_call.1} parent=11 // pred_region
          _
        $region92: #{tpu_custom_call.1} parent=11 // pred_fallthru
          _
        // Predicated region
        $region93: #{tpu_custom_call.1} parent=11 // pred_check
          %p874 = pneg %p540
        $region94: #{tpu_custom_call.1} parent=11 // pred_check_branch
          %876 = sbr.rel (%p874) target = $region96
        $region95: #{tpu_custom_call.1} parent=11 // pred_region
          _
        $region96: #{tpu_custom_call.1} parent=11 // pred_fallthru
          _
        // Predicated region
        $region97: #{tpu_custom_call.1} parent=11 // pred_check
          %p877 = pneg %p561
        $region98: #{tpu_custom_call.1} parent=11 // pred_check_branch
          %879 = sbr.rel (%p877) target = $region100
        $region99: #{tpu_custom_call.1} parent=11 // pred_region
          %s881 = ssub.s32 1024, 1024
          %882 = vsyncadd [#allocation34], %s881
          %s883 = sshll.u32 [#allocation33], 4
          %s884 = int_to_ptr.vmem [resolvable:$true] %s883
          %889 = dma.hbm_to_vmem [thread:$0]  %s23, 1024, %s884, [#allocation34], 64, 64, 4
        $region100: #{tpu_custom_call.1} parent=11 // pred_fallthru
          _
        // Predicated region
        $region101: #{tpu_custom_call.1} parent=11 // pred_check
          %p890 = pneg %p582
        $region102: #{tpu_custom_call.1} parent=11 // pred_check_branch
          %892 = sbr.rel (%p890) target = $region104
        $region103: #{tpu_custom_call.1} parent=11 // pred_region
          _
        $region104: #{tpu_custom_call.1} parent=11 // pred_fallthru
          _
        // Predicated region
        $region105: #{tpu_custom_call.1} parent=11 // pred_check
          %p893 = pneg %p603
        $region106: #{tpu_custom_call.1} parent=11 // pred_check_branch
          %895 = sbr.rel (%p893) target = $region108
        $region107: #{tpu_custom_call.1} parent=11 // pred_region
          _
        $region108: #{tpu_custom_call.1} parent=11 // pred_fallthru
          _
      $region12: #{tpu_custom_call.1} parent=5 // pred_fallthru
        _
      %p896 = scmp.lt.s32.totalorder %s47, 2
      // Predicated region
      $region109: #{tpu_custom_call.1} parent=5 // pred_check
        %p897 = pneg %p896
      $region110: #{tpu_custom_call.1} parent=5 // pred_check_branch
        %899 = sbr.rel (%p897) target = $region112
      $region111: #{tpu_custom_call.1} parent=5 // pred_region
        // Predicated region
        $region113: #{tpu_custom_call.1} parent=111 // pred_check
          %p900 = pneg %p67
        $region114: #{tpu_custom_call.1} parent=111 // pred_check_branch
          %902 = sbr.rel (%p900) target = $region116
        $region115: #{tpu_custom_call.1} parent=111 // pred_region
          %s903 = sand.u32 %s57, 1
          %s904 = scalar_lea.sflag [#allocation5], %s903
          %s905 = sand.u32 %s57, 1
          %s906 = smul.addr %s905, 16
          %s907 = scalar_lea.vmem [#allocation4], %s906
          %s909 = ssub.s32 256, 256
          %910 = vsyncadd %s904, %s909
          %s911 = smul.addr %s47, 2
          %s912 = smul.addr %s911, 128
          %s913 = scalar_lea.hbm %s0, %s912
          %s915 = sshll.u32 %s907, 4
          %s916 = int_to_ptr.vmem [resolvable:$true] %s915
          %918 = dma.hbm_to_vmem [thread:$0]  %s913, 256, %s916, %s904
        $region116: #{tpu_custom_call.1} parent=111 // pred_fallthru
          _
        // Predicated region
        $region117: #{tpu_custom_call.1} parent=111 // pred_check
          %p919 = pneg %p93
        $region118: #{tpu_custom_call.1} parent=111 // pred_check_branch
          %921 = sbr.rel (%p919) target = $region120
        $region119: #{tpu_custom_call.1} parent=111 // pred_region
          %p922 = scmp.lt.s32.totalorder %s47, 1
          %s923 = scalar_select %p922, %s47, 1
          %s924 = smul.addr %s923, 8
          %s925 = scalar_lea.vmem %s1, %s924
        $region120: #{tpu_custom_call.1} parent=111 // pred_fallthru
          _
      $region112: #{tpu_custom_call.1} parent=5 // pred_fallthru
        _
      %p926 = scmp.le.s32.totalorder 1, %s47
      %p927 = scmp.lt.s32.totalorder %s47, 3
      %p928 = pnand %p926, %p927
      %p929 = pneg %p928
      // Predicated region
      $region121: #{tpu_custom_call.1} parent=5 // pred_check
        _
      $region122: #{tpu_custom_call.1} parent=5 // pred_check_branch
        %931 = sbr.rel (%p928) target = $region124
      $region123: #{tpu_custom_call.1} parent=5 // pred_region
        %s932 = ssub.s32 %s47, 1
        %s933 = sand.u32 %s60, 1
        %s934 = scalar_lea.sflag [#allocation5], %s933
        %s935 = sand.u32 %s60, 1
        %s936 = smul.addr %s935, 16
        %s937 = scalar_lea.vmem [#allocation4], %s936
        // Predicated region
        $region125: #{tpu_custom_call.1} parent=123 // pred_check
          %p938 = pneg %p73
        $region126: #{tpu_custom_call.1} parent=123 // pred_check_branch
          %940 = sbr.rel (%p938) target = $region128
        $region127: #{tpu_custom_call.1} parent=123 // pred_region
          %941 = dma.done %s934, 256
        $region128: #{tpu_custom_call.1} parent=123 // pred_fallthru
          _
        // Predicated region
        $region129: #{tpu_custom_call.1} parent=123 // pred_check
          %p942 = pneg %p120
        $region130: #{tpu_custom_call.1} parent=123 // pred_check_branch
          %944 = sbr.rel (%p942) target = $region132
        $region131: #{tpu_custom_call.1} parent=123 // pred_region
          %945 = dma.done [#allocation7], 2048
        $region132: #{tpu_custom_call.1} parent=123 // pred_fallthru
          _
        // Predicated region
        $region133: #{tpu_custom_call.1} parent=123 // pred_check
          %p946 = pneg %p162
        $region134: #{tpu_custom_call.1} parent=123 // pred_check_branch
          %948 = sbr.rel (%p946) target = $region136
        $region135: #{tpu_custom_call.1} parent=123 // pred_region
          %949 = dma.done [#allocation7], 32
        $region136: #{tpu_custom_call.1} parent=123 // pred_fallthru
          _
        // Predicated region
        $region137: #{tpu_custom_call.1} parent=123 // pred_check
          %p950 = pneg %p183
        $region138: #{tpu_custom_call.1} parent=123 // pred_check_branch
          %952 = sbr.rel (%p950) target = $region140
        $region139: #{tpu_custom_call.1} parent=123 // pred_region
          %953 = dma.done [#allocation10], 16
        $region140: #{tpu_custom_call.1} parent=123 // pred_fallthru
          _
        // Predicated region
        $region141: #{tpu_custom_call.1} parent=123 // pred_check
          %p954 = pneg %p204
        $region142: #{tpu_custom_call.1} parent=123 // pred_check_branch
          %956 = sbr.rel (%p954) target = $region144
        $region143: #{tpu_custom_call.1} parent=123 // pred_region
          %957 = dma.done [#allocation10], 16
        $region144: #{tpu_custom_call.1} parent=123 // pred_fallthru
          _
        // Predicated region
        $region145: #{tpu_custom_call.1} parent=123 // pred_check
          %p958 = pneg %p225
        $region146: #{tpu_custom_call.1} parent=123 // pred_check_branch
          %960 = sbr.rel (%p958) target = $region148
        $region147: #{tpu_custom_call.1} parent=123 // pred_region
          %961 = dma.done [#allocation13], 96
        $region148: #{tpu_custom_call.1} parent=123 // pred_fallthru
          _
        // Predicated region
        $region149: #{tpu_custom_call.1} parent=123 // pred_check
          %p962 = pneg %p246
        $region150: #{tpu_custom_call.1} parent=123 // pred_check_branch
          %964 = sbr.rel (%p962) target = $region152
        $region151: #{tpu_custom_call.1} parent=123 // pred_region
          %965 = dma.done [#allocation13], 96
        $region152: #{tpu_custom_call.1} parent=123 // pred_fallthru
          _
        // Predicated region
        $region153: #{tpu_custom_call.1} parent=123 // pred_check
          %p966 = pneg %p267
        $region154: #{tpu_custom_call.1} parent=123 // pred_check_branch
          %968 = sbr.rel (%p966) target = $region156
        $region155: #{tpu_custom_call.1} parent=123 // pred_region
          %969 = dma.done [#allocation16], 18432
        $region156: #{tpu_custom_call.1} parent=123 // pred_fallthru
          _
        // Predicated region
        $region157: #{tpu_custom_call.1} parent=123 // pred_check
          %p970 = pneg %p288
        $region158: #{tpu_custom_call.1} parent=123 // pred_check_branch
          %972 = sbr.rel (%p970) target = $region160
        $region159: #{tpu_custom_call.1} parent=123 // pred_region
          %973 = dma.done [#allocation16], 288
        $region160: #{tpu_custom_call.1} parent=123 // pred_fallthru
          _
        // Predicated region
        $region161: #{tpu_custom_call.1} parent=123 // pred_check
          %p974 = pneg %p309
        $region162: #{tpu_custom_call.1} parent=123 // pred_check_branch
          %976 = sbr.rel (%p974) target = $region164
        $region163: #{tpu_custom_call.1} parent=123 // pred_region
          %977 = dma.done [#allocation19], 6144
        $region164: #{tpu_custom_call.1} parent=123 // pred_fallthru
          _
        // Predicated region
        $region165: #{tpu_custom_call.1} parent=123 // pred_check
          %p978 = pneg %p330
        $region166: #{tpu_custom_call.1} parent=123 // pred_check_branch
          %980 = sbr.rel (%p978) target = $region168
        $region167: #{tpu_custom_call.1} parent=123 // pred_region
          %981 = dma.done [#allocation19], 96
        $region168: #{tpu_custom_call.1} parent=123 // pred_fallthru
          _
        // Predicated region
        $region169: #{tpu_custom_call.1} parent=123 // pred_check
          %p982 = pneg %p351
        $region170: #{tpu_custom_call.1} parent=123 // pred_check_branch
          %984 = sbr.rel (%p982) target = $region172
        $region171: #{tpu_custom_call.1} parent=123 // pred_region
          %985 = dma.done [#allocation22], 96
        $region172: #{tpu_custom_call.1} parent=123 // pred_fallthru
          _
        // Predicated region
        $region173: #{tpu_custom_call.1} parent=123 // pred_check
          %p986 = pneg %p372
        $region174: #{tpu_custom_call.1} parent=123 // pred_check_branch
          %988 = sbr.rel (%p986) target = $region176
        $region175: #{tpu_custom_call.1} parent=123 // pred_region
          %989 = dma.done [#allocation22], 96
        $region176: #{tpu_custom_call.1} parent=123 // pred_fallthru
          _
        // Predicated region
        $region177: #{tpu_custom_call.1} parent=123 // pred_check
          %p990 = pneg %p393
        $region178: #{tpu_custom_call.1} parent=123 // pred_check_branch
          %992 = sbr.rel (%p990) target = $region180
        $region179: #{tpu_custom_call.1} parent=123 // pred_region
          %993 = dma.done [#allocation25], 24576
        $region180: #{tpu_custom_call.1} parent=123 // pred_fallthru
          _
        // Predicated region
        $region181: #{tpu_custom_call.1} parent=123 // pred_check
          %p994 = pneg %p414
        $region182: #{tpu_custom_call.1} parent=123 // pred_check_branch
          %996 = sbr.rel (%p994) target = $region184
        $region183: #{tpu_custom_call.1} parent=123 // pred_region
          %997 = dma.done [#allocation25], 384
        $region184: #{tpu_custom_call.1} parent=123 // pred_fallthru
          _
        // Predicated region
        $region185: #{tpu_custom_call.1} parent=123 // pred_check
          %p998 = pneg %p435
        $region186: #{tpu_custom_call.1} parent=123 // pred_check_branch
          %1000 = sbr.rel (%p998) target = $region188
        $region187: #{tpu_custom_call.1} parent=123 // pred_region
          %1001 = dma.done [#allocation28], 24576
        $region188: #{tpu_custom_call.1} parent=123 // pred_fallthru
          _
        // Predicated region
        $region189: #{tpu_custom_call.1} parent=123 // pred_check
          %p1002 = pneg %p456
        $region190: #{tpu_custom_call.1} parent=123 // pred_check_branch
          %1004 = sbr.rel (%p1002) target = $region192
        $region191: #{tpu_custom_call.1} parent=123 // pred_region
          %1005 = dma.done [#allocation28], 96
        $region192: #{tpu_custom_call.1} parent=123 // pred_fallthru
          _
        // Predicated region
        $region193: #{tpu_custom_call.1} parent=123 // pred_check
          %p1006 = pneg %p477
        $region194: #{tpu_custom_call.1} parent=123 // pred_check_branch
          %1008 = sbr.rel (%p1006) target = $region196
        $region195: #{tpu_custom_call.1} parent=123 // pred_region
          %1009 = dma.done [#allocation31], 16
        $region196: #{tpu_custom_call.1} parent=123 // pred_fallthru
          _
        // Predicated region
        $region197: #{tpu_custom_call.1} parent=123 // pred_check
          %p1010 = pneg %p498
        $region198: #{tpu_custom_call.1} parent=123 // pred_check_branch
          %1012 = sbr.rel (%p1010) target = $region200
        $region199: #{tpu_custom_call.1} parent=123 // pred_region
          %1013 = dma.done [#allocation31], 16
        $region200: #{tpu_custom_call.1} parent=123 // pred_fallthru
          _
        // Predicated region
        $region201: #{tpu_custom_call.1} parent=123 // pred_check
          %p1014 = pneg %p561
        $region202: #{tpu_custom_call.1} parent=123 // pred_check_branch
          %1016 = sbr.rel (%p1014) target = $region204
        $region203: #{tpu_custom_call.1} parent=123 // pred_region
          %1017 = dma.done [#allocation34], 1024
        $region204: #{tpu_custom_call.1} parent=123 // pred_fallthru
          _
        %s1018 = sand.u32 %s60, 1
        %s1019 = scalar_lea.sflag [#allocation5], %s1018
        %s1020 = sand.u32 %s60, 1
        %s1021 = smul.addr %s1020, 16
        %s1022 = scalar_lea.vmem [#allocation4], %s1021
        %p1023 = pneg %p73
        %p1024 = pneg %p70
        %p1025 = scmp.lt.s32.totalorder %s52, 1
        %s1026 = scalar_select %p1025, %s52, 1
        %s1027 = smul.addr %s1026, 8
        %s1028 = scalar_lea.vmem %s1, %s1027
        %p1029 = pneg %p99
        %p1030 = pneg %p96
        %p1031 = pneg %p120
        %p1032 = pneg %p117
        %p1033 = pneg %p141
        %p1034 = pneg %p138
        %p1035 = pneg %p162
        %p1036 = pneg %p159
        %p1037 = pneg %p183
        %p1038 = pneg %p180
        %p1039 = pneg %p204
        %p1040 = pneg %p201
        %p1041 = pneg %p225
        %p1042 = pneg %p222
        %p1043 = pneg %p246
        %p1044 = pneg %p243
        %p1045 = pneg %p267
        %p1046 = pneg %p264
        %p1047 = pneg %p288
        %p1048 = pneg %p285
        %p1049 = pneg %p309
        %p1050 = pneg %p306
        %p1051 = pneg %p330
        %p1052 = pneg %p327
        %p1053 = pneg %p351
        %p1054 = pneg %p348
        %p1055 = pneg %p372
        %p1056 = pneg %p369
        %p1057 = pneg %p393
        %p1058 = pneg %p390
        %p1059 = pneg %p414
        %p1060 = pneg %p411
        %p1061 = pneg %p435
        %p1062 = pneg %p432
        %p1063 = pneg %p456
        %p1064 = pneg %p453
        %p1065 = pneg %p477
        %p1066 = pneg %p474
        %p1067 = pneg %p498
        %p1068 = pneg %p495
        %p1069 = pneg %p519
        %p1070 = pneg %p516
        %p1071 = pneg %p540
        %p1072 = pneg %p537
        %p1073 = pneg %p561
        %p1074 = pneg %p558
        %p1075 = pneg %p582
        %p1076 = pneg %p579
        %p1077 = pneg %p603
        %p1078 = pneg %p600
        %p1079 = pneg %p629
        %p1080 = pneg %p626
        %p1081 = scmp.lt.s32.totalorder %s52, 1
        %s1082 = scalar_select %p1081, %s52, 1
        %s1083 = scalar_lea.vmem %s26, %s1082
        %p1084 = scmp.lt.s32.totalorder %s52, 1
        %s1085 = scalar_select %p1084, %s52, 1
        %s1086 = smul.addr %s1085, 8
        %s1087 = scalar_lea.vmem %s1, %s1086
        %p1088 = scmp.lt.s32.totalorder %s52, 1
        %s1089 = scalar_select %p1088, %s52, 1
        %s1090 = scalar_lea.vmem %s26, %s1089
        %v1092 = vld [vmem:[%s937] sm:$0xff]
        %v1093 = vld [vmem:[%s937 + $0x8] sm:$0xff]
        %v1094 = vld [vmem:[%s1087] sm:$0xff]
        %v1095 = vpack.c.bf16 %v1092, %v1092
        %v1096 = vpack.c.bf16 %v1093, %v1093
        %v1097 = vld [vmem:[#allocation6] sm:$0xf]
        %v1098 = vld [vmem:[#allocation6 + $0x4] sm:$0xf]
        %v1099 = vld [vmem:[#allocation6 + $0x8] sm:$0xf]
        %v1100 = vld [vmem:[#allocation6 + $0xc] sm:$0xf]
        %v1101 = vld [vmem:[#allocation6 + $0x10] sm:$0xf]
        %v1102 = vld [vmem:[#allocation6 + $0x14] sm:$0xf]
        %v1103 = vld [vmem:[#allocation6 + $0x18] sm:$0xf]
        %v1104 = vld [vmem:[#allocation6 + $0x1c] sm:$0xf]
        %v1105 = vld [vmem:[#allocation6 + $0x20] sm:$0xf]
        %v1106 = vld [vmem:[#allocation6 + $0x24] sm:$0xf]
        %v1107 = vld [vmem:[#allocation6 + $0x28] sm:$0xf]
        %v1108 = vld [vmem:[#allocation6 + $0x2c] sm:$0xf]
        %v1109 = vld [vmem:[#allocation6 + $0x30] sm:$0xf]
        %v1110 = vld [vmem:[#allocation6 + $0x34] sm:$0xf]
        %v1111 = vld [vmem:[#allocation6 + $0x38] sm:$0xf]
        %v1112 = vld [vmem:[#allocation6 + $0x3c] sm:$0xf]
        %v1113 = vld [vmem:[#allocation6 + $0x40] sm:$0xf]
        %v1114 = vld [vmem:[#allocation6 + $0x44] sm:$0xf]
        %v1115 = vld [vmem:[#allocation6 + $0x48] sm:$0xf]
        %v1116 = vld [vmem:[#allocation6 + $0x4c] sm:$0xf]
        %v1117 = vld [vmem:[#allocation6 + $0x50] sm:$0xf]
        %v1118 = vld [vmem:[#allocation6 + $0x54] sm:$0xf]
        %v1119 = vld [vmem:[#allocation6 + $0x58] sm:$0xf]
        %v1120 = vld [vmem:[#allocation6 + $0x5c] sm:$0xf]
        %v1121 = vld [vmem:[#allocation6 + $0x60] sm:$0xf]
        %v1122 = vld [vmem:[#allocation6 + $0x64] sm:$0xf]
        %v1123 = vld [vmem:[#allocation6 + $0x68] sm:$0xf]
        %v1124 = vld [vmem:[#allocation6 + $0x6c] sm:$0xf]
        %v1125 = vld [vmem:[#allocation6 + $0x70] sm:$0xf]
        %v1126 = vld [vmem:[#allocation6 + $0x74] sm:$0xf]
        %v1127 = vld [vmem:[#allocation6 + $0x78] sm:$0xf]
        %v1128 = vld [vmem:[#allocation6 + $0x7c] sm:$0xf]
        %v1129 = vld [vmem:[%s3] sm:$0x1]
        %v1131 = vlaneseq
        %v1132 = vshrl.u32 %v1131, 7
        %v1133 = vsub.s32 0, %v1132
        %v1134 = vrot.slane %v1129, %v1133
        %v1168 = vunpack.c.l.b16 %v1097
        %v1169 = vunpack.c.l.b16 %v1098
        %v1170 = vunpack.c.l.b16 %v1099
        %v1171 = vunpack.c.l.b16 %v1100
        %v1172 = vunpack.c.l.b16 %v1101
        %v1173 = vunpack.c.l.b16 %v1102
        %v1174 = vunpack.c.l.b16 %v1103
        %v1175 = vunpack.c.l.b16 %v1104
        %v1176 = vunpack.c.l.b16 %v1105
        %v1177 = vunpack.c.l.b16 %v1106
        %v1178 = vunpack.c.l.b16 %v1107
        %v1179 = vunpack.c.l.b16 %v1108
        %v1180 = vunpack.c.l.b16 %v1109
        %v1181 = vunpack.c.l.b16 %v1110
        %v1182 = vunpack.c.l.b16 %v1111
        %v1183 = vunpack.c.l.b16 %v1112
        %v1184 = vunpack.c.l.b16 %v1113
        %v1185 = vunpack.c.l.b16 %v1114
        %v1186 = vunpack.c.l.b16 %v1115
        %v1187 = vunpack.c.l.b16 %v1116
        %v1188 = vunpack.c.l.b16 %v1117
        %v1189 = vunpack.c.l.b16 %v1118
        %v1190 = vunpack.c.l.b16 %v1119
        %v1191 = vunpack.c.l.b16 %v1120
        %v1192 = vunpack.c.l.b16 %v1121
        %v1193 = vunpack.c.l.b16 %v1122
        %v1194 = vunpack.c.l.b16 %v1123
        %v1195 = vunpack.c.l.b16 %v1124
        %v1196 = vunpack.c.l.b16 %v1125
        %v1197 = vunpack.c.l.b16 %v1126
        %v1198 = vunpack.c.l.b16 %v1127
        %v1199 = vunpack.c.l.b16 %v1128
        %v1200 = vpack.c.b16 %v1169, %v1168
        %v1201 = vpack.c.b16 %v1171, %v1170
        %v1202 = vpack.c.b16 %v1173, %v1172
        %v1203 = vpack.c.b16 %v1175, %v1174
        %v1204 = vpack.c.b16 %v1177, %v1176
        %v1205 = vpack.c.b16 %v1179, %v1178
        %v1206 = vpack.c.b16 %v1181, %v1180
        %v1207 = vpack.c.b16 %v1183, %v1182
        %v1208 = vpack.c.b16 %v1185, %v1184
        %v1209 = vpack.c.b16 %v1187, %v1186
        %v1210 = vpack.c.b16 %v1189, %v1188
        %v1211 = vpack.c.b16 %v1191, %v1190
        %v1212 = vpack.c.b16 %v1193, %v1192
        %v1213 = vpack.c.b16 %v1195, %v1194
        %v1214 = vpack.c.b16 %v1197, %v1196
        %v1215 = vpack.c.b16 %v1199, %v1198
        %1232 = vmatprep.subr.bf16.mxu0 0
        %1233 = vmatpush1.bf16.msra.mxu0 %v1207
        %1234 = vmatprep.subr.bf16.mxu0 0
        %1235 = vmatpush1.bf16.msra.mxu0 %v1206
        %1236 = vmatprep.subr.bf16.mxu0 0
        %1237 = vmatpush1.bf16.msra.mxu0 %v1205
        %1238 = vmatprep.subr.bf16.mxu0 0
        %1239 = vmatpush1.bf16.msra.mxu0 %v1204
        %1240 = vmatprep.subr.bf16.mxu0 0
        %1241 = vmatpush1.bf16.msra.mxu0 %v1203
        %1242 = vmatprep.subr.bf16.mxu0 0
        %1243 = vmatpush1.bf16.msra.mxu0 %v1202
        %1244 = vmatprep.subr.bf16.mxu0 0
        %1245 = vmatpush1.bf16.msra.mxu0 %v1201
        %1246 = vmatprep.subr.bf16.mxu0 0
        %1247 = vmatpush1.bf16.msra.mxu0 %v1200
        %1248 = vmatprep.subr.bf16.mxu0 0
        %1249 = vmatpush2.bf16.msra.mxu0 %v1215
        %1250 = vmatprep.subr.bf16.mxu0 0
        %1251 = vmatpush2.bf16.msra.mxu0 %v1214
        %1252 = vmatprep.subr.bf16.mxu0 0
        %1253 = vmatpush2.bf16.msra.mxu0 %v1213
        %1254 = vmatprep.subr.bf16.mxu0 0
        %1255 = vmatpush2.bf16.msra.mxu0 %v1212
        %1256 = vmatprep.subr.bf16.mxu0 0
        %1257 = vmatpush2.bf16.msra.mxu0 %v1211
        %1258 = vmatprep.subr.bf16.mxu0 0
        %1259 = vmatpush2.bf16.msra.mxu0 %v1210
        %1260 = vmatprep.subr.bf16.mxu0 0
        %1261 = vmatpush2.bf16.msra.mxu0 %v1209
        %1262 = vmatprep.subr.bf16.mxu0 0
        %1263 = vmatpush2.bf16.msra.mxu0 %v1208
        %1264 = vmatprep.mubr.bf16.mxu0 %v1096
        %1265 = vmatmul.mubr.bf16.gmra.mxu0 %v1095
        %v1266 = vpop.f32.mrf.mxu0
        %v1267 = vadd.f32 %v1134, %v1266
        %v1268 = vpop.f32.mrf.mxu0
        %v1269 = vpop.f32.mrf.mxu0
        %v1270 = vpop.f32.mrf.mxu0
        %1271 = vdwg.mxu0
        %v1272 = vld [vmem:[#allocation8] sm:$0x1]
        %1274 = vset.pattern.permute.xlu0 0
        %1275 = vperm.xlu0 %1274, %v1094
        %v1276 = vpop.permute.xlu0 %1275
        %v1278 = vlaneseq
        %v1279 = vshrl.u32 %v1278, 7
        %v1280 = vsub.s32 0, %v1279
        %v1281 = vrot.slane %v1272, %v1280
        %v1282 = vmul.f32 %v1276, %v1281
        %v1283 = vld [vmem:[#allocation8 + $0x1] sm:$0x1]
        %1284 = vset.pattern.permute.xlu0 1
        %1285 = vperm.xlu0 %1284, %v1094
        %v1286 = vpop.permute.xlu0 %1285
        %v1288 = vlaneseq
        %v1289 = vshrl.u32 %v1288, 7
        %v1290 = vsub.s32 0, %v1289
        %v1291 = vrot.slane %v1283, %v1290
        %v1292 = vmul.f32 %v1286, %v1291
        %v1293 = vadd.f32 %v1282, %v1292
        %v1294 = vld [vmem:[#allocation9] sm:$0x1]
        %v1296 = vlaneseq
        %v1297 = vshrl.u32 %v1296, 7
        %v1298 = vsub.s32 0, %v1297
        %v1299 = vrot.slane %v1294, %v1298
        %v1301 = vadd.f32 %v1293, %v1299
        %v1302 = vadd.f32 %v1267, %v1301
        %v1303 = vlaneseq
        %v1304 = vshrl.u32 %v1303, 7
        %vm1305 = vcmp.eq.s32.totalorder %v1304, 0
        %v1306 = vld [vmem:[#allocation11] sm:$0x1]
        %v1307 = vsel %vm1305, 1, 0
        %vm1308 = vcmp.eq.s32.totalorder %v1307, 1
        %v1310 = vlaneseq
        %v1311 = vshrl.u32 %v1310, 7
        %v1312 = vsub.s32 0, %v1311
        %v1313 = vrot.slane %v1306, %v1312
        %v1315 = vsel %vm1308, %v1313, 0.0
        %1316 = vst [vmem:[#allocation2] sm:$0xff] %v1315
        %1317 = vst [vmem:[#allocation2 + $0x8] sm:$0xff] %v1302
        loop: start=0, step=1, limit=6
        $region205: #{tpu_custom_call.1} parent=123 // loop_pre_header
          _
        $region206: #{tpu_custom_call.1} parent=123 // loop_header
          %s1319 = sphi 0, %s1323
          %p1320 = scmp.ge.s32.totalorder %s1319, 6
        $region207: #{tpu_custom_call.1} parent=123 // loop_header_branch
          %1322 = sbr.rel (%p1320) target = $region211
        $region208: #{tpu_custom_call.1} parent=123 // loop_body
          %v1324 = vld [vmem:[#allocation2] sm:$0xff]
          %v1325 = vld [vmem:[#allocation2 + $0x8] sm:$0xff]
          %s1326 = scalar_lea.vmem [#allocation12], %s1319
          %v1327 = vld [vmem:[%s1326] sm:$0x1]
          %s1328 = scalar_lea.vmem [#allocation14], %s1319
          %v1329 = vld [vmem:[%s1328] sm:$0x1]
          %1330 = vadd.xlane.f32.xlu0 %v1324
          %v1331 = vpop.xlane.xlu0 %1330
          %1332 = vadd.xlane.f32.xlu0 %v1325
          %v1333 = vpop.xlane.xlu0 %1332
          %v1334 = vrcp.pop 128.0
          %v1335 = vmul.f32 %v1331, %v1334
          %v1336 = vmul.f32 %v1333, %v1334
          %v1337 = vsub.f32 %v1324, %v1335
          %v1338 = vsub.f32 %v1325, %v1336
          %v1339 = vmul.f32 %v1337, %v1337
          %v1340 = vmul.f32 %v1338, %v1338
          %1341 = vadd.xlane.f32.xlu0 %v1339
          %v1342 = vpop.xlane.xlu0 %1341
          %1343 = vadd.xlane.f32.xlu0 %v1340
          %v1344 = vpop.xlane.xlu0 %1343
          %v1345 = vmul.f32 %v1342, %v1334
          %v1346 = vmul.f32 %v1344, %v1334
          %v1347 = vadd.f32 %v1345, 1e-05
          %v1348 = vadd.f32 %v1346, 1e-05
          %v1349 = vrsqrt.pop %v1347
          %v1350 = vrsqrt.pop %v1348
          %v1351 = vmul.f32 %v1337, %v1349
          %v1352 = vmul.f32 %v1338, %v1350
          %v1354 = vlaneseq
          %v1355 = vshrl.u32 %v1354, 7
          %v1356 = vsub.s32 0, %v1355
          %v1357 = vrot.slane %v1327, %v1356
          %v1359 = vmul.f32 %v1351, %v1357
          %v1360 = vmul.f32 %v1352, %v1357
          %v1362 = vlaneseq
          %v1363 = vshrl.u32 %v1362, 7
          %v1364 = vsub.s32 0, %v1363
          %v1365 = vrot.slane %v1329, %v1364
          %v1367 = vadd.f32 %v1359, %v1365
          %v1368 = vadd.f32 %v1360, %v1365
          %v1369 = vpack.c.bf16 %v1368, %v1367
          %s1370 = smul.u32 %s1319, 48
          %s1371 = smul.addr %s1370, 4
          %s1372 = scalar_lea.vmem [#allocation15], %s1371
          %v1373 = vld [vmem:[%s1372] sm:$0xff]
          %v1374 = vld [vmem:[%s1372 + $0x8] sm:$0xf]
          %v1375 = vld [vmem:[%s1372 + $0xc] sm:$0xff]
          %v1376 = vld [vmem:[%s1372 + $0x14] sm:$0xf]
          %v1377 = vld [vmem:[%s1372 + $0x18] sm:$0xff]
          %v1378 = vld [vmem:[%s1372 + $0x20] sm:$0xf]
          %v1379 = vld [vmem:[%s1372 + $0x24] sm:$0xff]
          %v1380 = vld [vmem:[%s1372 + $0x2c] sm:$0xf]
          %v1381 = vld [vmem:[%s1372 + $0x30] sm:$0xff]
          %v1382 = vld [vmem:[%s1372 + $0x38] sm:$0xf]
          %v1383 = vld [vmem:[%s1372 + $0x3c] sm:$0xff]
          %v1384 = vld [vmem:[%s1372 + $0x44] sm:$0xf]
          %v1385 = vld [vmem:[%s1372 + $0x48] sm:$0xff]
          %v1386 = vld [vmem:[%s1372 + $0x50] sm:$0xf]
          %v1387 = vld [vmem:[%s1372 + $0x54] sm:$0xff]
          %v1388 = vld [vmem:[%s1372 + $0x5c] sm:$0xf]
          %v1389 = vld [vmem:[%s1372 + $0x60] sm:$0xff]
          %v1390 = vld [vmem:[%s1372 + $0x68] sm:$0xf]
          %v1391 = vld [vmem:[%s1372 + $0x6c] sm:$0xff]
          %v1392 = vld [vmem:[%s1372 + $0x74] sm:$0xf]
          %v1393 = vld [vmem:[%s1372 + $0x78] sm:$0xff]
          %v1394 = vld [vmem:[%s1372 + $0x80] sm:$0xf]
          %v1395 = vld [vmem:[%s1372 + $0x84] sm:$0xff]
          %v1396 = vld [vmem:[%s1372 + $0x8c] sm:$0xf]
          %v1397 = vld [vmem:[%s1372 + $0x90] sm:$0xff]
          %v1398 = vld [vmem:[%s1372 + $0x98] sm:$0xf]
          %v1399 = vld [vmem:[%s1372 + $0x9c] sm:$0xff]
          %v1400 = vld [vmem:[%s1372 + $0xa4] sm:$0xf]
          %v1401 = vld [vmem:[%s1372 + $0xa8] sm:$0xff]
          %v1402 = vld [vmem:[%s1372 + $0xb0] sm:$0xf]
          %v1403 = vld [vmem:[%s1372 + $0xb4] sm:$0xff]
          %v1404 = vld [vmem:[%s1372 + $0xbc] sm:$0xf]
          %s1405 = smul.u32 %s1319, 3
          %s1406 = scalar_lea.vmem [#allocation17], %s1405
          %v1407 = vld [vmem:[%s1406] sm:$0x7]
          %v1409 = vlaneseq
          %v1410 = vshrl.u32 %v1409, 7
          %v1411 = vsub.s32 0, %v1410
          %v1412 = vrot.slane %v1407, %v1411
          %v1413 = vlaneseq
          %v1414 = vshrl.u32 %v1413, 7
          %v1415 = vsub.s32 1, %v1414
          %v1416 = vrot.slane %v1407, %v1415
          %v1417 = vlaneseq
          %v1418 = vshrl.u32 %v1417, 7
          %v1419 = vsub.s32 2, %v1418
          %v1420 = vrot.slane %v1407, %v1419
          %v1456 = vunpack.c.l.b16 %v1373
          %v1457 = vunpack.c.h.b16 %v1373
          %v1458 = vunpack.c.l.b16 %v1374
          %v1459 = vunpack.c.l.b16 %v1375
          %v1460 = vunpack.c.h.b16 %v1375
          %v1461 = vunpack.c.l.b16 %v1376
          %v1462 = vunpack.c.l.b16 %v1377
          %v1463 = vunpack.c.h.b16 %v1377
          %v1464 = vunpack.c.l.b16 %v1378
          %v1465 = vunpack.c.l.b16 %v1379
          %v1466 = vunpack.c.h.b16 %v1379
          %v1467 = vunpack.c.l.b16 %v1380
          %v1468 = vunpack.c.l.b16 %v1381
          %v1469 = vunpack.c.h.b16 %v1381
          %v1470 = vunpack.c.l.b16 %v1382
          %v1471 = vunpack.c.l.b16 %v1383
          %v1472 = vunpack.c.h.b16 %v1383
          %v1473 = vunpack.c.l.b16 %v1384
          %v1474 = vunpack.c.l.b16 %v1385
          %v1475 = vunpack.c.h.b16 %v1385
          %v1476 = vunpack.c.l.b16 %v1386
          %v1477 = vunpack.c.l.b16 %v1387
          %v1478 = vunpack.c.h.b16 %v1387
          %v1479 = vunpack.c.l.b16 %v1388
          %v1480 = vunpack.c.l.b16 %v1389
          %v1481 = vunpack.c.h.b16 %v1389
          %v1482 = vunpack.c.l.b16 %v1390
          %v1483 = vunpack.c.l.b16 %v1391
          %v1484 = vunpack.c.h.b16 %v1391
          %v1485 = vunpack.c.l.b16 %v1392
          %v1486 = vunpack.c.l.b16 %v1393
          %v1487 = vunpack.c.h.b16 %v1393
          %v1488 = vunpack.c.l.b16 %v1394
          %v1489 = vunpack.c.l.b16 %v1395
          %v1490 = vunpack.c.h.b16 %v1395
          %v1491 = vunpack.c.l.b16 %v1396
          %v1492 = vunpack.c.l.b16 %v1397
          %v1493 = vunpack.c.h.b16 %v1397
          %v1494 = vunpack.c.l.b16 %v1398
          %v1495 = vunpack.c.l.b16 %v1399
          %v1496 = vunpack.c.h.b16 %v1399
          %v1497 = vunpack.c.l.b16 %v1400
          %v1498 = vunpack.c.l.b16 %v1401
          %v1499 = vunpack.c.h.b16 %v1401
          %v1500 = vunpack.c.l.b16 %v1402
          %v1501 = vunpack.c.l.b16 %v1403
          %v1502 = vunpack.c.h.b16 %v1403
          %v1503 = vunpack.c.l.b16 %v1404
          %v1504 = vpack.c.b16 %v1459, %v1456
          %v1505 = vpack.c.b16 %v1460, %v1457
          %v1506 = vpack.c.b16 %v1461, %v1458
          %v1507 = vpack.c.b16 %v1465, %v1462
          %v1508 = vpack.c.b16 %v1466, %v1463
          %v1509 = vpack.c.b16 %v1467, %v1464
          %v1510 = vpack.c.b16 %v1471, %v1468
          %v1511 = vpack.c.b16 %v1472, %v1469
          %v1512 = vpack.c.b16 %v1473, %v1470
          %v1513 = vpack.c.b16 %v1477, %v1474
          %v1514 = vpack.c.b16 %v1478, %v1475
          %v1515 = vpack.c.b16 %v1479, %v1476
          %v1516 = vpack.c.b16 %v1483, %v1480
          %v1517 = vpack.c.b16 %v1484, %v1481
          %v1518 = vpack.c.b16 %v1485, %v1482
          %v1519 = vpack.c.b16 %v1489, %v1486
          %v1520 = vpack.c.b16 %v1490, %v1487
          %v1521 = vpack.c.b16 %v1491, %v1488
          %v1522 = vpack.c.b16 %v1495, %v1492
          %v1523 = vpack.c.b16 %v1496, %v1493
          %v1524 = vpack.c.b16 %v1497, %v1494
          %v1525 = vpack.c.b16 %v1501, %v1498
          %v1526 = vpack.c.b16 %v1502, %v1499
          %v1527 = vpack.c.b16 %v1503, %v1500
          %1552 = vmatprep.subr.bf16.mxu0 %v1526
          %1553 = vmatpush1.bf16.msra.mxu0 %v1525
          %1554 = vmatprep.subr.bf16.mxu0 %v1523
          %1555 = vmatpush1.bf16.msra.mxu0 %v1522
          %1556 = vmatprep.subr.bf16.mxu0 %v1520
          %1557 = vmatpush1.bf16.msra.mxu0 %v1519
          %1558 = vmatprep.subr.bf16.mxu0 %v1517
          %1559 = vmatpush1.bf16.msra.mxu0 %v1516
          %1560 = vmatprep.subr.bf16.mxu0 %v1514
          %1561 = vmatpush1.bf16.msra.mxu0 %v1513
          %1562 = vmatprep.subr.bf16.mxu0 %v1511
          %1563 = vmatpush1.bf16.msra.mxu0 %v1510
          %1564 = vmatprep.subr.bf16.mxu0 %v1508
          %1565 = vmatpush1.bf16.msra.mxu0 %v1507
          %1566 = vmatprep.subr.bf16.mxu0 %v1505
          %1567 = vmatpush1.bf16.msra.mxu0 %v1504
          %1568 = vmatprep.subr.bf16.mxu0 0
          %1569 = vmatpush2.bf16.msra.mxu0 0
          %1570 = vmatprep.subr.bf16.mxu0 0
          %1571 = vmatpush2.bf16.msra.mxu0 0
          %1572 = vmatprep.subr.bf16.mxu0 0
          %1573 = vmatpush2.bf16.msra.mxu0 0
          %1574 = vmatprep.subr.bf16.mxu0 0
          %1575 = vmatpush2.bf16.msra.mxu0 0
          %1576 = vmatprep.subr.bf16.mxu0 0
          %1577 = vmatpush2.bf16.msra.mxu0 0
          %1578 = vmatprep.subr.bf16.mxu0 0
          %1579 = vmatpush2.bf16.msra.mxu0 0
          %1580 = vmatprep.subr.bf16.mxu0 0
          %1581 = vmatpush2.bf16.msra.mxu0 0
          %1582 = vmatprep.subr.bf16.mxu0 0
          %1583 = vmatpush2.bf16.msra.mxu0 0
          %1584 = vmatprep.mubr.bf16.mxu0 0
          %1585 = vmatmul.mubr.bf16.gmra.mxu0 %v1369
          %v1586 = vpop.f32.mrf.mxu0
          %v1587 = vadd.f32 %v1412, %v1586
          %v1588 = vpop.f32.mrf.mxu0
          %v1589 = vadd.f32 %v1416, %v1588
          %v1590 = vpop.f32.mrf.mxu0
          %v1591 = vadd.f32 %v1412, %v1590
          %v1592 = vpop.f32.mrf.mxu0
          %v1593 = vadd.f32 %v1416, %v1592
          %1594 = vdwg.mxu0
          %1595 = vmatprep.subr.bf16.mxu0 0
          %1596 = vmatpush1.bf16.msra.mxu0 %v1527
          %1597 = vmatprep.subr.bf16.mxu0 0
          %1598 = vmatpush1.bf16.msra.mxu0 %v1524
          %1599 = vmatprep.subr.bf16.mxu0 0
          %1600 = vmatpush1.bf16.msra.mxu0 %v1521
          %1601 = vmatprep.subr.bf16.mxu0 0
          %1602 = vmatpush1.bf16.msra.mxu0 %v1518
          %1603 = vmatprep.subr.bf16.mxu0 0
          %1604 = vmatpush1.bf16.msra.mxu0 %v1515
          %1605 = vmatprep.subr.bf16.mxu0 0
          %1606 = vmatpush1.bf16.msra.mxu0 %v1512
          %1607 = vmatprep.subr.bf16.mxu0 0
          %1608 = vmatpush1.bf16.msra.mxu0 %v1509
          %1609 = vmatprep.subr.bf16.mxu0 0
          %1610 = vmatpush1.bf16.msra.mxu0 %v1506
          %1611 = vmatprep.subr.bf16.mxu0 0
          %1612 = vmatpush2.bf16.msra.mxu0 0
          %1613 = vmatprep.subr.bf16.mxu0 0
          %1614 = vmatpush2.bf16.msra.mxu0 0
          %1615 = vmatprep.subr.bf16.mxu0 0
          %1616 = vmatpush2.bf16.msra.mxu0 0
          %1617 = vmatprep.subr.bf16.mxu0 0
          %1618 = vmatpush2.bf16.msra.mxu0 0
          %1619 = vmatprep.subr.bf16.mxu0 0
          %1620 = vmatpush2.bf16.msra.mxu0 0
          %1621 = vmatprep.subr.bf16.mxu0 0
          %1622 = vmatpush2.bf16.msra.mxu0 0
          %1623 = vmatprep.subr.bf16.mxu0 0
          %1624 = vmatpush2.bf16.msra.mxu0 0
          %1625 = vmatprep.subr.bf16.mxu0 0
          %1626 = vmatpush2.bf16.msra.mxu0 0
          %1627 = vmatprep.mubr.bf16.mxu0 0
          %1628 = vmatmul.mubr.bf16.gmra.mxu0 %v1369
          %v1629 = vpop.f32.mrf.mxu0
          %v1630 = vadd.f32 %v1420, %v1629
          %v1631 = vpop.f32.mrf.mxu0
          %v1632 = vpop.f32.mrf.mxu0
          %v1633 = vadd.f32 %v1420, %v1632
          %v1634 = vpop.f32.mrf.mxu0
          %1635 = vdwg.mxu0
          %v1636 = vpack.c.bf16 %v1591, %v1587
          %v1637 = vpack.c.bf16 %v1593, %v1589
          %v1638 = vpack.c.bf16 %v1633, %v1630
          %v1639 = vld [vmem:[#allocation33] sm:$0xf]
          %v1640 = vld [vmem:[#allocation33 + $0x4] sm:$0xf]
          %v1641 = vld [vmem:[#allocation33 + $0x8] sm:$0xf]
          %v1642 = vld [vmem:[#allocation33 + $0xc] sm:$0xf]
          %v1643 = vld [vmem:[#allocation33 + $0x10] sm:$0xf]
          %v1644 = vld [vmem:[#allocation33 + $0x14] sm:$0xf]
          %v1645 = vld [vmem:[#allocation33 + $0x18] sm:$0xf]
          %v1646 = vld [vmem:[#allocation33 + $0x1c] sm:$0xf]
          %v1647 = vld [vmem:[#allocation33 + $0x20] sm:$0xf]
          %v1648 = vld [vmem:[#allocation33 + $0x24] sm:$0xf]
          %v1649 = vld [vmem:[#allocation33 + $0x28] sm:$0xf]
          %v1650 = vld [vmem:[#allocation33 + $0x2c] sm:$0xf]
          %v1651 = vld [vmem:[#allocation33 + $0x30] sm:$0xf]
          %v1652 = vld [vmem:[#allocation33 + $0x34] sm:$0xf]
          %v1653 = vld [vmem:[#allocation33 + $0x38] sm:$0xf]
          %v1654 = vld [vmem:[#allocation33 + $0x3c] sm:$0xf]
          %v1671 = vunpack.c.l.b16 %v1639
          %v1672 = vunpack.c.l.b16 %v1640
          %v1673 = vunpack.c.l.b16 %v1641
          %v1674 = vunpack.c.l.b16 %v1642
          %v1675 = vunpack.c.l.b16 %v1643
          %v1676 = vunpack.c.l.b16 %v1644
          %v1677 = vunpack.c.l.b16 %v1645
          %v1678 = vunpack.c.l.b16 %v1646
          %v1679 = vunpack.c.l.b16 %v1647
          %v1680 = vunpack.c.l.b16 %v1648
          %v1681 = vunpack.c.l.b16 %v1649
          %v1682 = vunpack.c.l.b16 %v1650
          %v1683 = vunpack.c.l.b16 %v1651
          %v1684 = vunpack.c.l.b16 %v1652
          %v1685 = vunpack.c.l.b16 %v1653
          %v1686 = vunpack.c.l.b16 %v1654
          %v1687 = vpack.c.b16 %v1672, %v1671
          %v1688 = vpack.c.b16 %v1674, %v1673
          %v1689 = vpack.c.b16 %v1676, %v1675
          %v1690 = vpack.c.b16 %v1678, %v1677
          %v1691 = vpack.c.b16 %v1680, %v1679
          %v1692 = vpack.c.b16 %v1682, %v1681
          %v1693 = vpack.c.b16 %v1684, %v1683
          %v1694 = vpack.c.b16 %v1686, %v1685
          %v1703 = vmul.bf16 %v1637, %v1687
          %v1704 = vmul.bf16 %v1637, %v1688
          %v1705 = vmul.bf16 %v1637, %v1689
          %v1706 = vmul.bf16 %v1637, %v1690
          %v1707 = vmul.bf16 %v1637, %v1691
          %v1708 = vmul.bf16 %v1637, %v1692
          %v1709 = vmul.bf16 %v1637, %v1693
          %v1710 = vmul.bf16 %v1637, %v1694
          %v1711 = vmul.bf16 %v1638, %v1687
          %v1712 = vmul.bf16 %v1638, %v1688
          %v1713 = vmul.bf16 %v1638, %v1689
          %v1714 = vmul.bf16 %v1638, %v1690
          %v1715 = vmul.bf16 %v1638, %v1691
          %v1716 = vmul.bf16 %v1638, %v1692
          %v1717 = vmul.bf16 %v1638, %v1693
          %v1718 = vmul.bf16 %v1638, %v1694
          %v1719 = vld [vmem:[%s25] sm:$0x1]
          %v1721 = vlaneseq
          %v1722 = vshrl.u32 %v1721, 7
          %v1723 = vsub.s32 0, %v1722
          %v1724 = vrot.slane %v1719, %v1723
          %1726 = vmatprep.subr.bf16.mxu0 0
          %1727 = vmatpush1.bf16.xpose.msra.mxu0 %v1710
          %1728 = vmatprep.subr.bf16.mxu0 0
          %1729 = vmatpush1.bf16.xpose.msra.mxu0 %v1709
          %1730 = vmatprep.subr.bf16.mxu0 0
          %1731 = vmatpush1.bf16.xpose.msra.mxu0 %v1708
          %1732 = vmatprep.subr.bf16.mxu0 0
          %1733 = vmatpush1.bf16.xpose.msra.mxu0 %v1707
          %1734 = vmatprep.subr.bf16.mxu0 0
          %1735 = vmatpush1.bf16.xpose.msra.mxu0 %v1706
          %1736 = vmatprep.subr.bf16.mxu0 0
          %1737 = vmatpush1.bf16.xpose.msra.mxu0 %v1705
          %1738 = vmatprep.subr.bf16.mxu0 0
          %1739 = vmatpush1.bf16.xpose.msra.mxu0 %v1704
          %1740 = vmatprep.subr.bf16.mxu0 0
          %1741 = vmatpush1.bf16.xpose.msra.mxu0 %v1703
          %1742 = vmatprep.subr.bf16.mxu0 0
          %1743 = vmatpush2.bf16.xpose.msra.mxu0 0
          %1744 = vmatprep.subr.bf16.mxu0 0
          %1745 = vmatpush2.bf16.xpose.msra.mxu0 0
          %1746 = vmatprep.subr.bf16.mxu0 0
          %1747 = vmatpush2.bf16.xpose.msra.mxu0 0
          %1748 = vmatprep.subr.bf16.mxu0 0
          %1749 = vmatpush2.bf16.xpose.msra.mxu0 0
          %1750 = vmatprep.subr.bf16.mxu0 0
          %1751 = vmatpush2.bf16.xpose.msra.mxu0 0
          %1752 = vmatprep.subr.bf16.mxu0 0
          %1753 = vmatpush2.bf16.xpose.msra.mxu0 0
          %1754 = vmatprep.subr.bf16.mxu0 0
          %1755 = vmatpush2.bf16.xpose.msra.mxu0 0
          %1756 = vmatprep.subr.bf16.mxu0 0
          %1757 = vmatpush2.bf16.xpose.msra.mxu0 0
          %1758 = vmatprep.mubr.bf16.mxu0 0
          %1759 = vmatmul.mubr.bf16.gmra.mxu0 %v1636
          %v1760 = vpop.f32.mrf.mxu0
          %v1761 = vadd.f32 %v1724, %v1760
          %v1762 = vpop.f32.mrf.mxu0
          %v1763 = vpop.f32.mrf.mxu0
          %v1764 = vadd.f32 %v1724, %v1763
          %v1765 = vpop.f32.mrf.mxu0
          %1766 = vdwg.mxu0
          %1767 = vmax.xlane.f32.xlu0 %v1761
          %v1768 = vpop.xlane.xlu0 %1767
          %1769 = vmax.xlane.f32.xlu0 %v1764
          %v1770 = vpop.xlane.xlu0 %1769
          %v1771 = vsub.f32 %v1761, %v1768
          %v1772 = vsub.f32 %v1764, %v1770
          %v1773 = vmul.f32 %v1771, 1.442695
          %v1774 = vpow.pop %v1773
          %v1775 = vmul.f32 %v1772, 1.442695
          %v1776 = vpow.pop %v1775
          %v1777 = vld [vmem:[%s24] sm:$0xff]
          %v1778 = vld [vmem:[%s24 + $0x8] sm:$0xff]
          %v1779 = vld [vmem:[%s24 + $0x10] sm:$0xff]
          %v1780 = vld [vmem:[%s24 + $0x18] sm:$0xff]
          %v1781 = vld [vmem:[%s24 + $0x20] sm:$0xff]
          %v1782 = vld [vmem:[%s24 + $0x28] sm:$0xff]
          %v1783 = vld [vmem:[%s24 + $0x30] sm:$0xff]
          %v1784 = vld [vmem:[%s24 + $0x38] sm:$0xff]
          %v1785 = vld [vmem:[%s24 + $0x40] sm:$0xff]
          %v1786 = vld [vmem:[%s24 + $0x48] sm:$0xff]
          %v1787 = vld [vmem:[%s24 + $0x50] sm:$0xff]
          %v1788 = vld [vmem:[%s24 + $0x58] sm:$0xff]
          %v1789 = vld [vmem:[%s24 + $0x60] sm:$0xff]
          %v1790 = vld [vmem:[%s24 + $0x68] sm:$0xff]
          %v1791 = vld [vmem:[%s24 + $0x70] sm:$0xff]
          %v1792 = vld [vmem:[%s24 + $0x78] sm:$0xff]
          %1793 = vmatprep.subr.mxu0 0.0
          %1794 = vmatpush1.msra.mxu0 %v1792
          %1795 = vmatprep.subr.mxu0 0.0
          %1796 = vmatpush1.msra.mxu0 %v1791
          %1797 = vmatprep.subr.mxu0 0.0
          %1798 = vmatpush1.msra.mxu0 %v1790
          %1799 = vmatprep.subr.mxu0 0.0
          %1800 = vmatpush1.msra.mxu0 %v1789
          %1801 = vmatprep.subr.mxu0 0.0
          %1802 = vmatpush1.msra.mxu0 %v1788
          %1803 = vmatprep.subr.mxu0 0.0
          %1804 = vmatpush1.msra.mxu0 %v1787
          %1805 = vmatprep.subr.mxu0 0.0
          %1806 = vmatpush1.msra.mxu0 %v1786
          %1807 = vmatprep.subr.mxu0 0.0
          %1808 = vmatpush1.msra.mxu0 %v1785
          %1809 = vmatprep.subr.mxu0 0.0
          %1810 = vmatpush1.msra.mxu0 %v1784
          %1811 = vmatprep.subr.mxu0 0.0
          %1812 = vmatpush1.msra.mxu0 %v1783
          %1813 = vmatprep.subr.mxu0 0.0
          %1814 = vmatpush1.msra.mxu0 %v1782
          %1815 = vmatprep.subr.mxu0 0.0
          %1816 = vmatpush1.msra.mxu0 %v1781
          %1817 = vmatprep.subr.mxu0 0.0
          %1818 = vmatpush1.msra.mxu0 %v1780
          %1819 = vmatprep.subr.mxu0 0.0
          %1820 = vmatpush1.msra.mxu0 %v1779
          %1821 = vmatprep.subr.mxu0 0.0
          %1822 = vmatpush1.msra.mxu0 %v1778
          %1823 = vmatprep.subr.mxu0 0.0
          %1824 = vmatpush1.msra.mxu0 %v1777
          %1825 = vmatprep.subr.mxu0 0.0
          %1826 = vmatpush2.msra.mxu0 0.0
          %1827 = vmatprep.subr.mxu0 0.0
          %1828 = vmatpush2.msra.mxu0 0.0
          %1829 = vmatprep.subr.mxu0 0.0
          %1830 = vmatpush2.msra.mxu0 0.0
          %1831 = vmatprep.subr.mxu0 0.0
          %1832 = vmatpush2.msra.mxu0 0.0
          %1833 = vmatprep.subr.mxu0 0.0
          %1834 = vmatpush2.msra.mxu0 0.0
          %1835 = vmatprep.subr.mxu0 0.0
          %1836 = vmatpush2.msra.mxu0 0.0
          %1837 = vmatprep.subr.mxu0 0.0
          %1838 = vmatpush2.msra.mxu0 0.0
          %1839 = vmatprep.subr.mxu0 0.0
          %1840 = vmatpush2.msra.mxu0 0.0
          %1841 = vmatprep.subr.mxu0 0.0
          %1842 = vmatpush2.msra.mxu0 0.0
          %1843 = vmatprep.subr.mxu0 0.0
          %1844 = vmatpush2.msra.mxu0 0.0
          %1845 = vmatprep.subr.mxu0 0.0
          %1846 = vmatpush2.msra.mxu0 0.0
          %1847 = vmatprep.subr.mxu0 0.0
          %1848 = vmatpush2.msra.mxu0 0.0
          %1849 = vmatprep.subr.mxu0 0.0
          %1850 = vmatpush2.msra.mxu0 0.0
          %1851 = vmatprep.subr.mxu0 0.0
          %1852 = vmatpush2.msra.mxu0 0.0
          %1853 = vmatprep.subr.mxu0 0.0
          %1854 = vmatpush2.msra.mxu0 0.0
          %1855 = vmatprep.subr.mxu0 0.0
          %1856 = vmatpush2.msra.mxu0 0.0
          %1857 = vmatprep.mubr.f32.mxu0 0.0
          %1858 = vmatmul.mubr.f32.gmra.mxu0 %v1774
          %v1859 = vpop.f32.mrf.mxu0
          %v1860 = vadd.f32 0.0, %v1859
          %v1861 = vpop.f32.mrf.mxu0
          %1862 = vmatprep.mubr.f32.mxu0 0.0
          %1863 = vmatmul.mubr.f32.gmra.mxu0 %v1776
          %v1864 = vpop.f32.mrf.mxu0
          %v1865 = vadd.f32 0.0, %v1864
          %v1866 = vpop.f32.mrf.mxu0
          %1867 = vdwg.mxu0
          %v1868 = vrcp.pop %v1860
          %v1869 = vrcp.pop %v1865
          %v1870 = vmul.f32 %v1774, %v1868
          %v1871 = vmul.f32 %v1776, %v1869
          %v1872 = vpack.c.bf16 %v1871, %v1870
          %1873 = vmatprep.subr.bf16.mxu0 0
          %1874 = vmatpush1.bf16.msra.mxu0 %v1718
          %1875 = vmatprep.subr.bf16.mxu0 0
          %1876 = vmatpush1.bf16.msra.mxu0 %v1717
          %1877 = vmatprep.subr.bf16.mxu0 0
          %1878 = vmatpush1.bf16.msra.mxu0 %v1716
          %1879 = vmatprep.subr.bf16.mxu0 0
          %1880 = vmatpush1.bf16.msra.mxu0 %v1715
          %1881 = vmatprep.subr.bf16.mxu0 0
          %1882 = vmatpush1.bf16.msra.mxu0 %v1714
          %1883 = vmatprep.subr.bf16.mxu0 0
          %1884 = vmatpush1.bf16.msra.mxu0 %v1713
          %1885 = vmatprep.subr.bf16.mxu0 0
          %1886 = vmatpush1.bf16.msra.mxu0 %v1712
          %1887 = vmatprep.subr.bf16.mxu0 0
          %1888 = vmatpush1.bf16.msra.mxu0 %v1711
          %1889 = vmatprep.subr.bf16.mxu0 0
          %1890 = vmatpush2.bf16.msra.mxu0 0
          %1891 = vmatprep.subr.bf16.mxu0 0
          %1892 = vmatpush2.bf16.msra.mxu0 0
          %1893 = vmatprep.subr.bf16.mxu0 0
          %1894 = vmatpush2.bf16.msra.mxu0 0
          %1895 = vmatprep.subr.bf16.mxu0 0
          %1896 = vmatpush2.bf16.msra.mxu0 0
          %1897 = vmatprep.subr.bf16.mxu0 0
          %1898 = vmatpush2.bf16.msra.mxu0 0
          %1899 = vmatprep.subr.bf16.mxu0 0
          %1900 = vmatpush2.bf16.msra.mxu0 0
          %1901 = vmatprep.subr.bf16.mxu0 0
          %1902 = vmatpush2.bf16.msra.mxu0 0
          %1903 = vmatprep.subr.bf16.mxu0 0
          %1904 = vmatpush2.bf16.msra.mxu0 0
          %1905 = vmatprep.mubr.bf16.mxu0 0
          %1906 = vmatmul.mubr.bf16.gmra.mxu0 %v1872
          %v1907 = vpop.f32.mrf.mxu0
          %v1908 = vadd.f32 0.0, %v1907
          %v1909 = vpop.f32.mrf.mxu0
          %v1910 = vpop.f32.mrf.mxu0
          %v1911 = vadd.f32 0.0, %v1910
          %v1912 = vpop.f32.mrf.mxu0
          %1913 = vdwg.mxu0
          %v1914 = vpack.c.bf16 %v1911, %v1908
          %s1915 = smul.u32 %s1319, 16
          %s1916 = smul.addr %s1915, 4
          %s1917 = scalar_lea.vmem [#allocation18], %s1916
          %v1918 = vld [vmem:[%s1917] sm:$0xf]
          %v1919 = vld [vmem:[%s1917 + $0x4] sm:$0xf]
          %v1920 = vld [vmem:[%s1917 + $0x8] sm:$0xf]
          %v1921 = vld [vmem:[%s1917 + $0xc] sm:$0xf]
          %v1922 = vld [vmem:[%s1917 + $0x10] sm:$0xf]
          %v1923 = vld [vmem:[%s1917 + $0x14] sm:$0xf]
          %v1924 = vld [vmem:[%s1917 + $0x18] sm:$0xf]
          %v1925 = vld [vmem:[%s1917 + $0x1c] sm:$0xf]
          %v1926 = vld [vmem:[%s1917 + $0x20] sm:$0xf]
          %v1927 = vld [vmem:[%s1917 + $0x24] sm:$0xf]
          %v1928 = vld [vmem:[%s1917 + $0x28] sm:$0xf]
          %v1929 = vld [vmem:[%s1917 + $0x2c] sm:$0xf]
          %v1930 = vld [vmem:[%s1917 + $0x30] sm:$0xf]
          %v1931 = vld [vmem:[%s1917 + $0x34] sm:$0xf]
          %v1932 = vld [vmem:[%s1917 + $0x38] sm:$0xf]
          %v1933 = vld [vmem:[%s1917 + $0x3c] sm:$0xf]
          %s1934 = scalar_lea.vmem [#allocation20], %s1319
          %v1935 = vld [vmem:[%s1934] sm:$0x1]
          %v1937 = vlaneseq
          %v1938 = vshrl.u32 %v1937, 7
          %v1939 = vsub.s32 0, %v1938
          %v1940 = vrot.slane %v1935, %v1939
          %v1958 = vunpack.c.l.b16 %v1918
          %v1959 = vunpack.c.l.b16 %v1919
          %v1960 = vunpack.c.l.b16 %v1920
          %v1961 = vunpack.c.l.b16 %v1921
          %v1962 = vunpack.c.l.b16 %v1922
          %v1963 = vunpack.c.l.b16 %v1923
          %v1964 = vunpack.c.l.b16 %v1924
          %v1965 = vunpack.c.l.b16 %v1925
          %v1966 = vunpack.c.l.b16 %v1926
          %v1967 = vunpack.c.l.b16 %v1927
          %v1968 = vunpack.c.l.b16 %v1928
          %v1969 = vunpack.c.l.b16 %v1929
          %v1970 = vunpack.c.l.b16 %v1930
          %v1971 = vunpack.c.l.b16 %v1931
          %v1972 = vunpack.c.l.b16 %v1932
          %v1973 = vunpack.c.l.b16 %v1933
          %v1974 = vpack.c.b16 %v1959, %v1958
          %v1975 = vpack.c.b16 %v1961, %v1960
          %v1976 = vpack.c.b16 %v1963, %v1962
          %v1977 = vpack.c.b16 %v1965, %v1964
          %v1978 = vpack.c.b16 %v1967, %v1966
          %v1979 = vpack.c.b16 %v1969, %v1968
          %v1980 = vpack.c.b16 %v1971, %v1970
          %v1981 = vpack.c.b16 %v1973, %v1972
          %1990 = vmatprep.subr.bf16.mxu0 0
          %1991 = vmatpush1.bf16.msra.mxu0 %v1981
          %1992 = vmatprep.subr.bf16.mxu0 0
          %1993 = vmatpush1.bf16.msra.mxu0 %v1980
          %1994 = vmatprep.subr.bf16.mxu0 0
          %1995 = vmatpush1.bf16.msra.mxu0 %v1979
          %1996 = vmatprep.subr.bf16.mxu0 0
          %1997 = vmatpush1.bf16.msra.mxu0 %v1978
          %1998 = vmatprep.subr.bf16.mxu0 0
          %1999 = vmatpush1.bf16.msra.mxu0 %v1977
          %2000 = vmatprep.subr.bf16.mxu0 0
          %2001 = vmatpush1.bf16.msra.mxu0 %v1976
          %2002 = vmatprep.subr.bf16.mxu0 0
          %2003 = vmatpush1.bf16.msra.mxu0 %v1975
          %2004 = vmatprep.subr.bf16.mxu0 0
          %2005 = vmatpush1.bf16.msra.mxu0 %v1974
          %2006 = vmatprep.subr.bf16.mxu0 0
          %2007 = vmatpush2.bf16.msra.mxu0 0
          %2008 = vmatprep.subr.bf16.mxu0 0
          %2009 = vmatpush2.bf16.msra.mxu0 0
          %2010 = vmatprep.subr.bf16.mxu0 0
          %2011 = vmatpush2.bf16.msra.mxu0 0
          %2012 = vmatprep.subr.bf16.mxu0 0
          %2013 = vmatpush2.bf16.msra.mxu0 0
          %2014 = vmatprep.subr.bf16.mxu0 0
          %2015 = vmatpush2.bf16.msra.mxu0 0
          %2016 = vmatprep.subr.bf16.mxu0 0
          %2017 = vmatpush2.bf16.msra.mxu0 0
          %2018 = vmatprep.subr.bf16.mxu0 0
          %2019 = vmatpush2.bf16.msra.mxu0 0
          %2020 = vmatprep.subr.bf16.mxu0 0
          %2021 = vmatpush2.bf16.msra.mxu0 0
          %2022 = vmatprep.mubr.bf16.mxu0 0
          %2023 = vmatmul.mubr.bf16.gmra.mxu0 %v1914
          %v2024 = vpop.f32.mrf.mxu0
          %v2025 = vadd.f32 %v1940, %v2024
          %v2026 = vpop.f32.mrf.mxu0
          %v2027 = vpop.f32.mrf.mxu0
          %v2028 = vadd.f32 %v1940, %v2027
          %v2029 = vpop.f32.mrf.mxu0
          %2030 = vdwg.mxu0
          %v2031 = vadd.f32 %v1324, %v2025
          %v2032 = vadd.f32 %v1325, %v2028
          %s2033 = scalar_lea.vmem [#allocation21], %s1319
          %v2034 = vld [vmem:[%s2033] sm:$0x1]
          %s2035 = scalar_lea.vmem [#allocation23], %s1319
          %v2036 = vld [vmem:[%s2035] sm:$0x1]
          %2037 = vadd.xlane.f32.xlu0 %v2031
          %v2038 = vpop.xlane.xlu0 %2037
          %2039 = vadd.xlane.f32.xlu0 %v2032
          %v2040 = vpop.xlane.xlu0 %2039
          %v2041 = vmul.f32 %v2038, %v1334
          %v2042 = vmul.f32 %v2040, %v1334
          %v2043 = vsub.f32 %v2031, %v2041
          %v2044 = vsub.f32 %v2032, %v2042
          %v2045 = vmul.f32 %v2043, %v2043
          %v2046 = vmul.f32 %v2044, %v2044
          %2047 = vadd.xlane.f32.xlu0 %v2045
          %v2048 = vpop.xlane.xlu0 %2047
          %2049 = vadd.xlane.f32.xlu0 %v2046
          %v2050 = vpop.xlane.xlu0 %2049
          %v2051 = vmul.f32 %v2048, %v1334
          %v2052 = vmul.f32 %v2050, %v1334
          %v2053 = vadd.f32 %v2051, 1e-05
          %v2054 = vadd.f32 %v2052, 1e-05
          %v2055 = vrsqrt.pop %v2053
          %v2056 = vrsqrt.pop %v2054
          %v2057 = vmul.f32 %v2043, %v2055
          %v2058 = vmul.f32 %v2044, %v2056
          %v2060 = vlaneseq
          %v2061 = vshrl.u32 %v2060, 7
          %v2062 = vsub.s32 0, %v2061
          %v2063 = vrot.slane %v2034, %v2062
          %v2065 = vmul.f32 %v2057, %v2063
          %v2066 = vmul.f32 %v2058, %v2063
          %v2068 = vlaneseq
          %v2069 = vshrl.u32 %v2068, 7
          %v2070 = vsub.s32 0, %v2069
          %v2071 = vrot.slane %v2036, %v2070
          %v2073 = vadd.f32 %v2065, %v2071
          %v2074 = vadd.f32 %v2066, %v2071
          %v2075 = vpack.c.bf16 %v2074, %v2073
          %s2076 = smul.u32 %s1319, 64
          %s2077 = smul.addr %s2076, 4
          %s2078 = scalar_lea.vmem [#allocation24], %s2077
          %v2079 = vld [vmem:[%s2078] sm:$0xff]
          %v2080 = vld [vmem:[%s2078 + $0x8] sm:$0xff]
          %v2081 = vld [vmem:[%s2078 + $0x10] sm:$0xff]
          %v2082 = vld [vmem:[%s2078 + $0x18] sm:$0xff]
          %v2083 = vld [vmem:[%s2078 + $0x20] sm:$0xff]
          %v2084 = vld [vmem:[%s2078 + $0x28] sm:$0xff]
          %v2085 = vld [vmem:[%s2078 + $0x30] sm:$0xff]
          %v2086 = vld [vmem:[%s2078 + $0x38] sm:$0xff]
          %v2087 = vld [vmem:[%s2078 + $0x40] sm:$0xff]
          %v2088 = vld [vmem:[%s2078 + $0x48] sm:$0xff]
          %v2089 = vld [vmem:[%s2078 + $0x50] sm:$0xff]
          %v2090 = vld [vmem:[%s2078 + $0x58] sm:$0xff]
          %v2091 = vld [vmem:[%s2078 + $0x60] sm:$0xff]
          %v2092 = vld [vmem:[%s2078 + $0x68] sm:$0xff]
          %v2093 = vld [vmem:[%s2078 + $0x70] sm:$0xff]
          %v2094 = vld [vmem:[%s2078 + $0x78] sm:$0xff]
          %v2095 = vld [vmem:[%s2078 + $0x80] sm:$0xff]
          %v2096 = vld [vmem:[%s2078 + $0x88] sm:$0xff]
          %v2097 = vld [vmem:[%s2078 + $0x90] sm:$0xff]
          %v2098 = vld [vmem:[%s2078 + $0x98] sm:$0xff]
          %v2099 = vld [vmem:[%s2078 + $0xa0] sm:$0xff]
          %v2100 = vld [vmem:[%s2078 + $0xa8] sm:$0xff]
          %v2101 = vld [vmem:[%s2078 + $0xb0] sm:$0xff]
          %v2102 = vld [vmem:[%s2078 + $0xb8] sm:$0xff]
          %v2103 = vld [vmem:[%s2078 + $0xc0] sm:$0xff]
          %v2104 = vld [vmem:[%s2078 + $0xc8] sm:$0xff]
          %v2105 = vld [vmem:[%s2078 + $0xd0] sm:$0xff]
          %v2106 = vld [vmem:[%s2078 + $0xd8] sm:$0xff]
          %v2107 = vld [vmem:[%s2078 + $0xe0] sm:$0xff]
          %v2108 = vld [vmem:[%s2078 + $0xe8] sm:$0xff]
          %v2109 = vld [vmem:[%s2078 + $0xf0] sm:$0xff]
          %v2110 = vld [vmem:[%s2078 + $0xf8] sm:$0xff]
          %s2111 = smul.u32 %s1319, 4
          %s2112 = scalar_lea.vmem [#allocation26], %s2111
          %v2113 = vld [vmem:[%s2112] sm:$0xf]
          %v2115 = vlaneseq
          %v2116 = vshrl.u32 %v2115, 7
          %v2117 = vsub.s32 0, %v2116
          %v2118 = vrot.slane %v2113, %v2117
          %v2119 = vlaneseq
          %v2120 = vshrl.u32 %v2119, 7
          %v2121 = vsub.s32 1, %v2120
          %v2122 = vrot.slane %v2113, %v2121
          %v2123 = vlaneseq
          %v2124 = vshrl.u32 %v2123, 7
          %v2125 = vsub.s32 2, %v2124
          %v2126 = vrot.slane %v2113, %v2125
          %v2127 = vlaneseq
          %v2128 = vshrl.u32 %v2127, 7
          %v2129 = vsub.s32 3, %v2128
          %v2130 = vrot.slane %v2113, %v2129
          %v2167 = vunpack.c.l.b16 %v2079
          %v2168 = vunpack.c.h.b16 %v2079
          %v2169 = vunpack.c.l.b16 %v2080
          %v2170 = vunpack.c.h.b16 %v2080
          %v2171 = vunpack.c.l.b16 %v2081
          %v2172 = vunpack.c.h.b16 %v2081
          %v2173 = vunpack.c.l.b16 %v2082
          %v2174 = vunpack.c.h.b16 %v2082
          %v2175 = vunpack.c.l.b16 %v2083
          %v2176 = vunpack.c.h.b16 %v2083
          %v2177 = vunpack.c.l.b16 %v2084
          %v2178 = vunpack.c.h.b16 %v2084
          %v2179 = vunpack.c.l.b16 %v2085
          %v2180 = vunpack.c.h.b16 %v2085
          %v2181 = vunpack.c.l.b16 %v2086
          %v2182 = vunpack.c.h.b16 %v2086
          %v2183 = vunpack.c.l.b16 %v2087
          %v2184 = vunpack.c.h.b16 %v2087
          %v2185 = vunpack.c.l.b16 %v2088
          %v2186 = vunpack.c.h.b16 %v2088
          %v2187 = vunpack.c.l.b16 %v2089
          %v2188 = vunpack.c.h.b16 %v2089
          %v2189 = vunpack.c.l.b16 %v2090
          %v2190 = vunpack.c.h.b16 %v2090
          %v2191 = vunpack.c.l.b16 %v2091
          %v2192 = vunpack.c.h.b16 %v2091
          %v2193 = vunpack.c.l.b16 %v2092
          %v2194 = vunpack.c.h.b16 %v2092
          %v2195 = vunpack.c.l.b16 %v2093
          %v2196 = vunpack.c.h.b16 %v2093
          %v2197 = vunpack.c.l.b16 %v2094
          %v2198 = vunpack.c.h.b16 %v2094
          %v2199 = vunpack.c.l.b16 %v2095
          %v2200 = vunpack.c.h.b16 %v2095
          %v2201 = vunpack.c.l.b16 %v2096
          %v2202 = vunpack.c.h.b16 %v2096
          %v2203 = vunpack.c.l.b16 %v2097
          %v2204 = vunpack.c.h.b16 %v2097
          %v2205 = vunpack.c.l.b16 %v2098
          %v2206 = vunpack.c.h.b16 %v2098
          %v2207 = vunpack.c.l.b16 %v2099
          %v2208 = vunpack.c.h.b16 %v2099
          %v2209 = vunpack.c.l.b16 %v2100
          %v2210 = vunpack.c.h.b16 %v2100
          %v2211 = vunpack.c.l.b16 %v2101
          %v2212 = vunpack.c.h.b16 %v2101
          %v2213 = vunpack.c.l.b16 %v2102
          %v2214 = vunpack.c.h.b16 %v2102
          %v2215 = vunpack.c.l.b16 %v2103
          %v2216 = vunpack.c.h.b16 %v2103
          %v2217 = vunpack.c.l.b16 %v2104
          %v2218 = vunpack.c.h.b16 %v2104
          %v2219 = vunpack.c.l.b16 %v2105
          %v2220 = vunpack.c.h.b16 %v2105
          %v2221 = vunpack.c.l.b16 %v2106
          %v2222 = vunpack.c.h.b16 %v2106
          %v2223 = vunpack.c.l.b16 %v2107
          %v2224 = vunpack.c.h.b16 %v2107
          %v2225 = vunpack.c.l.b16 %v2108
          %v2226 = vunpack.c.h.b16 %v2108
          %v2227 = vunpack.c.l.b16 %v2109
          %v2228 = vunpack.c.h.b16 %v2109
          %v2229 = vunpack.c.l.b16 %v2110
          %v2230 = vunpack.c.h.b16 %v2110
          %v2231 = vpack.c.b16 %v2171, %v2167
          %v2232 = vpack.c.b16 %v2172, %v2168
          %v2233 = vpack.c.b16 %v2173, %v2169
          %v2234 = vpack.c.b16 %v2174, %v2170
          %v2235 = vpack.c.b16 %v2179, %v2175
          %v2236 = vpack.c.b16 %v2180, %v2176
          %v2237 = vpack.c.b16 %v2181, %v2177
          %v2238 = vpack.c.b16 %v2182, %v2178
          %v2239 = vpack.c.b16 %v2187, %v2183
          %v2240 = vpack.c.b16 %v2188, %v2184
          %v2241 = vpack.c.b16 %v2189, %v2185
          %v2242 = vpack.c.b16 %v2190, %v2186
          %v2243 = vpack.c.b16 %v2195, %v2191
          %v2244 = vpack.c.b16 %v2196, %v2192
          %v2245 = vpack.c.b16 %v2197, %v2193
          %v2246 = vpack.c.b16 %v2198, %v2194
          %v2247 = vpack.c.b16 %v2203, %v2199
          %v2248 = vpack.c.b16 %v2204, %v2200
          %v2249 = vpack.c.b16 %v2205, %v2201
          %v2250 = vpack.c.b16 %v2206, %v2202
          %v2251 = vpack.c.b16 %v2211, %v2207
          %v2252 = vpack.c.b16 %v2212, %v2208
          %v2253 = vpack.c.b16 %v2213, %v2209
          %v2254 = vpack.c.b16 %v2214, %v2210
          %v2255 = vpack.c.b16 %v2219, %v2215
          %v2256 = vpack.c.b16 %v2220, %v2216
          %v2257 = vpack.c.b16 %v2221, %v2217
          %v2258 = vpack.c.b16 %v2222, %v2218
          %v2259 = vpack.c.b16 %v2227, %v2223
          %v2260 = vpack.c.b16 %v2228, %v2224
          %v2261 = vpack.c.b16 %v2229, %v2225
          %v2262 = vpack.c.b16 %v2230, %v2226
          %2295 = vmatprep.subr.bf16.mxu0 %v2260
          %2296 = vmatpush1.bf16.msra.mxu0 %v2259
          %2297 = vmatprep.subr.bf16.mxu0 %v2256
          %2298 = vmatpush1.bf16.msra.mxu0 %v2255
          %2299 = vmatprep.subr.bf16.mxu0 %v2252
          %2300 = vmatpush1.bf16.msra.mxu0 %v2251
          %2301 = vmatprep.subr.bf16.mxu0 %v2248
          %2302 = vmatpush1.bf16.msra.mxu0 %v2247
          %2303 = vmatprep.subr.bf16.mxu0 %v2244
          %2304 = vmatpush1.bf16.msra.mxu0 %v2243
          %2305 = vmatprep.subr.bf16.mxu0 %v2240
          %2306 = vmatpush1.bf16.msra.mxu0 %v2239
          %2307 = vmatprep.subr.bf16.mxu0 %v2236
          %2308 = vmatpush1.bf16.msra.mxu0 %v2235
          %2309 = vmatprep.subr.bf16.mxu0 %v2232
          %2310 = vmatpush1.bf16.msra.mxu0 %v2231
          %2311 = vmatprep.subr.bf16.mxu0 0
          %2312 = vmatpush2.bf16.msra.mxu0 0
          %2313 = vmatprep.subr.bf16.mxu0 0
          %2314 = vmatpush2.bf16.msra.mxu0 0
          %2315 = vmatprep.subr.bf16.mxu0 0
          %2316 = vmatpush2.bf16.msra.mxu0 0
          %2317 = vmatprep.subr.bf16.mxu0 0
          %2318 = vmatpush2.bf16.msra.mxu0 0
          %2319 = vmatprep.subr.bf16.mxu0 0
          %2320 = vmatpush2.bf16.msra.mxu0 0
          %2321 = vmatprep.subr.bf16.mxu0 0
          %2322 = vmatpush2.bf16.msra.mxu0 0
          %2323 = vmatprep.subr.bf16.mxu0 0
          %2324 = vmatpush2.bf16.msra.mxu0 0
          %2325 = vmatprep.subr.bf16.mxu0 0
          %2326 = vmatpush2.bf16.msra.mxu0 0
          %2327 = vmatprep.mubr.bf16.mxu0 0
          %2328 = vmatmul.mubr.bf16.gmra.mxu0 %v2075
          %v2329 = vpop.f32.mrf.mxu0
          %v2330 = vadd.f32 %v2118, %v2329
          %v2331 = vpop.f32.mrf.mxu0
          %v2332 = vadd.f32 %v2122, %v2331
          %v2333 = vpop.f32.mrf.mxu0
          %v2334 = vadd.f32 %v2118, %v2333
          %v2335 = vpop.f32.mrf.mxu0
          %v2336 = vadd.f32 %v2122, %v2335
          %2337 = vdwg.mxu0
          %2338 = vmatprep.subr.bf16.mxu0 %v2262
          %2339 = vmatpush1.bf16.msra.mxu0 %v2261
          %2340 = vmatprep.subr.bf16.mxu0 %v2258
          %2341 = vmatpush1.bf16.msra.mxu0 %v2257
          %2342 = vmatprep.subr.bf16.mxu0 %v2254
          %2343 = vmatpush1.bf16.msra.mxu0 %v2253
          %2344 = vmatprep.subr.bf16.mxu0 %v2250
          %2345 = vmatpush1.bf16.msra.mxu0 %v2249
          %2346 = vmatprep.subr.bf16.mxu0 %v2246
          %2347 = vmatpush1.bf16.msra.mxu0 %v2245
          %2348 = vmatprep.subr.bf16.mxu0 %v2242
          %2349 = vmatpush1.bf16.msra.mxu0 %v2241
          %2350 = vmatprep.subr.bf16.mxu0 %v2238
          %2351 = vmatpush1.bf16.msra.mxu0 %v2237
          %2352 = vmatprep.subr.bf16.mxu0 %v2234
          %2353 = vmatpush1.bf16.msra.mxu0 %v2233
          %2354 = vmatprep.subr.bf16.mxu0 0
          %2355 = vmatpush2.bf16.msra.mxu0 0
          %2356 = vmatprep.subr.bf16.mxu0 0
          %2357 = vmatpush2.bf16.msra.mxu0 0
          %2358 = vmatprep.subr.bf16.mxu0 0
          %2359 = vmatpush2.bf16.msra.mxu0 0
          %2360 = vmatprep.subr.bf16.mxu0 0
          %2361 = vmatpush2.bf16.msra.mxu0 0
          %2362 = vmatprep.subr.bf16.mxu0 0
          %2363 = vmatpush2.bf16.msra.mxu0 0
          %2364 = vmatprep.subr.bf16.mxu0 0
          %2365 = vmatpush2.bf16.msra.mxu0 0
          %2366 = vmatprep.subr.bf16.mxu0 0
          %2367 = vmatpush2.bf16.msra.mxu0 0
          %2368 = vmatprep.subr.bf16.mxu0 0
          %2369 = vmatpush2.bf16.msra.mxu0 0
          %2370 = vmatprep.mubr.bf16.mxu0 0
          %2371 = vmatmul.mubr.bf16.gmra.mxu0 %v2075
          %v2372 = vpop.f32.mrf.mxu0
          %v2373 = vadd.f32 %v2126, %v2372
          %v2374 = vpop.f32.mrf.mxu0
          %v2375 = vadd.f32 %v2130, %v2374
          %v2376 = vpop.f32.mrf.mxu0
          %v2377 = vadd.f32 %v2126, %v2376
          %v2378 = vpop.f32.mrf.mxu0
          %v2379 = vadd.f32 %v2130, %v2378
          %2380 = vdwg.mxu0
          %v2381 = vmax.f32 %v2330, 0.0
          %v2382 = vmax.f32 %v2332, 0.0
          %v2383 = vmax.f32 %v2373, 0.0
          %v2384 = vmax.f32 %v2375, 0.0
          %v2385 = vmax.f32 %v2334, 0.0
          %v2386 = vmax.f32 %v2336, 0.0
          %v2387 = vmax.f32 %v2377, 0.0
          %v2388 = vmax.f32 %v2379, 0.0
          %v2389 = vpack.c.bf16 %v2385, %v2381
          %v2390 = vpack.c.bf16 %v2386, %v2382
          %v2391 = vpack.c.bf16 %v2387, %v2383
          %v2392 = vpack.c.bf16 %v2388, %v2384
          %s2393 = smul.addr %s2076, 4
          %s2394 = scalar_lea.vmem [#allocation27], %s2393
          %v2395 = vld [vmem:[%s2394] sm:$0xf]
          %v2396 = vld [vmem:[%s2394 + $0x4] sm:$0xf]
          %v2397 = vld [vmem:[%s2394 + $0x8] sm:$0xf]
          %v2398 = vld [vmem:[%s2394 + $0xc] sm:$0xf]
          %v2399 = vld [vmem:[%s2394 + $0x10] sm:$0xf]
          %v2400 = vld [vmem:[%s2394 + $0x14] sm:$0xf]
          %v2401 = vld [vmem:[%s2394 + $0x18] sm:$0xf]
          %v2402 = vld [vmem:[%s2394 + $0x1c] sm:$0xf]
          %v2403 = vld [vmem:[%s2394 + $0x20] sm:$0xf]
          %v2404 = vld [vmem:[%s2394 + $0x24] sm:$0xf]
          %v2405 = vld [vmem:[%s2394 + $0x28] sm:$0xf]
          %v2406 = vld [vmem:[%s2394 + $0x2c] sm:$0xf]
          %v2407 = vld [vmem:[%s2394 + $0x30] sm:$0xf]
          %v2408 = vld [vmem:[%s2394 + $0x34] sm:$0xf]
          %v2409 = vld [vmem:[%s2394 + $0x38] sm:$0xf]
          %v2410 = vld [vmem:[%s2394 + $0x3c] sm:$0xf]
          %v2411 = vld [vmem:[%s2394 + $0x40] sm:$0xf]
          %v2412 = vld [vmem:[%s2394 + $0x44] sm:$0xf]
          %v2413 = vld [vmem:[%s2394 + $0x48] sm:$0xf]
          %v2414 = vld [vmem:[%s2394 + $0x4c] sm:$0xf]
          %v2415 = vld [vmem:[%s2394 + $0x50] sm:$0xf]
          %v2416 = vld [vmem:[%s2394 + $0x54] sm:$0xf]
          %v2417 = vld [vmem:[%s2394 + $0x58] sm:$0xf]
          %v2418 = vld [vmem:[%s2394 + $0x5c] sm:$0xf]
          %v2419 = vld [vmem:[%s2394 + $0x60] sm:$0xf]
          %v2420 = vld [vmem:[%s2394 + $0x64] sm:$0xf]
          %v2421 = vld [vmem:[%s2394 + $0x68] sm:$0xf]
          %v2422 = vld [vmem:[%s2394 + $0x6c] sm:$0xf]
          %v2423 = vld [vmem:[%s2394 + $0x70] sm:$0xf]
          %v2424 = vld [vmem:[%s2394 + $0x74] sm:$0xf]
          %v2425 = vld [vmem:[%s2394 + $0x78] sm:$0xf]
          %v2426 = vld [vmem:[%s2394 + $0x7c] sm:$0xf]
          %v2427 = vld [vmem:[%s2394 + $0x80] sm:$0xf]
          %v2428 = vld [vmem:[%s2394 + $0x84] sm:$0xf]
          %v2429 = vld [vmem:[%s2394 + $0x88] sm:$0xf]
          %v2430 = vld [vmem:[%s2394 + $0x8c] sm:$0xf]
          %v2431 = vld [vmem:[%s2394 + $0x90] sm:$0xf]
          %v2432 = vld [vmem:[%s2394 + $0x94] sm:$0xf]
          %v2433 = vld [vmem:[%s2394 + $0x98] sm:$0xf]
          %v2434 = vld [vmem:[%s2394 + $0x9c] sm:$0xf]
          %v2435 = vld [vmem:[%s2394 + $0xa0] sm:$0xf]
          %v2436 = vld [vmem:[%s2394 + $0xa4] sm:$0xf]
          %v2437 = vld [vmem:[%s2394 + $0xa8] sm:$0xf]
          %v2438 = vld [vmem:[%s2394 + $0xac] sm:$0xf]
          %v2439 = vld [vmem:[%s2394 + $0xb0] sm:$0xf]
          %v2440 = vld [vmem:[%s2394 + $0xb4] sm:$0xf]
          %v2441 = vld [vmem:[%s2394 + $0xb8] sm:$0xf]
          %v2442 = vld [vmem:[%s2394 + $0xbc] sm:$0xf]
          %v2443 = vld [vmem:[%s2394 + $0xc0] sm:$0xf]
          %v2444 = vld [vmem:[%s2394 + $0xc4] sm:$0xf]
          %v2445 = vld [vmem:[%s2394 + $0xc8] sm:$0xf]
          %v2446 = vld [vmem:[%s2394 + $0xcc] sm:$0xf]
          %v2447 = vld [vmem:[%s2394 + $0xd0] sm:$0xf]
          %v2448 = vld [vmem:[%s2394 + $0xd4] sm:$0xf]
          %v2449 = vld [vmem:[%s2394 + $0xd8] sm:$0xf]
          %v2450 = vld [vmem:[%s2394 + $0xdc] sm:$0xf]
          %v2451 = vld [vmem:[%s2394 + $0xe0] sm:$0xf]
          %v2452 = vld [vmem:[%s2394 + $0xe4] sm:$0xf]
          %v2453 = vld [vmem:[%s2394 + $0xe8] sm:$0xf]
          %v2454 = vld [vmem:[%s2394 + $0xec] sm:$0xf]
          %v2455 = vld [vmem:[%s2394 + $0xf0] sm:$0xf]
          %v2456 = vld [vmem:[%s2394 + $0xf4] sm:$0xf]
          %v2457 = vld [vmem:[%s2394 + $0xf8] sm:$0xf]
          %v2458 = vld [vmem:[%s2394 + $0xfc] sm:$0xf]
          %s2459 = scalar_lea.vmem [#allocation29], %s1319
          %v2460 = vld [vmem:[%s2459] sm:$0x1]
          %v2462 = vlaneseq
          %v2463 = vshrl.u32 %v2462, 7
          %v2464 = vsub.s32 0, %v2463
          %v2465 = vrot.slane %v2460, %v2464
          %v2531 = vunpack.c.l.b16 %v2395
          %v2532 = vunpack.c.l.b16 %v2396
          %v2533 = vunpack.c.l.b16 %v2397
          %v2534 = vunpack.c.l.b16 %v2398
          %v2535 = vunpack.c.l.b16 %v2399
          %v2536 = vunpack.c.l.b16 %v2400
          %v2537 = vunpack.c.l.b16 %v2401
          %v2538 = vunpack.c.l.b16 %v2402
          %v2539 = vunpack.c.l.b16 %v2403
          %v2540 = vunpack.c.l.b16 %v2404
          %v2541 = vunpack.c.l.b16 %v2405
          %v2542 = vunpack.c.l.b16 %v2406
          %v2543 = vunpack.c.l.b16 %v2407
          %v2544 = vunpack.c.l.b16 %v2408
          %v2545 = vunpack.c.l.b16 %v2409
          %v2546 = vunpack.c.l.b16 %v2410
          %v2547 = vunpack.c.l.b16 %v2411
          %v2548 = vunpack.c.l.b16 %v2412
          %v2549 = vunpack.c.l.b16 %v2413
          %v2550 = vunpack.c.l.b16 %v2414
          %v2551 = vunpack.c.l.b16 %v2415
          %v2552 = vunpack.c.l.b16 %v2416
          %v2553 = vunpack.c.l.b16 %v2417
          %v2554 = vunpack.c.l.b16 %v2418
          %v2555 = vunpack.c.l.b16 %v2419
          %v2556 = vunpack.c.l.b16 %v2420
          %v2557 = vunpack.c.l.b16 %v2421
          %v2558 = vunpack.c.l.b16 %v2422
          %v2559 = vunpack.c.l.b16 %v2423
          %v2560 = vunpack.c.l.b16 %v2424
          %v2561 = vunpack.c.l.b16 %v2425
          %v2562 = vunpack.c.l.b16 %v2426
          %v2563 = vunpack.c.l.b16 %v2427
          %v2564 = vunpack.c.l.b16 %v2428
          %v2565 = vunpack.c.l.b16 %v2429
          %v2566 = vunpack.c.l.b16 %v2430
          %v2567 = vunpack.c.l.b16 %v2431
          %v2568 = vunpack.c.l.b16 %v2432
          %v2569 = vunpack.c.l.b16 %v2433
          %v2570 = vunpack.c.l.b16 %v2434
          %v2571 = vunpack.c.l.b16 %v2435
          %v2572 = vunpack.c.l.b16 %v2436
          %v2573 = vunpack.c.l.b16 %v2437
          %v2574 = vunpack.c.l.b16 %v2438
          %v2575 = vunpack.c.l.b16 %v2439
          %v2576 = vunpack.c.l.b16 %v2440
          %v2577 = vunpack.c.l.b16 %v2441
          %v2578 = vunpack.c.l.b16 %v2442
          %v2579 = vunpack.c.l.b16 %v2443
          %v2580 = vunpack.c.l.b16 %v2444
          %v2581 = vunpack.c.l.b16 %v2445
          %v2582 = vunpack.c.l.b16 %v2446
          %v2583 = vunpack.c.l.b16 %v2447
          %v2584 = vunpack.c.l.b16 %v2448
          %v2585 = vunpack.c.l.b16 %v2449
          %v2586 = vunpack.c.l.b16 %v2450
          %v2587 = vunpack.c.l.b16 %v2451
          %v2588 = vunpack.c.l.b16 %v2452
          %v2589 = vunpack.c.l.b16 %v2453
          %v2590 = vunpack.c.l.b16 %v2454
          %v2591 = vunpack.c.l.b16 %v2455
          %v2592 = vunpack.c.l.b16 %v2456
          %v2593 = vunpack.c.l.b16 %v2457
          %v2594 = vunpack.c.l.b16 %v2458
          %v2595 = vpack.c.b16 %v2532, %v2531
          %v2596 = vpack.c.b16 %v2534, %v2533
          %v2597 = vpack.c.b16 %v2536, %v2535
          %v2598 = vpack.c.b16 %v2538, %v2537
          %v2599 = vpack.c.b16 %v2540, %v2539
          %v2600 = vpack.c.b16 %v2542, %v2541
          %v2601 = vpack.c.b16 %v2544, %v2543
          %v2602 = vpack.c.b16 %v2546, %v2545
          %v2603 = vpack.c.b16 %v2548, %v2547
          %v2604 = vpack.c.b16 %v2550, %v2549
          %v2605 = vpack.c.b16 %v2552, %v2551
          %v2606 = vpack.c.b16 %v2554, %v2553
          %v2607 = vpack.c.b16 %v2556, %v2555
          %v2608 = vpack.c.b16 %v2558, %v2557
          %v2609 = vpack.c.b16 %v2560, %v2559
          %v2610 = vpack.c.b16 %v2562, %v2561
          %v2611 = vpack.c.b16 %v2564, %v2563
          %v2612 = vpack.c.b16 %v2566, %v2565
          %v2613 = vpack.c.b16 %v2568, %v2567
          %v2614 = vpack.c.b16 %v2570, %v2569
          %v2615 = vpack.c.b16 %v2572, %v2571
          %v2616 = vpack.c.b16 %v2574, %v2573
          %v2617 = vpack.c.b16 %v2576, %v2575
          %v2618 = vpack.c.b16 %v2578, %v2577
          %v2619 = vpack.c.b16 %v2580, %v2579
          %v2620 = vpack.c.b16 %v2582, %v2581
          %v2621 = vpack.c.b16 %v2584, %v2583
          %v2622 = vpack.c.b16 %v2586, %v2585
          %v2623 = vpack.c.b16 %v2588, %v2587
          %v2624 = vpack.c.b16 %v2590, %v2589
          %v2625 = vpack.c.b16 %v2592, %v2591
          %v2626 = vpack.c.b16 %v2594, %v2593
          %2659 = vmatprep.subr.bf16.mxu0 0
          %2660 = vmatpush1.bf16.msra.mxu0 %v2602
          %2661 = vmatprep.subr.bf16.mxu0 0
          %2662 = vmatpush1.bf16.msra.mxu0 %v2601
          %2663 = vmatprep.subr.bf16.mxu0 0
          %2664 = vmatpush1.bf16.msra.mxu0 %v2600
          %2665 = vmatprep.subr.bf16.mxu0 0
          %2666 = vmatpush1.bf16.msra.mxu0 %v2599
          %2667 = vmatprep.subr.bf16.mxu0 0
          %2668 = vmatpush1.bf16.msra.mxu0 %v2598
          %2669 = vmatprep.subr.bf16.mxu0 0
          %2670 = vmatpush1.bf16.msra.mxu0 %v2597
          %2671 = vmatprep.subr.bf16.mxu0 0
          %2672 = vmatpush1.bf16.msra.mxu0 %v2596
          %2673 = vmatprep.subr.bf16.mxu0 0
          %2674 = vmatpush1.bf16.msra.mxu0 %v2595
          %2675 = vmatprep.subr.bf16.mxu0 0
          %2676 = vmatpush2.bf16.msra.mxu0 %v2610
          %2677 = vmatprep.subr.bf16.mxu0 0
          %2678 = vmatpush2.bf16.msra.mxu0 %v2609
          %2679 = vmatprep.subr.bf16.mxu0 0
          %2680 = vmatpush2.bf16.msra.mxu0 %v2608
          %2681 = vmatprep.subr.bf16.mxu0 0
          %2682 = vmatpush2.bf16.msra.mxu0 %v2607
          %2683 = vmatprep.subr.bf16.mxu0 0
          %2684 = vmatpush2.bf16.msra.mxu0 %v2606
          %2685 = vmatprep.subr.bf16.mxu0 0
          %2686 = vmatpush2.bf16.msra.mxu0 %v2605
          %2687 = vmatprep.subr.bf16.mxu0 0
          %2688 = vmatpush2.bf16.msra.mxu0 %v2604
          %2689 = vmatprep.subr.bf16.mxu0 0
          %2690 = vmatpush2.bf16.msra.mxu0 %v2603
          %2691 = vmatprep.mubr.bf16.mxu0 %v2390
          %2692 = vmatmul.mubr.bf16.gmra.mxu0 %v2389
          %v2693 = vpop.f32.mrf.mxu0
          %v2694 = vadd.f32 %v2465, %v2693
          %v2695 = vpop.f32.mrf.mxu0
          %v2696 = vpop.f32.mrf.mxu0
          %v2697 = vadd.f32 %v2465, %v2696
          %v2698 = vpop.f32.mrf.mxu0
          %2699 = vdwg.mxu0
          %2700 = vmatprep.subr.bf16.mxu0 0
          %2701 = vmatpush1.bf16.msra.mxu0 %v2618
          %2702 = vmatprep.subr.bf16.mxu0 0
          %2703 = vmatpush1.bf16.msra.mxu0 %v2617
          %2704 = vmatprep.subr.bf16.mxu0 0
          %2705 = vmatpush1.bf16.msra.mxu0 %v2616
          %2706 = vmatprep.subr.bf16.mxu0 0
          %2707 = vmatpush1.bf16.msra.mxu0 %v2615
          %2708 = vmatprep.subr.bf16.mxu0 0
          %2709 = vmatpush1.bf16.msra.mxu0 %v2614
          %2710 = vmatprep.subr.bf16.mxu0 0
          %2711 = vmatpush1.bf16.msra.mxu0 %v2613
          %2712 = vmatprep.subr.bf16.mxu0 0
          %2713 = vmatpush1.bf16.msra.mxu0 %v2612
          %2714 = vmatprep.subr.bf16.mxu0 0
          %2715 = vmatpush1.bf16.msra.mxu0 %v2611
          %2716 = vmatprep.subr.bf16.mxu0 0
          %2717 = vmatpush2.bf16.msra.mxu0 %v2626
          %2718 = vmatprep.subr.bf16.mxu0 0
          %2719 = vmatpush2.bf16.msra.mxu0 %v2625
          %2720 = vmatprep.subr.bf16.mxu0 0
          %2721 = vmatpush2.bf16.msra.mxu0 %v2624
          %2722 = vmatprep.subr.bf16.mxu0 0
          %2723 = vmatpush2.bf16.msra.mxu0 %v2623
          %2724 = vmatprep.subr.bf16.mxu0 0
          %2725 = vmatpush2.bf16.msra.mxu0 %v2622
          %2726 = vmatprep.subr.bf16.mxu0 0
          %2727 = vmatpush2.bf16.msra.mxu0 %v2621
          %2728 = vmatprep.subr.bf16.mxu0 0
          %2729 = vmatpush2.bf16.msra.mxu0 %v2620
          %2730 = vmatprep.subr.bf16.mxu0 0
          %2731 = vmatpush2.bf16.msra.mxu0 %v2619
          %2732 = vmatprep.mubr.bf16.mxu0 %v2392
          %2733 = vmatmul.mubr.bf16.gmra.mxu0 %v2391
          %v2734 = vpop.f32.mrf.mxu0
          %v2735 = vadd.f32 %v2694, %v2734
          %v2736 = vpop.f32.mrf.mxu0
          %v2737 = vpop.f32.mrf.mxu0
          %v2738 = vadd.f32 %v2697, %v2737
          %v2739 = vpop.f32.mrf.mxu0
          %2740 = vdwg.mxu0
          %v2741 = vadd.f32 %v2031, %v2735
          %v2742 = vadd.f32 %v2032, %v2738
          %2743 = vst [vmem:[#allocation2] sm:$0xff] %v2741
          %2744 = vst [vmem:[#allocation2 + $0x8] sm:$0xff] %v2742
        $region209: #{tpu_custom_call.1} parent=123 // loop_footer
          %s1323 = sadd.s32 1, %s1319
        $region210: #{tpu_custom_call.1} parent=123 // loop_footer_branch
          %1318 = sbr.rel target = $region206
        $region211: #{tpu_custom_call.1} parent=123 // loop_exit
          _
        %v2745 = vld [vmem:[#allocation2] sm:$0x1]
        %v2746 = vld [vmem:[#allocation30] sm:$0x1]
        %v2747 = vld [vmem:[#allocation32] sm:$0x1]
        %vm2748 = vcmask 1040384
        %v2749 = vsel %vm2748, %v2745, 0.0
        %2750 = vadd.xlane.f32.xlu0 %v2749
        %v2751 = vpop.xlane.xlu0 %2750
        %v2752 = vrcp.pop 128.0
        %v2753 = vmul.f32 %v2751, %v2752
        %v2754 = vsub.f32 %v2745, %v2753
        %v2755 = vmul.f32 %v2754, %v2754
        %v2756 = vsel %vm2748, %v2755, 0.0
        %2757 = vadd.xlane.f32.xlu0 %v2756
        %v2758 = vpop.xlane.xlu0 %2757
        %v2759 = vmul.f32 %v2758, %v2752
        %v2760 = vadd.f32 %v2759, 1e-05
        %v2761 = vrsqrt.pop %v2760
        %v2762 = vmul.f32 %v2754, %v2761
        %v2763 = vmul.f32 %v2762, %v2746
        %v2764 = vadd.f32 %v2763, %v2747
        %v2765 = vpack.c.bf16 %v2764, %v2764
        %v2766 = vld [vmem:[%s21] sm:$0xf]
        %v2767 = vld [vmem:[%s21 + $0x4] sm:$0xf]
        %v2768 = vld [vmem:[%s21 + $0x8] sm:$0xf]
        %v2769 = vld [vmem:[%s21 + $0xc] sm:$0xf]
        %v2770 = vld [vmem:[%s21 + $0x10] sm:$0xf]
        %v2771 = vld [vmem:[%s21 + $0x14] sm:$0xf]
        %v2772 = vld [vmem:[%s21 + $0x18] sm:$0xf]
        %v2773 = vld [vmem:[%s21 + $0x1c] sm:$0xf]
        %v2774 = vld [vmem:[%s21 + $0x20] sm:$0xf]
        %v2775 = vld [vmem:[%s21 + $0x24] sm:$0xf]
        %v2776 = vld [vmem:[%s21 + $0x28] sm:$0xf]
        %v2777 = vld [vmem:[%s21 + $0x2c] sm:$0xf]
        %v2778 = vld [vmem:[%s21 + $0x30] sm:$0xf]
        %v2779 = vld [vmem:[%s21 + $0x34] sm:$0xf]
        %v2780 = vld [vmem:[%s21 + $0x38] sm:$0xf]
        %v2781 = vld [vmem:[%s21 + $0x3c] sm:$0xf]
        %v2782 = vld [vmem:[#allocation3] sm:$0x1]
        %v2799 = vunpack.c.l.b16 %v2766
        %v2800 = vunpack.c.l.b16 %v2767
        %v2801 = vunpack.c.l.b16 %v2768
        %v2802 = vunpack.c.l.b16 %v2769
        %v2803 = vunpack.c.l.b16 %v2770
        %v2804 = vunpack.c.l.b16 %v2771
        %v2805 = vunpack.c.l.b16 %v2772
        %v2806 = vunpack.c.l.b16 %v2773
        %v2807 = vunpack.c.l.b16 %v2774
        %v2808 = vunpack.c.l.b16 %v2775
        %v2809 = vunpack.c.l.b16 %v2776
        %v2810 = vunpack.c.l.b16 %v2777
        %v2811 = vunpack.c.l.b16 %v2778
        %v2812 = vunpack.c.l.b16 %v2779
        %v2813 = vunpack.c.l.b16 %v2780
        %v2814 = vunpack.c.l.b16 %v2781
        %v2815 = vpack.c.b16 %v2800, %v2799
        %v2816 = vpack.c.b16 %v2802, %v2801
        %v2817 = vpack.c.b16 %v2804, %v2803
        %v2818 = vpack.c.b16 %v2806, %v2805
        %v2819 = vpack.c.b16 %v2808, %v2807
        %v2820 = vpack.c.b16 %v2810, %v2809
        %v2821 = vpack.c.b16 %v2812, %v2811
        %v2822 = vpack.c.b16 %v2814, %v2813
        %2831 = vmatprep.subr.bf16.mxu0 0
        %2832 = vmatpush1.bf16.msra.mxu0 %v2822
        %2833 = vmatprep.subr.bf16.mxu0 0
        %2834 = vmatpush1.bf16.msra.mxu0 %v2821
        %2835 = vmatprep.subr.bf16.mxu0 0
        %2836 = vmatpush1.bf16.msra.mxu0 %v2820
        %2837 = vmatprep.subr.bf16.mxu0 0
        %2838 = vmatpush1.bf16.msra.mxu0 %v2819
        %2839 = vmatprep.subr.bf16.mxu0 0
        %2840 = vmatpush1.bf16.msra.mxu0 %v2818
        %2841 = vmatprep.subr.bf16.mxu0 0
        %2842 = vmatpush1.bf16.msra.mxu0 %v2817
        %2843 = vmatprep.subr.bf16.mxu0 0
        %2844 = vmatpush1.bf16.msra.mxu0 %v2816
        %2845 = vmatprep.subr.bf16.mxu0 0
        %2846 = vmatpush1.bf16.msra.mxu0 %v2815
        %2847 = vmatprep.subr.bf16.mxu0 0
        %2848 = vmatpush2.bf16.msra.mxu0 0
        %2849 = vmatprep.subr.bf16.mxu0 0
        %2850 = vmatpush2.bf16.msra.mxu0 0
        %2851 = vmatprep.subr.bf16.mxu0 0
        %2852 = vmatpush2.bf16.msra.mxu0 0
        %2853 = vmatprep.subr.bf16.mxu0 0
        %2854 = vmatpush2.bf16.msra.mxu0 0
        %2855 = vmatprep.subr.bf16.mxu0 0
        %2856 = vmatpush2.bf16.msra.mxu0 0
        %2857 = vmatprep.subr.bf16.mxu0 0
        %2858 = vmatpush2.bf16.msra.mxu0 0
        %2859 = vmatprep.subr.bf16.mxu0 0
        %2860 = vmatpush2.bf16.msra.mxu0 0
        %2861 = vmatprep.subr.bf16.mxu0 0
        %2862 = vmatpush2.bf16.msra.mxu0 0
        %2863 = vmatprep.mubr.bf16.mxu0 0
        %2864 = vmatmul.mubr.bf16.gmra.mxu0 %v2765
        %v2865 = vpop.f32.mrf.mxu0
        %v2866 = vadd.f32 %v2782, %v2865
        %v2867 = vpop.f32.mrf.mxu0
        %v2868 = vpop.f32.mrf.mxu0
        %v2869 = vpop.f32.mrf.mxu0
        %2870 = vdwg.mxu0
        %vm2871 = vcmask 0
        %2872 = vst.msk [vmem:[%s1090] sm:$0x1] %vm2871, %v2866
        %p2873 = scmp.lt.s32.totalorder %s52, 1
        %s2874 = scalar_select %p2873, %s52, 1
        %s2875 = scalar_lea.vmem %s26, %s2874
        // Predicated region
        $region212: #{tpu_custom_call.1} parent=123 // pred_check
          %p2876 = pneg %p626
        $region213: #{tpu_custom_call.1} parent=123 // pred_check_branch
          %2878 = sbr.rel (%p2876) target = $region215
        $region214: #{tpu_custom_call.1} parent=123 // pred_region
          _
        $region215: #{tpu_custom_call.1} parent=123 // pred_fallthru
          _
      $region124: #{tpu_custom_call.1} parent=5 // pred_fallthru
        _
      %p2879 = scmp.le.s32.totalorder 2, %s47
      // Predicated region
      $region216: #{tpu_custom_call.1} parent=5 // pred_check
        %p2880 = pneg %p2879
      $region217: #{tpu_custom_call.1} parent=5 // pred_check_branch
        %2882 = sbr.rel (%p2880) target = $region219
      $region218: #{tpu_custom_call.1} parent=5 // pred_region
        %s2883 = ssub.s32 %s47, 2
        // Predicated region
        $region220: #{tpu_custom_call.1} parent=218 // pred_check
          %p2884 = pneg %p632
        $region221: #{tpu_custom_call.1} parent=218 // pred_check_branch
          %2886 = sbr.rel (%p2884) target = $region223
        $region222: #{tpu_custom_call.1} parent=218 // pred_region
          %p2887 = scmp.lt.s32.totalorder %s53, 1
          %s2888 = scalar_select %p2887, %s53, 1
          %s2889 = scalar_lea.vmem %s26, %s2888
        $region223: #{tpu_custom_call.1} parent=218 // pred_fallthru
          _
      $region219: #{tpu_custom_call.1} parent=5 // pred_fallthru
        _
    $region6: #{tpu_custom_call.1} parent=1 // loop_footer
      %s51 = sadd.s32 1, %s47
    $region7: #{tpu_custom_call.1} parent=1 // loop_footer_branch
      %46 = sbr.rel target = $region3
    $region8: #{tpu_custom_call.1} parent=1 // loop_exit
      _
    %2890 = vsyncpa [#allocation5], 1
    %s2891 = scalar_lea.sflag [#allocation5], 1
    %2892 = vsyncpa %s2891, 1
    %2893 = vsyncpa [#allocation7], 1
    %2894 = vsyncpa [#allocation10], 1
    %2895 = vsyncpa [#allocation13], 1
    %2896 = vsyncpa [#allocation16], 1
    %2897 = vsyncpa [#allocation19], 1
    %2898 = vsyncpa [#allocation22], 1
    %2899 = vsyncpa [#allocation25], 1
    %2900 = vsyncpa [#allocation28], 1
    %2901 = vsyncpa [#allocation31], 1
    %2902 = vsyncpa [#allocation34], 1

// kernel: tpu_custom_call.1
$region0: #{tpu_custom_call.1}
  #allocation0 [shape = 'u32[]', space=smem, size = 0x4, offset = 0x4, fixed_abs, tag = 'smem constant byte address 0x4 - core index']
  #allocation1 [shape = 'u32[144,128]{1,0:T(1,128)}', space=vmem, size = 0x12000, scoped, tag = 'internal scratch']
  #allocation2 [shape = 'f32[1,16,128]{2,1,0:T(8,128)}', space=vmem, size = 0x2000, scoped, tag = 'scratch operand']
  #allocation3 [shape = 'f32[1,1]{1,0:T(1,128)S(1)}', space=vmem, size = 0x200, scoped, tag = 'scoped memory for tpu_custom_call.1']
  %s0 = inlined_call_operand.hbm [shape: f32[2,8,256], index: 0, kind: input, shape index: {}]
  %s1 = inlined_call_operand.vmem [shape: f32[2,8,2], index: 1, kind: input, shape index: {}]
  %s2 = inlined_call_operand.hbm [shape: bf16[256,128], index: 2, kind: input, shape index: {}]
  %s3 = inlined_call_operand.vmem [shape: f32[1,128], index: 3, kind: input, shape index: {}]
  %s4 = inlined_call_operand.hbm [shape: f32[2,128], index: 4, kind: input, shape index: {}]
  %s5 = inlined_call_operand.hbm [shape: f32[1,128], index: 5, kind: input, shape index: {}]
  %s6 = inlined_call_operand.hbm [shape: f32[1,128], index: 6, kind: input, shape index: {}]
  %s7 = inlined_call_operand.hbm [shape: f32[6,1,128], index: 7, kind: input, shape index: {}]
  %s8 = inlined_call_operand.hbm [shape: f32[6,1,128], index: 8, kind: input, shape index: {}]
  %s9 = inlined_call_operand.hbm [shape: bf16[6,128,384], index: 9, kind: input, shape index: {}]
  %s10 = inlined_call_operand.hbm [shape: f32[6,1,384], index: 10, kind: input, shape index: {}]
  %s11 = inlined_call_operand.hbm [shape: bf16[6,128,128], index: 11, kind: input, shape index: {}]
  %s12 = inlined_call_operand.hbm [shape: f32[6,1,128], index: 12, kind: input, shape index: {}]
  %s13 = inlined_call_operand.hbm [shape: f32[6,1,128], index: 13, kind: input, shape index: {}]
  %s14 = inlined_call_operand.hbm [shape: f32[6,1,128], index: 14, kind: input, shape index: {}]
  %s15 = inlined_call_operand.hbm [shape: bf16[6,128,512], index: 15, kind: input, shape index: {}]
  %s16 = inlined_call_operand.hbm [shape: f32[6,1,512], index: 16, kind: input, shape index: {}]
  %s17 = inlined_call_operand.hbm [shape: bf16[6,512,128], index: 17, kind: input, shape index: {}]
  %s18 = inlined_call_operand.hbm [shape: f32[6,1,128], index: 18, kind: input, shape index: {}]
  %s19 = inlined_call_operand.hbm [shape: f32[1,128], index: 19, kind: input, shape index: {}]
  %s20 = inlined_call_operand.hbm [shape: f32[1,128], index: 20, kind: input, shape index: {}]
  %s21 = inlined_call_operand.vmem [shape: bf16[128,1], index: 21, kind: input, shape index: {}]
  %s22 = inlined_call_operand.<no memory space> [shape: f32[1,1], index: 22, kind: input, shape index: {}]
  %s23 = inlined_call_operand.hbm [shape: bf16[128,128], index: 23, kind: input, shape index: {}]
  %s24 = inlined_call_operand.vmem [shape: f32[128,128], index: 24, kind: input, shape index: {}]
  %s25 = inlined_call_operand.vmem [shape: f32[1,128], index: 25, kind: input, shape index: {}]
  %s26 = inlined_call_operand.vmem [shape: f32[2,1,1], index: 26, kind: output, shape index: {}]
  %s27 = sld [smem:[#allocation0]]
  $region224: #{tpu_custom_call.1} parent=0
    _
  %s29 = ssub.s32 1, %s27
  %s30 = scalar_select 0, %s29, %s27
  %v31 = vstv %s22
  %32 = vst [vmem:[#allocation3] sm:$0x1] %v31
  $region1: #{tpu_custom_call.1} parent=0
    #allocation4 [shape = 'u8[16384]{0}', space=vmem, size = 0x4000, scoped, tag = 'input window, operand 0']
    #allocation5 [shape = 's32[2]{0}', space=sflag, size = 0x8, scoped, tag = 'scoped memory for tpu_custom_call.1']
    #allocation6 [shape = 'u8[65536]{0}', space=vmem, size = 0x10000, scoped, tag = 'input window, operand 2, single buffered']
    #allocation7 [shape = 's32[1]{0}', space=sflag, size = 0x4, scoped, tag = 'scoped memory for tpu_custom_call.1']
    #allocation8 [shape = 'u8[1024]{0}', space=vmem, size = 0x400, scoped, tag = 'input window, operand 4, single buffered']
    #allocation9 [shape = 'u8[512]{0}', space=vmem, size = 0x400, scoped, tag = 'input window, operand 5, single buffered']
    #allocation10 [shape = 's32[1]{0}', space=sflag, size = 0x4, scoped, tag = 'scoped memory for tpu_custom_call.1']
    #allocation11 [shape = 'u8[512]{0}', space=vmem, size = 0x400, scoped, tag = 'input window, operand 6, single buffered']
    #allocation12 [shape = 'u8[3072]{0}', space=vmem, size = 0xc00, scoped, tag = 'input window, operand 7, single buffered']
    #allocation13 [shape = 's32[1]{0}', space=sflag, size = 0x4, scoped, tag = 'scoped memory for tpu_custom_call.1']
    #allocation14 [shape = 'u8[3072]{0}', space=vmem, size = 0xc00, scoped, tag = 'input window, operand 8, single buffered']
    #allocation15 [shape = 'u8[589824]{0}', space=vmem, size = 0x90000, scoped, tag = 'input window, operand 9, single buffered']
    #allocation16 [shape = 's32[1]{0}', space=sflag, size = 0x4, scoped, tag = 'scoped memory for tpu_custom_call.1']
    #allocation17 [shape = 'u8[9216]{0}', space=vmem, size = 0x2400, scoped, tag = 'input window, operand 10, single buffered']
    #allocation18 [shape = 'u8[196608]{0}', space=vmem, size = 0x30000, scoped, tag = 'input window, operand 11, single buffered']
    #allocation19 [shape = 's32[1]{0}', space=sflag, size = 0x4, scoped, tag = 'scoped memory for tpu_custom_call.1']
    #allocation20 [shape = 'u8[3072]{0}', space=vmem, size = 0xc00, scoped, tag = 'input window, operand 12, single buffered']
    #allocation21 [shape = 'u8[3072]{0}', space=vmem, size = 0xc00, scoped, tag = 'input window, operand 13, single buffered']
    #allocation22 [shape = 's32[1]{0}', space=sflag, size = 0x4, scoped, tag = 'scoped memory for tpu_custom_call.1']
    #allocation23 [shape = 'u8[3072]{0}', space=vmem, size = 0xc00, scoped, tag = 'input window, operand 14, single buffered']
    #allocation24 [shape = 'u8[786432]{0}', space=vmem, size = 0xc0000, scoped, tag = 'input window, operand 15, single buffered']
    #allocation25 [shape = 's32[1]{0}', space=sflag, size = 0x4, scoped, tag = 'scoped memory for tpu_custom_call.1']
    #allocation26 [shape = 'u8[12288]{0}', space=vmem, size = 0x3000, scoped, tag = 'input window, operand 16, single buffered']
    #allocation27 [shape = 'u8[786432]{0}', space=vmem, size = 0xc0000, scoped, tag = 'input window, operand 17, single buffered']
    #allocation28 [shape = 's32[1]{0}', space=sflag, size = 0x4, scoped, tag = 'scoped memory for tpu_custom_call.1']
    #allocation29 [shape = 'u8[3072]{0}', space=vmem, size = 0xc00, scoped, tag = 'input window, operand 18, single buffered']
    #allocation30 [shape = 'u8[512]{0}', space=vmem, size = 0x400, scoped, tag = 'input window, operand 19, single buffered']
    #allocation31 [shape = 's32[1]{0}', space=sflag, size = 0x4, scoped, tag = 'scoped memory for tpu_custom_call.1']
    #allocation32 [shape = 'u8[512]{0}', space=vmem, size = 0x400, scoped, tag = 'input window, operand 20, single buffered']
    #allocation33 [shape = 'u8[32768]{0}', space=vmem, size = 0x8000, scoped, tag = 'input window, operand 23, single buffered']
    #allocation34 [shape = 's32[1]{0}', space=sflag, size = 0x4, scoped, tag = 'scoped memory for tpu_custom_call.1']
    %33 = vsyncpa [#allocation5], 0
    %s34 = scalar_lea.sflag [#allocation5], 1
    %35 = vsyncpa %s34, 0
    %36 = vsyncpa [#allocation7], 0
    %37 = vsyncpa [#allocation10], 0
    %38 = vsyncpa [#allocation13], 0
    %39 = vsyncpa [#allocation16], 0
    %40 = vsyncpa [#allocation19], 0
    %41 = vsyncpa [#allocation22], 0
    %42 = vsyncpa [#allocation25], 0
    %43 = vsyncpa [#allocation28], 0
    %44 = vsyncpa [#allocation31], 0
    %45 = vsyncpa [#allocation34], 0
    loop: start=0, step=1, limit=4
    $region2: #{tpu_custom_call.1} parent=1 // loop_pre_header
      _
    $region3: #{tpu_custom_call.1} parent=1 // loop_header
      %s47 = sphi 0, %s51
      %p48 = scmp.ge.s32.totalorder %s47, 4
      %s57 = sphi 0, %s59
      %s60 = sphi 0, %s57
      %s61 = sphi 0, %s60
      %s77 = sphi 0, %s61
      %s83 = sphi 0, %s85
      %s86 = sphi 0, %s83
      %s87 = sphi 0, %s86
      %s103 = sphi 0, %s87
      %s107 = sphi 0, %s107
      %s109 = sphi 0, %s107
      %s110 = sphi 0, %s109
      %s124 = sphi 0, %s110
      %s128 = sphi 0, %s128
      %s130 = sphi 0, %s128
      %s131 = sphi 0, %s130
      %s145 = sphi 0, %s131
      %s149 = sphi 0, %s149
      %s151 = sphi 0, %s149
      %s152 = sphi 0, %s151
      %s166 = sphi 0, %s152
      %s170 = sphi 0, %s170
      %s172 = sphi 0, %s170
      %s173 = sphi 0, %s172
      %s187 = sphi 0, %s173
      %s191 = sphi 0, %s191
      %s193 = sphi 0, %s191
      %s194 = sphi 0, %s193
      %s208 = sphi 0, %s194
      %s212 = sphi 0, %s212
      %s214 = sphi 0, %s212
      %s215 = sphi 0, %s214
      %s229 = sphi 0, %s215
      %s233 = sphi 0, %s233
      %s235 = sphi 0, %s233
      %s236 = sphi 0, %s235
      %s250 = sphi 0, %s236
      %s254 = sphi 0, %s254
      %s256 = sphi 0, %s254
      %s257 = sphi 0, %s256
      %s271 = sphi 0, %s257
      %s275 = sphi 0, %s275
      %s277 = sphi 0, %s275
      %s278 = sphi 0, %s277
      %s292 = sphi 0, %s278
      %s296 = sphi 0, %s296
      %s298 = sphi 0, %s296
      %s299 = sphi 0, %s298
      %s313 = sphi 0, %s299
      %s317 = sphi 0, %s317
      %s319 = sphi 0, %s317
      %s320 = sphi 0, %s319
      %s334 = sphi 0, %s320
      %s338 = sphi 0, %s338
      %s340 = sphi 0, %s338
      %s341 = sphi 0, %s340
      %s355 = sphi 0, %s341
      %s359 = sphi 0, %s359
      %s361 = sphi 0, %s359
      %s362 = sphi 0, %s361
      %s376 = sphi 0, %s362
      %s380 = sphi 0, %s380
      %s382 = sphi 0, %s380
      %s383 = sphi 0, %s382
      %s397 = sphi 0, %s383
      %s401 = sphi 0, %s401
      %s403 = sphi 0, %s401
      %s404 = sphi 0, %s403
      %s418 = sphi 0, %s404
      %s422 = sphi 0, %s422
      %s424 = sphi 0, %s422
      %s425 = sphi 0, %s424
      %s439 = sphi 0, %s425
      %s443 = sphi 0, %s443
      %s445 = sphi 0, %s443
      %s446 = sphi 0, %s445
      %s460 = sphi 0, %s446
      %s464 = sphi 0, %s464
      %s466 = sphi 0, %s464
      %s467 = sphi 0, %s466
      %s481 = sphi 0, %s467
      %s485 = sphi 0, %s485
      %s487 = sphi 0, %s485
      %s488 = sphi 0, %s487
      %s502 = sphi 0, %s488
      %s506 = sphi 0, %s506
      %s508 = sphi 0, %s506
      %s509 = sphi 0, %s508
      %s523 = sphi 0, %s509
      %s527 = sphi 0, %s527
      %s529 = sphi 0, %s527
      %s530 = sphi 0, %s529
      %s544 = sphi 0, %s530
      %s548 = sphi 0, %s548
      %s550 = sphi 0, %s548
      %s551 = sphi 0, %s550
      %s565 = sphi 0, %s551
      %s569 = sphi 0, %s569
      %s571 = sphi 0, %s569
      %s572 = sphi 0, %s571
      %s586 = sphi 0, %s572
      %s590 = sphi 0, %s590
      %s592 = sphi 0, %s590
      %s593 = sphi 0, %s592
      %s607 = sphi 0, %s593
      %s613 = sphi 0, %s615
      %s616 = sphi 0, %s613
      %s617 = sphi 0, %s616
      %s633 = sphi 0, %s617
    $region4: #{tpu_custom_call.1} parent=1 // loop_header_branch
      %50 = sbr.rel (%p48) target = $region8
    $region5: #{tpu_custom_call.1} parent=1 // loop_body
      %s52 = ssub.s32 %s47, 1
      %s53 = ssub.s32 %s47, 2
      %s54 = sadd.s32 %s47, 1
      %s55 = ssub.s32 %s47, %s54
      %p56 = scmp.eq.s32.totalorder %s55, 0
      %s58 = sadd.s32 %s57, 1
      %s59 = scalar_select %p56, %s57, %s58
      %p62 = pneg %p56
      %p63 = scmp.eq.s32.totalorder %s47, 1
      %p64 = por %p62, %p63
      %p65 = scmp.ne.s32.totalorder %s57, %s60
      %p66 = scmp.eq.s32.totalorder %s47, 0
      %p67 = por %p65, %p66
      %p68 = scmp.ne.s32.totalorder %s57, %s60
      %p69 = scmp.eq.s32.totalorder %s52, 1
      %p70 = por %p68, %p69
      %p71 = scmp.ne.s32.totalorder %s60, %s61
      %p72 = scmp.eq.s32.totalorder %s52, 0
      %p73 = por %p71, %p72
      %p74 = scmp.ne.s32.totalorder %s60, %s61
      %p75 = scmp.eq.s32.totalorder %s53, 1
      %p76 = por %p74, %p75
      %p78 = scmp.ne.s32.totalorder %s61, %s77
      %p79 = scmp.eq.s32.totalorder %s53, 0
      %p80 = por %p78, %p79
      %s81 = ssub.s32 %s47, %s54
      %p82 = scmp.eq.s32.totalorder %s81, 0
      %s84 = sadd.s32 %s83, 1
      %s85 = scalar_select %p82, %s83, %s84
      %p88 = pneg %p82
      %p89 = scmp.eq.s32.totalorder %s47, 1
      %p90 = por %p88, %p89
      %p91 = scmp.ne.s32.totalorder %s83, %s86
      %p92 = scmp.eq.s32.totalorder %s47, 0
      %p93 = por %p91, %p92
      %p94 = scmp.ne.s32.totalorder %s83, %s86
      %p95 = scmp.eq.s32.totalorder %s52, 1
      %p96 = por %p94, %p95
      %p97 = scmp.ne.s32.totalorder %s86, %s87
      %p98 = scmp.eq.s32.totalorder %s52, 0
      %p99 = por %p97, %p98
      %p100 = scmp.ne.s32.totalorder %s86, %s87
      %p101 = scmp.eq.s32.totalorder %s53, 1
      %p102 = por %p100, %p101
      %p104 = scmp.ne.s32.totalorder %s87, %s103
      %p105 = scmp.eq.s32.totalorder %s53, 0
      %p106 = por %p104, %p105
      %s108 = sadd.s32 %s107, 1
      %p111 = scmp.eq.s32.totalorder %s47, 1
      %p112 = scmp.ne.s32.totalorder %s107, %s109
      %p113 = scmp.eq.s32.totalorder %s47, 0
      %p114 = por %p112, %p113
      %p115 = scmp.ne.s32.totalorder %s107, %s109
      %p116 = scmp.eq.s32.totalorder %s52, 1
      %p117 = por %p115, %p116
      %p118 = scmp.ne.s32.totalorder %s109, %s110
      %p119 = scmp.eq.s32.totalorder %s52, 0
      %p120 = por %p118, %p119
      %p121 = scmp.ne.s32.totalorder %s109, %s110
      %p122 = scmp.eq.s32.totalorder %s53, 1
      %p123 = por %p121, %p122
      %p125 = scmp.ne.s32.totalorder %s110, %s124
      %p126 = scmp.eq.s32.totalorder %s53, 0
      %p127 = por %p125, %p126
      %s129 = sadd.s32 %s128, 1
      %p132 = scmp.eq.s32.totalorder %s47, 1
      %p133 = scmp.ne.s32.totalorder %s128, %s130
      %p134 = scmp.eq.s32.totalorder %s47, 0
      %p135 = por %p133, %p134
      %p136 = scmp.ne.s32.totalorder %s128, %s130
      %p137 = scmp.eq.s32.totalorder %s52, 1
      %p138 = por %p136, %p137
      %p139 = scmp.ne.s32.totalorder %s130, %s131
      %p140 = scmp.eq.s32.totalorder %s52, 0
      %p141 = por %p139, %p140
      %p142 = scmp.ne.s32.totalorder %s130, %s131
      %p143 = scmp.eq.s32.totalorder %s53, 1
      %p144 = por %p142, %p143
      %p146 = scmp.ne.s32.totalorder %s131, %s145
      %p147 = scmp.eq.s32.totalorder %s53, 0
      %p148 = por %p146, %p147
      %s150 = sadd.s32 %s149, 1
      %p153 = scmp.eq.s32.totalorder %s47, 1
      %p154 = scmp.ne.s32.totalorder %s149, %s151
      %p155 = scmp.eq.s32.totalorder %s47, 0
      %p156 = por %p154, %p155
      %p157 = scmp.ne.s32.totalorder %s149, %s151
      %p158 = scmp.eq.s32.totalorder %s52, 1
      %p159 = por %p157, %p158
      %p160 = scmp.ne.s32.totalorder %s151, %s152
      %p161 = scmp.eq.s32.totalorder %s52, 0
      %p162 = por %p160, %p161
      %p163 = scmp.ne.s32.totalorder %s151, %s152
      %p164 = scmp.eq.s32.totalorder %s53, 1
      %p165 = por %p163, %p164
      %p167 = scmp.ne.s32.totalorder %s152, %s166
      %p168 = scmp.eq.s32.totalorder %s53, 0
      %p169 = por %p167, %p168
      %s171 = sadd.s32 %s170, 1
      %p174 = scmp.eq.s32.totalorder %s47, 1
      %p175 = scmp.ne.s32.totalorder %s170, %s172
      %p176 = scmp.eq.s32.totalorder %s47, 0
      %p177 = por %p175, %p176
      %p178 = scmp.ne.s32.totalorder %s170, %s172
      %p179 = scmp.eq.s32.totalorder %s52, 1
      %p180 = por %p178, %p179
      %p181 = scmp.ne.s32.totalorder %s172, %s173
      %p182 = scmp.eq.s32.totalorder %s52, 0
      %p183 = por %p181, %p182
      %p184 = scmp.ne.s32.totalorder %s172, %s173
      %p185 = scmp.eq.s32.totalorder %s53, 1
      %p186 = por %p184, %p185
      %p188 = scmp.ne.s32.totalorder %s173, %s187
      %p189 = scmp.eq.s32.totalorder %s53, 0
      %p190 = por %p188, %p189
      %s192 = sadd.s32 %s191, 1
      %p195 = scmp.eq.s32.totalorder %s47, 1
      %p196 = scmp.ne.s32.totalorder %s191, %s193
      %p197 = scmp.eq.s32.totalorder %s47, 0
      %p198 = por %p196, %p197
      %p199 = scmp.ne.s32.totalorder %s191, %s193
      %p200 = scmp.eq.s32.totalorder %s52, 1
      %p201 = por %p199, %p200
      %p202 = scmp.ne.s32.totalorder %s193, %s194
      %p203 = scmp.eq.s32.totalorder %s52, 0
      %p204 = por %p202, %p203
      %p205 = scmp.ne.s32.totalorder %s193, %s194
      %p206 = scmp.eq.s32.totalorder %s53, 1
      %p207 = por %p205, %p206
      %p209 = scmp.ne.s32.totalorder %s194, %s208
      %p210 = scmp.eq.s32.totalorder %s53, 0
      %p211 = por %p209, %p210
      %s213 = sadd.s32 %s212, 1
      %p216 = scmp.eq.s32.totalorder %s47, 1
      %p217 = scmp.ne.s32.totalorder %s212, %s214
      %p218 = scmp.eq.s32.totalorder %s47, 0
      %p219 = por %p217, %p218
      %p220 = scmp.ne.s32.totalorder %s212, %s214
      %p221 = scmp.eq.s32.totalorder %s52, 1
      %p222 = por %p220, %p221
      %p223 = scmp.ne.s32.totalorder %s214, %s215
      %p224 = scmp.eq.s32.totalorder %s52, 0
      %p225 = por %p223, %p224
      %p226 = scmp.ne.s32.totalorder %s214, %s215
      %p227 = scmp.eq.s32.totalorder %s53, 1
      %p228 = por %p226, %p227
      %p230 = scmp.ne.s32.totalorder %s215, %s229
      %p231 = scmp.eq.s32.totalorder %s53, 0
      %p232 = por %p230, %p231
      %s234 = sadd.s32 %s233, 1
      %p237 = scmp.eq.s32.totalorder %s47, 1
      %p238 = scmp.ne.s32.totalorder %s233, %s235
      %p239 = scmp.eq.s32.totalorder %s47, 0
      %p240 = por %p238, %p239
      %p241 = scmp.ne.s32.totalorder %s233, %s235
      %p242 = scmp.eq.s32.totalorder %s52, 1
      %p243 = por %p241, %p242
      %p244 = scmp.ne.s32.totalorder %s235, %s236
      %p245 = scmp.eq.s32.totalorder %s52, 0
      %p246 = por %p244, %p245
      %p247 = scmp.ne.s32.totalorder %s235, %s236
      %p248 = scmp.eq.s32.totalorder %s53, 1
      %p249 = por %p247, %p248
      %p251 = scmp.ne.s32.totalorder %s236, %s250
      %p252 = scmp.eq.s32.totalorder %s53, 0
      %p253 = por %p251, %p252
      %s255 = sadd.s32 %s254, 1
      %p258 = scmp.eq.s32.totalorder %s47, 1
      %p259 = scmp.ne.s32.totalorder %s254, %s256
      %p260 = scmp.eq.s32.totalorder %s47, 0
      %p261 = por %p259, %p260
      %p262 = scmp.ne.s32.totalorder %s254, %s256
      %p263 = scmp.eq.s32.totalorder %s52, 1
      %p264 = por %p262, %p263
      %p265 = scmp.ne.s32.totalorder %s256, %s257
      %p266 = scmp.eq.s32.totalorder %s52, 0
      %p267 = por %p265, %p266
      %p268 = scmp.ne.s32.totalorder %s256, %s257
      %p269 = scmp.eq.s32.totalorder %s53, 1
      %p270 = por %p268, %p269
      %p272 = scmp.ne.s32.totalorder %s257, %s271
      %p273 = scmp.eq.s32.totalorder %s53, 0
      %p274 = por %p272, %p273
      %s276 = sadd.s32 %s275, 1
      %p279 = scmp.eq.s32.totalorder %s47, 1
      %p280 = scmp.ne.s32.totalorder %s275, %s277
      %p281 = scmp.eq.s32.totalorder %s47, 0
      %p282 = por %p280, %p281
      %p283 = scmp.ne.s32.totalorder %s275, %s277
      %p284 = scmp.eq.s32.totalorder %s52, 1
      %p285 = por %p283, %p284
      %p286 = scmp.ne.s32.totalorder %s277, %s278
      %p287 = scmp.eq.s32.totalorder %s52, 0
      %p288 = por %p286, %p287
      %p289 = scmp.ne.s32.totalorder %s277, %s278
      %p290 = scmp.eq.s32.totalorder %s53, 1
      %p291 = por %p289, %p290
      %p293 = scmp.ne.s32.totalorder %s278, %s292
      %p294 = scmp.eq.s32.totalorder %s53, 0
      %p295 = por %p293, %p294
      %s297 = sadd.s32 %s296, 1
      %p300 = scmp.eq.s32.totalorder %s47, 1
      %p301 = scmp.ne.s32.totalorder %s296, %s298
      %p302 = scmp.eq.s32.totalorder %s47, 0
      %p303 = por %p301, %p302
      %p304 = scmp.ne.s32.totalorder %s296, %s298
      %p305 = scmp.eq.s32.totalorder %s52, 1
      %p306 = por %p304, %p305
      %p307 = scmp.ne.s32.totalorder %s298, %s299
      %p308 = scmp.eq.s32.totalorder %s52, 0
      %p309 = por %p307, %p308
      %p310 = scmp.ne.s32.totalorder %s298, %s299
      %p311 = scmp.eq.s32.totalorder %s53, 1
      %p312 = por %p310, %p311
      %p314 = scmp.ne.s32.totalorder %s299, %s313
      %p315 = scmp.eq.s32.totalorder %s53, 0
      %p316 = por %p314, %p315
      %s318 = sadd.s32 %s317, 1
      %p321 = scmp.eq.s32.totalorder %s47, 1
      %p322 = scmp.ne.s32.totalorder %s317, %s319
      %p323 = scmp.eq.s32.totalorder %s47, 0
      %p324 = por %p322, %p323
      %p325 = scmp.ne.s32.totalorder %s317, %s319
      %p326 = scmp.eq.s32.totalorder %s52, 1
      %p327 = por %p325, %p326
      %p328 = scmp.ne.s32.totalorder %s319, %s320
      %p329 = scmp.eq.s32.totalorder %s52, 0
      %p330 = por %p328, %p329
      %p331 = scmp.ne.s32.totalorder %s319, %s320
      %p332 = scmp.eq.s32.totalorder %s53, 1
      %p333 = por %p331, %p332
      %p335 = scmp.ne.s32.totalorder %s320, %s334
      %p336 = scmp.eq.s32.totalorder %s53, 0
      %p337 = por %p335, %p336
      %s339 = sadd.s32 %s338, 1
      %p342 = scmp.eq.s32.totalorder %s47, 1
      %p343 = scmp.ne.s32.totalorder %s338, %s340
      %p344 = scmp.eq.s32.totalorder %s47, 0
      %p345 = por %p343, %p344
      %p346 = scmp.ne.s32.totalorder %s338, %s340
      %p347 = scmp.eq.s32.totalorder %s52, 1
      %p348 = por %p346, %p347
      %p349 = scmp.ne.s32.totalorder %s340, %s341
      %p350 = scmp.eq.s32.totalorder %s52, 0
      %p351 = por %p349, %p350
      %p352 = scmp.ne.s32.totalorder %s340, %s341
      %p353 = scmp.eq.s32.totalorder %s53, 1
      %p354 = por %p352, %p353
      %p356 = scmp.ne.s32.totalorder %s341, %s355
      %p357 = scmp.eq.s32.totalorder %s53, 0
      %p358 = por %p356, %p357
      %s360 = sadd.s32 %s359, 1
      %p363 = scmp.eq.s32.totalorder %s47, 1
      %p364 = scmp.ne.s32.totalorder %s359, %s361
      %p365 = scmp.eq.s32.totalorder %s47, 0
      %p366 = por %p364, %p365
      %p367 = scmp.ne.s32.totalorder %s359, %s361
      %p368 = scmp.eq.s32.totalorder %s52, 1
      %p369 = por %p367, %p368
      %p370 = scmp.ne.s32.totalorder %s361, %s362
      %p371 = scmp.eq.s32.totalorder %s52, 0
      %p372 = por %p370, %p371
      %p373 = scmp.ne.s32.totalorder %s361, %s362
      %p374 = scmp.eq.s32.totalorder %s53, 1
      %p375 = por %p373, %p374
      %p377 = scmp.ne.s32.totalorder %s362, %s376
      %p378 = scmp.eq.s32.totalorder %s53, 0
      %p379 = por %p377, %p378
      %s381 = sadd.s32 %s380, 1
      %p384 = scmp.eq.s32.totalorder %s47, 1
      %p385 = scmp.ne.s32.totalorder %s380, %s382
      %p386 = scmp.eq.s32.totalorder %s47, 0
      %p387 = por %p385, %p386
      %p388 = scmp.ne.s32.totalorder %s380, %s382
      %p389 = scmp.eq.s32.totalorder %s52, 1
      %p390 = por %p388, %p389
      %p391 = scmp.ne.s32.totalorder %s382, %s383
      %p392 = scmp.eq.s32.totalorder %s52, 0
      %p393 = por %p391, %p392
      %p394 = scmp.ne.s32.totalorder %s382, %s383
      %p395 = scmp.eq.s32.totalorder %s53, 1
      %p396 = por %p394, %p395
      %p398 = scmp.ne.s32.totalorder %s383, %s397
      %p399 = scmp.eq.s32.totalorder %s53, 0
      %p400 = por %p398, %p399
      %s402 = sadd.s32 %s401, 1
      %p405 = scmp.eq.s32.totalorder %s47, 1
      %p406 = scmp.ne.s32.totalorder %s401, %s403
      %p407 = scmp.eq.s32.totalorder %s47, 0
      %p408 = por %p406, %p407
      %p409 = scmp.ne.s32.totalorder %s401, %s403
      %p410 = scmp.eq.s32.totalorder %s52, 1
      %p411 = por %p409, %p410
      %p412 = scmp.ne.s32.totalorder %s403, %s404
      %p413 = scmp.eq.s32.totalorder %s52, 0
      %p414 = por %p412, %p413
      %p415 = scmp.ne.s32.totalorder %s403, %s404
      %p416 = scmp.eq.s32.totalorder %s53, 1
      %p417 = por %p415, %p416
      %p419 = scmp.ne.s32.totalorder %s404, %s418
      %p420 = scmp.eq.s32.totalorder %s53, 0
      %p421 = por %p419, %p420
      %s423 = sadd.s32 %s422, 1
      %p426 = scmp.eq.s32.totalorder %s47, 1
      %p427 = scmp.ne.s32.totalorder %s422, %s424
      %p428 = scmp.eq.s32.totalorder %s47, 0
      %p429 = por %p427, %p428
      %p430 = scmp.ne.s32.totalorder %s422, %s424
      %p431 = scmp.eq.s32.totalorder %s52, 1
      %p432 = por %p430, %p431
      %p433 = scmp.ne.s32.totalorder %s424, %s425
      %p434 = scmp.eq.s32.totalorder %s52, 0
      %p435 = por %p433, %p434
      %p436 = scmp.ne.s32.totalorder %s424, %s425
      %p437 = scmp.eq.s32.totalorder %s53, 1
      %p438 = por %p436, %p437
      %p440 = scmp.ne.s32.totalorder %s425, %s439
      %p441 = scmp.eq.s32.totalorder %s53, 0
      %p442 = por %p440, %p441
      %s444 = sadd.s32 %s443, 1
      %p447 = scmp.eq.s32.totalorder %s47, 1
      %p448 = scmp.ne.s32.totalorder %s443, %s445
      %p449 = scmp.eq.s32.totalorder %s47, 0
      %p450 = por %p448, %p449
      %p451 = scmp.ne.s32.totalorder %s443, %s445
      %p452 = scmp.eq.s32.totalorder %s52, 1
      %p453 = por %p451, %p452
      %p454 = scmp.ne.s32.totalorder %s445, %s446
      %p455 = scmp.eq.s32.totalorder %s52, 0
      %p456 = por %p454, %p455
      %p457 = scmp.ne.s32.totalorder %s445, %s446
      %p458 = scmp.eq.s32.totalorder %s53, 1
      %p459 = por %p457, %p458
      %p461 = scmp.ne.s32.totalorder %s446, %s460
      %p462 = scmp.eq.s32.totalorder %s53, 0
      %p463 = por %p461, %p462
      %s465 = sadd.s32 %s464, 1
      %p468 = scmp.eq.s32.totalorder %s47, 1
      %p469 = scmp.ne.s32.totalorder %s464, %s466
      %p470 = scmp.eq.s32.totalorder %s47, 0
      %p471 = por %p469, %p470
      %p472 = scmp.ne.s32.totalorder %s464, %s466
      %p473 = scmp.eq.s32.totalorder %s52, 1
      %p474 = por %p472, %p473
      %p475 = scmp.ne.s32.totalorder %s466, %s467
      %p476 = scmp.eq.s32.totalorder %s52, 0
      %p477 = por %p475, %p476
      %p478 = scmp.ne.s32.totalorder %s466, %s467
      %p479 = scmp.eq.s32.totalorder %s53, 1
      %p480 = por %p478, %p479
      %p482 = scmp.ne.s32.totalorder %s467, %s481
      %p483 = scmp.eq.s32.totalorder %s53, 0
      %p484 = por %p482, %p483
      %s486 = sadd.s32 %s485, 1
      %p489 = scmp.eq.s32.totalorder %s47, 1
      %p490 = scmp.ne.s32.totalorder %s485, %s487
      %p491 = scmp.eq.s32.totalorder %s47, 0
      %p492 = por %p490, %p491
      %p493 = scmp.ne.s32.totalorder %s485, %s487
      %p494 = scmp.eq.s32.totalorder %s52, 1
      %p495 = por %p493, %p494
      %p496 = scmp.ne.s32.totalorder %s487, %s488
      %p497 = scmp.eq.s32.totalorder %s52, 0
      %p498 = por %p496, %p497
      %p499 = scmp.ne.s32.totalorder %s487, %s488
      %p500 = scmp.eq.s32.totalorder %s53, 1
      %p501 = por %p499, %p500
      %p503 = scmp.ne.s32.totalorder %s488, %s502
      %p504 = scmp.eq.s32.totalorder %s53, 0
      %p505 = por %p503, %p504
      %s507 = sadd.s32 %s506, 1
      %p510 = scmp.eq.s32.totalorder %s47, 1
      %p511 = scmp.ne.s32.totalorder %s506, %s508
      %p512 = scmp.eq.s32.totalorder %s47, 0
      %p513 = por %p511, %p512
      %p514 = scmp.ne.s32.totalorder %s506, %s508
      %p515 = scmp.eq.s32.totalorder %s52, 1
      %p516 = por %p514, %p515
      %p517 = scmp.ne.s32.totalorder %s508, %s509
      %p518 = scmp.eq.s32.totalorder %s52, 0
      %p519 = por %p517, %p518
      %p520 = scmp.ne.s32.totalorder %s508, %s509
      %p521 = scmp.eq.s32.totalorder %s53, 1
      %p522 = por %p520, %p521
      %p524 = scmp.ne.s32.totalorder %s509, %s523
      %p525 = scmp.eq.s32.totalorder %s53, 0
      %p526 = por %p524, %p525
      %s528 = sadd.s32 %s527, 1
      %p531 = scmp.eq.s32.totalorder %s47, 1
      %p532 = scmp.ne.s32.totalorder %s527, %s529
      %p533 = scmp.eq.s32.totalorder %s47, 0
      %p534 = por %p532, %p533
      %p535 = scmp.ne.s32.totalorder %s527, %s529
      %p536 = scmp.eq.s32.totalorder %s52, 1
      %p537 = por %p535, %p536
      %p538 = scmp.ne.s32.totalorder %s529, %s530
      %p539 = scmp.eq.s32.totalorder %s52, 0
      %p540 = por %p538, %p539
      %p541 = scmp.ne.s32.totalorder %s529, %s530
      %p542 = scmp.eq.s32.totalorder %s53, 1
      %p543 = por %p541, %p542
      %p545 = scmp.ne.s32.totalorder %s530, %s544
      %p546 = scmp.eq.s32.totalorder %s53, 0
      %p547 = por %p545, %p546
      %s549 = sadd.s32 %s548, 1
      %p552 = scmp.eq.s32.totalorder %s47, 1
      %p553 = scmp.ne.s32.totalorder %s548, %s550
      %p554 = scmp.eq.s32.totalorder %s47, 0
      %p555 = por %p553, %p554
      %p556 = scmp.ne.s32.totalorder %s548, %s550
      %p557 = scmp.eq.s32.totalorder %s52, 1
      %p558 = por %p556, %p557
      %p559 = scmp.ne.s32.totalorder %s550, %s551
      %p560 = scmp.eq.s32.totalorder %s52, 0
      %p561 = por %p559, %p560
      %p562 = scmp.ne.s32.totalorder %s550, %s551
      %p563 = scmp.eq.s32.totalorder %s53, 1
      %p564 = por %p562, %p563
      %p566 = scmp.ne.s32.totalorder %s551, %s565
      %p567 = scmp.eq.s32.totalorder %s53, 0
      %p568 = por %p566, %p567
      %s570 = sadd.s32 %s569, 1
      %p573 = scmp.eq.s32.totalorder %s47, 1
      %p574 = scmp.ne.s32.totalorder %s569, %s571
      %p575 = scmp.eq.s32.totalorder %s47, 0
      %p576 = por %p574, %p575
      %p577 = scmp.ne.s32.totalorder %s569, %s571
      %p578 = scmp.eq.s32.totalorder %s52, 1
      %p579 = por %p577, %p578
      %p580 = scmp.ne.s32.totalorder %s571, %s572
      %p581 = scmp.eq.s32.totalorder %s52, 0
      %p582 = por %p580, %p581
      %p583 = scmp.ne.s32.totalorder %s571, %s572
      %p584 = scmp.eq.s32.totalorder %s53, 1
      %p585 = por %p583, %p584
      %p587 = scmp.ne.s32.totalorder %s572, %s586
      %p588 = scmp.eq.s32.totalorder %s53, 0
      %p589 = por %p587, %p588
      %s591 = sadd.s32 %s590, 1
      %p594 = scmp.eq.s32.totalorder %s47, 1
      %p595 = scmp.ne.s32.totalorder %s590, %s592
      %p596 = scmp.eq.s32.totalorder %s47, 0
      %p597 = por %p595, %p596
      %p598 = scmp.ne.s32.totalorder %s590, %s592
      %p599 = scmp.eq.s32.totalorder %s52, 1
      %p600 = por %p598, %p599
      %p601 = scmp.ne.s32.totalorder %s592, %s593
      %p602 = scmp.eq.s32.totalorder %s52, 0
      %p603 = por %p601, %p602
      %p604 = scmp.ne.s32.totalorder %s592, %s593
      %p605 = scmp.eq.s32.totalorder %s53, 1
      %p606 = por %p604, %p605
      %p608 = scmp.ne.s32.totalorder %s593, %s607
      %p609 = scmp.eq.s32.totalorder %s53, 0
      %p610 = por %p608, %p609
      %s611 = ssub.s32 %s47, %s54
      %p612 = scmp.eq.s32.totalorder %s611, 0
      %s614 = sadd.s32 %s613, 1
      %s615 = scalar_select %p612, %s613, %s614
      %p618 = pneg %p612
      %p619 = scmp.eq.s32.totalorder %s47, 1
      %p620 = por %p618, %p619
      %p621 = scmp.ne.s32.totalorder %s613, %s616
      %p622 = scmp.eq.s32.totalorder %s47, 0
      %p623 = por %p621, %p622
      %p624 = scmp.ne.s32.totalorder %s613, %s616
      %p625 = scmp.eq.s32.totalorder %s52, 1
      %p626 = por %p624, %p625
      %p627 = scmp.ne.s32.totalorder %s616, %s617
      %p628 = scmp.eq.s32.totalorder %s52, 0
      %p629 = por %p627, %p628
      %p630 = scmp.ne.s32.totalorder %s616, %s617
      %p631 = scmp.eq.s32.totalorder %s53, 1
      %p632 = por %p630, %p631
      %p634 = scmp.ne.s32.totalorder %s617, %s633
      %p635 = scmp.eq.s32.totalorder %s53, 0
      %p636 = por %p634, %p635
      %p637 = scmp.le.s32.totalorder 1, %s47
      %p638 = scmp.lt.s32.totalorder %s47, 3
      %p639 = pnand %p637, %p638
      %p640 = pneg %p639
      // Predicated region
      $region9: #{tpu_custom_call.1} parent=5 // pred_check
        _
      $region10: #{tpu_custom_call.1} parent=5 // pred_check_branch
        %642 = sbr.rel (%p639) target = $region12
      $region11: #{tpu_custom_call.1} parent=5 // pred_region
        %s643 = ssub.s32 %s47, 1
        // Predicated region
        $region13: #{tpu_custom_call.1} parent=11 // pred_check
          %p644 = pneg %p120
        $region14: #{tpu_custom_call.1} parent=11 // pred_check_branch
          %646 = sbr.rel (%p644) target = $region16
        $region15: #{tpu_custom_call.1} parent=11 // pred_region
          %s648 = ssub.s32 2048, 2048
          %649 = vsyncadd [#allocation7], %s648
          %s650 = sshll.u32 [#allocation6], 4
          %s651 = int_to_ptr.vmem [resolvable:$true] %s650
          %656 = dma.hbm_to_vmem [thread:$0]  %s2, 2048, %s651, [#allocation7], 64, 64, 4
        $region16: #{tpu_custom_call.1} parent=11 // pred_fallthru
          _
        // Predicated region
        $region17: #{tpu_custom_call.1} parent=11 // pred_check
          %p657 = pneg %p141
        $region18: #{tpu_custom_call.1} parent=11 // pred_check_branch
          %659 = sbr.rel (%p657) target = $region20
        $region19: #{tpu_custom_call.1} parent=11 // pred_region
          _
        $region20: #{tpu_custom_call.1} parent=11 // pred_fallthru
          _
        // Predicated region
        $region21: #{tpu_custom_call.1} parent=11 // pred_check
          %p660 = pneg %p162
        $region22: #{tpu_custom_call.1} parent=11 // pred_check_branch
          %662 = sbr.rel (%p660) target = $region24
        $region23: #{tpu_custom_call.1} parent=11 // pred_region
          %s664 = ssub.s32 32, 32
          %665 = vsyncadd [#allocation7], %s664
          %s667 = sshll.u32 [#allocation8], 4
          %s668 = int_to_ptr.vmem [resolvable:$true] %s667
          %670 = dma.hbm_to_vmem [thread:$0]  %s4, 32, %s668, [#allocation7]
        $region24: #{tpu_custom_call.1} parent=11 // pred_fallthru
          _
        // Predicated region
        $region25: #{tpu_custom_call.1} parent=11 // pred_check
          %p671 = pneg %p183
        $region26: #{tpu_custom_call.1} parent=11 // pred_check_branch
          %673 = sbr.rel (%p671) target = $region28
        $region27: #{tpu_custom_call.1} parent=11 // pred_region
          %s675 = ssub.s32 16, 16
          %676 = vsyncadd [#allocation10], %s675
          %s678 = sshll.u32 [#allocation9], 4
          %s679 = int_to_ptr.vmem [resolvable:$true] %s678
          %681 = dma.hbm_to_vmem [thread:$0]  %s5, 16, %s679, [#allocation10]
        $region28: #{tpu_custom_call.1} parent=11 // pred_fallthru
          _
        // Predicated region
        $region29: #{tpu_custom_call.1} parent=11 // pred_check
          %p682 = pneg %p204
        $region30: #{tpu_custom_call.1} parent=11 // pred_check_branch
          %684 = sbr.rel (%p682) target = $region32
        $region31: #{tpu_custom_call.1} parent=11 // pred_region
          %s686 = ssub.s32 16, 16
          %687 = vsyncadd [#allocation10], %s686
          %s689 = sshll.u32 [#allocation11], 4
          %s690 = int_to_ptr.vmem [resolvable:$true] %s689
          %692 = dma.hbm_to_vmem [thread:$0]  %s6, 16, %s690, [#allocation10]
        $region32: #{tpu_custom_call.1} parent=11 // pred_fallthru
          _
        // Predicated region
        $region33: #{tpu_custom_call.1} parent=11 // pred_check
          %p693 = pneg %p225
        $region34: #{tpu_custom_call.1} parent=11 // pred_check_branch
          %695 = sbr.rel (%p693) target = $region36
        $region35: #{tpu_custom_call.1} parent=11 // pred_region
          %s697 = ssub.s32 96, 96
          %698 = vsyncadd [#allocation13], %s697
          %s699 = sshll.u32 [#allocation12], 4
          %s700 = int_to_ptr.vmem [resolvable:$true] %s699
          %705 = dma.hbm_to_vmem [thread:$0]  %s7, 96, %s700, [#allocation13], 16, 16, 1
        $region36: #{tpu_custom_call.1} parent=11 // pred_fallthru
          _
        // Predicated region
        $region37: #{tpu_custom_call.1} parent=11 // pred_check
          %p706 = pneg %p246
        $region38: #{tpu_custom_call.1} parent=11 // pred_check_branch
          %708 = sbr.rel (%p706) target = $region40
        $region39: #{tpu_custom_call.1} parent=11 // pred_region
          %s710 = ssub.s32 96, 96
          %711 = vsyncadd [#allocation13], %s710
          %s712 = sshll.u32 [#allocation14], 4
          %s713 = int_to_ptr.vmem [resolvable:$true] %s712
          %718 = dma.hbm_to_vmem [thread:$0]  %s8, 96, %s713, [#allocation13], 16, 16, 1
        $region40: #{tpu_custom_call.1} parent=11 // pred_fallthru
          _
        // Predicated region
        $region41: #{tpu_custom_call.1} parent=11 // pred_check
          %p719 = pneg %p267
        $region42: #{tpu_custom_call.1} parent=11 // pred_check_branch
          %721 = sbr.rel (%p719) target = $region44
        $region43: #{tpu_custom_call.1} parent=11 // pred_region
          %s723 = ssub.s32 18432, 18432
          %724 = vsyncadd [#allocation16], %s723
          %s725 = sshll.u32 [#allocation15], 4
          %s726 = int_to_ptr.vmem [resolvable:$true] %s725
          %731 = dma.hbm_to_vmem [thread:$0]  %s9, 18432, %s726, [#allocation16], 192, 192, 12
        $region44: #{tpu_custom_call.1} parent=11 // pred_fallthru
          _
        // Predicated region
        $region45: #{tpu_custom_call.1} parent=11 // pred_check
          %p732 = pneg %p288
        $region46: #{tpu_custom_call.1} parent=11 // pred_check_branch
          %734 = sbr.rel (%p732) target = $region48
        $region47: #{tpu_custom_call.1} parent=11 // pred_region
          %s736 = ssub.s32 288, 288
          %737 = vsyncadd [#allocation16], %s736
          %s738 = sshll.u32 [#allocation17], 4
          %s739 = int_to_ptr.vmem [resolvable:$true] %s738
          %744 = dma.hbm_to_vmem [thread:$0]  %s10, 288, %s739, [#allocation16], 48, 48, 3
        $region48: #{tpu_custom_call.1} parent=11 // pred_fallthru
          _
        // Predicated region
        $region49: #{tpu_custom_call.1} parent=11 // pred_check
          %p745 = pneg %p309
        $region50: #{tpu_custom_call.1} parent=11 // pred_check_branch
          %747 = sbr.rel (%p745) target = $region52
        $region51: #{tpu_custom_call.1} parent=11 // pred_region
          %s749 = ssub.s32 6144, 6144
          %750 = vsyncadd [#allocation19], %s749
          %s751 = sshll.u32 [#allocation18], 4
          %s752 = int_to_ptr.vmem [resolvable:$true] %s751
          %757 = dma.hbm_to_vmem [thread:$0]  %s11, 6144, %s752, [#allocation19], 64, 64, 4
        $region52: #{tpu_custom_call.1} parent=11 // pred_fallthru
          _
        // Predicated region
        $region53: #{tpu_custom_call.1} parent=11 // pred_check
          %p758 = pneg %p330
        $region54: #{tpu_custom_call.1} parent=11 // pred_check_branch
          %760 = sbr.rel (%p758) target = $region56
        $region55: #{tpu_custom_call.1} parent=11 // pred_region
          %s762 = ssub.s32 96, 96
          %763 = vsyncadd [#allocation19], %s762
          %s764 = sshll.u32 [#allocation20], 4
          %s765 = int_to_ptr.vmem [resolvable:$true] %s764
          %770 = dma.hbm_to_vmem [thread:$0]  %s12, 96, %s765, [#allocation19], 16, 16, 1
        $region56: #{tpu_custom_call.1} parent=11 // pred_fallthru
          _
        // Predicated region
        $region57: #{tpu_custom_call.1} parent=11 // pred_check
          %p771 = pneg %p351
        $region58: #{tpu_custom_call.1} parent=11 // pred_check_branch
          %773 = sbr.rel (%p771) target = $region60
        $region59: #{tpu_custom_call.1} parent=11 // pred_region
          %s775 = ssub.s32 96, 96
          %776 = vsyncadd [#allocation22], %s775
          %s777 = sshll.u32 [#allocation21], 4
          %s778 = int_to_ptr.vmem [resolvable:$true] %s777
          %783 = dma.hbm_to_vmem [thread:$0]  %s13, 96, %s778, [#allocation22], 16, 16, 1
        $region60: #{tpu_custom_call.1} parent=11 // pred_fallthru
          _
        // Predicated region
        $region61: #{tpu_custom_call.1} parent=11 // pred_check
          %p784 = pneg %p372
        $region62: #{tpu_custom_call.1} parent=11 // pred_check_branch
          %786 = sbr.rel (%p784) target = $region64
        $region63: #{tpu_custom_call.1} parent=11 // pred_region
          %s788 = ssub.s32 96, 96
          %789 = vsyncadd [#allocation22], %s788
          %s790 = sshll.u32 [#allocation23], 4
          %s791 = int_to_ptr.vmem [resolvable:$true] %s790
          %796 = dma.hbm_to_vmem [thread:$0]  %s14, 96, %s791, [#allocation22], 16, 16, 1
        $region64: #{tpu_custom_call.1} parent=11 // pred_fallthru
          _
        // Predicated region
        $region65: #{tpu_custom_call.1} parent=11 // pred_check
          %p797 = pneg %p393
        $region66: #{tpu_custom_call.1} parent=11 // pred_check_branch
          %799 = sbr.rel (%p797) target = $region68
        $region67: #{tpu_custom_call.1} parent=11 // pred_region
          %s801 = ssub.s32 24576, 24576
          %802 = vsyncadd [#allocation25], %s801
          %s803 = sshll.u32 [#allocation24], 4
          %s804 = int_to_ptr.vmem [resolvable:$true] %s803
          %809 = dma.hbm_to_vmem [thread:$0]  %s15, 24576, %s804, [#allocation25], 256, 256, 16
        $region68: #{tpu_custom_call.1} parent=11 // pred_fallthru
          _
        // Predicated region
        $region69: #{tpu_custom_call.1} parent=11 // pred_check
          %p810 = pneg %p414
        $region70: #{tpu_custom_call.1} parent=11 // pred_check_branch
          %812 = sbr.rel (%p810) target = $region72
        $region71: #{tpu_custom_call.1} parent=11 // pred_region
          %s814 = ssub.s32 384, 384
          %815 = vsyncadd [#allocation25], %s814
          %s816 = sshll.u32 [#allocation26], 4
          %s817 = int_to_ptr.vmem [resolvable:$true] %s816
          %822 = dma.hbm_to_vmem [thread:$0]  %s16, 384, %s817, [#allocation25], 64, 64, 4
        $region72: #{tpu_custom_call.1} parent=11 // pred_fallthru
          _
        // Predicated region
        $region73: #{tpu_custom_call.1} parent=11 // pred_check
          %p823 = pneg %p435
        $region74: #{tpu_custom_call.1} parent=11 // pred_check_branch
          %825 = sbr.rel (%p823) target = $region76
        $region75: #{tpu_custom_call.1} parent=11 // pred_region
          %s827 = ssub.s32 24576, 24576
          %828 = vsyncadd [#allocation28], %s827
          %s829 = sshll.u32 [#allocation27], 4
          %s830 = int_to_ptr.vmem [resolvable:$true] %s829
          %835 = dma.hbm_to_vmem [thread:$0]  %s17, 24576, %s830, [#allocation28], 64, 64, 4
        $region76: #{tpu_custom_call.1} parent=11 // pred_fallthru
          _
        // Predicated region
        $region77: #{tpu_custom_call.1} parent=11 // pred_check
          %p836 = pneg %p456
        $region78: #{tpu_custom_call.1} parent=11 // pred_check_branch
          %838 = sbr.rel (%p836) target = $region80
        $region79: #{tpu_custom_call.1} parent=11 // pred_region
          %s840 = ssub.s32 96, 96
          %841 = vsyncadd [#allocation28], %s840
          %s842 = sshll.u32 [#allocation29], 4
          %s843 = int_to_ptr.vmem [resolvable:$true] %s842
          %848 = dma.hbm_to_vmem [thread:$0]  %s18, 96, %s843, [#allocation28], 16, 16, 1
        $region80: #{tpu_custom_call.1} parent=11 // pred_fallthru
          _
        // Predicated region
        $region81: #{tpu_custom_call.1} parent=11 // pred_check
          %p849 = pneg %p477
        $region82: #{tpu_custom_call.1} parent=11 // pred_check_branch
          %851 = sbr.rel (%p849) target = $region84
        $region83: #{tpu_custom_call.1} parent=11 // pred_region
          %s853 = ssub.s32 16, 16
          %854 = vsyncadd [#allocation31], %s853
          %s856 = sshll.u32 [#allocation30], 4
          %s857 = int_to_ptr.vmem [resolvable:$true] %s856
          %859 = dma.hbm_to_vmem [thread:$0]  %s19, 16, %s857, [#allocation31]
        $region84: #{tpu_custom_call.1} parent=11 // pred_fallthru
          _
        // Predicated region
        $region85: #{tpu_custom_call.1} parent=11 // pred_check
          %p860 = pneg %p498
        $region86: #{tpu_custom_call.1} parent=11 // pred_check_branch
          %862 = sbr.rel (%p860) target = $region88
        $region87: #{tpu_custom_call.1} parent=11 // pred_region
          %s864 = ssub.s32 16, 16
          %865 = vsyncadd [#allocation31], %s864
          %s867 = sshll.u32 [#allocation32], 4
          %s868 = int_to_ptr.vmem [resolvable:$true] %s867
          %870 = dma.hbm_to_vmem [thread:$0]  %s20, 16, %s868, [#allocation31]
        $region88: #{tpu_custom_call.1} parent=11 // pred_fallthru
          _
        // Predicated region
        $region89: #{tpu_custom_call.1} parent=11 // pred_check
          %p871 = pneg %p519
        $region90: #{tpu_custom_call.1} parent=11 // pred_check_branch
          %873 = sbr.rel (%p871) target = $region92
        $region91: #{tpu_custom_call.1} parent=11 // pred_region
          _
        $region92: #{tpu_custom_call.1} parent=11 // pred_fallthru
          _
        // Predicated region
        $region93: #{tpu_custom_call.1} parent=11 // pred_check
          %p874 = pneg %p540
        $region94: #{tpu_custom_call.1} parent=11 // pred_check_branch
          %876 = sbr.rel (%p874) target = $region96
        $region95: #{tpu_custom_call.1} parent=11 // pred_region
          _
        $region96: #{tpu_custom_call.1} parent=11 // pred_fallthru
          _
        // Predicated region
        $region97: #{tpu_custom_call.1} parent=11 // pred_check
          %p877 = pneg %p561
        $region98: #{tpu_custom_call.1} parent=11 // pred_check_branch
          %879 = sbr.rel (%p877) target = $region100
        $region99: #{tpu_custom_call.1} parent=11 // pred_region
          %s881 = ssub.s32 1024, 1024
          %882 = vsyncadd [#allocation34], %s881
          %s883 = sshll.u32 [#allocation33], 4
          %s884 = int_to_ptr.vmem [resolvable:$true] %s883
          %889 = dma.hbm_to_vmem [thread:$0]  %s23, 1024, %s884, [#allocation34], 64, 64, 4
        $region100: #{tpu_custom_call.1} parent=11 // pred_fallthru
          _
        // Predicated region
        $region101: #{tpu_custom_call.1} parent=11 // pred_check
          %p890 = pneg %p582
        $region102: #{tpu_custom_call.1} parent=11 // pred_check_branch
          %892 = sbr.rel (%p890) target = $region104
        $region103: #{tpu_custom_call.1} parent=11 // pred_region
          _
        $region104: #{tpu_custom_call.1} parent=11 // pred_fallthru
          _
        // Predicated region
        $region105: #{tpu_custom_call.1} parent=11 // pred_check
          %p893 = pneg %p603
        $region106: #{tpu_custom_call.1} parent=11 // pred_check_branch
          %895 = sbr.rel (%p893) target = $region108
        $region107: #{tpu_custom_call.1} parent=11 // pred_region
          _
        $region108: #{tpu_custom_call.1} parent=11 // pred_fallthru
          _
      $region12: #{tpu_custom_call.1} parent=5 // pred_fallthru
        _
      %p896 = scmp.lt.s32.totalorder %s47, 2
      // Predicated region
      $region109: #{tpu_custom_call.1} parent=5 // pred_check
        %p897 = pneg %p896
      $region110: #{tpu_custom_call.1} parent=5 // pred_check_branch
        %899 = sbr.rel (%p897) target = $region112
      $region111: #{tpu_custom_call.1} parent=5 // pred_region
        // Predicated region
        $region113: #{tpu_custom_call.1} parent=111 // pred_check
          %p900 = pneg %p67
        $region114: #{tpu_custom_call.1} parent=111 // pred_check_branch
          %902 = sbr.rel (%p900) target = $region116
        $region115: #{tpu_custom_call.1} parent=111 // pred_region
          %s903 = sand.u32 %s57, 1
          %s904 = scalar_lea.sflag [#allocation5], %s903
          %s905 = sand.u32 %s57, 1
          %s906 = smul.addr %s905, 16
          %s907 = scalar_lea.vmem [#allocation4], %s906
          %s909 = ssub.s32 256, 256
          %910 = vsyncadd %s904, %s909
          %s911 = smul.addr %s47, 2
          %s912 = smul.addr %s911, 128
          %s913 = scalar_lea.hbm %s0, %s912
          %s915 = sshll.u32 %s907, 4
          %s916 = int_to_ptr.vmem [resolvable:$true] %s915
          %918 = dma.hbm_to_vmem [thread:$0]  %s913, 256, %s916, %s904
        $region116: #{tpu_custom_call.1} parent=111 // pred_fallthru
          _
        // Predicated region
        $region117: #{tpu_custom_call.1} parent=111 // pred_check
          %p919 = pneg %p93
        $region118: #{tpu_custom_call.1} parent=111 // pred_check_branch
          %921 = sbr.rel (%p919) target = $region120
        $region119: #{tpu_custom_call.1} parent=111 // pred_region
          %p922 = scmp.lt.s32.totalorder %s47, 1
          %s923 = scalar_select %p922, %s47, 1
          %s924 = smul.addr %s923, 8
          %s925 = scalar_lea.vmem %s1, %s924
        $region120: #{tpu_custom_call.1} parent=111 // pred_fallthru
          _
      $region112: #{tpu_custom_call.1} parent=5 // pred_fallthru
        _
      %p926 = scmp.le.s32.totalorder 1, %s47
      %p927 = scmp.lt.s32.totalorder %s47, 3
      %p928 = pnand %p926, %p927
      %p929 = pneg %p928
      // Predicated region
      $region121: #{tpu_custom_call.1} parent=5 // pred_check
        _
      $region122: #{tpu_custom_call.1} parent=5 // pred_check_branch
        %931 = sbr.rel (%p928) target = $region124
      $region123: #{tpu_custom_call.1} parent=5 // pred_region
        %s932 = ssub.s32 %s47, 1
        %s933 = sand.u32 %s60, 1
        %s934 = scalar_lea.sflag [#allocation5], %s933
        %s935 = sand.u32 %s60, 1
        %s936 = smul.addr %s935, 16
        %s937 = scalar_lea.vmem [#allocation4], %s936
        // Predicated region
        $region125: #{tpu_custom_call.1} parent=123 // pred_check
          %p938 = pneg %p73
        $region126: #{tpu_custom_call.1} parent=123 // pred_check_branch
          %940 = sbr.rel (%p938) target = $region128
        $region127: #{tpu_custom_call.1} parent=123 // pred_region
          %941 = dma.done %s934, 256
        $region128: #{tpu_custom_call.1} parent=123 // pred_fallthru
          _
        // Predicated region
        $region129: #{tpu_custom_call.1} parent=123 // pred_check
          %p942 = pneg %p120
        $region130: #{tpu_custom_call.1} parent=123 // pred_check_branch
          %944 = sbr.rel (%p942) target = $region132
        $region131: #{tpu_custom_call.1} parent=123 // pred_region
          %945 = dma.done [#allocation7], 2048
        $region132: #{tpu_custom_call.1} parent=123 // pred_fallthru
          _
        // Predicated region
        $region133: #{tpu_custom_call.1} parent=123 // pred_check
          %p946 = pneg %p162
        $region134: #{tpu_custom_call.1} parent=123 // pred_check_branch
          %948 = sbr.rel (%p946) target = $region136
        $region135: #{tpu_custom_call.1} parent=123 // pred_region
          %949 = dma.done [#allocation7], 32
        $region136: #{tpu_custom_call.1} parent=123 // pred_fallthru
          _
        // Predicated region
        $region137: #{tpu_custom_call.1} parent=123 // pred_check
          %p950 = pneg %p183
        $region138: #{tpu_custom_call.1} parent=123 // pred_check_branch
          %952 = sbr.rel (%p950) target = $region140
        $region139: #{tpu_custom_call.1} parent=123 // pred_region
          %953 = dma.done [#allocation10], 16
        $region140: #{tpu_custom_call.1} parent=123 // pred_fallthru
          _
        // Predicated region
        $region141: #{tpu_custom_call.1} parent=123 // pred_check
          %p954 = pneg %p204
        $region142: #{tpu_custom_call.1} parent=123 // pred_check_branch
          %956 = sbr.rel (%p954) target = $region144
        $region143: #{tpu_custom_call.1} parent=123 // pred_region
          %957 = dma.done [#allocation10], 16
        $region144: #{tpu_custom_call.1} parent=123 // pred_fallthru
          _
        // Predicated region
        $region145: #{tpu_custom_call.1} parent=123 // pred_check
          %p958 = pneg %p225
        $region146: #{tpu_custom_call.1} parent=123 // pred_check_branch
          %960 = sbr.rel (%p958) target = $region148
        $region147: #{tpu_custom_call.1} parent=123 // pred_region
          %961 = dma.done [#allocation13], 96
        $region148: #{tpu_custom_call.1} parent=123 // pred_fallthru
          _
        // Predicated region
        $region149: #{tpu_custom_call.1} parent=123 // pred_check
          %p962 = pneg %p246
        $region150: #{tpu_custom_call.1} parent=123 // pred_check_branch
          %964 = sbr.rel (%p962) target = $region152
        $region151: #{tpu_custom_call.1} parent=123 // pred_region
          %965 = dma.done [#allocation13], 96
        $region152: #{tpu_custom_call.1} parent=123 // pred_fallthru
          _
        // Predicated region
        $region153: #{tpu_custom_call.1} parent=123 // pred_check
          %p966 = pneg %p267
        $region154: #{tpu_custom_call.1} parent=123 // pred_check_branch
          %968 = sbr.rel (%p966) target = $region156
        $region155: #{tpu_custom_call.1} parent=123 // pred_region
          %969 = dma.done [#allocation16], 18432
        $region156: #{tpu_custom_call.1} parent=123 // pred_fallthru
          _
        // Predicated region
        $region157: #{tpu_custom_call.1} parent=123 // pred_check
          %p970 = pneg %p288
        $region158: #{tpu_custom_call.1} parent=123 // pred_check_branch
          %972 = sbr.rel (%p970) target = $region160
        $region159: #{tpu_custom_call.1} parent=123 // pred_region
          %973 = dma.done [#allocation16], 288
        $region160: #{tpu_custom_call.1} parent=123 // pred_fallthru
          _
        // Predicated region
        $region161: #{tpu_custom_call.1} parent=123 // pred_check
          %p974 = pneg %p309
        $region162: #{tpu_custom_call.1} parent=123 // pred_check_branch
          %976 = sbr.rel (%p974) target = $region164
        $region163: #{tpu_custom_call.1} parent=123 // pred_region
          %977 = dma.done [#allocation19], 6144
        $region164: #{tpu_custom_call.1} parent=123 // pred_fallthru
          _
        // Predicated region
        $region165: #{tpu_custom_call.1} parent=123 // pred_check
          %p978 = pneg %p330
        $region166: #{tpu_custom_call.1} parent=123 // pred_check_branch
          %980 = sbr.rel (%p978) target = $region168
        $region167: #{tpu_custom_call.1} parent=123 // pred_region
          %981 = dma.done [#allocation19], 96
        $region168: #{tpu_custom_call.1} parent=123 // pred_fallthru
          _
        // Predicated region
        $region169: #{tpu_custom_call.1} parent=123 // pred_check
          %p982 = pneg %p351
        $region170: #{tpu_custom_call.1} parent=123 // pred_check_branch
          %984 = sbr.rel (%p982) target = $region172
        $region171: #{tpu_custom_call.1} parent=123 // pred_region
          %985 = dma.done [#allocation22], 96
        $region172: #{tpu_custom_call.1} parent=123 // pred_fallthru
          _
        // Predicated region
        $region173: #{tpu_custom_call.1} parent=123 // pred_check
          %p986 = pneg %p372
        $region174: #{tpu_custom_call.1} parent=123 // pred_check_branch
          %988 = sbr.rel (%p986) target = $region176
        $region175: #{tpu_custom_call.1} parent=123 // pred_region
          %989 = dma.done [#allocation22], 96
        $region176: #{tpu_custom_call.1} parent=123 // pred_fallthru
          _
        // Predicated region
        $region177: #{tpu_custom_call.1} parent=123 // pred_check
          %p990 = pneg %p393
        $region178: #{tpu_custom_call.1} parent=123 // pred_check_branch
          %992 = sbr.rel (%p990) target = $region180
        $region179: #{tpu_custom_call.1} parent=123 // pred_region
          %993 = dma.done [#allocation25], 24576
        $region180: #{tpu_custom_call.1} parent=123 // pred_fallthru
          _
        // Predicated region
        $region181: #{tpu_custom_call.1} parent=123 // pred_check
          %p994 = pneg %p414
        $region182: #{tpu_custom_call.1} parent=123 // pred_check_branch
          %996 = sbr.rel (%p994) target = $region184
        $region183: #{tpu_custom_call.1} parent=123 // pred_region
          %997 = dma.done [#allocation25], 384
        $region184: #{tpu_custom_call.1} parent=123 // pred_fallthru
          _
        // Predicated region
        $region185: #{tpu_custom_call.1} parent=123 // pred_check
          %p998 = pneg %p435
        $region186: #{tpu_custom_call.1} parent=123 // pred_check_branch
          %1000 = sbr.rel (%p998) target = $region188
        $region187: #{tpu_custom_call.1} parent=123 // pred_region
          %1001 = dma.done [#allocation28], 24576
        $region188: #{tpu_custom_call.1} parent=123 // pred_fallthru
          _
        // Predicated region
        $region189: #{tpu_custom_call.1} parent=123 // pred_check
          %p1002 = pneg %p456
        $region190: #{tpu_custom_call.1} parent=123 // pred_check_branch
          %1004 = sbr.rel (%p1002) target = $region192
        $region191: #{tpu_custom_call.1} parent=123 // pred_region
          %1005 = dma.done [#allocation28], 96
        $region192: #{tpu_custom_call.1} parent=123 // pred_fallthru
          _
        // Predicated region
        $region193: #{tpu_custom_call.1} parent=123 // pred_check
          %p1006 = pneg %p477
        $region194: #{tpu_custom_call.1} parent=123 // pred_check_branch
          %1008 = sbr.rel (%p1006) target = $region196
        $region195: #{tpu_custom_call.1} parent=123 // pred_region
          %1009 = dma.done [#allocation31], 16
        $region196: #{tpu_custom_call.1} parent=123 // pred_fallthru
          _
        // Predicated region
        $region197: #{tpu_custom_call.1} parent=123 // pred_check
          %p1010 = pneg %p498
        $region198: #{tpu_custom_call.1} parent=123 // pred_check_branch
          %1012 = sbr.rel (%p1010) target = $region200
        $region199: #{tpu_custom_call.1} parent=123 // pred_region
          %1013 = dma.done [#allocation31], 16
        $region200: #{tpu_custom_call.1} parent=123 // pred_fallthru
          _
        // Predicated region
        $region201: #{tpu_custom_call.1} parent=123 // pred_check
          %p1014 = pneg %p561
        $region202: #{tpu_custom_call.1} parent=123 // pred_check_branch
          %1016 = sbr.rel (%p1014) target = $region204
        $region203: #{tpu_custom_call.1} parent=123 // pred_region
          %1017 = dma.done [#allocation34], 1024
        $region204: #{tpu_custom_call.1} parent=123 // pred_fallthru
          _
        %s1018 = sand.u32 %s60, 1
        %s1019 = scalar_lea.sflag [#allocation5], %s1018
        %s1020 = sand.u32 %s60, 1
        %s1021 = smul.addr %s1020, 16
        %s1022 = scalar_lea.vmem [#allocation4], %s1021
        %p1023 = pneg %p73
        %p1024 = pneg %p70
        %p1025 = scmp.lt.s32.totalorder %s52, 1
        %s1026 = scalar_select %p1025, %s52, 1
        %s1027 = smul.addr %s1026, 8
        %s1028 = scalar_lea.vmem %s1, %s1027
        %p1029 = pneg %p99
        %p1030 = pneg %p96
        %p1031 = pneg %p120
        %p1032 = pneg %p117
        %p1033 = pneg %p141
        %p1034 = pneg %p138
        %p1035 = pneg %p162
        %p1036 = pneg %p159
        %p1037 = pneg %p183
        %p1038 = pneg %p180
        %p1039 = pneg %p204
        %p1040 = pneg %p201
        %p1041 = pneg %p225
        %p1042 = pneg %p222
        %p1043 = pneg %p246
        %p1044 = pneg %p243
        %p1045 = pneg %p267
        %p1046 = pneg %p264
        %p1047 = pneg %p288
        %p1048 = pneg %p285
        %p1049 = pneg %p309
        %p1050 = pneg %p306
        %p1051 = pneg %p330
        %p1052 = pneg %p327
        %p1053 = pneg %p351
        %p1054 = pneg %p348
        %p1055 = pneg %p372
        %p1056 = pneg %p369
        %p1057 = pneg %p393
        %p1058 = pneg %p390
        %p1059 = pneg %p414
        %p1060 = pneg %p411
        %p1061 = pneg %p435
        %p1062 = pneg %p432
        %p1063 = pneg %p456
        %p1064 = pneg %p453
        %p1065 = pneg %p477
        %p1066 = pneg %p474
        %p1067 = pneg %p498
        %p1068 = pneg %p495
        %p1069 = pneg %p519
        %p1070 = pneg %p516
        %p1071 = pneg %p540
        %p1072 = pneg %p537
        %p1073 = pneg %p561
        %p1074 = pneg %p558
        %p1075 = pneg %p582
        %p1076 = pneg %p579
        %p1077 = pneg %p603
        %p1078 = pneg %p600
        %p1079 = pneg %p629
        %p1080 = pneg %p626
        %p1081 = scmp.lt.s32.totalorder %s52, 1
        %s1082 = scalar_select %p1081, %s52, 1
        %s1083 = scalar_lea.vmem %s26, %s1082
        %p1084 = scmp.lt.s32.totalorder %s52, 1
        %s1085 = scalar_select %p1084, %s52, 1
        %s1086 = smul.addr %s1085, 8
        %s1087 = scalar_lea.vmem %s1, %s1086
        %p1088 = scmp.lt.s32.totalorder %s52, 1
        %s1089 = scalar_select %p1088, %s52, 1
        %s1090 = scalar_lea.vmem %s26, %s1089
        %v1092 = vld [vmem:[%s937] sm:$0xff]
        %v1093 = vld [vmem:[%s937 + $0x8] sm:$0xff]
        %v1094 = vld [vmem:[%s1087] sm:$0xff]
        %v1095 = vpack.c.bf16 %v1092, %v1092
        %v1096 = vpack.c.bf16 %v1093, %v1093
        %v1097 = vld [vmem:[#allocation6] sm:$0xf]
        %v1098 = vld [vmem:[#allocation6 + $0x4] sm:$0xf]
        %v1099 = vld [vmem:[#allocation6 + $0x8] sm:$0xf]
        %v1100 = vld [vmem:[#allocation6 + $0xc] sm:$0xf]
        %v1101 = vld [vmem:[#allocation6 + $0x10] sm:$0xf]
        %v1102 = vld [vmem:[#allocation6 + $0x14] sm:$0xf]
        %v1103 = vld [vmem:[#allocation6 + $0x18] sm:$0xf]
        %v1104 = vld [vmem:[#allocation6 + $0x1c] sm:$0xf]
        %v1105 = vld [vmem:[#allocation6 + $0x20] sm:$0xf]
        %v1106 = vld [vmem:[#allocation6 + $0x24] sm:$0xf]
        %v1107 = vld [vmem:[#allocation6 + $0x28] sm:$0xf]
        %v1108 = vld [vmem:[#allocation6 + $0x2c] sm:$0xf]
        %v1109 = vld [vmem:[#allocation6 + $0x30] sm:$0xf]
        %v1110 = vld [vmem:[#allocation6 + $0x34] sm:$0xf]
        %v1111 = vld [vmem:[#allocation6 + $0x38] sm:$0xf]
        %v1112 = vld [vmem:[#allocation6 + $0x3c] sm:$0xf]
        %v1113 = vld [vmem:[#allocation6 + $0x40] sm:$0xf]
        %v1114 = vld [vmem:[#allocation6 + $0x44] sm:$0xf]
        %v1115 = vld [vmem:[#allocation6 + $0x48] sm:$0xf]
        %v1116 = vld [vmem:[#allocation6 + $0x4c] sm:$0xf]
        %v1117 = vld [vmem:[#allocation6 + $0x50] sm:$0xf]
        %v1118 = vld [vmem:[#allocation6 + $0x54] sm:$0xf]
        %v1119 = vld [vmem:[#allocation6 + $0x58] sm:$0xf]
        %v1120 = vld [vmem:[#allocation6 + $0x5c] sm:$0xf]
        %v1121 = vld [vmem:[#allocation6 + $0x60] sm:$0xf]
        %v1122 = vld [vmem:[#allocation6 + $0x64] sm:$0xf]
        %v1123 = vld [vmem:[#allocation6 + $0x68] sm:$0xf]
        %v1124 = vld [vmem:[#allocation6 + $0x6c] sm:$0xf]
        %v1125 = vld [vmem:[#allocation6 + $0x70] sm:$0xf]
        %v1126 = vld [vmem:[#allocation6 + $0x74] sm:$0xf]
        %v1127 = vld [vmem:[#allocation6 + $0x78] sm:$0xf]
        %v1128 = vld [vmem:[#allocation6 + $0x7c] sm:$0xf]
        %v1129 = vld [vmem:[%s3] sm:$0x1]
        %v1131 = vlaneseq
        %v1132 = vshrl.u32 %v1131, 7
        %v1133 = vsub.s32 0, %v1132
        %v1134 = vrot.slane %v1129, %v1133
        %v1168 = vunpack.c.l.b16 %v1097
        %v1169 = vunpack.c.l.b16 %v1098
        %v1170 = vunpack.c.l.b16 %v1099
        %v1171 = vunpack.c.l.b16 %v1100
        %v1172 = vunpack.c.l.b16 %v1101
        %v1173 = vunpack.c.l.b16 %v1102
        %v1174 = vunpack.c.l.b16 %v1103
        %v1175 = vunpack.c.l.b16 %v1104
        %v1176 = vunpack.c.l.b16 %v1105
        %v1177 = vunpack.c.l.b16 %v1106
        %v1178 = vunpack.c.l.b16 %v1107
        %v1179 = vunpack.c.l.b16 %v1108
        %v1180 = vunpack.c.l.b16 %v1109
        %v1181 = vunpack.c.l.b16 %v1110
        %v1182 = vunpack.c.l.b16 %v1111
        %v1183 = vunpack.c.l.b16 %v1112
        %v1184 = vunpack.c.l.b16 %v1113
        %v1185 = vunpack.c.l.b16 %v1114
        %v1186 = vunpack.c.l.b16 %v1115
        %v1187 = vunpack.c.l.b16 %v1116
        %v1188 = vunpack.c.l.b16 %v1117
        %v1189 = vunpack.c.l.b16 %v1118
        %v1190 = vunpack.c.l.b16 %v1119
        %v1191 = vunpack.c.l.b16 %v1120
        %v1192 = vunpack.c.l.b16 %v1121
        %v1193 = vunpack.c.l.b16 %v1122
        %v1194 = vunpack.c.l.b16 %v1123
        %v1195 = vunpack.c.l.b16 %v1124
        %v1196 = vunpack.c.l.b16 %v1125
        %v1197 = vunpack.c.l.b16 %v1126
        %v1198 = vunpack.c.l.b16 %v1127
        %v1199 = vunpack.c.l.b16 %v1128
        %v1200 = vpack.c.b16 %v1169, %v1168
        %v1201 = vpack.c.b16 %v1171, %v1170
        %v1202 = vpack.c.b16 %v1173, %v1172
        %v1203 = vpack.c.b16 %v1175, %v1174
        %v1204 = vpack.c.b16 %v1177, %v1176
        %v1205 = vpack.c.b16 %v1179, %v1178
        %v1206 = vpack.c.b16 %v1181, %v1180
        %v1207 = vpack.c.b16 %v1183, %v1182
        %v1208 = vpack.c.b16 %v1185, %v1184
        %v1209 = vpack.c.b16 %v1187, %v1186
        %v1210 = vpack.c.b16 %v1189, %v1188
        %v1211 = vpack.c.b16 %v1191, %v1190
        %v1212 = vpack.c.b16 %v1193, %v1192
        %v1213 = vpack.c.b16 %v1195, %v1194
        %v1214 = vpack.c.b16 %v1197, %v1196
        %v1215 = vpack.c.b16 %v1199, %v1198
        %1232 = vmatprep.subr.bf16.mxu0 0
        %1233 = vmatpush1.bf16.msra.mxu0 %v1207
        %1234 = vmatprep.subr.bf16.mxu0 0
        %1235 = vmatpush1.bf16.msra.mxu0 %v1206
        %1236 = vmatprep.subr.bf16.mxu0 0
        %1237 = vmatpush1.bf16.msra.mxu0 %v1205
        %1238 = vmatprep.subr.bf16.mxu0 0
        %1239 = vmatpush1.bf16.msra.mxu0 %v1204
        %1240 = vmatprep.subr.bf16.mxu0 0
        %1241 = vmatpush1.bf16.msra.mxu0 %v1203
        %1242 = vmatprep.subr.bf16.mxu0 0
        %1243 = vmatpush1.bf16.msra.mxu0 %v1202
        %1244 = vmatprep.subr.bf16.mxu0 0
        %1245 = vmatpush1.bf16.msra.mxu0 %v1201
        %1246 = vmatprep.subr.bf16.mxu0 0
        %1247 = vmatpush1.bf16.msra.mxu0 %v1200
        %1248 = vmatprep.subr.bf16.mxu0 0
        %1249 = vmatpush2.bf16.msra.mxu0 %v1215
        %1250 = vmatprep.subr.bf16.mxu0 0
        %1251 = vmatpush2.bf16.msra.mxu0 %v1214
        %1252 = vmatprep.subr.bf16.mxu0 0
        %1253 = vmatpush2.bf16.msra.mxu0 %v1213
        %1254 = vmatprep.subr.bf16.mxu0 0
        %1255 = vmatpush2.bf16.msra.mxu0 %v1212
        %1256 = vmatprep.subr.bf16.mxu0 0
        %1257 = vmatpush2.bf16.msra.mxu0 %v1211
        %1258 = vmatprep.subr.bf16.mxu0 0
        %1259 = vmatpush2.bf16.msra.mxu0 %v1210
        %1260 = vmatprep.subr.bf16.mxu0 0
        %1261 = vmatpush2.bf16.msra.mxu0 %v1209
        %1262 = vmatprep.subr.bf16.mxu0 0
        %1263 = vmatpush2.bf16.msra.mxu0 %v1208
        %1264 = vmatprep.mubr.bf16.mxu0 %v1096
        %1265 = vmatmul.mubr.bf16.gmra.mxu0 %v1095
        %v1266 = vpop.f32.mrf.mxu0
        %v1267 = vadd.f32 %v1134, %v1266
        %v1268 = vpop.f32.mrf.mxu0
        %v1269 = vpop.f32.mrf.mxu0
        %v1270 = vpop.f32.mrf.mxu0
        %1271 = vdwg.mxu0
        %v1272 = vld [vmem:[#allocation8] sm:$0x1]
        %1274 = vset.pattern.permute.xlu0 0
        %1275 = vperm.xlu0 %1274, %v1094
        %v1276 = vpop.permute.xlu0 %1275
        %v1278 = vlaneseq
        %v1279 = vshrl.u32 %v1278, 7
        %v1280 = vsub.s32 0, %v1279
        %v1281 = vrot.slane %v1272, %v1280
        %v1282 = vmul.f32 %v1276, %v1281
        %v1283 = vld [vmem:[#allocation8 + $0x1] sm:$0x1]
        %1284 = vset.pattern.permute.xlu0 1
        %1285 = vperm.xlu0 %1284, %v1094
        %v1286 = vpop.permute.xlu0 %1285
        %v1288 = vlaneseq
        %v1289 = vshrl.u32 %v1288, 7
        %v1290 = vsub.s32 0, %v1289
        %v1291 = vrot.slane %v1283, %v1290
        %v1292 = vmul.f32 %v1286, %v1291
        %v1293 = vadd.f32 %v1282, %v1292
        %v1294 = vld [vmem:[#allocation9] sm:$0x1]
        %v1296 = vlaneseq
        %v1297 = vshrl.u32 %v1296, 7
        %v1298 = vsub.s32 0, %v1297
        %v1299 = vrot.slane %v1294, %v1298
        %v1301 = vadd.f32 %v1293, %v1299
        %v1302 = vadd.f32 %v1267, %v1301
        %v1303 = vlaneseq
        %v1304 = vshrl.u32 %v1303, 7
        %vm1305 = vcmp.eq.s32.totalorder %v1304, 0
        %v1306 = vld [vmem:[#allocation11] sm:$0x1]
        %v1307 = vsel %vm1305, 1, 0
        %vm1308 = vcmp.eq.s32.totalorder %v1307, 1
        %v1310 = vlaneseq
        %v1311 = vshrl.u32 %v1310, 7
        %v1312 = vsub.s32 0, %v1311
        %v1313 = vrot.slane %v1306, %v1312
        %v1315 = vsel %vm1308, %v1313, 0.0
        %1316 = vst [vmem:[#allocation2] sm:$0xff] %v1315
        %1317 = vst [vmem:[#allocation2 + $0x8] sm:$0xff] %v1302
        loop: start=0, step=1, limit=6
        $region205: #{tpu_custom_call.1} parent=123 // loop_pre_header
          _
        $region206: #{tpu_custom_call.1} parent=123 // loop_header
          %s1319 = sphi 0, %s1323
          %p1320 = scmp.ge.s32.totalorder %s1319, 6
        $region207: #{tpu_custom_call.1} parent=123 // loop_header_branch
          %1322 = sbr.rel (%p1320) target = $region211
        $region208: #{tpu_custom_call.1} parent=123 // loop_body
          %v1324 = vld [vmem:[#allocation2] sm:$0xff]
          %v1325 = vld [vmem:[#allocation2 + $0x8] sm:$0xff]
          %s1326 = scalar_lea.vmem [#allocation12], %s1319
          %v1327 = vld [vmem:[%s1326] sm:$0x1]
          %s1328 = scalar_lea.vmem [#allocation14], %s1319
          %v1329 = vld [vmem:[%s1328] sm:$0x1]
          %1330 = vadd.xlane.f32.xlu0 %v1324
          %v1331 = vpop.xlane.xlu0 %1330
          %1332 = vadd.xlane.f32.xlu0 %v1325
          %v1333 = vpop.xlane.xlu0 %1332
          %v1334 = vrcp.pop 128.0
          %v1335 = vmul.f32 %v1331, %v1334
          %v1336 = vmul.f32 %v1333, %v1334
          %v1337 = vsub.f32 %v1324, %v1335
          %v1338 = vsub.f32 %v1325, %v1336
          %v1339 = vmul.f32 %v1337, %v1337
          %v1340 = vmul.f32 %v1338, %v1338
          %1341 = vadd.xlane.f32.xlu0 %v1339
          %v1342 = vpop.xlane.xlu0 %1341
          %1343 = vadd.xlane.f32.xlu0 %v1340
          %v1344 = vpop.xlane.xlu0 %1343
          %v1345 = vmul.f32 %v1342, %v1334
          %v1346 = vmul.f32 %v1344, %v1334
          %v1347 = vadd.f32 %v1345, 1e-05
          %v1348 = vadd.f32 %v1346, 1e-05
          %v1349 = vrsqrt.pop %v1347
          %v1350 = vrsqrt.pop %v1348
          %v1351 = vmul.f32 %v1337, %v1349
          %v1352 = vmul.f32 %v1338, %v1350
          %v1354 = vlaneseq
          %v1355 = vshrl.u32 %v1354, 7
          %v1356 = vsub.s32 0, %v1355
          %v1357 = vrot.slane %v1327, %v1356
          %v1359 = vmul.f32 %v1351, %v1357
          %v1360 = vmul.f32 %v1352, %v1357
          %v1362 = vlaneseq
          %v1363 = vshrl.u32 %v1362, 7
          %v1364 = vsub.s32 0, %v1363
          %v1365 = vrot.slane %v1329, %v1364
          %v1367 = vadd.f32 %v1359, %v1365
          %v1368 = vadd.f32 %v1360, %v1365
          %v1369 = vpack.c.bf16 %v1368, %v1367
          %s1370 = smul.u32 %s1319, 48
          %s1371 = smul.addr %s1370, 4
          %s1372 = scalar_lea.vmem [#allocation15], %s1371
          %v1373 = vld [vmem:[%s1372] sm:$0xff]
          %v1374 = vld [vmem:[%s1372 + $0x8] sm:$0xf]
          %v1375 = vld [vmem:[%s1372 + $0xc] sm:$0xff]
          %v1376 = vld [vmem:[%s1372 + $0x14] sm:$0xf]
          %v1377 = vld [vmem:[%s1372 + $0x18] sm:$0xff]
          %v1378 = vld [vmem:[%s1372 + $0x20] sm:$0xf]
          %v1379 = vld [vmem:[%s1372 + $0x24] sm:$0xff]
          %v1380 = vld [vmem:[%s1372 + $0x2c] sm:$0xf]
          %v1381 = vld [vmem:[%s1372 + $0x30] sm:$0xff]
          %v1382 = vld [vmem:[%s1372 + $0x38] sm:$0xf]
          %v1383 = vld [vmem:[%s1372 + $0x3c] sm:$0xff]
          %v1384 = vld [vmem:[%s1372 + $0x44] sm:$0xf]
          %v1385 = vld [vmem:[%s1372 + $0x48] sm:$0xff]
          %v1386 = vld [vmem:[%s1372 + $0x50] sm:$0xf]
          %v1387 = vld [vmem:[%s1372 + $0x54] sm:$0xff]
          %v1388 = vld [vmem:[%s1372 + $0x5c] sm:$0xf]
          %v1389 = vld [vmem:[%s1372 + $0x60] sm:$0xff]
          %v1390 = vld [vmem:[%s1372 + $0x68] sm:$0xf]
          %v1391 = vld [vmem:[%s1372 + $0x6c] sm:$0xff]
          %v1392 = vld [vmem:[%s1372 + $0x74] sm:$0xf]
          %v1393 = vld [vmem:[%s1372 + $0x78] sm:$0xff]
          %v1394 = vld [vmem:[%s1372 + $0x80] sm:$0xf]
          %v1395 = vld [vmem:[%s1372 + $0x84] sm:$0xff]
          %v1396 = vld [vmem:[%s1372 + $0x8c] sm:$0xf]
          %v1397 = vld [vmem:[%s1372 + $0x90] sm:$0xff]
          %v1398 = vld [vmem:[%s1372 + $0x98] sm:$0xf]
          %v1399 = vld [vmem:[%s1372 + $0x9c] sm:$0xff]
          %v1400 = vld [vmem:[%s1372 + $0xa4] sm:$0xf]
          %v1401 = vld [vmem:[%s1372 + $0xa8] sm:$0xff]
          %v1402 = vld [vmem:[%s1372 + $0xb0] sm:$0xf]
          %v1403 = vld [vmem:[%s1372 + $0xb4] sm:$0xff]
          %v1404 = vld [vmem:[%s1372 + $0xbc] sm:$0xf]
          %s1405 = smul.u32 %s1319, 3
          %s1406 = scalar_lea.vmem [#allocation17], %s1405
          %v1407 = vld [vmem:[%s1406] sm:$0x7]
          %v1409 = vlaneseq
          %v1410 = vshrl.u32 %v1409, 7
          %v1411 = vsub.s32 0, %v1410
          %v1412 = vrot.slane %v1407, %v1411
          %v1413 = vlaneseq
          %v1414 = vshrl.u32 %v1413, 7
          %v1415 = vsub.s32 1, %v1414
          %v1416 = vrot.slane %v1407, %v1415
          %v1417 = vlaneseq
          %v1418 = vshrl.u32 %v1417, 7
          %v1419 = vsub.s32 2, %v1418
          %v1420 = vrot.slane %v1407, %v1419
          %v1456 = vunpack.c.l.b16 %v1373
          %v1457 = vunpack.c.h.b16 %v1373
          %v1458 = vunpack.c.l.b16 %v1374
          %v1459 = vunpack.c.l.b16 %v1375
          %v1460 = vunpack.c.h.b16 %v1375
          %v1461 = vunpack.c.l.b16 %v1376
          %v1462 = vunpack.c.l.b16 %v1377
          %v1463 = vunpack.c.h.b16 %v1377
          %v1464 = vunpack.c.l.b16 %v1378
          %v1465 = vunpack.c.l.b16 %v1379
          %v1466 = vunpack.c.h.b16 %v1379
          %v1467 = vunpack.c.l.b16 %v1380
          %v1468 = vunpack.c.l.b16 %v1381
          %v1469 = vunpack.c.h.b16 %v1381
          %v1470 = vunpack.c.l.b16 %v1382
          %v1471 = vunpack.c.l.b16 %v1383
          %v1472 = vunpack.c.h.b16 %v1383
          %v1473 = vunpack.c.l.b16 %v1384
          %v1474 = vunpack.c.l.b16 %v1385
          %v1475 = vunpack.c.h.b16 %v1385
          %v1476 = vunpack.c.l.b16 %v1386
          %v1477 = vunpack.c.l.b16 %v1387
          %v1478 = vunpack.c.h.b16 %v1387
          %v1479 = vunpack.c.l.b16 %v1388
          %v1480 = vunpack.c.l.b16 %v1389
          %v1481 = vunpack.c.h.b16 %v1389
          %v1482 = vunpack.c.l.b16 %v1390
          %v1483 = vunpack.c.l.b16 %v1391
          %v1484 = vunpack.c.h.b16 %v1391
          %v1485 = vunpack.c.l.b16 %v1392
          %v1486 = vunpack.c.l.b16 %v1393
          %v1487 = vunpack.c.h.b16 %v1393
          %v1488 = vunpack.c.l.b16 %v1394
          %v1489 = vunpack.c.l.b16 %v1395
          %v1490 = vunpack.c.h.b16 %v1395
          %v1491 = vunpack.c.l.b16 %v1396
          %v1492 = vunpack.c.l.b16 %v1397
          %v1493 = vunpack.c.h.b16 %v1397
          %v1494 = vunpack.c.l.b16 %v1398
          %v1495 = vunpack.c.l.b16 %v1399
          %v1496 = vunpack.c.h.b16 %v1399
          %v1497 = vunpack.c.l.b16 %v1400
          %v1498 = vunpack.c.l.b16 %v1401
          %v1499 = vunpack.c.h.b16 %v1401
          %v1500 = vunpack.c.l.b16 %v1402
          %v1501 = vunpack.c.l.b16 %v1403
          %v1502 = vunpack.c.h.b16 %v1403
          %v1503 = vunpack.c.l.b16 %v1404
          %v1504 = vpack.c.b16 %v1459, %v1456
          %v1505 = vpack.c.b16 %v1460, %v1457
          %v1506 = vpack.c.b16 %v1461, %v1458
          %v1507 = vpack.c.b16 %v1465, %v1462
          %v1508 = vpack.c.b16 %v1466, %v1463
          %v1509 = vpack.c.b16 %v1467, %v1464
          %v1510 = vpack.c.b16 %v1471, %v1468
          %v1511 = vpack.c.b16 %v1472, %v1469
          %v1512 = vpack.c.b16 %v1473, %v1470
          %v1513 = vpack.c.b16 %v1477, %v1474
          %v1514 = vpack.c.b16 %v1478, %v1475
          %v1515 = vpack.c.b16 %v1479, %v1476
          %v1516 = vpack.c.b16 %v1483, %v1480
          %v1517 = vpack.c.b16 %v1484, %v1481
          %v1518 = vpack.c.b16 %v1485, %v1482
          %v1519 = vpack.c.b16 %v1489, %v1486
          %v1520 = vpack.c.b16 %v1490, %v1487
          %v1521 = vpack.c.b16 %v1491, %v1488
          %v1522 = vpack.c.b16 %v1495, %v1492
          %v1523 = vpack.c.b16 %v1496, %v1493
          %v1524 = vpack.c.b16 %v1497, %v1494
          %v1525 = vpack.c.b16 %v1501, %v1498
          %v1526 = vpack.c.b16 %v1502, %v1499
          %v1527 = vpack.c.b16 %v1503, %v1500
          %1552 = vmatprep.subr.bf16.mxu0 %v1526
          %1553 = vmatpush1.bf16.msra.mxu0 %v1525
          %1554 = vmatprep.subr.bf16.mxu0 %v1523
          %1555 = vmatpush1.bf16.msra.mxu0 %v1522
          %1556 = vmatprep.subr.bf16.mxu0 %v1520
          %1557 = vmatpush1.bf16.msra.mxu0 %v1519
          %1558 = vmatprep.subr.bf16.mxu0 %v1517
          %1559 = vmatpush1.bf16.msra.mxu0 %v1516
          %1560 = vmatprep.subr.bf16.mxu0 %v1514
          %1561 = vmatpush1.bf16.msra.mxu0 %v1513
          %1562 = vmatprep.subr.bf16.mxu0 %v1511
          %1563 = vmatpush1.bf16.msra.mxu0 %v1510
          %1564 = vmatprep.subr.bf16.mxu0 %v1508
          %1565 = vmatpush1.bf16.msra.mxu0 %v1507
          %1566 = vmatprep.subr.bf16.mxu0 %v1505
          %1567 = vmatpush1.bf16.msra.mxu0 %v1504
          %1568 = vmatprep.subr.bf16.mxu0 0
          %1569 = vmatpush2.bf16.msra.mxu0 0
          %1570 = vmatprep.subr.bf16.mxu0 0
          %1571 = vmatpush2.bf16.msra.mxu0 0
          %1572 = vmatprep.subr.bf16.mxu0 0
          %1573 = vmatpush2.bf16.msra.mxu0 0
          %1574 = vmatprep.subr.bf16.mxu0 0
          %1575 = vmatpush2.bf16.msra.mxu0 0
          %1576 = vmatprep.subr.bf16.mxu0 0
          %1577 = vmatpush2.bf16.msra.mxu0 0
          %1578 = vmatprep.subr.bf16.mxu0 0
          %1579 = vmatpush2.bf16.msra.mxu0 0
          %1580 = vmatprep.subr.bf16.mxu0 0
          %1581 = vmatpush2.bf16.msra.mxu0 0
          %1582 = vmatprep.subr.bf16.mxu0 0
          %1583 = vmatpush2.bf16.msra.mxu0 0
          %1584 = vmatprep.mubr.bf16.mxu0 0
          %1585 = vmatmul.mubr.bf16.gmra.mxu0 %v1369
          %v1586 = vpop.f32.mrf.mxu0
          %v1587 = vadd.f32 %v1412, %v1586
          %v1588 = vpop.f32.mrf.mxu0
          %v1589 = vadd.f32 %v1416, %v1588
          %v1590 = vpop.f32.mrf.mxu0
          %v1591 = vadd.f32 %v1412, %v1590
          %v1592 = vpop.f32.mrf.mxu0
          %v1593 = vadd.f32 %v1416, %v1592
          %1594 = vdwg.mxu0
          %1595 = vmatprep.subr.bf16.mxu0 0
          %1596 = vmatpush1.bf16.msra.mxu0 %v1527
          %1597 = vmatprep.subr.bf16.mxu0 0
          %1598 = vmatpush1.bf16.msra.mxu0 %v1524
          %1599 = vmatprep.subr.bf16.mxu0 0
          %1600 = vmatpush1.bf16.msra.mxu0 %v1521
          %1601 = vmatprep.subr.bf16.mxu0 0
          %1602 = vmatpush1.bf16.msra.mxu0 %v1518
          %1603 = vmatprep.subr.bf16.mxu0 0
          %1604 = vmatpush1.bf16.msra.mxu0 %v1515
          %1605 = vmatprep.subr.bf16.mxu0 0
          %1606 = vmatpush1.bf16.msra.mxu0 %v1512
          %1607 = vmatprep.subr.bf16.mxu0 0
          %1608 = vmatpush1.bf16.msra.mxu0 %v1509
          %1609 = vmatprep.subr.bf16.mxu0 0
          %1610 = vmatpush1.bf16.msra.mxu0 %v1506
          %1611 = vmatprep.subr.bf16.mxu0 0
          %1612 = vmatpush2.bf16.msra.mxu0 0
          %1613 = vmatprep.subr.bf16.mxu0 0
          %1614 = vmatpush2.bf16.msra.mxu0 0
          %1615 = vmatprep.subr.bf16.mxu0 0
          %1616 = vmatpush2.bf16.msra.mxu0 0
          %1617 = vmatprep.subr.bf16.mxu0 0
          %1618 = vmatpush2.bf16.msra.mxu0 0
          %1619 = vmatprep.subr.bf16.mxu0 0
          %1620 = vmatpush2.bf16.msra.mxu0 0
          %1621 = vmatprep.subr.bf16.mxu0 0
          %1622 = vmatpush2.bf16.msra.mxu0 0
          %1623 = vmatprep.subr.bf16.mxu0 0
          %1624 = vmatpush2.bf16.msra.mxu0 0
          %1625 = vmatprep.subr.bf16.mxu0 0
          %1626 = vmatpush2.bf16.msra.mxu0 0
          %1627 = vmatprep.mubr.bf16.mxu0 0
          %1628 = vmatmul.mubr.bf16.gmra.mxu0 %v1369
          %v1629 = vpop.f32.mrf.mxu0
          %v1630 = vadd.f32 %v1420, %v1629
          %v1631 = vpop.f32.mrf.mxu0
          %v1632 = vpop.f32.mrf.mxu0
          %v1633 = vadd.f32 %v1420, %v1632
          %v1634 = vpop.f32.mrf.mxu0
          %1635 = vdwg.mxu0
          %v1636 = vpack.c.bf16 %v1591, %v1587
          %v1637 = vpack.c.bf16 %v1593, %v1589
          %v1638 = vpack.c.bf16 %v1633, %v1630
          %v1639 = vld [vmem:[#allocation33] sm:$0xf]
          %v1640 = vld [vmem:[#allocation33 + $0x4] sm:$0xf]
          %v1641 = vld [vmem:[#allocation33 + $0x8] sm:$0xf]
          %v1642 = vld [vmem:[#allocation33 + $0xc] sm:$0xf]
          %v1643 = vld [vmem:[#allocation33 + $0x10] sm:$0xf]
          %v1644 = vld [vmem:[#allocation33 + $0x14] sm:$0xf]
          %v1645 = vld [vmem:[#allocation33 + $0x18] sm:$0xf]
          %v1646 = vld [vmem:[#allocation33 + $0x1c] sm:$0xf]
          %v1647 = vld [vmem:[#allocation33 + $0x20] sm:$0xf]
          %v1648 = vld [vmem:[#allocation33 + $0x24] sm:$0xf]
          %v1649 = vld [vmem:[#allocation33 + $0x28] sm:$0xf]
          %v1650 = vld [vmem:[#allocation33 + $0x2c] sm:$0xf]
          %v1651 = vld [vmem:[#allocation33 + $0x30] sm:$0xf]
          %v1652 = vld [vmem:[#allocation33 + $0x34] sm:$0xf]
          %v1653 = vld [vmem:[#allocation33 + $0x38] sm:$0xf]
          %v1654 = vld [vmem:[#allocation33 + $0x3c] sm:$0xf]
          %v1671 = vunpack.c.l.b16 %v1639
          %v1672 = vunpack.c.l.b16 %v1640
          %v1673 = vunpack.c.l.b16 %v1641
          %v1674 = vunpack.c.l.b16 %v1642
          %v1675 = vunpack.c.l.b16 %v1643
          %v1676 = vunpack.c.l.b16 %v1644
          %v1677 = vunpack.c.l.b16 %v1645
          %v1678 = vunpack.c.l.b16 %v1646
          %v1679 = vunpack.c.l.b16 %v1647
          %v1680 = vunpack.c.l.b16 %v1648
          %v1681 = vunpack.c.l.b16 %v1649
          %v1682 = vunpack.c.l.b16 %v1650
          %v1683 = vunpack.c.l.b16 %v1651
          %v1684 = vunpack.c.l.b16 %v1652
          %v1685 = vunpack.c.l.b16 %v1653
          %v1686 = vunpack.c.l.b16 %v1654
          %v1687 = vpack.c.b16 %v1672, %v1671
          %v1688 = vpack.c.b16 %v1674, %v1673
          %v1689 = vpack.c.b16 %v1676, %v1675
          %v1690 = vpack.c.b16 %v1678, %v1677
          %v1691 = vpack.c.b16 %v1680, %v1679
          %v1692 = vpack.c.b16 %v1682, %v1681
          %v1693 = vpack.c.b16 %v1684, %v1683
          %v1694 = vpack.c.b16 %v1686, %v1685
          %v1703 = vmul.bf16 %v1637, %v1687
          %v1704 = vmul.bf16 %v1637, %v1688
          %v1705 = vmul.bf16 %v1637, %v1689
          %v1706 = vmul.bf16 %v1637, %v1690
          %v1707 = vmul.bf16 %v1637, %v1691
          %v1708 = vmul.bf16 %v1637, %v1692
          %v1709 = vmul.bf16 %v1637, %v1693
          %v1710 = vmul.bf16 %v1637, %v1694
          %v1711 = vmul.bf16 %v1638, %v1687
          %v1712 = vmul.bf16 %v1638, %v1688
          %v1713 = vmul.bf16 %v1638, %v1689
          %v1714 = vmul.bf16 %v1638, %v1690
          %v1715 = vmul.bf16 %v1638, %v1691
          %v1716 = vmul.bf16 %v1638, %v1692
          %v1717 = vmul.bf16 %v1638, %v1693
          %v1718 = vmul.bf16 %v1638, %v1694
          %v1719 = vld [vmem:[%s25] sm:$0x1]
          %v1721 = vlaneseq
          %v1722 = vshrl.u32 %v1721, 7
          %v1723 = vsub.s32 0, %v1722
          %v1724 = vrot.slane %v1719, %v1723
          %1726 = vmatprep.subr.bf16.mxu0 0
          %1727 = vmatpush1.bf16.xpose.msra.mxu0 %v1710
          %1728 = vmatprep.subr.bf16.mxu0 0
          %1729 = vmatpush1.bf16.xpose.msra.mxu0 %v1709
          %1730 = vmatprep.subr.bf16.mxu0 0
          %1731 = vmatpush1.bf16.xpose.msra.mxu0 %v1708
          %1732 = vmatprep.subr.bf16.mxu0 0
          %1733 = vmatpush1.bf16.xpose.msra.mxu0 %v1707
          %1734 = vmatprep.subr.bf16.mxu0 0
          %1735 = vmatpush1.bf16.xpose.msra.mxu0 %v1706
          %1736 = vmatprep.subr.bf16.mxu0 0
          %1737 = vmatpush1.bf16.xpose.msra.mxu0 %v1705
          %1738 = vmatprep.subr.bf16.mxu0 0
          %1739 = vmatpush1.bf16.xpose.msra.mxu0 %v1704
          %1740 = vmatprep.subr.bf16.mxu0 0
          %1741 = vmatpush1.bf16.xpose.msra.mxu0 %v1703
          %1742 = vmatprep.subr.bf16.mxu0 0
          %1743 = vmatpush2.bf16.xpose.msra.mxu0 0
          %1744 = vmatprep.subr.bf16.mxu0 0
          %1745 = vmatpush2.bf16.xpose.msra.mxu0 0
          %1746 = vmatprep.subr.bf16.mxu0 0
          %1747 = vmatpush2.bf16.xpose.msra.mxu0 0
          %1748 = vmatprep.subr.bf16.mxu0 0
          %1749 = vmatpush2.bf16.xpose.msra.mxu0 0
          %1750 = vmatprep.subr.bf16.mxu0 0
          %1751 = vmatpush2.bf16.xpose.msra.mxu0 0
          %1752 = vmatprep.subr.bf16.mxu0 0
          %1753 = vmatpush2.bf16.xpose.msra.mxu0 0
          %1754 = vmatprep.subr.bf16.mxu0 0
          %1755 = vmatpush2.bf16.xpose.msra.mxu0 0
          %1756 = vmatprep.subr.bf16.mxu0 0
          %1757 = vmatpush2.bf16.xpose.msra.mxu0 0
          %1758 = vmatprep.mubr.bf16.mxu0 0
          %1759 = vmatmul.mubr.bf16.gmra.mxu0 %v1636
          %v1760 = vpop.f32.mrf.mxu0
          %v1761 = vadd.f32 %v1724, %v1760
          %v1762 = vpop.f32.mrf.mxu0
          %v1763 = vpop.f32.mrf.mxu0
          %v1764 = vadd.f32 %v1724, %v1763
          %v1765 = vpop.f32.mrf.mxu0
          %1766 = vdwg.mxu0
          %1767 = vmax.xlane.f32.xlu0 %v1761
          %v1768 = vpop.xlane.xlu0 %1767
          %1769 = vmax.xlane.f32.xlu0 %v1764
          %v1770 = vpop.xlane.xlu0 %1769
          %v1771 = vsub.f32 %v1761, %v1768
          %v1772 = vsub.f32 %v1764, %v1770
          %v1773 = vmul.f32 %v1771, 1.442695
          %v1774 = vpow.pop %v1773
          %v1775 = vmul.f32 %v1772, 1.442695
          %v1776 = vpow.pop %v1775
          %v1777 = vld [vmem:[%s24] sm:$0xff]
          %v1778 = vld [vmem:[%s24 + $0x8] sm:$0xff]
          %v1779 = vld [vmem:[%s24 + $0x10] sm:$0xff]
          %v1780 = vld [vmem:[%s24 + $0x18] sm:$0xff]
          %v1781 = vld [vmem:[%s24 + $0x20] sm:$0xff]
          %v1782 = vld [vmem:[%s24 + $0x28] sm:$0xff]
          %v1783 = vld [vmem:[%s24 + $0x30] sm:$0xff]
          %v1784 = vld [vmem:[%s24 + $0x38] sm:$0xff]
          %v1785 = vld [vmem:[%s24 + $0x40] sm:$0xff]
          %v1786 = vld [vmem:[%s24 + $0x48] sm:$0xff]
          %v1787 = vld [vmem:[%s24 + $0x50] sm:$0xff]
          %v1788 = vld [vmem:[%s24 + $0x58] sm:$0xff]
          %v1789 = vld [vmem:[%s24 + $0x60] sm:$0xff]
          %v1790 = vld [vmem:[%s24 + $0x68] sm:$0xff]
          %v1791 = vld [vmem:[%s24 + $0x70] sm:$0xff]
          %v1792 = vld [vmem:[%s24 + $0x78] sm:$0xff]
          %1793 = vmatprep.subr.mxu0 0.0
          %1794 = vmatpush1.msra.mxu0 %v1792
          %1795 = vmatprep.subr.mxu0 0.0
          %1796 = vmatpush1.msra.mxu0 %v1791
          %1797 = vmatprep.subr.mxu0 0.0
          %1798 = vmatpush1.msra.mxu0 %v1790
          %1799 = vmatprep.subr.mxu0 0.0
          %1800 = vmatpush1.msra.mxu0 %v1789
          %1801 = vmatprep.subr.mxu0 0.0
          %1802 = vmatpush1.msra.mxu0 %v1788
          %1803 = vmatprep.subr.mxu0 0.0
          %1804 = vmatpush1.msra.mxu0 %v1787
          %1805 = vmatprep.subr.mxu0 0.0
          %1806 = vmatpush1.msra.mxu0 %v1786
          %1807 = vmatprep.subr.mxu0 0.0
          %1808 = vmatpush1.msra.mxu0 %v1785
          %1809 = vmatprep.subr.mxu0 0.0
          %1810 = vmatpush1.msra.mxu0 %v1784
          %1811 = vmatprep.subr.mxu0 0.0
          %1812 = vmatpush1.msra.mxu0 %v1783
          %1813 = vmatprep.subr.mxu0 0.0
          %1814 = vmatpush1.msra.mxu0 %v1782
          %1815 = vmatprep.subr.mxu0 0.0
          %1816 = vmatpush1.msra.mxu0 %v1781
          %1817 = vmatprep.subr.mxu0 0.0
          %1818 = vmatpush1.msra.mxu0 %v1780
          %1819 = vmatprep.subr.mxu0 0.0
          %1820 = vmatpush1.msra.mxu0 %v1779
          %1821 = vmatprep.subr.mxu0 0.0
          %1822 = vmatpush1.msra.mxu0 %v1778
          %1823 = vmatprep.subr.mxu0 0.0
          %1824 = vmatpush1.msra.mxu0 %v1777
          %1825 = vmatprep.subr.mxu0 0.0
          %1826 = vmatpush2.msra.mxu0 0.0
          %1827 = vmatprep.subr.mxu0 0.0
          %1828 = vmatpush2.msra.mxu0 0.0
          %1829 = vmatprep.subr.mxu0 0.0
          %1830 = vmatpush2.msra.mxu0 0.0
          %1831 = vmatprep.subr.mxu0 0.0
          %1832 = vmatpush2.msra.mxu0 0.0
          %1833 = vmatprep.subr.mxu0 0.0
          %1834 = vmatpush2.msra.mxu0 0.0
          %1835 = vmatprep.subr.mxu0 0.0
          %1836 = vmatpush2.msra.mxu0 0.0
          %1837 = vmatprep.subr.mxu0 0.0
          %1838 = vmatpush2.msra.mxu0 0.0
          %1839 = vmatprep.subr.mxu0 0.0
          %1840 = vmatpush2.msra.mxu0 0.0
          %1841 = vmatprep.subr.mxu0 0.0
          %1842 = vmatpush2.msra.mxu0 0.0
          %1843 = vmatprep.subr.mxu0 0.0
          %1844 = vmatpush2.msra.mxu0 0.0
          %1845 = vmatprep.subr.mxu0 0.0
          %1846 = vmatpush2.msra.mxu0 0.0
          %1847 = vmatprep.subr.mxu0 0.0
          %1848 = vmatpush2.msra.mxu0 0.0
          %1849 = vmatprep.subr.mxu0 0.0
          %1850 = vmatpush2.msra.mxu0 0.0
          %1851 = vmatprep.subr.mxu0 0.0
          %1852 = vmatpush2.msra.mxu0 0.0
          %1853 = vmatprep.subr.mxu0 0.0
          %1854 = vmatpush2.msra.mxu0 0.0
          %1855 = vmatprep.subr.mxu0 0.0
          %1856 = vmatpush2.msra.mxu0 0.0
          %1857 = vmatprep.mubr.f32.mxu0 0.0
          %1858 = vmatmul.mubr.f32.gmra.mxu0 %v1774
          %v1859 = vpop.f32.mrf.mxu0
          %v1860 = vadd.f32 0.0, %v1859
          %v1861 = vpop.f32.mrf.mxu0
          %1862 = vmatprep.mubr.f32.mxu0 0.0
          %1863 = vmatmul.mubr.f32.gmra.mxu0 %v1776
          %v1864 = vpop.f32.mrf.mxu0
          %v1865 = vadd.f32 0.0, %v1864
          %v1866 = vpop.f32.mrf.mxu0
          %1867 = vdwg.mxu0
          %v1868 = vrcp.pop %v1860
          %v1869 = vrcp.pop %v1865
          %v1870 = vmul.f32 %v1774, %v1868
          %v1871 = vmul.f32 %v1776, %v1869
          %v1872 = vpack.c.bf16 %v1871, %v1870
          %1873 = vmatprep.subr.bf16.mxu0 0
          %1874 = vmatpush1.bf16.msra.mxu0 %v1718
          %1875 = vmatprep.subr.bf16.mxu0 0
          %1876 = vmatpush1.bf16.msra.mxu0 %v1717
          %1877 = vmatprep.subr.bf16.mxu0 0
          %1878 = vmatpush1.bf16.msra.mxu0 %v1716
          %1879 = vmatprep.subr.bf16.mxu0 0
          %1880 = vmatpush1.bf16.msra.mxu0 %v1715
          %1881 = vmatprep.subr.bf16.mxu0 0
          %1882 = vmatpush1.bf16.msra.mxu0 %v1714
          %1883 = vmatprep.subr.bf16.mxu0 0
          %1884 = vmatpush1.bf16.msra.mxu0 %v1713
          %1885 = vmatprep.subr.bf16.mxu0 0
          %1886 = vmatpush1.bf16.msra.mxu0 %v1712
          %1887 = vmatprep.subr.bf16.mxu0 0
          %1888 = vmatpush1.bf16.msra.mxu0 %v1711
          %1889 = vmatprep.subr.bf16.mxu0 0
          %1890 = vmatpush2.bf16.msra.mxu0 0
          %1891 = vmatprep.subr.bf16.mxu0 0
          %1892 = vmatpush2.bf16.msra.mxu0 0
          %1893 = vmatprep.subr.bf16.mxu0 0
          %1894 = vmatpush2.bf16.msra.mxu0 0
          %1895 = vmatprep.subr.bf16.mxu0 0
          %1896 = vmatpush2.bf16.msra.mxu0 0
          %1897 = vmatprep.subr.bf16.mxu0 0
          %1898 = vmatpush2.bf16.msra.mxu0 0
          %1899 = vmatprep.subr.bf16.mxu0 0
          %1900 = vmatpush2.bf16.msra.mxu0 0
          %1901 = vmatprep.subr.bf16.mxu0 0
          %1902 = vmatpush2.bf16.msra.mxu0 0
          %1903 = vmatprep.subr.bf16.mxu0 0
          %1904 = vmatpush2.bf16.msra.mxu0 0
          %1905 = vmatprep.mubr.bf16.mxu0 0
          %1906 = vmatmul.mubr.bf16.gmra.mxu0 %v1872
          %v1907 = vpop.f32.mrf.mxu0
          %v1908 = vadd.f32 0.0, %v1907
          %v1909 = vpop.f32.mrf.mxu0
          %v1910 = vpop.f32.mrf.mxu0
          %v1911 = vadd.f32 0.0, %v1910
          %v1912 = vpop.f32.mrf.mxu0
          %1913 = vdwg.mxu0
          %v1914 = vpack.c.bf16 %v1911, %v1908
          %s1915 = smul.u32 %s1319, 16
          %s1916 = smul.addr %s1915, 4
          %s1917 = scalar_lea.vmem [#allocation18], %s1916
          %v1918 = vld [vmem:[%s1917] sm:$0xf]
          %v1919 = vld [vmem:[%s1917 + $0x4] sm:$0xf]
          %v1920 = vld [vmem:[%s1917 + $0x8] sm:$0xf]
          %v1921 = vld [vmem:[%s1917 + $0xc] sm:$0xf]
          %v1922 = vld [vmem:[%s1917 + $0x10] sm:$0xf]
          %v1923 = vld [vmem:[%s1917 + $0x14] sm:$0xf]
          %v1924 = vld [vmem:[%s1917 + $0x18] sm:$0xf]
          %v1925 = vld [vmem:[%s1917 + $0x1c] sm:$0xf]
          %v1926 = vld [vmem:[%s1917 + $0x20] sm:$0xf]
          %v1927 = vld [vmem:[%s1917 + $0x24] sm:$0xf]
          %v1928 = vld [vmem:[%s1917 + $0x28] sm:$0xf]
          %v1929 = vld [vmem:[%s1917 + $0x2c] sm:$0xf]
          %v1930 = vld [vmem:[%s1917 + $0x30] sm:$0xf]
          %v1931 = vld [vmem:[%s1917 + $0x34] sm:$0xf]
          %v1932 = vld [vmem:[%s1917 + $0x38] sm:$0xf]
          %v1933 = vld [vmem:[%s1917 + $0x3c] sm:$0xf]
          %s1934 = scalar_lea.vmem [#allocation20], %s1319
          %v1935 = vld [vmem:[%s1934] sm:$0x1]
          %v1937 = vlaneseq
          %v1938 = vshrl.u32 %v1937, 7
          %v1939 = vsub.s32 0, %v1938
          %v1940 = vrot.slane %v1935, %v1939
          %v1958 = vunpack.c.l.b16 %v1918
          %v1959 = vunpack.c.l.b16 %v1919
          %v1960 = vunpack.c.l.b16 %v1920
          %v1961 = vunpack.c.l.b16 %v1921
          %v1962 = vunpack.c.l.b16 %v1922
          %v1963 = vunpack.c.l.b16 %v1923
          %v1964 = vunpack.c.l.b16 %v1924
          %v1965 = vunpack.c.l.b16 %v1925
          %v1966 = vunpack.c.l.b16 %v1926
          %v1967 = vunpack.c.l.b16 %v1927
          %v1968 = vunpack.c.l.b16 %v1928
          %v1969 = vunpack.c.l.b16 %v1929
          %v1970 = vunpack.c.l.b16 %v1930
          %v1971 = vunpack.c.l.b16 %v1931
          %v1972 = vunpack.c.l.b16 %v1932
          %v1973 = vunpack.c.l.b16 %v1933
          %v1974 = vpack.c.b16 %v1959, %v1958
          %v1975 = vpack.c.b16 %v1961, %v1960
          %v1976 = vpack.c.b16 %v1963, %v1962
          %v1977 = vpack.c.b16 %v1965, %v1964
          %v1978 = vpack.c.b16 %v1967, %v1966
          %v1979 = vpack.c.b16 %v1969, %v1968
          %v1980 = vpack.c.b16 %v1971, %v1970
          %v1981 = vpack.c.b16 %v1973, %v1972
          %1990 = vmatprep.subr.bf16.mxu0 0
          %1991 = vmatpush1.bf16.msra.mxu0 %v1981
          %1992 = vmatprep.subr.bf16.mxu0 0
          %1993 = vmatpush1.bf16.msra.mxu0 %v1980
          %1994 = vmatprep.subr.bf16.mxu0 0
          %1995 = vmatpush1.bf16.msra.mxu0 %v1979
          %1996 = vmatprep.subr.bf16.mxu0 0
          %1997 = vmatpush1.bf16.msra.mxu0 %v1978
          %1998 = vmatprep.subr.bf16.mxu0 0
          %1999 = vmatpush1.bf16.msra.mxu0 %v1977
          %2000 = vmatprep.subr.bf16.mxu0 0
          %2001 = vmatpush1.bf16.msra.mxu0 %v1976
          %2002 = vmatprep.subr.bf16.mxu0 0
          %2003 = vmatpush1.bf16.msra.mxu0 %v1975
          %2004 = vmatprep.subr.bf16.mxu0 0
          %2005 = vmatpush1.bf16.msra.mxu0 %v1974
          %2006 = vmatprep.subr.bf16.mxu0 0
          %2007 = vmatpush2.bf16.msra.mxu0 0
          %2008 = vmatprep.subr.bf16.mxu0 0
          %2009 = vmatpush2.bf16.msra.mxu0 0
          %2010 = vmatprep.subr.bf16.mxu0 0
          %2011 = vmatpush2.bf16.msra.mxu0 0
          %2012 = vmatprep.subr.bf16.mxu0 0
          %2013 = vmatpush2.bf16.msra.mxu0 0
          %2014 = vmatprep.subr.bf16.mxu0 0
          %2015 = vmatpush2.bf16.msra.mxu0 0
          %2016 = vmatprep.subr.bf16.mxu0 0
          %2017 = vmatpush2.bf16.msra.mxu0 0
          %2018 = vmatprep.subr.bf16.mxu0 0
          %2019 = vmatpush2.bf16.msra.mxu0 0
          %2020 = vmatprep.subr.bf16.mxu0 0
          %2021 = vmatpush2.bf16.msra.mxu0 0
          %2022 = vmatprep.mubr.bf16.mxu0 0
          %2023 = vmatmul.mubr.bf16.gmra.mxu0 %v1914
          %v2024 = vpop.f32.mrf.mxu0
          %v2025 = vadd.f32 %v1940, %v2024
          %v2026 = vpop.f32.mrf.mxu0
          %v2027 = vpop.f32.mrf.mxu0
          %v2028 = vadd.f32 %v1940, %v2027
          %v2029 = vpop.f32.mrf.mxu0
          %2030 = vdwg.mxu0
          %v2031 = vadd.f32 %v1324, %v2025
          %v2032 = vadd.f32 %v1325, %v2028
          %s2033 = scalar_lea.vmem [#allocation21], %s1319
          %v2034 = vld [vmem:[%s2033] sm:$0x1]
          %s2035 = scalar_lea.vmem [#allocation23], %s1319
          %v2036 = vld [vmem:[%s2035] sm:$0x1]
          %2037 = vadd.xlane.f32.xlu0 %v2031
          %v2038 = vpop.xlane.xlu0 %2037
          %2039 = vadd.xlane.f32.xlu0 %v2032
          %v2040 = vpop.xlane.xlu0 %2039
          %v2041 = vmul.f32 %v2038, %v1334
          %v2042 = vmul.f32 %v2040, %v1334
          %v2043 = vsub.f32 %v2031, %v2041
          %v2044 = vsub.f32 %v2032, %v2042
          %v2045 = vmul.f32 %v2043, %v2043
          %v2046 = vmul.f32 %v2044, %v2044
          %2047 = vadd.xlane.f32.xlu0 %v2045
          %v2048 = vpop.xlane.xlu0 %2047
          %2049 = vadd.xlane.f32.xlu0 %v2046
          %v2050 = vpop.xlane.xlu0 %2049
          %v2051 = vmul.f32 %v2048, %v1334
          %v2052 = vmul.f32 %v2050, %v1334
          %v2053 = vadd.f32 %v2051, 1e-05
          %v2054 = vadd.f32 %v2052, 1e-05
          %v2055 = vrsqrt.pop %v2053
          %v2056 = vrsqrt.pop %v2054
          %v2057 = vmul.f32 %v2043, %v2055
          %v2058 = vmul.f32 %v2044, %v2056
          %v2060 = vlaneseq
          %v2061 = vshrl.u32 %v2060, 7
          %v2062 = vsub.s32 0, %v2061
          %v2063 = vrot.slane %v2034, %v2062
          %v2065 = vmul.f32 %v2057, %v2063
          %v2066 = vmul.f32 %v2058, %v2063
          %v2068 = vlaneseq
          %v2069 = vshrl.u32 %v2068, 7
          %v2070 = vsub.s32 0, %v2069
          %v2071 = vrot.slane %v2036, %v2070
          %v2073 = vadd.f32 %v2065, %v2071
          %v2074 = vadd.f32 %v2066, %v2071
          %v2075 = vpack.c.bf16 %v2074, %v2073
          %s2076 = smul.u32 %s1319, 64
          %s2077 = smul.addr %s2076, 4
          %s2078 = scalar_lea.vmem [#allocation24], %s2077
          %v2079 = vld [vmem:[%s2078] sm:$0xff]
          %v2080 = vld [vmem:[%s2078 + $0x8] sm:$0xff]
          %v2081 = vld [vmem:[%s2078 + $0x10] sm:$0xff]
          %v2082 = vld [vmem:[%s2078 + $0x18] sm:$0xff]
          %v2083 = vld [vmem:[%s2078 + $0x20] sm:$0xff]
          %v2084 = vld [vmem:[%s2078 + $0x28] sm:$0xff]
          %v2085 = vld [vmem:[%s2078 + $0x30] sm:$0xff]
          %v2086 = vld [vmem:[%s2078 + $0x38] sm:$0xff]
          %v2087 = vld [vmem:[%s2078 + $0x40] sm:$0xff]
          %v2088 = vld [vmem:[%s2078 + $0x48] sm:$0xff]
          %v2089 = vld [vmem:[%s2078 + $0x50] sm:$0xff]
          %v2090 = vld [vmem:[%s2078 + $0x58] sm:$0xff]
          %v2091 = vld [vmem:[%s2078 + $0x60] sm:$0xff]
          %v2092 = vld [vmem:[%s2078 + $0x68] sm:$0xff]
          %v2093 = vld [vmem:[%s2078 + $0x70] sm:$0xff]
          %v2094 = vld [vmem:[%s2078 + $0x78] sm:$0xff]
          %v2095 = vld [vmem:[%s2078 + $0x80] sm:$0xff]
          %v2096 = vld [vmem:[%s2078 + $0x88] sm:$0xff]
          %v2097 = vld [vmem:[%s2078 + $0x90] sm:$0xff]
          %v2098 = vld [vmem:[%s2078 + $0x98] sm:$0xff]
          %v2099 = vld [vmem:[%s2078 + $0xa0] sm:$0xff]
          %v2100 = vld [vmem:[%s2078 + $0xa8] sm:$0xff]
          %v2101 = vld [vmem:[%s2078 + $0xb0] sm:$0xff]
          %v2102 = vld [vmem:[%s2078 + $0xb8] sm:$0xff]
          %v2103 = vld [vmem:[%s2078 + $0xc0] sm:$0xff]
          %v2104 = vld [vmem:[%s2078 + $0xc8] sm:$0xff]
          %v2105 = vld [vmem:[%s2078 + $0xd0] sm:$0xff]
          %v2106 = vld [vmem:[%s2078 + $0xd8] sm:$0xff]
          %v2107 = vld [vmem:[%s2078 + $0xe0] sm:$0xff]
          %v2108 = vld [vmem:[%s2078 + $0xe8] sm:$0xff]
          %v2109 = vld [vmem:[%s2078 + $0xf0] sm:$0xff]
          %v2110 = vld [vmem:[%s2078 + $0xf8] sm:$0xff]
          %s2111 = smul.u32 %s1319, 4
          %s2112 = scalar_lea.vmem [#allocation26], %s2111
          %v2113 = vld [vmem:[%s2112] sm:$0xf]
          %v2115 = vlaneseq
          %v2116 = vshrl.u32 %v2115, 7
          %v2117 = vsub.s32 0, %v2116
          %v2118 = vrot.slane %v2113, %v2117
          %v2119 = vlaneseq
          %v2120 = vshrl.u32 %v2119, 7
          %v2121 = vsub.s32 1, %v2120
          %v2122 = vrot.slane %v2113, %v2121
          %v2123 = vlaneseq
          %v2124 = vshrl.u32 %v2123, 7
          %v2125 = vsub.s32 2, %v2124
          %v2126 = vrot.slane %v2113, %v2125
          %v2127 = vlaneseq
          %v2128 = vshrl.u32 %v2127, 7
          %v2129 = vsub.s32 3, %v2128
          %v2130 = vrot.slane %v2113, %v2129
          %v2167 = vunpack.c.l.b16 %v2079
          %v2168 = vunpack.c.h.b16 %v2079
          %v2169 = vunpack.c.l.b16 %v2080
          %v2170 = vunpack.c.h.b16 %v2080
          %v2171 = vunpack.c.l.b16 %v2081
          %v2172 = vunpack.c.h.b16 %v2081
          %v2173 = vunpack.c.l.b16 %v2082
          %v2174 = vunpack.c.h.b16 %v2082
          %v2175 = vunpack.c.l.b16 %v2083
          %v2176 = vunpack.c.h.b16 %v2083
          %v2177 = vunpack.c.l.b16 %v2084
          %v2178 = vunpack.c.h.b16 %v2084
          %v2179 = vunpack.c.l.b16 %v2085
          %v2180 = vunpack.c.h.b16 %v2085
          %v2181 = vunpack.c.l.b16 %v2086
          %v2182 = vunpack.c.h.b16 %v2086
          %v2183 = vunpack.c.l.b16 %v2087
          %v2184 = vunpack.c.h.b16 %v2087
          %v2185 = vunpack.c.l.b16 %v2088
          %v2186 = vunpack.c.h.b16 %v2088
          %v2187 = vunpack.c.l.b16 %v2089
          %v2188 = vunpack.c.h.b16 %v2089
          %v2189 = vunpack.c.l.b16 %v2090
          %v2190 = vunpack.c.h.b16 %v2090
          %v2191 = vunpack.c.l.b16 %v2091
          %v2192 = vunpack.c.h.b16 %v2091
          %v2193 = vunpack.c.l.b16 %v2092
          %v2194 = vunpack.c.h.b16 %v2092
          %v2195 = vunpack.c.l.b16 %v2093
          %v2196 = vunpack.c.h.b16 %v2093
          %v2197 = vunpack.c.l.b16 %v2094
          %v2198 = vunpack.c.h.b16 %v2094
          %v2199 = vunpack.c.l.b16 %v2095
          %v2200 = vunpack.c.h.b16 %v2095
          %v2201 = vunpack.c.l.b16 %v2096
          %v2202 = vunpack.c.h.b16 %v2096
          %v2203 = vunpack.c.l.b16 %v2097
          %v2204 = vunpack.c.h.b16 %v2097
          %v2205 = vunpack.c.l.b16 %v2098
          %v2206 = vunpack.c.h.b16 %v2098
          %v2207 = vunpack.c.l.b16 %v2099
          %v2208 = vunpack.c.h.b16 %v2099
          %v2209 = vunpack.c.l.b16 %v2100
          %v2210 = vunpack.c.h.b16 %v2100
          %v2211 = vunpack.c.l.b16 %v2101
          %v2212 = vunpack.c.h.b16 %v2101
          %v2213 = vunpack.c.l.b16 %v2102
          %v2214 = vunpack.c.h.b16 %v2102
          %v2215 = vunpack.c.l.b16 %v2103
          %v2216 = vunpack.c.h.b16 %v2103
          %v2217 = vunpack.c.l.b16 %v2104
          %v2218 = vunpack.c.h.b16 %v2104
          %v2219 = vunpack.c.l.b16 %v2105
          %v2220 = vunpack.c.h.b16 %v2105
          %v2221 = vunpack.c.l.b16 %v2106
          %v2222 = vunpack.c.h.b16 %v2106
          %v2223 = vunpack.c.l.b16 %v2107
          %v2224 = vunpack.c.h.b16 %v2107
          %v2225 = vunpack.c.l.b16 %v2108
          %v2226 = vunpack.c.h.b16 %v2108
          %v2227 = vunpack.c.l.b16 %v2109
          %v2228 = vunpack.c.h.b16 %v2109
          %v2229 = vunpack.c.l.b16 %v2110
          %v2230 = vunpack.c.h.b16 %v2110
          %v2231 = vpack.c.b16 %v2171, %v2167
          %v2232 = vpack.c.b16 %v2172, %v2168
          %v2233 = vpack.c.b16 %v2173, %v2169
          %v2234 = vpack.c.b16 %v2174, %v2170
          %v2235 = vpack.c.b16 %v2179, %v2175
          %v2236 = vpack.c.b16 %v2180, %v2176
          %v2237 = vpack.c.b16 %v2181, %v2177
          %v2238 = vpack.c.b16 %v2182, %v2178
          %v2239 = vpack.c.b16 %v2187, %v2183
          %v2240 = vpack.c.b16 %v2188, %v2184
          %v2241 = vpack.c.b16 %v2189, %v2185
          %v2242 = vpack.c.b16 %v2190, %v2186
          %v2243 = vpack.c.b16 %v2195, %v2191
          %v2244 = vpack.c.b16 %v2196, %v2192
          %v2245 = vpack.c.b16 %v2197, %v2193
          %v2246 = vpack.c.b16 %v2198, %v2194
          %v2247 = vpack.c.b16 %v2203, %v2199
          %v2248 = vpack.c.b16 %v2204, %v2200
          %v2249 = vpack.c.b16 %v2205, %v2201
          %v2250 = vpack.c.b16 %v2206, %v2202
          %v2251 = vpack.c.b16 %v2211, %v2207
          %v2252 = vpack.c.b16 %v2212, %v2208
          %v2253 = vpack.c.b16 %v2213, %v2209
          %v2254 = vpack.c.b16 %v2214, %v2210
          %v2255 = vpack.c.b16 %v2219, %v2215
          %v2256 = vpack.c.b16 %v2220, %v2216
          %v2257 = vpack.c.b16 %v2221, %v2217
          %v2258 = vpack.c.b16 %v2222, %v2218
          %v2259 = vpack.c.b16 %v2227, %v2223
          %v2260 = vpack.c.b16 %v2228, %v2224
          %v2261 = vpack.c.b16 %v2229, %v2225
          %v2262 = vpack.c.b16 %v2230, %v2226
          %2295 = vmatprep.subr.bf16.mxu0 %v2260
          %2296 = vmatpush1.bf16.msra.mxu0 %v2259
          %2297 = vmatprep.subr.bf16.mxu0 %v2256
          %2298 = vmatpush1.bf16.msra.mxu0 %v2255
          %2299 = vmatprep.subr.bf16.mxu0 %v2252
          %2300 = vmatpush1.bf16.msra.mxu0 %v2251
          %2301 = vmatprep.subr.bf16.mxu0 %v2248
          %2302 = vmatpush1.bf16.msra.mxu0 %v2247
          %2303 = vmatprep.subr.bf16.mxu0 %v2244
          %2304 = vmatpush1.bf16.msra.mxu0 %v2243
          %2305 = vmatprep.subr.bf16.mxu0 %v2240
          %2306 = vmatpush1.bf16.msra.mxu0 %v2239
          %2307 = vmatprep.subr.bf16.mxu0 %v2236
          %2308 = vmatpush1.bf16.msra.mxu0 %v2235
          %2309 = vmatprep.subr.bf16.mxu0 %v2232
          %2310 = vmatpush1.bf16.msra.mxu0 %v2231
          %2311 = vmatprep.subr.bf16.mxu0 0
          %2312 = vmatpush2.bf16.msra.mxu0 0
          %2313 = vmatprep.subr.bf16.mxu0 0
          %2314 = vmatpush2.bf16.msra.mxu0 0
          %2315 = vmatprep.subr.bf16.mxu0 0
          %2316 = vmatpush2.bf16.msra.mxu0 0
          %2317 = vmatprep.subr.bf16.mxu0 0
          %2318 = vmatpush2.bf16.msra.mxu0 0
          %2319 = vmatprep.subr.bf16.mxu0 0
          %2320 = vmatpush2.bf16.msra.mxu0 0
          %2321 = vmatprep.subr.bf16.mxu0 0
          %2322 = vmatpush2.bf16.msra.mxu0 0
          %2323 = vmatprep.subr.bf16.mxu0 0
          %2324 = vmatpush2.bf16.msra.mxu0 0
          %2325 = vmatprep.subr.bf16.mxu0 0
          %2326 = vmatpush2.bf16.msra.mxu0 0
          %2327 = vmatprep.mubr.bf16.mxu0 0
          %2328 = vmatmul.mubr.bf16.gmra.mxu0 %v2075
          %v2329 = vpop.f32.mrf.mxu0
          %v2330 = vadd.f32 %v2118, %v2329
          %v2331 = vpop.f32.mrf.mxu0
          %v2332 = vadd.f32 %v2122, %v2331
          %v2333 = vpop.f32.mrf.mxu0
          %v2334 = vadd.f32 %v2118, %v2333
          %v2335 = vpop.f32.mrf.mxu0
          %v2336 = vadd.f32 %v2122, %v2335
          %2337 = vdwg.mxu0
          %2338 = vmatprep.subr.bf16.mxu0 %v2262
          %2339 = vmatpush1.bf16.msra.mxu0 %v2261
          %2340 = vmatprep.subr.bf16.mxu0 %v2258
          %2341 = vmatpush1.bf16.msra.mxu0 %v2257
          %2342 = vmatprep.subr.bf16.mxu0 %v2254
          %2343 = vmatpush1.bf16.msra.mxu0 %v2253
          %2344 = vmatprep.subr.bf16.mxu0 %v2250
          %2345 = vmatpush1.bf16.msra.mxu0 %v2249
          %2346 = vmatprep.subr.bf16.mxu0 %v2246
          %2347 = vmatpush1.bf16.msra.mxu0 %v2245
          %2348 = vmatprep.subr.bf16.mxu0 %v2242
          %2349 = vmatpush1.bf16.msra.mxu0 %v2241
          %2350 = vmatprep.subr.bf16.mxu0 %v2238
          %2351 = vmatpush1.bf16.msra.mxu0 %v2237
          %2352 = vmatprep.subr.bf16.mxu0 %v2234
          %2353 = vmatpush1.bf16.msra.mxu0 %v2233
          %2354 = vmatprep.subr.bf16.mxu0 0
          %2355 = vmatpush2.bf16.msra.mxu0 0
          %2356 = vmatprep.subr.bf16.mxu0 0
          %2357 = vmatpush2.bf16.msra.mxu0 0
          %2358 = vmatprep.subr.bf16.mxu0 0
          %2359 = vmatpush2.bf16.msra.mxu0 0
          %2360 = vmatprep.subr.bf16.mxu0 0
          %2361 = vmatpush2.bf16.msra.mxu0 0
          %2362 = vmatprep.subr.bf16.mxu0 0
          %2363 = vmatpush2.bf16.msra.mxu0 0
          %2364 = vmatprep.subr.bf16.mxu0 0
          %2365 = vmatpush2.bf16.msra.mxu0 0
          %2366 = vmatprep.subr.bf16.mxu0 0
          %2367 = vmatpush2.bf16.msra.mxu0 0
          %2368 = vmatprep.subr.bf16.mxu0 0
          %2369 = vmatpush2.bf16.msra.mxu0 0
          %2370 = vmatprep.mubr.bf16.mxu0 0
          %2371 = vmatmul.mubr.bf16.gmra.mxu0 %v2075
          %v2372 = vpop.f32.mrf.mxu0
          %v2373 = vadd.f32 %v2126, %v2372
          %v2374 = vpop.f32.mrf.mxu0
          %v2375 = vadd.f32 %v2130, %v2374
          %v2376 = vpop.f32.mrf.mxu0
          %v2377 = vadd.f32 %v2126, %v2376
          %v2378 = vpop.f32.mrf.mxu0
          %v2379 = vadd.f32 %v2130, %v2378
          %2380 = vdwg.mxu0
          %v2381 = vmax.f32 %v2330, 0.0
          %v2382 = vmax.f32 %v2332, 0.0
          %v2383 = vmax.f32 %v2373, 0.0
          %v2384 = vmax.f32 %v2375, 0.0
          %v2385 = vmax.f32 %v2334, 0.0
          %v2386 = vmax.f32 %v2336, 0.0
          %v2387 = vmax.f32 %v2377, 0.0
          %v2388 = vmax.f32 %v2379, 0.0
          %v2389 = vpack.c.bf16 %v2385, %v2381
          %v2390 = vpack.c.bf16 %v2386, %v2382
          %v2391 = vpack.c.bf16 %v2387, %v2383
          %v2392 = vpack.c.bf16 %v2388, %v2384
          %s2393 = smul.addr %s2076, 4
          %s2394 = scalar_lea.vmem [#allocation27], %s2393
          %v2395 = vld [vmem:[%s2394] sm:$0xf]
          %v2396 = vld [vmem:[%s2394 + $0x4] sm:$0xf]
          %v2397 = vld [vmem:[%s2394 + $0x8] sm:$0xf]
          %v2398 = vld [vmem:[%s2394 + $0xc] sm:$0xf]
          %v2399 = vld [vmem:[%s2394 + $0x10] sm:$0xf]
          %v2400 = vld [vmem:[%s2394 + $0x14] sm:$0xf]
          %v2401 = vld [vmem:[%s2394 + $0x18] sm:$0xf]
          %v2402 = vld [vmem:[%s2394 + $0x1c] sm:$0xf]
          %v2403 = vld [vmem:[%s2394 + $0x20] sm:$0xf]
          %v2404 = vld [vmem:[%s2394 + $0x24] sm:$0xf]
          %v2405 = vld [vmem:[%s2394 + $0x28] sm:$0xf]
          %v2406 = vld [vmem:[%s2394 + $0x2c] sm:$0xf]
          %v2407 = vld [vmem:[%s2394 + $0x30] sm:$0xf]
          %v2408 = vld [vmem:[%s2394 + $0x34] sm:$0xf]
          %v2409 = vld [vmem:[%s2394 + $0x38] sm:$0xf]
          %v2410 = vld [vmem:[%s2394 + $0x3c] sm:$0xf]
          %v2411 = vld [vmem:[%s2394 + $0x40] sm:$0xf]
          %v2412 = vld [vmem:[%s2394 + $0x44] sm:$0xf]
          %v2413 = vld [vmem:[%s2394 + $0x48] sm:$0xf]
          %v2414 = vld [vmem:[%s2394 + $0x4c] sm:$0xf]
          %v2415 = vld [vmem:[%s2394 + $0x50] sm:$0xf]
          %v2416 = vld [vmem:[%s2394 + $0x54] sm:$0xf]
          %v2417 = vld [vmem:[%s2394 + $0x58] sm:$0xf]
          %v2418 = vld [vmem:[%s2394 + $0x5c] sm:$0xf]
          %v2419 = vld [vmem:[%s2394 + $0x60] sm:$0xf]
          %v2420 = vld [vmem:[%s2394 + $0x64] sm:$0xf]
          %v2421 = vld [vmem:[%s2394 + $0x68] sm:$0xf]
          %v2422 = vld [vmem:[%s2394 + $0x6c] sm:$0xf]
          %v2423 = vld [vmem:[%s2394 + $0x70] sm:$0xf]
          %v2424 = vld [vmem:[%s2394 + $0x74] sm:$0xf]
          %v2425 = vld [vmem:[%s2394 + $0x78] sm:$0xf]
          %v2426 = vld [vmem:[%s2394 + $0x7c] sm:$0xf]
          %v2427 = vld [vmem:[%s2394 + $0x80] sm:$0xf]
          %v2428 = vld [vmem:[%s2394 + $0x84] sm:$0xf]
          %v2429 = vld [vmem:[%s2394 + $0x88] sm:$0xf]
          %v2430 = vld [vmem:[%s2394 + $0x8c] sm:$0xf]
          %v2431 = vld [vmem:[%s2394 + $0x90] sm:$0xf]
          %v2432 = vld [vmem:[%s2394 + $0x94] sm:$0xf]
          %v2433 = vld [vmem:[%s2394 + $0x98] sm:$0xf]
          %v2434 = vld [vmem:[%s2394 + $0x9c] sm:$0xf]
          %v2435 = vld [vmem:[%s2394 + $0xa0] sm:$0xf]
          %v2436 = vld [vmem:[%s2394 + $0xa4] sm:$0xf]
          %v2437 = vld [vmem:[%s2394 + $0xa8] sm:$0xf]
          %v2438 = vld [vmem:[%s2394 + $0xac] sm:$0xf]
          %v2439 = vld [vmem:[%s2394 + $0xb0] sm:$0xf]
          %v2440 = vld [vmem:[%s2394 + $0xb4] sm:$0xf]
          %v2441 = vld [vmem:[%s2394 + $0xb8] sm:$0xf]
          %v2442 = vld [vmem:[%s2394 + $0xbc] sm:$0xf]
          %v2443 = vld [vmem:[%s2394 + $0xc0] sm:$0xf]
          %v2444 = vld [vmem:[%s2394 + $0xc4] sm:$0xf]
          %v2445 = vld [vmem:[%s2394 + $0xc8] sm:$0xf]
          %v2446 = vld [vmem:[%s2394 + $0xcc] sm:$0xf]
          %v2447 = vld [vmem:[%s2394 + $0xd0] sm:$0xf]
          %v2448 = vld [vmem:[%s2394 + $0xd4] sm:$0xf]
          %v2449 = vld [vmem:[%s2394 + $0xd8] sm:$0xf]
          %v2450 = vld [vmem:[%s2394 + $0xdc] sm:$0xf]
          %v2451 = vld [vmem:[%s2394 + $0xe0] sm:$0xf]
          %v2452 = vld [vmem:[%s2394 + $0xe4] sm:$0xf]
          %v2453 = vld [vmem:[%s2394 + $0xe8] sm:$0xf]
          %v2454 = vld [vmem:[%s2394 + $0xec] sm:$0xf]
          %v2455 = vld [vmem:[%s2394 + $0xf0] sm:$0xf]
          %v2456 = vld [vmem:[%s2394 + $0xf4] sm:$0xf]
          %v2457 = vld [vmem:[%s2394 + $0xf8] sm:$0xf]
          %v2458 = vld [vmem:[%s2394 + $0xfc] sm:$0xf]
          %s2459 = scalar_lea.vmem [#allocation29], %s1319
          %v2460 = vld [vmem:[%s2459] sm:$0x1]
          %v2462 = vlaneseq
          %v2463 = vshrl.u32 %v2462, 7
          %v2464 = vsub.s32 0, %v2463
          %v2465 = vrot.slane %v2460, %v2464
          %v2531 = vunpack.c.l.b16 %v2395
          %v2532 = vunpack.c.l.b16 %v2396
          %v2533 = vunpack.c.l.b16 %v2397
          %v2534 = vunpack.c.l.b16 %v2398
          %v2535 = vunpack.c.l.b16 %v2399
          %v2536 = vunpack.c.l.b16 %v2400
          %v2537 = vunpack.c.l.b16 %v2401
          %v2538 = vunpack.c.l.b16 %v2402
          %v2539 = vunpack.c.l.b16 %v2403
          %v2540 = vunpack.c.l.b16 %v2404
          %v2541 = vunpack.c.l.b16 %v2405
          %v2542 = vunpack.c.l.b16 %v2406
          %v2543 = vunpack.c.l.b16 %v2407
          %v2544 = vunpack.c.l.b16 %v2408
          %v2545 = vunpack.c.l.b16 %v2409
          %v2546 = vunpack.c.l.b16 %v2410
          %v2547 = vunpack.c.l.b16 %v2411
          %v2548 = vunpack.c.l.b16 %v2412
          %v2549 = vunpack.c.l.b16 %v2413
          %v2550 = vunpack.c.l.b16 %v2414
          %v2551 = vunpack.c.l.b16 %v2415
          %v2552 = vunpack.c.l.b16 %v2416
          %v2553 = vunpack.c.l.b16 %v2417
          %v2554 = vunpack.c.l.b16 %v2418
          %v2555 = vunpack.c.l.b16 %v2419
          %v2556 = vunpack.c.l.b16 %v2420
          %v2557 = vunpack.c.l.b16 %v2421
          %v2558 = vunpack.c.l.b16 %v2422
          %v2559 = vunpack.c.l.b16 %v2423
          %v2560 = vunpack.c.l.b16 %v2424
          %v2561 = vunpack.c.l.b16 %v2425
          %v2562 = vunpack.c.l.b16 %v2426
          %v2563 = vunpack.c.l.b16 %v2427
          %v2564 = vunpack.c.l.b16 %v2428
          %v2565 = vunpack.c.l.b16 %v2429
          %v2566 = vunpack.c.l.b16 %v2430
          %v2567 = vunpack.c.l.b16 %v2431
          %v2568 = vunpack.c.l.b16 %v2432
          %v2569 = vunpack.c.l.b16 %v2433
          %v2570 = vunpack.c.l.b16 %v2434
          %v2571 = vunpack.c.l.b16 %v2435
          %v2572 = vunpack.c.l.b16 %v2436
          %v2573 = vunpack.c.l.b16 %v2437
          %v2574 = vunpack.c.l.b16 %v2438
          %v2575 = vunpack.c.l.b16 %v2439
          %v2576 = vunpack.c.l.b16 %v2440
          %v2577 = vunpack.c.l.b16 %v2441
          %v2578 = vunpack.c.l.b16 %v2442
          %v2579 = vunpack.c.l.b16 %v2443
          %v2580 = vunpack.c.l.b16 %v2444
          %v2581 = vunpack.c.l.b16 %v2445
          %v2582 = vunpack.c.l.b16 %v2446
          %v2583 = vunpack.c.l.b16 %v2447
          %v2584 = vunpack.c.l.b16 %v2448
          %v2585 = vunpack.c.l.b16 %v2449
          %v2586 = vunpack.c.l.b16 %v2450
          %v2587 = vunpack.c.l.b16 %v2451
          %v2588 = vunpack.c.l.b16 %v2452
          %v2589 = vunpack.c.l.b16 %v2453
          %v2590 = vunpack.c.l.b16 %v2454
          %v2591 = vunpack.c.l.b16 %v2455
          %v2592 = vunpack.c.l.b16 %v2456
          %v2593 = vunpack.c.l.b16 %v2457
          %v2594 = vunpack.c.l.b16 %v2458
          %v2595 = vpack.c.b16 %v2532, %v2531
          %v2596 = vpack.c.b16 %v2534, %v2533
          %v2597 = vpack.c.b16 %v2536, %v2535
          %v2598 = vpack.c.b16 %v2538, %v2537
          %v2599 = vpack.c.b16 %v2540, %v2539
          %v2600 = vpack.c.b16 %v2542, %v2541
          %v2601 = vpack.c.b16 %v2544, %v2543
          %v2602 = vpack.c.b16 %v2546, %v2545
          %v2603 = vpack.c.b16 %v2548, %v2547
          %v2604 = vpack.c.b16 %v2550, %v2549
          %v2605 = vpack.c.b16 %v2552, %v2551
          %v2606 = vpack.c.b16 %v2554, %v2553
          %v2607 = vpack.c.b16 %v2556, %v2555
          %v2608 = vpack.c.b16 %v2558, %v2557
          %v2609 = vpack.c.b16 %v2560, %v2559
          %v2610 = vpack.c.b16 %v2562, %v2561
          %v2611 = vpack.c.b16 %v2564, %v2563
          %v2612 = vpack.c.b16 %v2566, %v2565
          %v2613 = vpack.c.b16 %v2568, %v2567
          %v2614 = vpack.c.b16 %v2570, %v2569
          %v2615 = vpack.c.b16 %v2572, %v2571
          %v2616 = vpack.c.b16 %v2574, %v2573
          %v2617 = vpack.c.b16 %v2576, %v2575
          %v2618 = vpack.c.b16 %v2578, %v2577
          %v2619 = vpack.c.b16 %v2580, %v2579
          %v2620 = vpack.c.b16 %v2582, %v2581
          %v2621 = vpack.c.b16 %v2584, %v2583
          %v2622 = vpack.c.b16 %v2586, %v2585
          %v2623 = vpack.c.b16 %v2588, %v2587
          %v2624 = vpack.c.b16 %v2590, %v2589
          %v2625 = vpack.c.b16 %v2592, %v2591
          %v2626 = vpack.c.b16 %v2594, %v2593
          %2659 = vmatprep.subr.bf16.mxu0 0
          %2660 = vmatpush1.bf16.msra.mxu0 %v2602
          %2661 = vmatprep.subr.bf16.mxu0 0
          %2662 = vmatpush1.bf16.msra.mxu0 %v2601
          %2663 = vmatprep.subr.bf16.mxu0 0
          %2664 = vmatpush1.bf16.msra.mxu0 %v2600
          %2665 = vmatprep.subr.bf16.mxu0 0
          %2666 = vmatpush1.bf16.msra.mxu0 %v2599
          %2667 = vmatprep.subr.bf16.mxu0 0
          %2668 = vmatpush1.bf16.msra.mxu0 %v2598
          %2669 = vmatprep.subr.bf16.mxu0 0
          %2670 = vmatpush1.bf16.msra.mxu0 %v2597
          %2671 = vmatprep.subr.bf16.mxu0 0
          %2672 = vmatpush1.bf16.msra.mxu0 %v2596
          %2673 = vmatprep.subr.bf16.mxu0 0
          %2674 = vmatpush1.bf16.msra.mxu0 %v2595
          %2675 = vmatprep.subr.bf16.mxu0 0
          %2676 = vmatpush2.bf16.msra.mxu0 %v2610
          %2677 = vmatprep.subr.bf16.mxu0 0
          %2678 = vmatpush2.bf16.msra.mxu0 %v2609
          %2679 = vmatprep.subr.bf16.mxu0 0
          %2680 = vmatpush2.bf16.msra.mxu0 %v2608
          %2681 = vmatprep.subr.bf16.mxu0 0
          %2682 = vmatpush2.bf16.msra.mxu0 %v2607
          %2683 = vmatprep.subr.bf16.mxu0 0
          %2684 = vmatpush2.bf16.msra.mxu0 %v2606
          %2685 = vmatprep.subr.bf16.mxu0 0
          %2686 = vmatpush2.bf16.msra.mxu0 %v2605
          %2687 = vmatprep.subr.bf16.mxu0 0
          %2688 = vmatpush2.bf16.msra.mxu0 %v2604
          %2689 = vmatprep.subr.bf16.mxu0 0
          %2690 = vmatpush2.bf16.msra.mxu0 %v2603
          %2691 = vmatprep.mubr.bf16.mxu0 %v2390
          %2692 = vmatmul.mubr.bf16.gmra.mxu0 %v2389
          %v2693 = vpop.f32.mrf.mxu0
          %v2694 = vadd.f32 %v2465, %v2693
          %v2695 = vpop.f32.mrf.mxu0
          %v2696 = vpop.f32.mrf.mxu0
          %v2697 = vadd.f32 %v2465, %v2696
          %v2698 = vpop.f32.mrf.mxu0
          %2699 = vdwg.mxu0
          %2700 = vmatprep.subr.bf16.mxu0 0
          %2701 = vmatpush1.bf16.msra.mxu0 %v2618
          %2702 = vmatprep.subr.bf16.mxu0 0
          %2703 = vmatpush1.bf16.msra.mxu0 %v2617
          %2704 = vmatprep.subr.bf16.mxu0 0
          %2705 = vmatpush1.bf16.msra.mxu0 %v2616
          %2706 = vmatprep.subr.bf16.mxu0 0
          %2707 = vmatpush1.bf16.msra.mxu0 %v2615
          %2708 = vmatprep.subr.bf16.mxu0 0
          %2709 = vmatpush1.bf16.msra.mxu0 %v2614
          %2710 = vmatprep.subr.bf16.mxu0 0
          %2711 = vmatpush1.bf16.msra.mxu0 %v2613
          %2712 = vmatprep.subr.bf16.mxu0 0
          %2713 = vmatpush1.bf16.msra.mxu0 %v2612
          %2714 = vmatprep.subr.bf16.mxu0 0
          %2715 = vmatpush1.bf16.msra.mxu0 %v2611
          %2716 = vmatprep.subr.bf16.mxu0 0
          %2717 = vmatpush2.bf16.msra.mxu0 %v2626
          %2718 = vmatprep.subr.bf16.mxu0 0
          %2719 = vmatpush2.bf16.msra.mxu0 %v2625
          %2720 = vmatprep.subr.bf16.mxu0 0
          %2721 = vmatpush2.bf16.msra.mxu0 %v2624
          %2722 = vmatprep.subr.bf16.mxu0 0
          %2723 = vmatpush2.bf16.msra.mxu0 %v2623
          %2724 = vmatprep.subr.bf16.mxu0 0
          %2725 = vmatpush2.bf16.msra.mxu0 %v2622
          %2726 = vmatprep.subr.bf16.mxu0 0
          %2727 = vmatpush2.bf16.msra.mxu0 %v2621
          %2728 = vmatprep.subr.bf16.mxu0 0
          %2729 = vmatpush2.bf16.msra.mxu0 %v2620
          %2730 = vmatprep.subr.bf16.mxu0 0
          %2731 = vmatpush2.bf16.msra.mxu0 %v2619
          %2732 = vmatprep.mubr.bf16.mxu0 %v2392
          %2733 = vmatmul.mubr.bf16.gmra.mxu0 %v2391
          %v2734 = vpop.f32.mrf.mxu0
          %v2735 = vadd.f32 %v2694, %v2734
          %v2736 = vpop.f32.mrf.mxu0
          %v2737 = vpop.f32.mrf.mxu0
          %v2738 = vadd.f32 %v2697, %v2737
          %v2739 = vpop.f32.mrf.mxu0
          %2740 = vdwg.mxu0
          %v2741 = vadd.f32 %v2031, %v2735
          %v2742 = vadd.f32 %v2032, %v2738
          %2743 = vst [vmem:[#allocation2] sm:$0xff] %v2741
          %2744 = vst [vmem:[#allocation2 + $0x8] sm:$0xff] %v2742
        $region209: #{tpu_custom_call.1} parent=123 // loop_footer
          %s1323 = sadd.s32 1, %s1319
        $region210: #{tpu_custom_call.1} parent=123 // loop_footer_branch
          %1318 = sbr.rel target = $region206
        $region211: #{tpu_custom_call.1} parent=123 // loop_exit
          _
        %v2745 = vld [vmem:[#allocation2] sm:$0x1]
        %v2746 = vld [vmem:[#allocation30] sm:$0x1]
        %v2747 = vld [vmem:[#allocation32] sm:$0x1]
        %vm2748 = vcmask 1040384
        %v2749 = vsel %vm2748, %v2745, 0.0
        %2750 = vadd.xlane.f32.xlu0 %v2749
        %v2751 = vpop.xlane.xlu0 %2750
        %v2752 = vrcp.pop 128.0
        %v2753 = vmul.f32 %v2751, %v2752
        %v2754 = vsub.f32 %v2745, %v2753
        %v2755 = vmul.f32 %v2754, %v2754
        %v2756 = vsel %vm2748, %v2755, 0.0
        %2757 = vadd.xlane.f32.xlu0 %v2756
        %v2758 = vpop.xlane.xlu0 %2757
        %v2759 = vmul.f32 %v2758, %v2752
        %v2760 = vadd.f32 %v2759, 1e-05
        %v2761 = vrsqrt.pop %v2760
        %v2762 = vmul.f32 %v2754, %v2761
        %v2763 = vmul.f32 %v2762, %v2746
        %v2764 = vadd.f32 %v2763, %v2747
        %v2765 = vpack.c.bf16 %v2764, %v2764
        %v2766 = vld [vmem:[%s21] sm:$0xf]
        %v2767 = vld [vmem:[%s21 + $0x4] sm:$0xf]
        %v2768 = vld [vmem:[%s21 + $0x8] sm:$0xf]
        %v2769 = vld [vmem:[%s21 + $0xc] sm:$0xf]
        %v2770 = vld [vmem:[%s21 + $0x10] sm:$0xf]
        %v2771 = vld [vmem:[%s21 + $0x14] sm:$0xf]
        %v2772 = vld [vmem:[%s21 + $0x18] sm:$0xf]
        %v2773 = vld [vmem:[%s21 + $0x1c] sm:$0xf]
        %v2774 = vld [vmem:[%s21 + $0x20] sm:$0xf]
        %v2775 = vld [vmem:[%s21 + $0x24] sm:$0xf]
        %v2776 = vld [vmem:[%s21 + $0x28] sm:$0xf]
        %v2777 = vld [vmem:[%s21 + $0x2c] sm:$0xf]
        %v2778 = vld [vmem:[%s21 + $0x30] sm:$0xf]
        %v2779 = vld [vmem:[%s21 + $0x34] sm:$0xf]
        %v2780 = vld [vmem:[%s21 + $0x38] sm:$0xf]
        %v2781 = vld [vmem:[%s21 + $0x3c] sm:$0xf]
        %v2782 = vld [vmem:[#allocation3] sm:$0x1]
        %v2799 = vunpack.c.l.b16 %v2766
        %v2800 = vunpack.c.l.b16 %v2767
        %v2801 = vunpack.c.l.b16 %v2768
        %v2802 = vunpack.c.l.b16 %v2769
        %v2803 = vunpack.c.l.b16 %v2770
        %v2804 = vunpack.c.l.b16 %v2771
        %v2805 = vunpack.c.l.b16 %v2772
        %v2806 = vunpack.c.l.b16 %v2773
        %v2807 = vunpack.c.l.b16 %v2774
        %v2808 = vunpack.c.l.b16 %v2775
        %v2809 = vunpack.c.l.b16 %v2776
        %v2810 = vunpack.c.l.b16 %v2777
        %v2811 = vunpack.c.l.b16 %v2778
        %v2812 = vunpack.c.l.b16 %v2779
        %v2813 = vunpack.c.l.b16 %v2780
        %v2814 = vunpack.c.l.b16 %v2781
        %v2815 = vpack.c.b16 %v2800, %v2799
        %v2816 = vpack.c.b16 %v2802, %v2801
        %v2817 = vpack.c.b16 %v2804, %v2803
        %v2818 = vpack.c.b16 %v2806, %v2805
        %v2819 = vpack.c.b16 %v2808, %v2807
        %v2820 = vpack.c.b16 %v2810, %v2809
        %v2821 = vpack.c.b16 %v2812, %v2811
        %v2822 = vpack.c.b16 %v2814, %v2813
        %2831 = vmatprep.subr.bf16.mxu0 0
        %2832 = vmatpush1.bf16.msra.mxu0 %v2822
        %2833 = vmatprep.subr.bf16.mxu0 0
        %2834 = vmatpush1.bf16.msra.mxu0 %v2821
        %2835 = vmatprep.subr.bf16.mxu0 0
        %2836 = vmatpush1.bf16.msra.mxu0 %v2820
        %2837 = vmatprep.subr.bf16.mxu0 0
        %2838 = vmatpush1.bf16.msra.mxu0 %v2819
        %2839 = vmatprep.subr.bf16.mxu0 0
        %2840 = vmatpush1.bf16.msra.mxu0 %v2818
        %2841 = vmatprep.subr.bf16.mxu0 0
        %2842 = vmatpush1.bf16.msra.mxu0 %v2817
        %2843 = vmatprep.subr.bf16.mxu0 0
        %2844 = vmatpush1.bf16.msra.mxu0 %v2816
        %2845 = vmatprep.subr.bf16.mxu0 0
        %2846 = vmatpush1.bf16.msra.mxu0 %v2815
        %2847 = vmatprep.subr.bf16.mxu0 0
        %2848 = vmatpush2.bf16.msra.mxu0 0
        %2849 = vmatprep.subr.bf16.mxu0 0
        %2850 = vmatpush2.bf16.msra.mxu0 0
        %2851 = vmatprep.subr.bf16.mxu0 0
        %2852 = vmatpush2.bf16.msra.mxu0 0
        %2853 = vmatprep.subr.bf16.mxu0 0
        %2854 = vmatpush2.bf16.msra.mxu0 0
        %2855 = vmatprep.subr.bf16.mxu0 0
        %2856 = vmatpush2.bf16.msra.mxu0 0
        %2857 = vmatprep.subr.bf16.mxu0 0
        %2858 = vmatpush2.bf16.msra.mxu0 0
        %2859 = vmatprep.subr.bf16.mxu0 0
        %2860 = vmatpush2.bf16.msra.mxu0 0
        %2861 = vmatprep.subr.bf16.mxu0 0
        %2862 = vmatpush2.bf16.msra.mxu0 0
        %2863 = vmatprep.mubr.bf16.mxu0 0
        %2864 = vmatmul.mubr.bf16.gmra.mxu0 %v2765
        %v2865 = vpop.f32.mrf.mxu0
        %v2866 = vadd.f32 %v2782, %v2865
        %v2867 = vpop.f32.mrf.mxu0
        %v2868 = vpop.f32.mrf.mxu0
        %v2869 = vpop.f32.mrf.mxu0
        %2870 = vdwg.mxu0
        %vm2871 = vcmask 0
        %2872 = vst.msk [vmem:[%s1090] sm:$0x1] %vm2871, %v2866
        %p2873 = scmp.lt.s32.totalorder %s52, 1
        %s2874 = scalar_select %p2873, %s52, 1
        %s2875 = scalar_lea.vmem %s26, %s2874
        // Predicated region
        $region212: #{tpu_custom_call.1} parent=123 // pred_check
          %p2876 = pneg %p626
        $region213: #{tpu_custom_call.1} parent=123 // pred_check_branch
          %2878 = sbr.rel (%p2876) target = $region215
        $region214: #{tpu_custom_call.1} parent=123 // pred_region
          _
        $region215: #{tpu_custom_call.1} parent=123 // pred_fallthru
          _
      $region124: #{tpu_custom_call.1} parent=5 // pred_fallthru
        _
      %p2879 = scmp.le.s32.totalorder 2, %s47
      // Predicated region
      $region216: #{tpu_custom_call.1} parent=5 // pred_check
        %p2880 = pneg %p2879
      $region217: #{tpu_custom_call.1} parent=5 // pred_check_branch
        %2882 = sbr.rel (%p2880) target = $region219
      $region218: #{tpu_custom_call.1} parent=5 // pred_region
        %s2883 = ssub.s32 %s47, 2
        // Predicated region
        $region220: #{tpu_custom_call.1} parent=218 // pred_check
          %p2884 = pneg %p632
        $region221: #{tpu_custom_call.1} parent=218 // pred_check_branch
          %2886 = sbr.rel (%p2884) target = $region223
        $region222: #{tpu_custom_call.1} parent=218 // pred_region
          %p2887 = scmp.lt.s32.totalorder %s53, 1
          %s2888 = scalar_select %p2887, %s53, 1
          %s2889 = scalar_lea.vmem %s26, %s2888
        $region223: #{tpu_custom_call.1} parent=218 // pred_fallthru
          _
      $region219: #{tpu_custom_call.1} parent=5 // pred_fallthru
        _
    $region6: #{tpu_custom_call.1} parent=1 // loop_footer
      %s51 = sadd.s32 1, %s47
    $region7: #{tpu_custom_call.1} parent=1 // loop_footer_branch
      %46 = sbr.rel target = $region3
    $region8: #{tpu_custom_call.1} parent=1 // loop_exit
      _
    %2890 = vsyncpa [#allocation5], 1
    %s2891 = scalar_lea.sflag [#allocation5], 1
    %2892 = vsyncpa %s2891, 1
    %2893 = vsyncpa [#allocation7], 1
    %2894 = vsyncpa [#allocation10], 1
    %2895 = vsyncpa [#allocation13], 1
    %2896 = vsyncpa [#allocation16], 1
    %2897 = vsyncpa [#allocation19], 1
    %2898 = vsyncpa [#allocation22], 1
    %2899 = vsyncpa [#allocation25], 1
    %2900 = vsyncpa [#allocation28], 1
    %2901 = vsyncpa [#allocation31], 1
    %2902 = vsyncpa [#allocation34], 1

</llo_original>
